<compile_context>
chip_gen: v6e
topology: v6e:2x2x1
jax: 0.10.0
libtpu: 0.0.40
codegen_flags: <defaults>
</compile_context>

<pallas_src>
import functools

import jax
import jax.numpy as jnp
from jax.experimental import pallas as pl
from jax.experimental.pallas import tpu as pltpu


def _round_up(x, m):
    return (x + m - 1) // m * m


_VMEM_LIMIT = 32 * 1024 * 1024  # safe on v5e (128 MiB), v6e (128 MiB), v7x (64 MiB)


def _default_tile_m():
    """Row-tile size per TPU generation: 512 on big-VMEM parts (v5e/v6e),
    256 on v7x (half the VMEM). Both are multiples of 256 for the 256-wide MXU."""
    try:
        info = pltpu.get_tpu_info()
        vmem = int(getattr(info, "vmem_capacity_bytes", 0) or 0)
        if vmem >= 96 * 1024 * 1024:
            return 512
    except Exception:
        pass
    return 256


_TILE_M = _default_tile_m()


def _compiler_params(parallel=True):
    sem = ("parallel",) if parallel else ("arbitrary",)
    return pltpu.CompilerParams(dimension_semantics=sem,
                                vmem_limit_bytes=_VMEM_LIMIT)


# --------------------------- Pallas kernels ---------------------------------

def _matmul_bias_act_kernel(a_ref, b_ref, bias_ref, o_ref, *, act):
    # bf16 x bf16 on the MXU, f32 accumulation; bias/activation in f32.
    acc = jnp.dot(a_ref[...], b_ref[...], preferred_element_type=jnp.float32)
    acc = acc + bias_ref[...]                 # (1, Np) f32 broadcasts over rows
    if act == "relu":
        acc = jnp.maximum(acc, 0.0)
    elif act == "tanh":
        acc = jnp.tanh(acc)
    o_ref[...] = acc.astype(o_ref.dtype)


def _max_reduce_kernel(x_ref, o_ref, *, k):
    out = x_ref[0]
    for t in range(1, k):
        out = jnp.maximum(out, x_ref[t])
    o_ref[...] = out


def _head_kernel(f_ref, w_ref, b_ref, o_ref, *, hw):
    # global average pool as an axis reduce (f32), fc in bf16 on MXU, tanh f32
    pooled = jnp.sum(f_ref[...], axis=1) * (1.0 / hw)          # (B, C) f32
    y = jnp.dot(pooled.astype(jnp.bfloat16), w_ref[...],
                preferred_element_type=jnp.float32)
    o_ref[...] = jnp.tanh(y + b_ref[...])


# --------------------------- kernel wrappers ---------------------------------

def matmul_bias_act(a, b, bias, act, out_dtype=jnp.float32):
    """act(a @ b + bias). a:(M,K) b:(K,N) bias:(N,). Row-tiled, bf16 MXU."""
    M, K = a.shape
    _, N = b.shape
    Kp, Np = _round_up(K, 128), _round_up(N, 128)
    tm = min(_TILE_M, _round_up(M, 16))
    Mp = _round_up(M, tm)
    ap = jnp.pad(a.astype(jnp.bfloat16), ((0, Mp - M), (0, Kp - K)))
    bp = jnp.pad(b.astype(jnp.bfloat16), ((0, Kp - K), (0, Np - N)))
    biasp = jnp.pad(bias.astype(jnp.float32), (0, Np - N)).reshape(1, Np)
    out = pl.pallas_call(
        functools.partial(_matmul_bias_act_kernel, act=act),
        out_shape=jax.ShapeDtypeStruct((Mp, Np), out_dtype),
        grid=(Mp // tm,),
        in_specs=[
            pl.BlockSpec((tm, Kp), lambda i: (i, 0)),
            pl.BlockSpec((Kp, Np), lambda i: (0, 0)),    # weights stay resident
            pl.BlockSpec((1, Np), lambda i: (0, 0)),
        ],
        out_specs=pl.BlockSpec((tm, Np), lambda i: (i, 0)),
        compiler_params=_compiler_params(parallel=True),
    )(ap, bp, biasp)
    return out[:M, :N]


def _max_reduce_rows(stacked):
    """stacked: (k, M, C) -> elementwise max over axis 0, row-tiled grid."""
    k, M, C = stacked.shape
    Cp = _round_up(C, 128)
    tm = min(_TILE_M, _round_up(M, 16))
    Mp = _round_up(M, tm)
    sp = jnp.pad(stacked, ((0, 0), (0, Mp - M), (0, Cp - C)))
    out = pl.pallas_call(
        functools.partial(_max_reduce_kernel, k=k),
        out_shape=jax.ShapeDtypeStruct((Mp, Cp), stacked.dtype),
        grid=(Mp // tm,),
        in_specs=[pl.BlockSpec((k, tm, Cp), lambda i: (0, i, 0))],
        out_specs=pl.BlockSpec((tm, Cp), lambda i: (i, 0)),
        compiler_params=_compiler_params(parallel=True),
    )(sp)
    return out[:M, :C]


def pool_fc_tanh(feat, w, bias):
    """feat: (B, HW, C) -> tanh(mean_HW(feat) @ w + bias), fused in one kernel."""
    B, HW, C = feat.shape
    _, O = w.shape
    Bp, Cp, Op = _round_up(B, 8), _round_up(C, 128), _round_up(O, 128)
    fp = jnp.pad(feat.astype(jnp.float32), ((0, Bp - B), (0, 0), (0, Cp - C)))
    wp = jnp.pad(w.astype(jnp.bfloat16), ((0, Cp - C), (0, Op - O)))
    bp = jnp.pad(bias.astype(jnp.float32), (0, Op - O)).reshape(1, Op)
    out = pl.pallas_call(
        functools.partial(_head_kernel, hw=HW),
        out_shape=jax.ShapeDtypeStruct((Bp, Op), jnp.float32),
        grid=(1,),
        in_specs=[
            pl.BlockSpec((Bp, HW, Cp), lambda i: (0, 0, 0)),
            pl.BlockSpec((Cp, Op), lambda i: (0, 0)),
            pl.BlockSpec((1, Op), lambda i: (0, 0)),
        ],
        out_specs=pl.BlockSpec((Bp, Op), lambda i: (0, 0)),
        compiler_params=_compiler_params(parallel=False),
    )(fp, wp, bp)
    return out[:B, :O]


# --------------------------- layer wrappers ----------------------------------

def conv2d(x, w, b, *, stride=1, padding=0, act="relu", out_dtype=jnp.float32):
    """x: (N,H,W,Cin), w: (kh,kw,Cin,Cout), b: (Cout,). im2col + Pallas matmul."""
    N, H, W, Cin = x.shape
    kh, kw, _, Cout = w.shape
    Ho = (H + 2 * padding - kh) // stride + 1
    Wo = (W + 2 * padding - kw) // stride + 1
    xb = x.astype(jnp.bfloat16)
    if kh == 1 and kw == 1 and stride == 1 and padding == 0:
        A = xb.reshape(N * H * W, Cin)
    else:
        # im2col in bf16 (half the HBM traffic of an f32 im2col)
        xp = jnp.pad(xb, ((0, 0), (padding, padding), (padding, padding), (0, 0)))
        cols = [
            xp[:, i:i + (Ho - 1) * stride + 1:stride,
               j:j + (Wo - 1) * stride + 1:stride, :]
            for i in range(kh) for j in range(kw)
        ]
        A = jnp.concatenate(cols, axis=-1).reshape(N * Ho * Wo, kh * kw * Cin)
    Bmat = w.reshape(kh * kw * Cin, Cout)
    out = matmul_bias_act(A, Bmat, b, act, out_dtype=out_dtype)
    return out.reshape(N, Ho, Wo, Cout)


def maxpool2d_ceil(x, k=3, s=2):
    """MaxPool2d(kernel=3, stride=2, ceil_mode=True), PyTorch semantics.

    Separable: max over W then max over H (3 shifted strided views per pass
    instead of 9), each pass reduced in a row-tiled Pallas kernel.
    """
    N, H, W, C = x.shape
    Ho = -((H - k) // -s) + 1            # ceil((H - k) / s) + 1
    Wo = -((W - k) // -s) + 1
    ph = max((Ho - 1) * s + k - H, 0)
    pw = max((Wo - 1) * s + k - W, 0)
    # (last window always starts inside the input for the SqueezeNet shapes)
    xw = jnp.pad(x, ((0, 0), (0, 0), (0, pw), (0, 0)), constant_values=-jnp.inf)
    wins = [xw[:, :, j:j + (Wo - 1) * s + 1:s, :] for j in range(k)]
    pooled_w = _max_reduce_rows(jnp.stack(wins, 0).reshape(k, N * H * Wo, C))
    pooled_w = pooled_w.reshape(N, H, Wo, C)
    xh = jnp.pad(pooled_w, ((0, 0), (0, ph), (0, 0), (0, 0)),
                 constant_values=-jnp.inf)
    wins = [xh[:, i:i + (Ho - 1) * s + 1:s, :, :] for i in range(k)]
    out = _max_reduce_rows(jnp.stack(wins, 0).reshape(k, N * Ho * Wo, C))
    return out.reshape(N, Ho, Wo, C)


# --------------------------- model definition --------------------------------

# SqueezeNet 1.0 Fire configs: (in_ch, squeeze, expand1x1, expand3x3)
_FIRE_CFG = [
    (96, 16, 64, 64), (128, 16, 64, 64), (128, 32, 128, 128),
    (256, 32, 128, 128), (256, 48, 192, 192), (384, 48, 192, 192),
    (384, 64, 256, 256), (512, 64, 256, 256),
]


def _conv_init(key, kh, kw, cin, cout):
    wk, bk = jax.random.split(key)
    scale = 1.0 / (kh * kw * cin) ** 0.5
    w = scale * jax.random.normal(wk, (kh, kw, cin, cout), jnp.float32)
    b = 0.01 * jax.random.normal(bk, (cout,), jnp.float32)
    return w, b


def init_params(key, input_channels, output_size):
    keys = jax.random.split(key, 2 + 3 * len(_FIRE_CFG))
    params = {}
    # replaced stem: Conv2d(input_channels, 96, kernel=3, stride=2, padding=1)
    params["conv0_w"], params["conv0_b"] = _conv_init(keys[0], 3, 3,
                                                      input_channels, 96)
    params["fires"] = []
    ki = 1
    for (cin, sq, e1, e3) in _FIRE_CFG:
        p = {}
        p["sq_w"], p["sq_b"] = _conv_init(keys[ki], 1, 1, cin, sq); ki += 1
        p["e1_w"], p["e1_b"] = _conv_init(keys[ki], 1, 1, sq, e1); ki += 1
        p["e3_w"], p["e3_b"] = _conv_init(keys[ki], 3, 3, sq, e3); ki += 1
        params["fires"].append(p)
    fk, fbk = jax.random.split(keys[ki])
    params["fc_w"] = (1.0 / 512 ** 0.5) * jax.random.normal(
        fk, (512, output_size), jnp.float32)
    params["fc_b"] = 0.01 * jax.random.normal(fbk, (output_size,), jnp.float32)
    return params


def fire(x, p, out_dtype=jnp.bfloat16):
    """Fire module. The expand1x1 conv is folded into the expand3x3 weights
    (a 1x1 conv == the center tap of a 3x3 conv, numerically identical), so a
    single Pallas matmul emits the already channel-concatenated [e1 | e3]
    output: no jnp.concatenate round trip, full-width MXU N (128..512)."""
    s = conv2d(x, p["sq_w"], p["sq_b"], stride=1, padding=0, act="relu",
               out_dtype=jnp.bfloat16)
    sq = p["e3_w"].shape[2]
    e1 = p["e1_w"].shape[-1]
    w_comb = jnp.zeros((3, 3, sq, e1 + p["e3_w"].shape[-1]), jnp.float32)
    w_comb = w_comb.at[1, 1, :, :e1].set(p["e1_w"][0, 0])
    w_comb = w_comb.at[:, :, :, e1:].set(p["e3_w"])
    b_comb = jnp.concatenate([p["e1_b"], p["e3_b"]])
    return conv2d(s, w_comb, b_comb, stride=1, padding=1, act="relu",
                  out_dtype=out_dtype)


def flexible_image_encoder(params, x_nchw):
    x = jnp.transpose(x_nchw, (0, 2, 3, 1)).astype(jnp.float32)  # NCHW -> NHWC
    # squeezenet.features
    x = conv2d(x, params["conv0_w"], params["conv0_b"],
               stride=2, padding=1, act="relu", out_dtype=jnp.bfloat16)
    x = maxpool2d_ceil(x)
    x = fire(x, params["fires"][0])
    x = fire(x, params["fires"][1])
    x = fire(x, params["fires"][2])
    x = maxpool2d_ceil(x)
    x = fire(x, params["fires"][3])
    x = fire(x, params["fires"][4])
    x = fire(x, params["fires"][5])
    x = fire(x, params["fires"][6])
    x = maxpool2d_ceil(x)
    x = fire(x, params["fires"][7], out_dtype=jnp.float32)   # -> (B, h, w, 512)
    # adaptive_avg_pool(1,1) + flatten + fc + tanh, fused in one Pallas kernel
    B, H, W, C = x.shape
    feat = x.reshape(B, H * W, C)
    return pool_fc_tanh(feat, params["fc_w"], params["fc_b"])


if __name__ == "__main__":
    key = jax.random.PRNGKey(0)
    pkey, xkey = jax.random.split(key)
    input_channels, output_size = 4, 32
    params = init_params(pkey, input_channels, output_size)
    x = jax.random.normal(xkey, (2, input_channels, 16, 16), jnp.float32)  # NCHW
    out = jax.jit(flexible_image_encoder)(params, x)
    out = jax.block_until_ready(out)
    assert out.shape == (2, output_size)
    assert bool(jnp.all(jnp.isfinite(out)))
    print("KERNEL_OK")
</pallas_src>

<mosaic_0001>
module attributes {stable_mosaic.version = 11 : i64} {
  func.func @_matmul_bias_act_kernel(%arg0: i32, %arg1: memref<128x128xbf16, #tpu.memory_space<vmem>>, %arg2: memref<128x128xbf16, #tpu.memory_space<vmem>>, %arg3: memref<1x128xf32, #tpu.memory_space<vmem>>, %arg4: memref<128x128xbf16, #tpu.memory_space<vmem>>) attributes {dimension_semantics = [#tpu.dimension_semantics<parallel>], iteration_bounds = array<i64: 1>, scalar_prefetch = 0 : i64, scratch_operands = 0 : i64, tpu.core_type = #tpu.core_type<tc>, window_params = [{transform_indices = @transform_0, window_bounds = array<i64: 128, 128>}, {pipeline_mode = #tpu.pipeline_mode<synchronous>, transform_indices = @transform_1, window_bounds = array<i64: 128, 128>}, {pipeline_mode = #tpu.pipeline_mode<synchronous>, transform_indices = @transform_2, window_bounds = array<i64: 1, 128>}, {transform_indices = @transform_3, window_bounds = array<i64: 128, 128>}]} {
    %c0 = arith.constant 0 : index
    %c0_0 = arith.constant 0 : index
    %0 = vector.load %arg1[%c0, %c0_0] : memref<128x128xbf16, #tpu.memory_space<vmem>>, vector<128x128xbf16>
    %c0_1 = arith.constant 0 : index
    %c0_2 = arith.constant 0 : index
    %1 = vector.load %arg2[%c0_1, %c0_2] : memref<128x128xbf16, #tpu.memory_space<vmem>>, vector<128x128xbf16>
    %cst = arith.constant dense<0.000000e+00> : vector<128x128xf32>
    %2 = tpu.matmul %0, %1, %cst {dimension_numbers = #tpu.dot_dimension_numbers<[1], [0], [0], [1], [0, 0, 1, 1], [], []>} : vector<128x128xbf16>, vector<128x128xbf16>, vector<128x128xf32> -> vector<128x128xf32>
    %c0_3 = arith.constant 0 : index
    %c0_4 = arith.constant 0 : index
    %3 = vector.load %arg3[%c0_3, %c0_4] : memref<1x128xf32, #tpu.memory_space<vmem>>, vector<1x128xf32>
    %4 = vector.broadcast %3 : vector<1x128xf32> to vector<128x128xf32>
    %5 = arith.addf %2, %4 : vector<128x128xf32>
    %cst_5 = arith.constant 0.000000e+00 : f32
    %6 = vector.broadcast %cst_5 : f32 to vector<128x128xf32>
    %7 = arith.maximumf %5, %6 : vector<128x128xf32>
    %8 = arith.truncf %7 : vector<128x128xf32> to vector<128x128xbf16>
    %c0_6 = arith.constant 0 : index
    %c0_7 = arith.constant 0 : index
    %9 = vector.load %arg4[%c0_6, %c0_7] : memref<128x128xbf16, #tpu.memory_space<vmem>>, vector<128x128xbf16>
    tpu.vector_store %arg4[%c0_6, %c0_7], %8 {strides = array<i32>} : memref<128x128xbf16, #tpu.memory_space<vmem>>, vector<128x128xbf16>,
    return
  }
  func.func @transform_0(%arg0: i32) -> (i32, i32) {
    %c0_i32 = arith.constant 0 : i32
    %c0_i32_0 = arith.constant 0 : i32
    return %arg0, %c0_i32 : i32, i32
  }
  func.func @transform_1(%arg0: i32) -> (i32, i32) {
    %c0_i32 = arith.constant 0 : i32
    %c0_i32_0 = arith.constant 0 : i32
    %c0_i32_1 = arith.constant 0 : i32
    return %c0_i32, %c0_i32_0 : i32, i32
  }
  func.func @transform_2(%arg0: i32) -> (i32, i32) {
    %c0_i32 = arith.constant 0 : i32
    %c0_i32_0 = arith.constant 0 : i32
    %c0_i32_1 = arith.constant 0 : i32
    return %c0_i32, %c0_i32_0 : i32, i32
  }
  func.func @transform_3(%arg0: i32) -> (i32, i32) {
    %c0_i32 = arith.constant 0 : i32
    %c0_i32_0 = arith.constant 0 : i32
    return %arg0, %c0_i32 : i32, i32
  }
}

module attributes {stable_mosaic.version = 11 : i64} {
  func.func @_max_reduce_kernel(%arg0: i32, %arg1: memref<3x64x128xbf16, #tpu.memory_space<vmem>>, %arg2: memref<64x128xbf16, #tpu.memory_space<vmem>>) attributes {dimension_semantics = [#tpu.dimension_semantics<parallel>], iteration_bounds = array<i64: 1>, scalar_prefetch = 0 : i64, scratch_operands = 0 : i64, tpu.core_type = #tpu.core_type<tc>, window_params = [{transform_indices = @transform_0, window_bounds = array<i64: 3, 64, 128>}, {transform_indices = @transform_1, window_bounds = array<i64: 64, 128>}]} {
    %c0 = arith.constant 0 : index
    %c0_0 = arith.constant 0 : index
    %c0_1 = arith.constant 0 : index
    %0 = vector.load %arg1[%c0, %c0_0, %c0_1] : memref<3x64x128xbf16, #tpu.memory_space<vmem>>, vector<1x64x128xbf16>
    %1 = vector.shape_cast %0 : vector<1x64x128xbf16> to vector<64x128xbf16>
    %c1 = arith.constant 1 : index
    %c0_2 = arith.constant 0 : index
    %c0_3 = arith.constant 0 : index
    %2 = vector.load %arg1[%c1, %c0_2, %c0_3] : memref<3x64x128xbf16, #tpu.memory_space<vmem>>, vector<1x64x128xbf16>
    %3 = vector.shape_cast %2 : vector<1x64x128xbf16> to vector<64x128xbf16>
    %4 = arith.maximumf %1, %3 : vector<64x128xbf16>
    %c2 = arith.constant 2 : index
    %c0_4 = arith.constant 0 : index
    %c0_5 = arith.constant 0 : index
    %5 = vector.load %arg1[%c2, %c0_4, %c0_5] : memref<3x64x128xbf16, #tpu.memory_space<vmem>>, vector<1x64x128xbf16>
    %6 = vector.shape_cast %5 : vector<1x64x128xbf16> to vector<64x128xbf16>
    %7 = arith.maximumf %4, %6 : vector<64x128xbf16>
    %c0_6 = arith.constant 0 : index
    %c0_7 = arith.constant 0 : index
    %8 = vector.load %arg2[%c0_6, %c0_7] : memref<64x128xbf16, #tpu.memory_space<vmem>>, vector<64x128xbf16>
    tpu.vector_store %arg2[%c0_6, %c0_7], %7 {strides = array<i32>} : memref<64x128xbf16, #tpu.memory_space<vmem>>, vector<64x128xbf16>,
    return
  }
  func.func @transform_0(%arg0: i32) -> (i32, i32, i32) {
    %c0_i32 = arith.constant 0 : i32
    %c0_i32_0 = arith.constant 0 : i32
    %c0_i32_1 = arith.constant 0 : i32
    return %c0_i32, %arg0, %c0_i32_0 : i32, i32, i32
  }
  func.func @transform_1(%arg0: i32) -> (i32, i32) {
    %c0_i32 = arith.constant 0 : i32
    %c0_i32_0 = arith.constant 0 : i32
    return %arg0, %c0_i32 : i32, i32
  }
}

module attributes {stable_mosaic.version = 11 : i64} {
  func.func @_max_reduce_kernel(%arg0: i32, %arg1: memref<3x32x128xbf16, #tpu.memory_space<vmem>>, %arg2: memref<32x128xbf16, #tpu.memory_space<vmem>>) attributes {dimension_semantics = [#tpu.dimension_semantics<parallel>], iteration_bounds = array<i64: 1>, scalar_prefetch = 0 : i64, scratch_operands = 0 : i64, tpu.core_type = #tpu.core_type<tc>, window_params = [{transform_indices = @transform_0, window_bounds = array<i64: 3, 32, 128>}, {transform_indices = @transform_1, window_bounds = array<i64: 32, 128>}]} {
    %c0 = arith.constant 0 : index
    %c0_0 = arith.constant 0 : index
    %c0_1 = arith.constant 0 : index
    %0 = vector.load %arg1[%c0, %c0_0, %c0_1] : memref<3x32x128xbf16, #tpu.memory_space<vmem>>, vector<1x32x128xbf16>
    %1 = vector.shape_cast %0 : vector<1x32x128xbf16> to vector<32x128xbf16>
    %c1 = arith.constant 1 : index
    %c0_2 = arith.constant 0 : index
    %c0_3 = arith.constant 0 : index
    %2 = vector.load %arg1[%c1, %c0_2, %c0_3] : memref<3x32x128xbf16, #tpu.memory_space<vmem>>, vector<1x32x128xbf16>
    %3 = vector.shape_cast %2 : vector<1x32x128xbf16> to vector<32x128xbf16>
    %4 = arith.maximumf %1, %3 : vector<32x128xbf16>
    %c2 = arith.constant 2 : index
    %c0_4 = arith.constant 0 : index
    %c0_5 = arith.constant 0 : index
    %5 = vector.load %arg1[%c2, %c0_4, %c0_5] : memref<3x32x128xbf16, #tpu.memory_space<vmem>>, vector<1x32x128xbf16>
    %6 = vector.shape_cast %5 : vector<1x32x128xbf16> to vector<32x128xbf16>
    %7 = arith.maximumf %4, %6 : vector<32x128xbf16>
    %c0_6 = arith.constant 0 : index
    %c0_7 = arith.constant 0 : index
    %8 = vector.load %arg2[%c0_6, %c0_7] : memref<32x128xbf16, #tpu.memory_space<vmem>>, vector<32x128xbf16>
    tpu.vector_store %arg2[%c0_6, %c0_7], %7 {strides = array<i32>} : memref<32x128xbf16, #tpu.memory_space<vmem>>, vector<32x128xbf16>,
    return
  }
  func.func @transform_0(%arg0: i32) -> (i32, i32, i32) {
    %c0_i32 = arith.constant 0 : i32
    %c0_i32_0 = arith.constant 0 : i32
    %c0_i32_1 = arith.constant 0 : i32
    return %c0_i32, %arg0, %c0_i32_0 : i32, i32, i32
  }
  func.func @transform_1(%arg0: i32) -> (i32, i32) {
    %c0_i32 = arith.constant 0 : i32
    %c0_i32_0 = arith.constant 0 : i32
    return %arg0, %c0_i32 : i32, i32
  }
}

module attributes {stable_mosaic.version = 11 : i64} {
  func.func @_matmul_bias_act_kernel(%arg0: i32, %arg1: memref<32x128xbf16, #tpu.memory_space<vmem>>, %arg2: memref<128x128xbf16, #tpu.memory_space<vmem>>, %arg3: memref<1x128xf32, #tpu.memory_space<vmem>>, %arg4: memref<32x128xbf16, #tpu.memory_space<vmem>>) attributes {dimension_semantics = [#tpu.dimension_semantics<parallel>], iteration_bounds = array<i64: 1>, scalar_prefetch = 0 : i64, scratch_operands = 0 : i64, tpu.core_type = #tpu.core_type<tc>, window_params = [{transform_indices = @transform_0, window_bounds = array<i64: 32, 128>}, {pipeline_mode = #tpu.pipeline_mode<synchronous>, transform_indices = @transform_1, window_bounds = array<i64: 128, 128>}, {pipeline_mode = #tpu.pipeline_mode<synchronous>, transform_indices = @transform_2, window_bounds = array<i64: 1, 128>}, {transform_indices = @transform_3, window_bounds = array<i64: 32, 128>}]} {
    %c0 = arith.constant 0 : index
    %c0_0 = arith.constant 0 : index
    %0 = vector.load %arg1[%c0, %c0_0] : memref<32x128xbf16, #tpu.memory_space<vmem>>, vector<32x128xbf16>
    %c0_1 = arith.constant 0 : index
    %c0_2 = arith.constant 0 : index
    %1 = vector.load %arg2[%c0_1, %c0_2] : memref<128x128xbf16, #tpu.memory_space<vmem>>, vector<128x128xbf16>
    %cst = arith.constant dense<0.000000e+00> : vector<32x128xf32>
    %2 = tpu.matmul %0, %1, %cst {dimension_numbers = #tpu.dot_dimension_numbers<[1], [0], [0], [1], [0, 0, 1, 1], [], []>} : vector<32x128xbf16>, vector<128x128xbf16>, vector<32x128xf32> -> vector<32x128xf32>
    %c0_3 = arith.constant 0 : index
    %c0_4 = arith.constant 0 : index
    %3 = vector.load %arg3[%c0_3, %c0_4] : memref<1x128xf32, #tpu.memory_space<vmem>>, vector<1x128xf32>
    %4 = vector.broadcast %3 : vector<1x128xf32> to vector<32x128xf32>
    %5 = arith.addf %2, %4 : vector<32x128xf32>
    %cst_5 = arith.constant 0.000000e+00 : f32
    %6 = vector.broadcast %cst_5 : f32 to vector<32x128xf32>
    %7 = arith.maximumf %5, %6 : vector<32x128xf32>
    %8 = arith.truncf %7 : vector<32x128xf32> to vector<32x128xbf16>
    %c0_6 = arith.constant 0 : index
    %c0_7 = arith.constant 0 : index
    %9 = vector.load %arg4[%c0_6, %c0_7] : memref<32x128xbf16, #tpu.memory_space<vmem>>, vector<32x128xbf16>
    tpu.vector_store %arg4[%c0_6, %c0_7], %8 {strides = array<i32>} : memref<32x128xbf16, #tpu.memory_space<vmem>>, vector<32x128xbf16>,
    return
  }
  func.func @transform_0(%arg0: i32) -> (i32, i32) {
    %c0_i32 = arith.constant 0 : i32
    %c0_i32_0 = arith.constant 0 : i32
    return %arg0, %c0_i32 : i32, i32
  }
  func.func @transform_1(%arg0: i32) -> (i32, i32) {
    %c0_i32 = arith.constant 0 : i32
    %c0_i32_0 = arith.constant 0 : i32
    %c0_i32_1 = arith.constant 0 : i32
    return %c0_i32, %c0_i32_0 : i32, i32
  }
  func.func @transform_2(%arg0: i32) -> (i32, i32) {
    %c0_i32 = arith.constant 0 : i32
    %c0_i32_0 = arith.constant 0 : i32
    %c0_i32_1 = arith.constant 0 : i32
    return %c0_i32, %c0_i32_0 : i32, i32
  }
  func.func @transform_3(%arg0: i32) -> (i32, i32) {
    %c0_i32 = arith.constant 0 : i32
    %c0_i32_0 = arith.constant 0 : i32
    return %arg0, %c0_i32 : i32, i32
  }
}

module attributes {stable_mosaic.version = 11 : i64} {
  func.func @_matmul_bias_act_kernel(%arg0: i32, %arg1: memref<32x256xbf16, #tpu.memory_space<vmem>>, %arg2: memref<256x128xbf16, #tpu.memory_space<vmem>>, %arg3: memref<1x128xf32, #tpu.memory_space<vmem>>, %arg4: memref<32x128xbf16, #tpu.memory_space<vmem>>) attributes {dimension_semantics = [#tpu.dimension_semantics<parallel>], iteration_bounds = array<i64: 1>, scalar_prefetch = 0 : i64, scratch_operands = 0 : i64, tpu.core_type = #tpu.core_type<tc>, window_params = [{transform_indices = @transform_0, window_bounds = array<i64: 32, 256>}, {pipeline_mode = #tpu.pipeline_mode<synchronous>, transform_indices = @transform_1, window_bounds = array<i64: 256, 128>}, {pipeline_mode = #tpu.pipeline_mode<synchronous>, transform_indices = @transform_2, window_bounds = array<i64: 1, 128>}, {transform_indices = @transform_3, window_bounds = array<i64: 32, 128>}]} {
    %c0 = arith.constant 0 : index
    %c0_0 = arith.constant 0 : index
    %0 = vector.load %arg1[%c0, %c0_0] : memref<32x256xbf16, #tpu.memory_space<vmem>>, vector<32x256xbf16>
    %c0_1 = arith.constant 0 : index
    %c0_2 = arith.constant 0 : index
    %1 = vector.load %arg2[%c0_1, %c0_2] : memref<256x128xbf16, #tpu.memory_space<vmem>>, vector<256x128xbf16>
    %cst = arith.constant dense<0.000000e+00> : vector<32x128xf32>
    %2 = tpu.matmul %0, %1, %cst {dimension_numbers = #tpu.dot_dimension_numbers<[1], [0], [0], [1], [0, 0, 1, 1], [], []>} : vector<32x256xbf16>, vector<256x128xbf16>, vector<32x128xf32> -> vector<32x128xf32>
    %c0_3 = arith.constant 0 : index
    %c0_4 = arith.constant 0 : index
    %3 = vector.load %arg3[%c0_3, %c0_4] : memref<1x128xf32, #tpu.memory_space<vmem>>, vector<1x128xf32>
    %4 = vector.broadcast %3 : vector<1x128xf32> to vector<32x128xf32>
    %5 = arith.addf %2, %4 : vector<32x128xf32>
    %cst_5 = arith.constant 0.000000e+00 : f32
    %6 = vector.broadcast %cst_5 : f32 to vector<32x128xf32>
    %7 = arith.maximumf %5, %6 : vector<32x128xf32>
    %8 = arith.truncf %7 : vector<32x128xf32> to vector<32x128xbf16>
    %c0_6 = arith.constant 0 : index
    %c0_7 = arith.constant 0 : index
    %9 = vector.load %arg4[%c0_6, %c0_7] : memref<32x128xbf16, #tpu.memory_space<vmem>>, vector<32x128xbf16>
    tpu.vector_store %arg4[%c0_6, %c0_7], %8 {strides = array<i32>} : memref<32x128xbf16, #tpu.memory_space<vmem>>, vector<32x128xbf16>,
    return
  }
  func.func @transform_0(%arg0: i32) -> (i32, i32) {
    %c0_i32 = arith.constant 0 : i32
    %c0_i32_0 = arith.constant 0 : i32
    return %arg0, %c0_i32 : i32, i32
  }
  func.func @transform_1(%arg0: i32) -> (i32, i32) {
    %c0_i32 = arith.constant 0 : i32
    %c0_i32_0 = arith.constant 0 : i32
    %c0_i32_1 = arith.constant 0 : i32
    return %c0_i32, %c0_i32_0 : i32, i32
  }
  func.func @transform_2(%arg0: i32) -> (i32, i32) {
    %c0_i32 = arith.constant 0 : i32
    %c0_i32_0 = arith.constant 0 : i32
    %c0_i32_1 = arith.constant 0 : i32
    return %c0_i32, %c0_i32_0 : i32, i32
  }
  func.func @transform_3(%arg0: i32) -> (i32, i32) {
    %c0_i32 = arith.constant 0 : i32
    %c0_i32_0 = arith.constant 0 : i32
    return %arg0, %c0_i32 : i32, i32
  }
}

module attributes {stable_mosaic.version = 11 : i64} {
  func.func @_matmul_bias_act_kernel(%arg0: i32, %arg1: memref<32x384xbf16, #tpu.memory_space<vmem>>, %arg2: memref<384x256xbf16, #tpu.memory_space<vmem>>, %arg3: memref<1x256xf32, #tpu.memory_space<vmem>>, %arg4: memref<32x256xbf16, #tpu.memory_space<vmem>>) attributes {dimension_semantics = [#tpu.dimension_semantics<parallel>], iteration_bounds = array<i64: 1>, scalar_prefetch = 0 : i64, scratch_operands = 0 : i64, tpu.core_type = #tpu.core_type<tc>, window_params = [{transform_indices = @transform_0, window_bounds = array<i64: 32, 384>}, {pipeline_mode = #tpu.pipeline_mode<synchronous>, transform_indices = @transform_1, window_bounds = array<i64: 384, 256>}, {pipeline_mode = #tpu.pipeline_mode<synchronous>, transform_indices = @transform_2, window_bounds = array<i64: 1, 256>}, {transform_indices = @transform_3, window_bounds = array<i64: 32, 256>}]} {
    %c0 = arith.constant 0 : index
    %c0_0 = arith.constant 0 : index
    %0 = vector.load %arg1[%c0, %c0_0] : memref<32x384xbf16, #tpu.memory_space<vmem>>, vector<32x384xbf16>
    %c0_1 = arith.constant 0 : index
    %c0_2 = arith.constant 0 : index
    %1 = vector.load %arg2[%c0_1, %c0_2] : memref<384x256xbf16, #tpu.memory_space<vmem>>, vector<384x256xbf16>
    %cst = arith.constant dense<0.000000e+00> : vector<32x256xf32>
    %2 = tpu.matmul %0, %1, %cst {dimension_numbers = #tpu.dot_dimension_numbers<[1], [0], [0], [1], [0, 0, 1, 1], [], []>} : vector<32x384xbf16>, vector<384x256xbf16>, vector<32x256xf32> -> vector<32x256xf32>
    %c0_3 = arith.constant 0 : index
    %c0_4 = arith.constant 0 : index
    %3 = vector.load %arg3[%c0_3, %c0_4] : memref<1x256xf32, #tpu.memory_space<vmem>>, vector<1x256xf32>
    %4 = vector.broadcast %3 : vector<1x256xf32> to vector<32x256xf32>
    %5 = arith.addf %2, %4 : vector<32x256xf32>
    %cst_5 = arith.constant 0.000000e+00 : f32
    %6 = vector.broadcast %cst_5 : f32 to vector<32x256xf32>
    %7 = arith.maximumf %5, %6 : vector<32x256xf32>
    %8 = arith.truncf %7 : vector<32x256xf32> to vector<32x256xbf16>
    %c0_6 = arith.constant 0 : index
    %c0_7 = arith.constant 0 : index
    %9 = vector.load %arg4[%c0_6, %c0_7] : memref<32x256xbf16, #tpu.memory_space<vmem>>, vector<32x256xbf16>
    tpu.vector_store %arg4[%c0_6, %c0_7], %8 {strides = array<i32>} : memref<32x256xbf16, #tpu.memory_space<vmem>>, vector<32x256xbf16>,
    return
  }
  func.func @transform_0(%arg0: i32) -> (i32, i32) {
    %c0_i32 = arith.constant 0 : i32
    %c0_i32_0 = arith.constant 0 : i32
    return %arg0, %c0_i32 : i32, i32
  }
  func.func @transform_1(%arg0: i32) -> (i32, i32) {
    %c0_i32 = arith.constant 0 : i32
    %c0_i32_0 = arith.constant 0 : i32
    %c0_i32_1 = arith.constant 0 : i32
    return %c0_i32, %c0_i32_0 : i32, i32
  }
  func.func @transform_2(%arg0: i32) -> (i32, i32) {
    %c0_i32 = arith.constant 0 : i32
    %c0_i32_0 = arith.constant 0 : i32
    %c0_i32_1 = arith.constant 0 : i32
    return %c0_i32, %c0_i32_0 : i32, i32
  }
  func.func @transform_3(%arg0: i32) -> (i32, i32) {
    %c0_i32 = arith.constant 0 : i32
    %c0_i32_0 = arith.constant 0 : i32
    return %arg0, %c0_i32 : i32, i32
  }
}

module attributes {stable_mosaic.version = 11 : i64} {
  func.func @_max_reduce_kernel(%arg0: i32, %arg1: memref<3x16x256xbf16, #tpu.memory_space<vmem>>, %arg2: memref<16x256xbf16, #tpu.memory_space<vmem>>) attributes {dimension_semantics = [#tpu.dimension_semantics<parallel>], iteration_bounds = array<i64: 1>, scalar_prefetch = 0 : i64, scratch_operands = 0 : i64, tpu.core_type = #tpu.core_type<tc>, window_params = [{transform_indices = @transform_0, window_bounds = array<i64: 3, 16, 256>}, {transform_indices = @transform_1, window_bounds = array<i64: 16, 256>}]} {
    %c0 = arith.constant 0 : index
    %c0_0 = arith.constant 0 : index
    %c0_1 = arith.constant 0 : index
    %0 = vector.load %arg1[%c0, %c0_0, %c0_1] : memref<3x16x256xbf16, #tpu.memory_space<vmem>>, vector<1x16x256xbf16>
    %1 = vector.shape_cast %0 : vector<1x16x256xbf16> to vector<16x256xbf16>
    %c1 = arith.constant 1 : index
    %c0_2 = arith.constant 0 : index
    %c0_3 = arith.constant 0 : index
    %2 = vector.load %arg1[%c1, %c0_2, %c0_3] : memref<3x16x256xbf16, #tpu.memory_space<vmem>>, vector<1x16x256xbf16>
    %3 = vector.shape_cast %2 : vector<1x16x256xbf16> to vector<16x256xbf16>
    %4 = arith.maximumf %1, %3 : vector<16x256xbf16>
    %c2 = arith.constant 2 : index
    %c0_4 = arith.constant 0 : index
    %c0_5 = arith.constant 0 : index
    %5 = vector.load %arg1[%c2, %c0_4, %c0_5] : memref<3x16x256xbf16, #tpu.memory_space<vmem>>, vector<1x16x256xbf16>
    %6 = vector.shape_cast %5 : vector<1x16x256xbf16> to vector<16x256xbf16>
    %7 = arith.maximumf %4, %6 : vector<16x256xbf16>
    %c0_6 = arith.constant 0 : index
    %c0_7 = arith.constant 0 : index
    %8 = vector.load %arg2[%c0_6, %c0_7] : memref<16x256xbf16, #tpu.memory_space<vmem>>, vector<16x256xbf16>
    tpu.vector_store %arg2[%c0_6, %c0_7], %7 {strides = array<i32>} : memref<16x256xbf16, #tpu.memory_space<vmem>>, vector<16x256xbf16>,
    return
  }
  func.func @transform_0(%arg0: i32) -> (i32, i32, i32) {
    %c0_i32 = arith.constant 0 : i32
    %c0_i32_0 = arith.constant 0 : i32
    %c0_i32_1 = arith.constant 0 : i32
    return %c0_i32, %arg0, %c0_i32_0 : i32, i32, i32
  }
  func.func @transform_1(%arg0: i32) -> (i32, i32) {
    %c0_i32 = arith.constant 0 : i32
    %c0_i32_0 = arith.constant 0 : i32
    return %arg0, %c0_i32 : i32, i32
  }
}

module attributes {stable_mosaic.version = 11 : i64} {
  func.func @_matmul_bias_act_kernel(%arg0: i32, %arg1: memref<16x256xbf16, #tpu.memory_space<vmem>>, %arg2: memref<256x128xbf16, #tpu.memory_space<vmem>>, %arg3: memref<1x128xf32, #tpu.memory_space<vmem>>, %arg4: memref<16x128xbf16, #tpu.memory_space<vmem>>) attributes {dimension_semantics = [#tpu.dimension_semantics<parallel>], iteration_bounds = array<i64: 1>, scalar_prefetch = 0 : i64, scratch_operands = 0 : i64, tpu.core_type = #tpu.core_type<tc>, window_params = [{transform_indices = @transform_0, window_bounds = array<i64: 16, 256>}, {pipeline_mode = #tpu.pipeline_mode<synchronous>, transform_indices = @transform_1, window_bounds = array<i64: 256, 128>}, {pipeline_mode = #tpu.pipeline_mode<synchronous>, transform_indices = @transform_2, window_bounds = array<i64: 1, 128>}, {transform_indices = @transform_3, window_bounds = array<i64: 16, 128>}]} {
    %c0 = arith.constant 0 : index
    %c0_0 = arith.constant 0 : index
    %0 = vector.load %arg1[%c0, %c0_0] : memref<16x256xbf16, #tpu.memory_space<vmem>>, vector<16x256xbf16>
    %c0_1 = arith.constant 0 : index
    %c0_2 = arith.constant 0 : index
    %1 = vector.load %arg2[%c0_1, %c0_2] : memref<256x128xbf16, #tpu.memory_space<vmem>>, vector<256x128xbf16>
    %cst = arith.constant dense<0.000000e+00> : vector<16x128xf32>
    %2 = tpu.matmul %0, %1, %cst {dimension_numbers = #tpu.dot_dimension_numbers<[1], [0], [0], [1], [0, 0, 1, 1], [], []>} : vector<16x256xbf16>, vector<256x128xbf16>, vector<16x128xf32> -> vector<16x128xf32>
    %c0_3 = arith.constant 0 : index
    %c0_4 = arith.constant 0 : index
    %3 = vector.load %arg3[%c0_3, %c0_4] : memref<1x128xf32, #tpu.memory_space<vmem>>, vector<1x128xf32>
    %4 = vector.broadcast %3 : vector<1x128xf32> to vector<16x128xf32>
    %5 = arith.addf %2, %4 : vector<16x128xf32>
    %cst_5 = arith.constant 0.000000e+00 : f32
    %6 = vector.broadcast %cst_5 : f32 to vector<16x128xf32>
    %7 = arith.maximumf %5, %6 : vector<16x128xf32>
    %8 = arith.truncf %7 : vector<16x128xf32> to vector<16x128xbf16>
    %c0_6 = arith.constant 0 : index
    %c0_7 = arith.constant 0 : index
    %9 = vector.load %arg4[%c0_6, %c0_7] : memref<16x128xbf16, #tpu.memory_space<vmem>>, vector<16x128xbf16>
    tpu.vector_store %arg4[%c0_6, %c0_7], %8 {strides = array<i32>} : memref<16x128xbf16, #tpu.memory_space<vmem>>, vector<16x128xbf16>,
    return
  }
  func.func @transform_0(%arg0: i32) -> (i32, i32) {
    %c0_i32 = arith.constant 0 : i32
    %c0_i32_0 = arith.constant 0 : i32
    return %arg0, %c0_i32 : i32, i32
  }
  func.func @transform_1(%arg0: i32) -> (i32, i32) {
    %c0_i32 = arith.constant 0 : i32
    %c0_i32_0 = arith.constant 0 : i32
    %c0_i32_1 = arith.constant 0 : i32
    return %c0_i32, %c0_i32_0 : i32, i32
  }
  func.func @transform_2(%arg0: i32) -> (i32, i32) {
    %c0_i32 = arith.constant 0 : i32
    %c0_i32_0 = arith.constant 0 : i32
    %c0_i32_1 = arith.constant 0 : i32
    return %c0_i32, %c0_i32_0 : i32, i32
  }
  func.func @transform_3(%arg0: i32) -> (i32, i32) {
    %c0_i32 = arith.constant 0 : i32
    %c0_i32_0 = arith.constant 0 : i32
    return %arg0, %c0_i32 : i32, i32
  }
}

module attributes {stable_mosaic.version = 11 : i64} {
  func.func @_matmul_bias_act_kernel(%arg0: i32, %arg1: memref<16x384xbf16, #tpu.memory_space<vmem>>, %arg2: memref<384x256xbf16, #tpu.memory_space<vmem>>, %arg3: memref<1x256xf32, #tpu.memory_space<vmem>>, %arg4: memref<16x256xbf16, #tpu.memory_space<vmem>>) attributes {dimension_semantics = [#tpu.dimension_semantics<parallel>], iteration_bounds = array<i64: 1>, scalar_prefetch = 0 : i64, scratch_operands = 0 : i64, tpu.core_type = #tpu.core_type<tc>, window_params = [{transform_indices = @transform_0, window_bounds = array<i64: 16, 384>}, {pipeline_mode = #tpu.pipeline_mode<synchronous>, transform_indices = @transform_1, window_bounds = array<i64: 384, 256>}, {pipeline_mode = #tpu.pipeline_mode<synchronous>, transform_indices = @transform_2, window_bounds = array<i64: 1, 256>}, {transform_indices = @transform_3, window_bounds = array<i64: 16, 256>}]} {
    %c0 = arith.constant 0 : index
    %c0_0 = arith.constant 0 : index
    %0 = vector.load %arg1[%c0, %c0_0] : memref<16x384xbf16, #tpu.memory_space<vmem>>, vector<16x384xbf16>
    %c0_1 = arith.constant 0 : index
    %c0_2 = arith.constant 0 : index
    %1 = vector.load %arg2[%c0_1, %c0_2] : memref<384x256xbf16, #tpu.memory_space<vmem>>, vector<384x256xbf16>
    %cst = arith.constant dense<0.000000e+00> : vector<16x256xf32>
    %2 = tpu.matmul %0, %1, %cst {dimension_numbers = #tpu.dot_dimension_numbers<[1], [0], [0], [1], [0, 0, 1, 1], [], []>} : vector<16x384xbf16>, vector<384x256xbf16>, vector<16x256xf32> -> vector<16x256xf32>
    %c0_3 = arith.constant 0 : index
    %c0_4 = arith.constant 0 : index
    %3 = vector.load %arg3[%c0_3, %c0_4] : memref<1x256xf32, #tpu.memory_space<vmem>>, vector<1x256xf32>
    %4 = vector.broadcast %3 : vector<1x256xf32> to vector<16x256xf32>
    %5 = arith.addf %2, %4 : vector<16x256xf32>
    %cst_5 = arith.constant 0.000000e+00 : f32
    %6 = vector.broadcast %cst_5 : f32 to vector<16x256xf32>
    %7 = arith.maximumf %5, %6 : vector<16x256xf32>
    %8 = arith.truncf %7 : vector<16x256xf32> to vector<16x256xbf16>
    %c0_6 = arith.constant 0 : index
    %c0_7 = arith.constant 0 : index
    %9 = vector.load %arg4[%c0_6, %c0_7] : memref<16x256xbf16, #tpu.memory_space<vmem>>, vector<16x256xbf16>
    tpu.vector_store %arg4[%c0_6, %c0_7], %8 {strides = array<i32>} : memref<16x256xbf16, #tpu.memory_space<vmem>>, vector<16x256xbf16>,
    return
  }
  func.func @transform_0(%arg0: i32) -> (i32, i32) {
    %c0_i32 = arith.constant 0 : i32
    %c0_i32_0 = arith.constant 0 : i32
    return %arg0, %c0_i32 : i32, i32
  }
  func.func @transform_1(%arg0: i32) -> (i32, i32) {
    %c0_i32 = arith.constant 0 : i32
    %c0_i32_0 = arith.constant 0 : i32
    %c0_i32_1 = arith.constant 0 : i32
    return %c0_i32, %c0_i32_0 : i32, i32
  }
  func.func @transform_2(%arg0: i32) -> (i32, i32) {
    %c0_i32 = arith.constant 0 : i32
    %c0_i32_0 = arith.constant 0 : i32
    %c0_i32_1 = arith.constant 0 : i32
    return %c0_i32, %c0_i32_0 : i32, i32
  }
  func.func @transform_3(%arg0: i32) -> (i32, i32) {
    %c0_i32 = arith.constant 0 : i32
    %c0_i32_0 = arith.constant 0 : i32
    return %arg0, %c0_i32 : i32, i32
  }
}

module attributes {stable_mosaic.version = 11 : i64} {
  func.func @_matmul_bias_act_kernel(%arg0: i32, %arg1: memref<16x512xbf16, #tpu.memory_space<vmem>>, %arg2: memref<512x384xbf16, #tpu.memory_space<vmem>>, %arg3: memref<1x384xf32, #tpu.memory_space<vmem>>, %arg4: memref<16x384xbf16, #tpu.memory_space<vmem>>) attributes {dimension_semantics = [#tpu.dimension_semantics<parallel>], iteration_bounds = array<i64: 1>, scalar_prefetch = 0 : i64, scratch_operands = 0 : i64, tpu.core_type = #tpu.core_type<tc>, window_params = [{transform_indices = @transform_0, window_bounds = array<i64: 16, 512>}, {pipeline_mode = #tpu.pipeline_mode<synchronous>, transform_indices = @transform_1, window_bounds = array<i64: 512, 384>}, {pipeline_mode = #tpu.pipeline_mode<synchronous>, transform_indices = @transform_2, window_bounds = array<i64: 1, 384>}, {transform_indices = @transform_3, window_bounds = array<i64: 16, 384>}]} {
    %c0 = arith.constant 0 : index
    %c0_0 = arith.constant 0 : index
    %0 = vector.load %arg1[%c0, %c0_0] : memref<16x512xbf16, #tpu.memory_space<vmem>>, vector<16x512xbf16>
    %c0_1 = arith.constant 0 : index
    %c0_2 = arith.constant 0 : index
    %1 = vector.load %arg2[%c0_1, %c0_2] : memref<512x384xbf16, #tpu.memory_space<vmem>>, vector<512x384xbf16>
    %cst = arith.constant dense<0.000000e+00> : vector<16x384xf32>
    %2 = tpu.matmul %0, %1, %cst {dimension_numbers = #tpu.dot_dimension_numbers<[1], [0], [0], [1], [0, 0, 1, 1], [], []>} : vector<16x512xbf16>, vector<512x384xbf16>, vector<16x384xf32> -> vector<16x384xf32>
    %c0_3 = arith.constant 0 : index
    %c0_4 = arith.constant 0 : index
    %3 = vector.load %arg3[%c0_3, %c0_4] : memref<1x384xf32, #tpu.memory_space<vmem>>, vector<1x384xf32>
    %4 = vector.broadcast %3 : vector<1x384xf32> to vector<16x384xf32>
    %5 = arith.addf %2, %4 : vector<16x384xf32>
    %cst_5 = arith.constant 0.000000e+00 : f32
    %6 = vector.broadcast %cst_5 : f32 to vector<16x384xf32>
    %7 = arith.maximumf %5, %6 : vector<16x384xf32>
    %8 = arith.truncf %7 : vector<16x384xf32> to vector<16x384xbf16>
    %c0_6 = arith.constant 0 : index
    %c0_7 = arith.constant 0 : index
    %9 = vector.load %arg4[%c0_6, %c0_7] : memref<16x384xbf16, #tpu.memory_space<vmem>>, vector<16x384xbf16>
    tpu.vector_store %arg4[%c0_6, %c0_7], %8 {strides = array<i32>} : memref<16x384xbf16, #tpu.memory_space<vmem>>, vector<16x384xbf16>,
    return
  }
  func.func @transform_0(%arg0: i32) -> (i32, i32) {
    %c0_i32 = arith.constant 0 : i32
    %c0_i32_0 = arith.constant 0 : i32
    return %arg0, %c0_i32 : i32, i32
  }
  func.func @transform_1(%arg0: i32) -> (i32, i32) {
    %c0_i32 = arith.constant 0 : i32
    %c0_i32_0 = arith.constant 0 : i32
    %c0_i32_1 = arith.constant 0 : i32
    return %c0_i32, %c0_i32_0 : i32, i32
  }
  func.func @transform_2(%arg0: i32) -> (i32, i32) {
    %c0_i32 = arith.constant 0 : i32
    %c0_i32_0 = arith.constant 0 : i32
    %c0_i32_1 = arith.constant 0 : i32
    return %c0_i32, %c0_i32_0 : i32, i32
  }
  func.func @transform_3(%arg0: i32) -> (i32, i32) {
    %c0_i32 = arith.constant 0 : i32
    %c0_i32_0 = arith.constant 0 : i32
    return %arg0, %c0_i32 : i32, i32
  }
}

module attributes {stable_mosaic.version = 11 : i64} {
  func.func @_matmul_bias_act_kernel(%arg0: i32, %arg1: memref<16x384xbf16, #tpu.memory_space<vmem>>, %arg2: memref<384x128xbf16, #tpu.memory_space<vmem>>, %arg3: memref<1x128xf32, #tpu.memory_space<vmem>>, %arg4: memref<16x128xbf16, #tpu.memory_space<vmem>>) attributes {dimension_semantics = [#tpu.dimension_semantics<parallel>], iteration_bounds = array<i64: 1>, scalar_prefetch = 0 : i64, scratch_operands = 0 : i64, tpu.core_type = #tpu.core_type<tc>, window_params = [{transform_indices = @transform_0, window_bounds = array<i64: 16, 384>}, {pipeline_mode = #tpu.pipeline_mode<synchronous>, transform_indices = @transform_1, window_bounds = array<i64: 384, 128>}, {pipeline_mode = #tpu.pipeline_mode<synchronous>, transform_indices = @transform_2, window_bounds = array<i64: 1, 128>}, {transform_indices = @transform_3, window_bounds = array<i64: 16, 128>}]} {
    %c0 = arith.constant 0 : index
    %c0_0 = arith.constant 0 : index
    %0 = vector.load %arg1[%c0, %c0_0] : memref<16x384xbf16, #tpu.memory_space<vmem>>, vector<16x384xbf16>
    %c0_1 = arith.constant 0 : index
    %c0_2 = arith.constant 0 : index
    %1 = vector.load %arg2[%c0_1, %c0_2] : memref<384x128xbf16, #tpu.memory_space<vmem>>, vector<384x128xbf16>
    %cst = arith.constant dense<0.000000e+00> : vector<16x128xf32>
    %2 = tpu.matmul %0, %1, %cst {dimension_numbers = #tpu.dot_dimension_numbers<[1], [0], [0], [1], [0, 0, 1, 1], [], []>} : vector<16x384xbf16>, vector<384x128xbf16>, vector<16x128xf32> -> vector<16x128xf32>
    %c0_3 = arith.constant 0 : index
    %c0_4 = arith.constant 0 : index
    %3 = vector.load %arg3[%c0_3, %c0_4] : memref<1x128xf32, #tpu.memory_space<vmem>>, vector<1x128xf32>
    %4 = vector.broadcast %3 : vector<1x128xf32> to vector<16x128xf32>
    %5 = arith.addf %2, %4 : vector<16x128xf32>
    %cst_5 = arith.constant 0.000000e+00 : f32
    %6 = vector.broadcast %cst_5 : f32 to vector<16x128xf32>
    %7 = arith.maximumf %5, %6 : vector<16x128xf32>
    %8 = arith.truncf %7 : vector<16x128xf32> to vector<16x128xbf16>
    %c0_6 = arith.constant 0 : index
    %c0_7 = arith.constant 0 : index
    %9 = vector.load %arg4[%c0_6, %c0_7] : memref<16x128xbf16, #tpu.memory_space<vmem>>, vector<16x128xbf16>
    tpu.vector_store %arg4[%c0_6, %c0_7], %8 {strides = array<i32>} : memref<16x128xbf16, #tpu.memory_space<vmem>>, vector<16x128xbf16>,
    return
  }
  func.func @transform_0(%arg0: i32) -> (i32, i32) {
    %c0_i32 = arith.constant 0 : i32
    %c0_i32_0 = arith.constant 0 : i32
    return %arg0, %c0_i32 : i32, i32
  }
  func.func @transform_1(%arg0: i32) -> (i32, i32) {
    %c0_i32 = arith.constant 0 : i32
    %c0_i32_0 = arith.constant 0 : i32
    %c0_i32_1 = arith.constant 0 : i32
    return %c0_i32, %c0_i32_0 : i32, i32
  }
  func.func @transform_2(%arg0: i32) -> (i32, i32) {
    %c0_i32 = arith.constant 0 : i32
    %c0_i32_0 = arith.constant 0 : i32
    %c0_i32_1 = arith.constant 0 : i32
    return %c0_i32, %c0_i32_0 : i32, i32
  }
  func.func @transform_3(%arg0: i32) -> (i32, i32) {
    %c0_i32 = arith.constant 0 : i32
    %c0_i32_0 = arith.constant 0 : i32
    return %arg0, %c0_i32 : i32, i32
  }
}

module attributes {stable_mosaic.version = 11 : i64} {
  func.func @_matmul_bias_act_kernel(%arg0: i32, %arg1: memref<16x640xbf16, #tpu.memory_space<vmem>>, %arg2: memref<640x512xbf16, #tpu.memory_space<vmem>>, %arg3: memref<1x512xf32, #tpu.memory_space<vmem>>, %arg4: memref<16x512xbf16, #tpu.memory_space<vmem>>) attributes {dimension_semantics = [#tpu.dimension_semantics<parallel>], iteration_bounds = array<i64: 1>, scalar_prefetch = 0 : i64, scratch_operands = 0 : i64, tpu.core_type = #tpu.core_type<tc>, window_params = [{transform_indices = @transform_0, window_bounds = array<i64: 16, 640>}, {pipeline_mode = #tpu.pipeline_mode<synchronous>, transform_indices = @transform_1, window_bounds = array<i64: 640, 512>}, {pipeline_mode = #tpu.pipeline_mode<synchronous>, transform_indices = @transform_2, window_bounds = array<i64: 1, 512>}, {transform_indices = @transform_3, window_bounds = array<i64: 16, 512>}]} {
    %c0 = arith.constant 0 : index
    %c0_0 = arith.constant 0 : index
    %0 = vector.load %arg1[%c0, %c0_0] : memref<16x640xbf16, #tpu.memory_space<vmem>>, vector<16x640xbf16>
    %c0_1 = arith.constant 0 : index
    %c0_2 = arith.constant 0 : index
    %1 = vector.load %arg2[%c0_1, %c0_2] : memref<640x512xbf16, #tpu.memory_space<vmem>>, vector<640x512xbf16>
    %cst = arith.constant dense<0.000000e+00> : vector<16x512xf32>
    %2 = tpu.matmul %0, %1, %cst {dimension_numbers = #tpu.dot_dimension_numbers<[1], [0], [0], [1], [0, 0, 1, 1], [], []>} : vector<16x640xbf16>, vector<640x512xbf16>, vector<16x512xf32> -> vector<16x512xf32>
    %c0_3 = arith.constant 0 : index
    %c0_4 = arith.constant 0 : index
    %3 = vector.load %arg3[%c0_3, %c0_4] : memref<1x512xf32, #tpu.memory_space<vmem>>, vector<1x512xf32>
    %4 = vector.broadcast %3 : vector<1x512xf32> to vector<16x512xf32>
    %5 = arith.addf %2, %4 : vector<16x512xf32>
    %cst_5 = arith.constant 0.000000e+00 : f32
    %6 = vector.broadcast %cst_5 : f32 to vector<16x512xf32>
    %7 = arith.maximumf %5, %6 : vector<16x512xf32>
    %8 = arith.truncf %7 : vector<16x512xf32> to vector<16x512xbf16>
    %c0_6 = arith.constant 0 : index
    %c0_7 = arith.constant 0 : index
    %9 = vector.load %arg4[%c0_6, %c0_7] : memref<16x512xbf16, #tpu.memory_space<vmem>>, vector<16x512xbf16>
    tpu.vector_store %arg4[%c0_6, %c0_7], %8 {strides = array<i32>} : memref<16x512xbf16, #tpu.memory_space<vmem>>, vector<16x512xbf16>,
    return
  }
  func.func @transform_0(%arg0: i32) -> (i32, i32) {
    %c0_i32 = arith.constant 0 : i32
    %c0_i32_0 = arith.constant 0 : i32
    return %arg0, %c0_i32 : i32, i32
  }
  func.func @transform_1(%arg0: i32) -> (i32, i32) {
    %c0_i32 = arith.constant 0 : i32
    %c0_i32_0 = arith.constant 0 : i32
    %c0_i32_1 = arith.constant 0 : i32
    return %c0_i32, %c0_i32_0 : i32, i32
  }
  func.func @transform_2(%arg0: i32) -> (i32, i32) {
    %c0_i32 = arith.constant 0 : i32
    %c0_i32_0 = arith.constant 0 : i32
    %c0_i32_1 = arith.constant 0 : i32
    return %c0_i32, %c0_i32_0 : i32, i32
  }
  func.func @transform_3(%arg0: i32) -> (i32, i32) {
    %c0_i32 = arith.constant 0 : i32
    %c0_i32_0 = arith.constant 0 : i32
    return %arg0, %c0_i32 : i32, i32
  }
}

module attributes {stable_mosaic.version = 11 : i64} {
  func.func @_max_reduce_kernel(%arg0: i32, %arg1: memref<3x16x512xbf16, #tpu.memory_space<vmem>>, %arg2: memref<16x512xbf16, #tpu.memory_space<vmem>>) attributes {dimension_semantics = [#tpu.dimension_semantics<parallel>], iteration_bounds = array<i64: 1>, scalar_prefetch = 0 : i64, scratch_operands = 0 : i64, tpu.core_type = #tpu.core_type<tc>, window_params = [{transform_indices = @transform_0, window_bounds = array<i64: 3, 16, 512>}, {transform_indices = @transform_1, window_bounds = array<i64: 16, 512>}]} {
    %c0 = arith.constant 0 : index
    %c0_0 = arith.constant 0 : index
    %c0_1 = arith.constant 0 : index
    %0 = vector.load %arg1[%c0, %c0_0, %c0_1] : memref<3x16x512xbf16, #tpu.memory_space<vmem>>, vector<1x16x512xbf16>
    %1 = vector.shape_cast %0 : vector<1x16x512xbf16> to vector<16x512xbf16>
    %c1 = arith.constant 1 : index
    %c0_2 = arith.constant 0 : index
    %c0_3 = arith.constant 0 : index
    %2 = vector.load %arg1[%c1, %c0_2, %c0_3] : memref<3x16x512xbf16, #tpu.memory_space<vmem>>, vector<1x16x512xbf16>
    %3 = vector.shape_cast %2 : vector<1x16x512xbf16> to vector<16x512xbf16>
    %4 = arith.maximumf %1, %3 : vector<16x512xbf16>
    %c2 = arith.constant 2 : index
    %c0_4 = arith.constant 0 : index
    %c0_5 = arith.constant 0 : index
    %5 = vector.load %arg1[%c2, %c0_4, %c0_5] : memref<3x16x512xbf16, #tpu.memory_space<vmem>>, vector<1x16x512xbf16>
    %6 = vector.shape_cast %5 : vector<1x16x512xbf16> to vector<16x512xbf16>
    %7 = arith.maximumf %4, %6 : vector<16x512xbf16>
    %c0_6 = arith.constant 0 : index
    %c0_7 = arith.constant 0 : index
    %8 = vector.load %arg2[%c0_6, %c0_7] : memref<16x512xbf16, #tpu.memory_space<vmem>>, vector<16x512xbf16>
    tpu.vector_store %arg2[%c0_6, %c0_7], %7 {strides = array<i32>} : memref<16x512xbf16, #tpu.memory_space<vmem>>, vector<16x512xbf16>,
    return
  }
  func.func @transform_0(%arg0: i32) -> (i32, i32, i32) {
    %c0_i32 = arith.constant 0 : i32
    %c0_i32_0 = arith.constant 0 : i32
    %c0_i32_1 = arith.constant 0 : i32
    return %c0_i32, %arg0, %c0_i32_0 : i32, i32, i32
  }
  func.func @transform_1(%arg0: i32) -> (i32, i32) {
    %c0_i32 = arith.constant 0 : i32
    %c0_i32_0 = arith.constant 0 : i32
    return %arg0, %c0_i32 : i32, i32
  }
}

module attributes {stable_mosaic.version = 11 : i64} {
  func.func @_matmul_bias_act_kernel(%arg0: i32, %arg1: memref<16x512xbf16, #tpu.memory_space<vmem>>, %arg2: memref<512x128xbf16, #tpu.memory_space<vmem>>, %arg3: memref<1x128xf32, #tpu.memory_space<vmem>>, %arg4: memref<16x128xbf16, #tpu.memory_space<vmem>>) attributes {dimension_semantics = [#tpu.dimension_semantics<parallel>], iteration_bounds = array<i64: 1>, scalar_prefetch = 0 : i64, scratch_operands = 0 : i64, tpu.core_type = #tpu.core_type<tc>, window_params = [{transform_indices = @transform_0, window_bounds = array<i64: 16, 512>}, {pipeline_mode = #tpu.pipeline_mode<synchronous>, transform_indices = @transform_1, window_bounds = array<i64: 512, 128>}, {pipeline_mode = #tpu.pipeline_mode<synchronous>, transform_indices = @transform_2, window_bounds = array<i64: 1, 128>}, {transform_indices = @transform_3, window_bounds = array<i64: 16, 128>}]} {
    %c0 = arith.constant 0 : index
    %c0_0 = arith.constant 0 : index
    %0 = vector.load %arg1[%c0, %c0_0] : memref<16x512xbf16, #tpu.memory_space<vmem>>, vector<16x512xbf16>
    %c0_1 = arith.constant 0 : index
    %c0_2 = arith.constant 0 : index
    %1 = vector.load %arg2[%c0_1, %c0_2] : memref<512x128xbf16, #tpu.memory_space<vmem>>, vector<512x128xbf16>
    %cst = arith.constant dense<0.000000e+00> : vector<16x128xf32>
    %2 = tpu.matmul %0, %1, %cst {dimension_numbers = #tpu.dot_dimension_numbers<[1], [0], [0], [1], [0, 0, 1, 1], [], []>} : vector<16x512xbf16>, vector<512x128xbf16>, vector<16x128xf32> -> vector<16x128xf32>
    %c0_3 = arith.constant 0 : index
    %c0_4 = arith.constant 0 : index
    %3 = vector.load %arg3[%c0_3, %c0_4] : memref<1x128xf32, #tpu.memory_space<vmem>>, vector<1x128xf32>
    %4 = vector.broadcast %3 : vector<1x128xf32> to vector<16x128xf32>
    %5 = arith.addf %2, %4 : vector<16x128xf32>
    %cst_5 = arith.constant 0.000000e+00 : f32
    %6 = vector.broadcast %cst_5 : f32 to vector<16x128xf32>
    %7 = arith.maximumf %5, %6 : vector<16x128xf32>
    %8 = arith.truncf %7 : vector<16x128xf32> to vector<16x128xbf16>
    %c0_6 = arith.constant 0 : index
    %c0_7 = arith.constant 0 : index
    %9 = vector.load %arg4[%c0_6, %c0_7] : memref<16x128xbf16, #tpu.memory_space<vmem>>, vector<16x128xbf16>
    tpu.vector_store %arg4[%c0_6, %c0_7], %8 {strides = array<i32>} : memref<16x128xbf16, #tpu.memory_space<vmem>>, vector<16x128xbf16>,
    return
  }
  func.func @transform_0(%arg0: i32) -> (i32, i32) {
    %c0_i32 = arith.constant 0 : i32
    %c0_i32_0 = arith.constant 0 : i32
    return %arg0, %c0_i32 : i32, i32
  }
  func.func @transform_1(%arg0: i32) -> (i32, i32) {
    %c0_i32 = arith.constant 0 : i32
    %c0_i32_0 = arith.constant 0 : i32
    %c0_i32_1 = arith.constant 0 : i32
    return %c0_i32, %c0_i32_0 : i32, i32
  }
  func.func @transform_2(%arg0: i32) -> (i32, i32) {
    %c0_i32 = arith.constant 0 : i32
    %c0_i32_0 = arith.constant 0 : i32
    %c0_i32_1 = arith.constant 0 : i32
    return %c0_i32, %c0_i32_0 : i32, i32
  }
  func.func @transform_3(%arg0: i32) -> (i32, i32) {
    %c0_i32 = arith.constant 0 : i32
    %c0_i32_0 = arith.constant 0 : i32
    return %arg0, %c0_i32 : i32, i32
  }
}

module attributes {stable_mosaic.version = 11 : i64} {
  func.func @_matmul_bias_act_kernel(%arg0: i32, %arg1: memref<16x640xbf16, #tpu.memory_space<vmem>>, %arg2: memref<640x512xbf16, #tpu.memory_space<vmem>>, %arg3: memref<1x512xf32, #tpu.memory_space<vmem>>, %arg4: memref<16x512xf32, #tpu.memory_space<vmem>>) attributes {dimension_semantics = [#tpu.dimension_semantics<parallel>], iteration_bounds = array<i64: 1>, scalar_prefetch = 0 : i64, scratch_operands = 0 : i64, tpu.core_type = #tpu.core_type<tc>, window_params = [{transform_indices = @transform_0, window_bounds = array<i64: 16, 640>}, {pipeline_mode = #tpu.pipeline_mode<synchronous>, transform_indices = @transform_1, window_bounds = array<i64: 640, 512>}, {pipeline_mode = #tpu.pipeline_mode<synchronous>, transform_indices = @transform_2, window_bounds = array<i64: 1, 512>}, {transform_indices = @transform_3, window_bounds = array<i64: 16, 512>}]} {
    %c0 = arith.constant 0 : index
    %c0_0 = arith.constant 0 : index
    %0 = vector.load %arg1[%c0, %c0_0] : memref<16x640xbf16, #tpu.memory_space<vmem>>, vector<16x640xbf16>
    %c0_1 = arith.constant 0 : index
    %c0_2 = arith.constant 0 : index
    %1 = vector.load %arg2[%c0_1, %c0_2] : memref<640x512xbf16, #tpu.memory_space<vmem>>, vector<640x512xbf16>
    %cst = arith.constant dense<0.000000e+00> : vector<16x512xf32>
    %2 = tpu.matmul %0, %1, %cst {dimension_numbers = #tpu.dot_dimension_numbers<[1], [0], [0], [1], [0, 0, 1, 1], [], []>} : vector<16x640xbf16>, vector<640x512xbf16>, vector<16x512xf32> -> vector<16x512xf32>
    %c0_3 = arith.constant 0 : index
    %c0_4 = arith.constant 0 : index
    %3 = vector.load %arg3[%c0_3, %c0_4] : memref<1x512xf32, #tpu.memory_space<vmem>>, vector<1x512xf32>
    %4 = vector.broadcast %3 : vector<1x512xf32> to vector<16x512xf32>
    %5 = arith.addf %2, %4 : vector<16x512xf32>
    %cst_5 = arith.constant 0.000000e+00 : f32
    %6 = vector.broadcast %cst_5 : f32 to vector<16x512xf32>
    %7 = arith.maximumf %5, %6 : vector<16x512xf32>
    %c0_6 = arith.constant 0 : index
    %c0_7 = arith.constant 0 : index
    %8 = vector.load %arg4[%c0_6, %c0_7] : memref<16x512xf32, #tpu.memory_space<vmem>>, vector<16x512xf32>
    tpu.vector_store %arg4[%c0_6, %c0_7], %7 {strides = array<i32>} : memref<16x512xf32, #tpu.memory_space<vmem>>, vector<16x512xf32>,
    return
  }
  func.func @transform_0(%arg0: i32) -> (i32, i32) {
    %c0_i32 = arith.constant 0 : i32
    %c0_i32_0 = arith.constant 0 : i32
    return %arg0, %c0_i32 : i32, i32
  }
  func.func @transform_1(%arg0: i32) -> (i32, i32) {
    %c0_i32 = arith.constant 0 : i32
    %c0_i32_0 = arith.constant 0 : i32
    %c0_i32_1 = arith.constant 0 : i32
    return %c0_i32, %c0_i32_0 : i32, i32
  }
  func.func @transform_2(%arg0: i32) -> (i32, i32) {
    %c0_i32 = arith.constant 0 : i32
    %c0_i32_0 = arith.constant 0 : i32
    %c0_i32_1 = arith.constant 0 : i32
    return %c0_i32, %c0_i32_0 : i32, i32
  }
  func.func @transform_3(%arg0: i32) -> (i32, i32) {
    %c0_i32 = arith.constant 0 : i32
    %c0_i32_0 = arith.constant 0 : i32
    return %arg0, %c0_i32 : i32, i32
  }
}

module attributes {stable_mosaic.version = 11 : i64} {
  func.func @_head_kernel(%arg0: i32, %arg1: memref<8x1x512xf32, #tpu.memory_space<vmem>>, %arg2: memref<512x128xbf16, #tpu.memory_space<vmem>>, %arg3: memref<1x128xf32, #tpu.memory_space<vmem>>, %arg4: memref<8x128xf32, #tpu.memory_space<vmem>>) attributes {dimension_semantics = [#tpu.dimension_semantics<arbitrary>], iteration_bounds = array<i64: 1>, scalar_prefetch = 0 : i64, scratch_operands = 0 : i64, tpu.core_type = #tpu.core_type<tc>, window_params = [{pipeline_mode = #tpu.pipeline_mode<synchronous>, transform_indices = @transform_0, window_bounds = array<i64: 8, 1, 512>}, {pipeline_mode = #tpu.pipeline_mode<synchronous>, transform_indices = @transform_1, window_bounds = array<i64: 512, 128>}, {pipeline_mode = #tpu.pipeline_mode<synchronous>, transform_indices = @transform_2, window_bounds = array<i64: 1, 128>}, {pipeline_mode = #tpu.pipeline_mode<synchronous>, transform_indices = @transform_3, window_bounds = array<i64: 8, 128>}]} {
    %c0 = arith.constant 0 : index
    %c0_0 = arith.constant 0 : index
    %c0_1 = arith.constant 0 : index
    %0 = vector.load %arg1[%c0, %c0_0, %c0_1] : memref<8x1x512xf32, #tpu.memory_space<vmem>>, vector<8x1x512xf32>
    %cst = arith.constant dense<0.000000e+00> : vector<8x512xf32>
    %1 = vector.multi_reduction <add>, %0, %cst [1] : vector<8x1x512xf32> to vector<8x512xf32>
    %cst_2 = arith.constant 1.000000e+00 : f32
    %2 = vector.broadcast %cst_2 : f32 to vector<8x512xf32>
    %3 = arith.mulf %1, %2 : vector<8x512xf32>
    %4 = arith.truncf %3 : vector<8x512xf32> to vector<8x512xbf16>
    %c0_3 = arith.constant 0 : index
    %c0_4 = arith.constant 0 : index
    %5 = vector.load %arg2[%c0_3, %c0_4] : memref<512x128xbf16, #tpu.memory_space<vmem>>, vector<512x128xbf16>
    %cst_5 = arith.constant dense<0.000000e+00> : vector<8x128xf32>
    %6 = tpu.matmul %4, %5, %cst_5 {dimension_numbers = #tpu.dot_dimension_numbers<[1], [0], [0], [1], [0, 0, 1, 1], [], []>} : vector<8x512xbf16>, vector<512x128xbf16>, vector<8x128xf32> -> vector<8x128xf32>
    %c0_6 = arith.constant 0 : index
    %c0_7 = arith.constant 0 : index
    %7 = vector.load %arg3[%c0_6, %c0_7] : memref<1x128xf32, #tpu.memory_space<vmem>>, vector<1x128xf32>
    %8 = vector.broadcast %7 : vector<1x128xf32> to vector<8x128xf32>
    %9 = arith.addf %6, %8 : vector<8x128xf32>
    %10 = math.tanh %9 : vector<8x128xf32>
    %c0_8 = arith.constant 0 : index
    %c0_9 = arith.constant 0 : index
    %11 = vector.load %arg4[%c0_8, %c0_9] : memref<8x128xf32, #tpu.memory_space<vmem>>, vector<8x128xf32>
    tpu.vector_store %arg4[%c0_8, %c0_9], %10 {strides = array<i32>} : memref<8x128xf32, #tpu.memory_space<vmem>>, vector<8x128xf32>,
    return
  }
  func.func @transform_0(%arg0: i32) -> (i32, i32, i32) {
    %c0_i32 = arith.constant 0 : i32
    %c0_i32_0 = arith.constant 0 : i32
    %c0_i32_1 = arith.constant 0 : i32
    %c0_i32_2 = arith.constant 0 : i32
    return %c0_i32, %c0_i32_0, %c0_i32_1 : i32, i32, i32
  }
  func.func @transform_1(%arg0: i32) -> (i32, i32) {
    %c0_i32 = arith.constant 0 : i32
    %c0_i32_0 = arith.constant 0 : i32
    %c0_i32_1 = arith.constant 0 : i32
    return %c0_i32, %c0_i32_0 : i32, i32
  }
  func.func @transform_2(%arg0: i32) -> (i32, i32) {
    %c0_i32 = arith.constant 0 : i32
    %c0_i32_0 = arith.constant 0 : i32
    %c0_i32_1 = arith.constant 0 : i32
    return %c0_i32, %c0_i32_0 : i32, i32
  }
  func.func @transform_3(%arg0: i32) -> (i32, i32) {
    %c0_i32 = arith.constant 0 : i32
    %c0_i32_0 = arith.constant 0 : i32
    %c0_i32_1 = arith.constant 0 : i32
    return %c0_i32, %c0_i32_0 : i32, i32
  }
}

</mosaic_0001>

<llo_original>
// kernel: flexible_image_encoder.24
$region0: #{flexible_image_encoder.24}
  #allocation0 [shape = 'u32[]', space=smem, size = 0x4, offset = 0x4, fixed_abs, tag = 'smem constant byte address 0x4 - core index']
  #allocation1 [shape = 'u32[144,128]{1,0:T(1,128)}', space=vmem, size = 0x12000, scoped, tag = 'internal scratch']
  %s0 = inlined_call_operand.vmem [shape: bf16[128,128], index: 0, kind: input, shape index: {}]
  %s1 = inlined_call_operand.vmem [shape: bf16[128,128], index: 1, kind: input, shape index: {}]
  %s2 = inlined_call_operand.vmem [shape: f32[1,128], index: 2, kind: input, shape index: {}]
  %s3 = inlined_call_operand.vmem [shape: bf16[128,128], index: 3, kind: output, shape index: {}]
  %s4 = sld [smem:[#allocation0]]
  $region22: #{flexible_image_encoder.24} parent=0
    _
  %s6 = ssub.s32 1, %s4
  %s7 = scalar_select 0, %s6, %s4
  // Predicated region
  $region2: #{flexible_image_encoder.24} parent=0 // pred_check
    _
  $region3: #{flexible_image_encoder.24} parent=0 // pred_check_branch
    %9 = sbr.rel (0) target = $region5
  $region4: #{flexible_image_encoder.24} parent=0 // pred_region
    _
  $region5: #{flexible_image_encoder.24} parent=0 // pred_fallthru
    _
  // Predicated region
  $region6: #{flexible_image_encoder.24} parent=0 // pred_check
    _
  $region7: #{flexible_image_encoder.24} parent=0 // pred_check_branch
    %11 = sbr.rel (0) target = $region9
  $region8: #{flexible_image_encoder.24} parent=0 // pred_region
    _
  $region9: #{flexible_image_encoder.24} parent=0 // pred_fallthru
    _
  // Predicated region
  $region10: #{flexible_image_encoder.24} parent=0 // pred_check
    _
  $region11: #{flexible_image_encoder.24} parent=0 // pred_check_branch
    %13 = sbr.rel (0) target = $region13
  $region12: #{flexible_image_encoder.24} parent=0 // pred_region
    _
  $region13: #{flexible_image_encoder.24} parent=0 // pred_fallthru
    _
  %v15 = vld [vmem:[%s0] sm:$0xf]
  %v16 = vld [vmem:[%s0 + $0x4] sm:$0xf]
  %v17 = vld [vmem:[%s0 + $0x8] sm:$0xf]
  %v18 = vld [vmem:[%s0 + $0xc] sm:$0xf]
  %v19 = vld [vmem:[%s0 + $0x10] sm:$0xf]
  %v20 = vld [vmem:[%s0 + $0x14] sm:$0xf]
  %v21 = vld [vmem:[%s0 + $0x18] sm:$0xf]
  %v22 = vld [vmem:[%s0 + $0x1c] sm:$0xf]
  %v23 = vld [vmem:[%s0 + $0x20] sm:$0xf]
  %v24 = vld [vmem:[%s0 + $0x24] sm:$0xf]
  %v25 = vld [vmem:[%s0 + $0x28] sm:$0xf]
  %v26 = vld [vmem:[%s0 + $0x2c] sm:$0xf]
  %v27 = vld [vmem:[%s0 + $0x30] sm:$0xf]
  %v28 = vld [vmem:[%s0 + $0x34] sm:$0xf]
  %v29 = vld [vmem:[%s0 + $0x38] sm:$0xf]
  %v30 = vld [vmem:[%s0 + $0x3c] sm:$0xf]
  %v31 = vld [vmem:[%s1] sm:$0xf]
  %v32 = vld [vmem:[%s1 + $0x4] sm:$0xf]
  %v33 = vld [vmem:[%s1 + $0x8] sm:$0xf]
  %v34 = vld [vmem:[%s1 + $0xc] sm:$0xf]
  %v35 = vld [vmem:[%s1 + $0x10] sm:$0xf]
  %v36 = vld [vmem:[%s1 + $0x14] sm:$0xf]
  %v37 = vld [vmem:[%s1 + $0x18] sm:$0xf]
  %v38 = vld [vmem:[%s1 + $0x1c] sm:$0xf]
  %v39 = vld [vmem:[%s1 + $0x20] sm:$0xf]
  %v40 = vld [vmem:[%s1 + $0x24] sm:$0xf]
  %v41 = vld [vmem:[%s1 + $0x28] sm:$0xf]
  %v42 = vld [vmem:[%s1 + $0x2c] sm:$0xf]
  %v43 = vld [vmem:[%s1 + $0x30] sm:$0xf]
  %v44 = vld [vmem:[%s1 + $0x34] sm:$0xf]
  %v45 = vld [vmem:[%s1 + $0x38] sm:$0xf]
  %v46 = vld [vmem:[%s1 + $0x3c] sm:$0xf]
  %v47 = vld [vmem:[%s2] sm:$0x1]
  %v49 = vlaneseq
  %v50 = vshrl.u32 %v49, 7
  %v51 = vsub.s32 0, %v50
  %v52 = vrot.slane %v47, %v51
  %v70 = vunpack.c.l.b16 %v15
  %v71 = vunpack.c.l.b16 %v16
  %v72 = vunpack.c.l.b16 %v17
  %v73 = vunpack.c.l.b16 %v18
  %v74 = vunpack.c.l.b16 %v19
  %v75 = vunpack.c.l.b16 %v20
  %v76 = vunpack.c.l.b16 %v21
  %v77 = vunpack.c.l.b16 %v22
  %v78 = vunpack.c.l.b16 %v23
  %v79 = vunpack.c.l.b16 %v24
  %v80 = vunpack.c.l.b16 %v25
  %v81 = vunpack.c.l.b16 %v26
  %v82 = vunpack.c.l.b16 %v27
  %v83 = vunpack.c.l.b16 %v28
  %v84 = vunpack.c.l.b16 %v29
  %v85 = vunpack.c.l.b16 %v30
  %v86 = vpack.c.b16 %v71, %v70
  %v87 = vpack.c.b16 %v73, %v72
  %v88 = vpack.c.b16 %v75, %v74
  %v89 = vpack.c.b16 %v77, %v76
  %v90 = vpack.c.b16 %v79, %v78
  %v91 = vpack.c.b16 %v81, %v80
  %v92 = vpack.c.b16 %v83, %v82
  %v93 = vpack.c.b16 %v85, %v84
  %v118 = vunpack.c.l.b16 %v31
  %v119 = vunpack.c.l.b16 %v32
  %v120 = vunpack.c.l.b16 %v33
  %v121 = vunpack.c.l.b16 %v34
  %v122 = vunpack.c.l.b16 %v35
  %v123 = vunpack.c.l.b16 %v36
  %v124 = vunpack.c.l.b16 %v37
  %v125 = vunpack.c.l.b16 %v38
  %v126 = vunpack.c.l.b16 %v39
  %v127 = vunpack.c.l.b16 %v40
  %v128 = vunpack.c.l.b16 %v41
  %v129 = vunpack.c.l.b16 %v42
  %v130 = vunpack.c.l.b16 %v43
  %v131 = vunpack.c.l.b16 %v44
  %v132 = vunpack.c.l.b16 %v45
  %v133 = vunpack.c.l.b16 %v46
  %v134 = vpack.c.b16 %v119, %v118
  %v135 = vpack.c.b16 %v121, %v120
  %v136 = vpack.c.b16 %v123, %v122
  %v137 = vpack.c.b16 %v125, %v124
  %v138 = vpack.c.b16 %v127, %v126
  %v139 = vpack.c.b16 %v129, %v128
  %v140 = vpack.c.b16 %v131, %v130
  %v141 = vpack.c.b16 %v133, %v132
  %150 = vmatprep.subr.bf16.mxu0 0
  %151 = vmatpush1.bf16.msra.mxu0 %v141
  %152 = vmatprep.subr.bf16.mxu0 0
  %153 = vmatpush1.bf16.msra.mxu0 %v140
  %154 = vmatprep.subr.bf16.mxu0 0
  %155 = vmatpush1.bf16.msra.mxu0 %v139
  %156 = vmatprep.subr.bf16.mxu0 0
  %157 = vmatpush1.bf16.msra.mxu0 %v138
  %158 = vmatprep.subr.bf16.mxu0 0
  %159 = vmatpush1.bf16.msra.mxu0 %v137
  %160 = vmatprep.subr.bf16.mxu0 0
  %161 = vmatpush1.bf16.msra.mxu0 %v136
  %162 = vmatprep.subr.bf16.mxu0 0
  %163 = vmatpush1.bf16.msra.mxu0 %v135
  %164 = vmatprep.subr.bf16.mxu0 0
  %165 = vmatpush1.bf16.msra.mxu0 %v134
  %166 = vmatprep.subr.bf16.mxu0 0
  %167 = vmatpush2.bf16.msra.mxu0 0
  %168 = vmatprep.subr.bf16.mxu0 0
  %169 = vmatpush2.bf16.msra.mxu0 0
  %170 = vmatprep.subr.bf16.mxu0 0
  %171 = vmatpush2.bf16.msra.mxu0 0
  %172 = vmatprep.subr.bf16.mxu0 0
  %173 = vmatpush2.bf16.msra.mxu0 0
  %174 = vmatprep.subr.bf16.mxu0 0
  %175 = vmatpush2.bf16.msra.mxu0 0
  %176 = vmatprep.subr.bf16.mxu0 0
  %177 = vmatpush2.bf16.msra.mxu0 0
  %178 = vmatprep.subr.bf16.mxu0 0
  %179 = vmatpush2.bf16.msra.mxu0 0
  %180 = vmatprep.subr.bf16.mxu0 0
  %181 = vmatpush2.bf16.msra.mxu0 0
  %182 = vmatprep.mubr.bf16.mxu0 0
  %183 = vmatmul.mubr.bf16.gmra.mxu0 %v86
  %v184 = vpop.f32.mrf.mxu0
  %v185 = vadd.f32 %v52, %v184
  %v186 = vpop.f32.mrf.mxu0
  %v187 = vpop.f32.mrf.mxu0
  %v188 = vadd.f32 %v52, %v187
  %v189 = vpop.f32.mrf.mxu0
  %190 = vmatprep.mubr.bf16.mxu0 0
  %191 = vmatmul.mubr.bf16.gmra.mxu0 %v87
  %v192 = vpop.f32.mrf.mxu0
  %v193 = vadd.f32 %v52, %v192
  %v194 = vpop.f32.mrf.mxu0
  %v195 = vpop.f32.mrf.mxu0
  %v196 = vadd.f32 %v52, %v195
  %v197 = vpop.f32.mrf.mxu0
  %198 = vmatprep.mubr.bf16.mxu0 0
  %199 = vmatmul.mubr.bf16.gmra.mxu0 %v88
  %v200 = vpop.f32.mrf.mxu0
  %v201 = vadd.f32 %v52, %v200
  %v202 = vpop.f32.mrf.mxu0
  %v203 = vpop.f32.mrf.mxu0
  %v204 = vadd.f32 %v52, %v203
  %v205 = vpop.f32.mrf.mxu0
  %206 = vmatprep.mubr.bf16.mxu0 0
  %207 = vmatmul.mubr.bf16.gmra.mxu0 %v89
  %v208 = vpop.f32.mrf.mxu0
  %v209 = vadd.f32 %v52, %v208
  %v210 = vpop.f32.mrf.mxu0
  %v211 = vpop.f32.mrf.mxu0
  %v212 = vadd.f32 %v52, %v211
  %v213 = vpop.f32.mrf.mxu0
  %214 = vmatprep.mubr.bf16.mxu0 0
  %215 = vmatmul.mubr.bf16.gmra.mxu0 %v90
  %v216 = vpop.f32.mrf.mxu0
  %v217 = vadd.f32 %v52, %v216
  %v218 = vpop.f32.mrf.mxu0
  %v219 = vpop.f32.mrf.mxu0
  %v220 = vadd.f32 %v52, %v219
  %v221 = vpop.f32.mrf.mxu0
  %222 = vmatprep.mubr.bf16.mxu0 0
  %223 = vmatmul.mubr.bf16.gmra.mxu0 %v91
  %v224 = vpop.f32.mrf.mxu0
  %v225 = vadd.f32 %v52, %v224
  %v226 = vpop.f32.mrf.mxu0
  %v227 = vpop.f32.mrf.mxu0
  %v228 = vadd.f32 %v52, %v227
  %v229 = vpop.f32.mrf.mxu0
  %230 = vmatprep.mubr.bf16.mxu0 0
  %231 = vmatmul.mubr.bf16.gmra.mxu0 %v92
  %v232 = vpop.f32.mrf.mxu0
  %v233 = vadd.f32 %v52, %v232
  %v234 = vpop.f32.mrf.mxu0
  %v235 = vpop.f32.mrf.mxu0
  %v236 = vadd.f32 %v52, %v235
  %v237 = vpop.f32.mrf.mxu0
  %238 = vmatprep.mubr.bf16.mxu0 0
  %239 = vmatmul.mubr.bf16.gmra.mxu0 %v93
  %v240 = vpop.f32.mrf.mxu0
  %v241 = vadd.f32 %v52, %v240
  %v242 = vpop.f32.mrf.mxu0
  %v243 = vpop.f32.mrf.mxu0
  %v244 = vadd.f32 %v52, %v243
  %v245 = vpop.f32.mrf.mxu0
  %246 = vdwg.mxu0
  %v247 = vmax.f32 %v185, 0.0
  %v248 = vmax.f32 %v188, 0.0
  %v249 = vmax.f32 %v193, 0.0
  %v250 = vmax.f32 %v196, 0.0
  %v251 = vmax.f32 %v201, 0.0
  %v252 = vmax.f32 %v204, 0.0
  %v253 = vmax.f32 %v209, 0.0
  %v254 = vmax.f32 %v212, 0.0
  %v255 = vmax.f32 %v217, 0.0
  %v256 = vmax.f32 %v220, 0.0
  %v257 = vmax.f32 %v225, 0.0
  %v258 = vmax.f32 %v228, 0.0
  %v259 = vmax.f32 %v233, 0.0
  %v260 = vmax.f32 %v236, 0.0
  %v261 = vmax.f32 %v241, 0.0
  %v262 = vmax.f32 %v244, 0.0
  %v263 = vpack.c.bf16 %v248, %v247
  %v264 = vpack.c.bf16 %v250, %v249
  %v265 = vpack.c.bf16 %v252, %v251
  %v266 = vpack.c.bf16 %v254, %v253
  %v267 = vpack.c.bf16 %v256, %v255
  %v268 = vpack.c.bf16 %v258, %v257
  %v269 = vpack.c.bf16 %v260, %v259
  %v270 = vpack.c.bf16 %v262, %v261
  %v279 = vunpack.c.l.b16 %v263
  %v280 = vunpack.c.h.b16 %v263
  %v281 = vunpack.c.l.b16 %v264
  %v282 = vunpack.c.h.b16 %v264
  %v283 = vunpack.c.l.b16 %v265
  %v284 = vunpack.c.h.b16 %v265
  %v285 = vunpack.c.l.b16 %v266
  %v286 = vunpack.c.h.b16 %v266
  %v287 = vunpack.c.l.b16 %v267
  %v288 = vunpack.c.h.b16 %v267
  %v289 = vunpack.c.l.b16 %v268
  %v290 = vunpack.c.h.b16 %v268
  %v291 = vunpack.c.l.b16 %v269
  %v292 = vunpack.c.h.b16 %v269
  %v293 = vunpack.c.l.b16 %v270
  %v294 = vunpack.c.h.b16 %v270
  %v295 = vpack.c.b16 %v279, %v279
  %v296 = vpack.c.b16 %v280, %v280
  %v297 = vpack.c.b16 %v281, %v281
  %v298 = vpack.c.b16 %v282, %v282
  %v299 = vpack.c.b16 %v283, %v283
  %v300 = vpack.c.b16 %v284, %v284
  %v301 = vpack.c.b16 %v285, %v285
  %v302 = vpack.c.b16 %v286, %v286
  %v303 = vpack.c.b16 %v287, %v287
  %v304 = vpack.c.b16 %v288, %v288
  %v305 = vpack.c.b16 %v289, %v289
  %v306 = vpack.c.b16 %v290, %v290
  %v307 = vpack.c.b16 %v291, %v291
  %v308 = vpack.c.b16 %v292, %v292
  %v309 = vpack.c.b16 %v293, %v293
  %v310 = vpack.c.b16 %v294, %v294
  %327 = vst [vmem:[%s3] sm:$0xf] %v295
  %328 = vst [vmem:[%s3 + $0x4] sm:$0xf] %v296
  %329 = vst [vmem:[%s3 + $0x8] sm:$0xf] %v297
  %330 = vst [vmem:[%s3 + $0xc] sm:$0xf] %v298
  %331 = vst [vmem:[%s3 + $0x10] sm:$0xf] %v299
  %332 = vst [vmem:[%s3 + $0x14] sm:$0xf] %v300
  %333 = vst [vmem:[%s3 + $0x18] sm:$0xf] %v301
  %334 = vst [vmem:[%s3 + $0x1c] sm:$0xf] %v302
  %335 = vst [vmem:[%s3 + $0x20] sm:$0xf] %v303
  %336 = vst [vmem:[%s3 + $0x24] sm:$0xf] %v304
  %337 = vst [vmem:[%s3 + $0x28] sm:$0xf] %v305
  %338 = vst [vmem:[%s3 + $0x2c] sm:$0xf] %v306
  %339 = vst [vmem:[%s3 + $0x30] sm:$0xf] %v307
  %340 = vst [vmem:[%s3 + $0x34] sm:$0xf] %v308
  %341 = vst [vmem:[%s3 + $0x38] sm:$0xf] %v309
  %342 = vst [vmem:[%s3 + $0x3c] sm:$0xf] %v310
  // Predicated region
  $region14: #{flexible_image_encoder.24} parent=0 // pred_check
    _
  $region15: #{flexible_image_encoder.24} parent=0 // pred_check_branch
    %344 = sbr.rel (0) target = $region17
  $region16: #{flexible_image_encoder.24} parent=0 // pred_region
    _
  $region17: #{flexible_image_encoder.24} parent=0 // pred_fallthru
    _
  // Predicated region
  $region18: #{flexible_image_encoder.24} parent=0 // pred_check
    _
  $region19: #{flexible_image_encoder.24} parent=0 // pred_check_branch
    %346 = sbr.rel (0) target = $region21
  $region20: #{flexible_image_encoder.24} parent=0 // pred_region
    _
  $region21: #{flexible_image_encoder.24} parent=0 // pred_fallthru
    _

// kernel: flexible_image_encoder.25
$region0: #{flexible_image_encoder.25}
  #allocation0 [shape = 'u32[]', space=smem, size = 0x4, offset = 0x4, fixed_abs, tag = 'smem constant byte address 0x4 - core index']
  #allocation1 [shape = 'u32[144,128]{1,0:T(1,128)}', space=vmem, size = 0x12000, scoped, tag = 'internal scratch']
  %s0 = inlined_call_operand.vmem [shape: bf16[3,64,128], index: 0, kind: input, shape index: {}]
  %s1 = inlined_call_operand.vmem [shape: bf16[64,128], index: 1, kind: output, shape index: {}]
  %s2 = sld [smem:[#allocation0]]
  $region14: #{flexible_image_encoder.25} parent=0
    _
  %s4 = ssub.s32 1, %s2
  %s5 = scalar_select 0, %s4, %s2
  // Predicated region
  $region2: #{flexible_image_encoder.25} parent=0 // pred_check
    _
  $region3: #{flexible_image_encoder.25} parent=0 // pred_check_branch
    %7 = sbr.rel (0) target = $region5
  $region4: #{flexible_image_encoder.25} parent=0 // pred_region
    _
  $region5: #{flexible_image_encoder.25} parent=0 // pred_fallthru
    _
  %v8 = vld [vmem:[%s0] sm:$0xf]
  %v9 = vld [vmem:[%s0 + $0x4] sm:$0xf]
  %v10 = vld [vmem:[%s0 + $0x8] sm:$0xf]
  %v11 = vld [vmem:[%s0 + $0xc] sm:$0xf]
  %v12 = vld [vmem:[%s0 + $0x10] sm:$0xf]
  %v13 = vld [vmem:[%s0 + $0x14] sm:$0xf]
  %v14 = vld [vmem:[%s0 + $0x18] sm:$0xf]
  %v15 = vld [vmem:[%s0 + $0x1c] sm:$0xf]
  %s16 = scalar_lea.vmem %s0, 32
  %v17 = vld [vmem:[%s16] sm:$0xf]
  %v18 = vld [vmem:[%s16 + $0x4] sm:$0xf]
  %v19 = vld [vmem:[%s16 + $0x8] sm:$0xf]
  %v20 = vld [vmem:[%s16 + $0xc] sm:$0xf]
  %v21 = vld [vmem:[%s16 + $0x10] sm:$0xf]
  %v22 = vld [vmem:[%s16 + $0x14] sm:$0xf]
  %v23 = vld [vmem:[%s16 + $0x18] sm:$0xf]
  %v24 = vld [vmem:[%s16 + $0x1c] sm:$0xf]
  %v25 = vmax.bf16 %v8, %v17
  %v26 = vmax.bf16 %v9, %v18
  %v27 = vmax.bf16 %v10, %v19
  %v28 = vmax.bf16 %v11, %v20
  %v29 = vmax.bf16 %v12, %v21
  %v30 = vmax.bf16 %v13, %v22
  %v31 = vmax.bf16 %v14, %v23
  %v32 = vmax.bf16 %v15, %v24
  %s33 = scalar_lea.vmem %s0, 64
  %v34 = vld [vmem:[%s33] sm:$0xf]
  %v35 = vld [vmem:[%s33 + $0x4] sm:$0xf]
  %v36 = vld [vmem:[%s33 + $0x8] sm:$0xf]
  %v37 = vld [vmem:[%s33 + $0xc] sm:$0xf]
  %v38 = vld [vmem:[%s33 + $0x10] sm:$0xf]
  %v39 = vld [vmem:[%s33 + $0x14] sm:$0xf]
  %v40 = vld [vmem:[%s33 + $0x18] sm:$0xf]
  %v41 = vld [vmem:[%s33 + $0x1c] sm:$0xf]
  %v42 = vmax.bf16 %v25, %v34
  %v43 = vmax.bf16 %v26, %v35
  %v44 = vmax.bf16 %v27, %v36
  %v45 = vmax.bf16 %v28, %v37
  %v46 = vmax.bf16 %v29, %v38
  %v47 = vmax.bf16 %v30, %v39
  %v48 = vmax.bf16 %v31, %v40
  %v49 = vmax.bf16 %v32, %v41
  %50 = vst [vmem:[%s1] sm:$0xf] %v42
  %51 = vst [vmem:[%s1 + $0x4] sm:$0xf] %v43
  %52 = vst [vmem:[%s1 + $0x8] sm:$0xf] %v44
  %53 = vst [vmem:[%s1 + $0xc] sm:$0xf] %v45
  %54 = vst [vmem:[%s1 + $0x10] sm:$0xf] %v46
  %55 = vst [vmem:[%s1 + $0x14] sm:$0xf] %v47
  %56 = vst [vmem:[%s1 + $0x18] sm:$0xf] %v48
  %57 = vst [vmem:[%s1 + $0x1c] sm:$0xf] %v49
  // Predicated region
  $region6: #{flexible_image_encoder.25} parent=0 // pred_check
    _
  $region7: #{flexible_image_encoder.25} parent=0 // pred_check_branch
    %59 = sbr.rel (0) target = $region9
  $region8: #{flexible_image_encoder.25} parent=0 // pred_region
    _
  $region9: #{flexible_image_encoder.25} parent=0 // pred_fallthru
    _
  // Predicated region
  $region10: #{flexible_image_encoder.25} parent=0 // pred_check
    _
  $region11: #{flexible_image_encoder.25} parent=0 // pred_check_branch
    %61 = sbr.rel (0) target = $region13
  $region12: #{flexible_image_encoder.25} parent=0 // pred_region
    _
  $region13: #{flexible_image_encoder.25} parent=0 // pred_fallthru
    _

// kernel: flexible_image_encoder.26
$region0: #{flexible_image_encoder.26}
  #allocation0 [shape = 'u32[]', space=smem, size = 0x4, offset = 0x4, fixed_abs, tag = 'smem constant byte address 0x4 - core index']
  #allocation1 [shape = 'u32[144,128]{1,0:T(1,128)}', space=vmem, size = 0x12000, scoped, tag = 'internal scratch']
  %s0 = inlined_call_operand.vmem [shape: bf16[3,32,128], index: 0, kind: input, shape index: {}]
  %s1 = inlined_call_operand.vmem [shape: bf16[32,128], index: 1, kind: output, shape index: {}]
  %s2 = sld [smem:[#allocation0]]
  $region14: #{flexible_image_encoder.26} parent=0
    _
  %s4 = ssub.s32 1, %s2
  %s5 = scalar_select 0, %s4, %s2
  // Predicated region
  $region2: #{flexible_image_encoder.26} parent=0 // pred_check
    _
  $region3: #{flexible_image_encoder.26} parent=0 // pred_check_branch
    %7 = sbr.rel (0) target = $region5
  $region4: #{flexible_image_encoder.26} parent=0 // pred_region
    _
  $region5: #{flexible_image_encoder.26} parent=0 // pred_fallthru
    _
  %v8 = vld [vmem:[%s0] sm:$0xf]
  %v9 = vld [vmem:[%s0 + $0x4] sm:$0xf]
  %v10 = vld [vmem:[%s0 + $0x8] sm:$0xf]
  %v11 = vld [vmem:[%s0 + $0xc] sm:$0xf]
  %s12 = scalar_lea.vmem %s0, 16
  %v13 = vld [vmem:[%s12] sm:$0xf]
  %v14 = vld [vmem:[%s12 + $0x4] sm:$0xf]
  %v15 = vld [vmem:[%s12 + $0x8] sm:$0xf]
  %v16 = vld [vmem:[%s12 + $0xc] sm:$0xf]
  %v17 = vmax.bf16 %v8, %v13
  %v18 = vmax.bf16 %v9, %v14
  %v19 = vmax.bf16 %v10, %v15
  %v20 = vmax.bf16 %v11, %v16
  %s21 = scalar_lea.vmem %s0, 32
  %v22 = vld [vmem:[%s21] sm:$0xf]
  %v23 = vld [vmem:[%s21 + $0x4] sm:$0xf]
  %v24 = vld [vmem:[%s21 + $0x8] sm:$0xf]
  %v25 = vld [vmem:[%s21 + $0xc] sm:$0xf]
  %v26 = vmax.bf16 %v17, %v22
  %v27 = vmax.bf16 %v18, %v23
  %v28 = vmax.bf16 %v19, %v24
  %v29 = vmax.bf16 %v20, %v25
  %30 = vst [vmem:[%s1] sm:$0xf] %v26
  %31 = vst [vmem:[%s1 + $0x4] sm:$0xf] %v27
  %32 = vst [vmem:[%s1 + $0x8] sm:$0xf] %v28
  %33 = vst [vmem:[%s1 + $0xc] sm:$0xf] %v29
  // Predicated region
  $region6: #{flexible_image_encoder.26} parent=0 // pred_check
    _
  $region7: #{flexible_image_encoder.26} parent=0 // pred_check_branch
    %35 = sbr.rel (0) target = $region9
  $region8: #{flexible_image_encoder.26} parent=0 // pred_region
    _
  $region9: #{flexible_image_encoder.26} parent=0 // pred_fallthru
    _
  // Predicated region
  $region10: #{flexible_image_encoder.26} parent=0 // pred_check
    _
  $region11: #{flexible_image_encoder.26} parent=0 // pred_check_branch
    %37 = sbr.rel (0) target = $region13
  $region12: #{flexible_image_encoder.26} parent=0 // pred_region
    _
  $region13: #{flexible_image_encoder.26} parent=0 // pred_fallthru
    _

// kernel: flexible_image_encoder.27
$region0: #{flexible_image_encoder.27}
  #allocation0 [shape = 'u32[]', space=smem, size = 0x4, offset = 0x4, fixed_abs, tag = 'smem constant byte address 0x4 - core index']
  #allocation1 [shape = 'u32[144,128]{1,0:T(1,128)}', space=vmem, size = 0x12000, scoped, tag = 'internal scratch']
  %s0 = inlined_call_operand.vmem [shape: bf16[32,128], index: 0, kind: input, shape index: {}]
  %s1 = inlined_call_operand.vmem [shape: bf16[128,128], index: 1, kind: input, shape index: {}]
  %s2 = inlined_call_operand.vmem [shape: f32[1,128], index: 2, kind: input, shape index: {}]
  %s3 = inlined_call_operand.vmem [shape: bf16[32,128], index: 3, kind: output, shape index: {}]
  %s4 = sld [smem:[#allocation0]]
  $region22: #{flexible_image_encoder.27} parent=0
    _
  %s6 = ssub.s32 1, %s4
  %s7 = scalar_select 0, %s6, %s4
  // Predicated region
  $region2: #{flexible_image_encoder.27} parent=0 // pred_check
    _
  $region3: #{flexible_image_encoder.27} parent=0 // pred_check_branch
    %9 = sbr.rel (0) target = $region5
  $region4: #{flexible_image_encoder.27} parent=0 // pred_region
    _
  $region5: #{flexible_image_encoder.27} parent=0 // pred_fallthru
    _
  // Predicated region
  $region6: #{flexible_image_encoder.27} parent=0 // pred_check
    _
  $region7: #{flexible_image_encoder.27} parent=0 // pred_check_branch
    %11 = sbr.rel (0) target = $region9
  $region8: #{flexible_image_encoder.27} parent=0 // pred_region
    _
  $region9: #{flexible_image_encoder.27} parent=0 // pred_fallthru
    _
  // Predicated region
  $region10: #{flexible_image_encoder.27} parent=0 // pred_check
    _
  $region11: #{flexible_image_encoder.27} parent=0 // pred_check_branch
    %13 = sbr.rel (0) target = $region13
  $region12: #{flexible_image_encoder.27} parent=0 // pred_region
    _
  $region13: #{flexible_image_encoder.27} parent=0 // pred_fallthru
    _
  %v15 = vld [vmem:[%s0] sm:$0xf]
  %v16 = vld [vmem:[%s0 + $0x4] sm:$0xf]
  %v17 = vld [vmem:[%s0 + $0x8] sm:$0xf]
  %v18 = vld [vmem:[%s0 + $0xc] sm:$0xf]
  %v19 = vld [vmem:[%s1] sm:$0xf]
  %v20 = vld [vmem:[%s1 + $0x4] sm:$0xf]
  %v21 = vld [vmem:[%s1 + $0x8] sm:$0xf]
  %v22 = vld [vmem:[%s1 + $0xc] sm:$0xf]
  %v23 = vld [vmem:[%s1 + $0x10] sm:$0xf]
  %v24 = vld [vmem:[%s1 + $0x14] sm:$0xf]
  %v25 = vld [vmem:[%s1 + $0x18] sm:$0xf]
  %v26 = vld [vmem:[%s1 + $0x1c] sm:$0xf]
  %v27 = vld [vmem:[%s1 + $0x20] sm:$0xf]
  %v28 = vld [vmem:[%s1 + $0x24] sm:$0xf]
  %v29 = vld [vmem:[%s1 + $0x28] sm:$0xf]
  %v30 = vld [vmem:[%s1 + $0x2c] sm:$0xf]
  %v31 = vld [vmem:[%s1 + $0x30] sm:$0xf]
  %v32 = vld [vmem:[%s1 + $0x34] sm:$0xf]
  %v33 = vld [vmem:[%s1 + $0x38] sm:$0xf]
  %v34 = vld [vmem:[%s1 + $0x3c] sm:$0xf]
  %v35 = vld [vmem:[%s2] sm:$0x1]
  %v37 = vlaneseq
  %v38 = vshrl.u32 %v37, 7
  %v39 = vsub.s32 0, %v38
  %v40 = vrot.slane %v35, %v39
  %v46 = vunpack.c.l.b16 %v15
  %v47 = vunpack.c.l.b16 %v16
  %v48 = vunpack.c.l.b16 %v17
  %v49 = vunpack.c.l.b16 %v18
  %v50 = vpack.c.b16 %v47, %v46
  %v51 = vpack.c.b16 %v49, %v48
  %v70 = vunpack.c.l.b16 %v19
  %v71 = vunpack.c.l.b16 %v20
  %v72 = vunpack.c.l.b16 %v21
  %v73 = vunpack.c.l.b16 %v22
  %v74 = vunpack.c.l.b16 %v23
  %v75 = vunpack.c.l.b16 %v24
  %v76 = vunpack.c.l.b16 %v25
  %v77 = vunpack.c.l.b16 %v26
  %v78 = vunpack.c.l.b16 %v27
  %v79 = vunpack.c.l.b16 %v28
  %v80 = vunpack.c.l.b16 %v29
  %v81 = vunpack.c.l.b16 %v30
  %v82 = vunpack.c.l.b16 %v31
  %v83 = vunpack.c.l.b16 %v32
  %v84 = vunpack.c.l.b16 %v33
  %v85 = vunpack.c.l.b16 %v34
  %v86 = vpack.c.b16 %v71, %v70
  %v87 = vpack.c.b16 %v73, %v72
  %v88 = vpack.c.b16 %v75, %v74
  %v89 = vpack.c.b16 %v77, %v76
  %v90 = vpack.c.b16 %v79, %v78
  %v91 = vpack.c.b16 %v81, %v80
  %v92 = vpack.c.b16 %v83, %v82
  %v93 = vpack.c.b16 %v85, %v84
  %102 = vmatprep.subr.bf16.mxu0 0
  %103 = vmatpush1.bf16.msra.mxu0 %v93
  %104 = vmatprep.subr.bf16.mxu0 0
  %105 = vmatpush1.bf16.msra.mxu0 %v92
  %106 = vmatprep.subr.bf16.mxu0 0
  %107 = vmatpush1.bf16.msra.mxu0 %v91
  %108 = vmatprep.subr.bf16.mxu0 0
  %109 = vmatpush1.bf16.msra.mxu0 %v90
  %110 = vmatprep.subr.bf16.mxu0 0
  %111 = vmatpush1.bf16.msra.mxu0 %v89
  %112 = vmatprep.subr.bf16.mxu0 0
  %113 = vmatpush1.bf16.msra.mxu0 %v88
  %114 = vmatprep.subr.bf16.mxu0 0
  %115 = vmatpush1.bf16.msra.mxu0 %v87
  %116 = vmatprep.subr.bf16.mxu0 0
  %117 = vmatpush1.bf16.msra.mxu0 %v86
  %118 = vmatprep.subr.bf16.mxu0 0
  %119 = vmatpush2.bf16.msra.mxu0 0
  %120 = vmatprep.subr.bf16.mxu0 0
  %121 = vmatpush2.bf16.msra.mxu0 0
  %122 = vmatprep.subr.bf16.mxu0 0
  %123 = vmatpush2.bf16.msra.mxu0 0
  %124 = vmatprep.subr.bf16.mxu0 0
  %125 = vmatpush2.bf16.msra.mxu0 0
  %126 = vmatprep.subr.bf16.mxu0 0
  %127 = vmatpush2.bf16.msra.mxu0 0
  %128 = vmatprep.subr.bf16.mxu0 0
  %129 = vmatpush2.bf16.msra.mxu0 0
  %130 = vmatprep.subr.bf16.mxu0 0
  %131 = vmatpush2.bf16.msra.mxu0 0
  %132 = vmatprep.subr.bf16.mxu0 0
  %133 = vmatpush2.bf16.msra.mxu0 0
  %134 = vmatprep.mubr.bf16.mxu0 0
  %135 = vmatmul.mubr.bf16.gmra.mxu0 %v50
  %v136 = vpop.f32.mrf.mxu0
  %v137 = vadd.f32 %v40, %v136
  %v138 = vpop.f32.mrf.mxu0
  %v139 = vpop.f32.mrf.mxu0
  %v140 = vadd.f32 %v40, %v139
  %v141 = vpop.f32.mrf.mxu0
  %142 = vmatprep.mubr.bf16.mxu0 0
  %143 = vmatmul.mubr.bf16.gmra.mxu0 %v51
  %v144 = vpop.f32.mrf.mxu0
  %v145 = vadd.f32 %v40, %v144
  %v146 = vpop.f32.mrf.mxu0
  %v147 = vpop.f32.mrf.mxu0
  %v148 = vadd.f32 %v40, %v147
  %v149 = vpop.f32.mrf.mxu0
  %150 = vdwg.mxu0
  %v151 = vmax.f32 %v137, 0.0
  %v152 = vmax.f32 %v140, 0.0
  %v153 = vmax.f32 %v145, 0.0
  %v154 = vmax.f32 %v148, 0.0
  %v155 = vpack.c.bf16 %v152, %v151
  %v156 = vpack.c.bf16 %v154, %v153
  %v159 = vunpack.c.l.b16 %v155
  %v160 = vunpack.c.h.b16 %v155
  %v161 = vunpack.c.l.b16 %v156
  %v162 = vunpack.c.h.b16 %v156
  %v163 = vpack.c.b16 %v159, %v159
  %v164 = vpack.c.b16 %v160, %v160
  %v165 = vpack.c.b16 %v161, %v161
  %v166 = vpack.c.b16 %v162, %v162
  %171 = vst [vmem:[%s3] sm:$0xf] %v163
  %172 = vst [vmem:[%s3 + $0x4] sm:$0xf] %v164
  %173 = vst [vmem:[%s3 + $0x8] sm:$0xf] %v165
  %174 = vst [vmem:[%s3 + $0xc] sm:$0xf] %v166
  // Predicated region
  $region14: #{flexible_image_encoder.27} parent=0 // pred_check
    _
  $region15: #{flexible_image_encoder.27} parent=0 // pred_check_branch
    %176 = sbr.rel (0) target = $region17
  $region16: #{flexible_image_encoder.27} parent=0 // pred_region
    _
  $region17: #{flexible_image_encoder.27} parent=0 // pred_fallthru
    _
  // Predicated region
  $region18: #{flexible_image_encoder.27} parent=0 // pred_check
    _
  $region19: #{flexible_image_encoder.27} parent=0 // pred_check_branch
    %178 = sbr.rel (0) target = $region21
  $region20: #{flexible_image_encoder.27} parent=0 // pred_region
    _
  $region21: #{flexible_image_encoder.27} parent=0 // pred_fallthru
    _

// kernel: flexible_image_encoder.28
$region0: #{flexible_image_encoder.28}
  #allocation0 [shape = 'u32[]', space=smem, size = 0x4, offset = 0x4, fixed_abs, tag = 'smem constant byte address 0x4 - core index']
  #allocation1 [shape = 'u32[144,128]{1,0:T(1,128)}', space=vmem, size = 0x12000, scoped, tag = 'internal scratch']
  %s0 = inlined_call_operand.vmem [shape: bf16[32,256], index: 0, kind: input, shape index: {}]
  %s1 = inlined_call_operand.vmem [shape: bf16[256,128], index: 1, kind: input, shape index: {}]
  %s2 = inlined_call_operand.vmem [shape: f32[1,128], index: 2, kind: input, shape index: {}]
  %s3 = inlined_call_operand.vmem [shape: bf16[32,128], index: 3, kind: output, shape index: {}]
  %s4 = sld [smem:[#allocation0]]
  $region22: #{flexible_image_encoder.28} parent=0
    _
  %s6 = ssub.s32 1, %s4
  %s7 = scalar_select 0, %s6, %s4
  // Predicated region
  $region2: #{flexible_image_encoder.28} parent=0 // pred_check
    _
  $region3: #{flexible_image_encoder.28} parent=0 // pred_check_branch
    %9 = sbr.rel (0) target = $region5
  $region4: #{flexible_image_encoder.28} parent=0 // pred_region
    _
  $region5: #{flexible_image_encoder.28} parent=0 // pred_fallthru
    _
  // Predicated region
  $region6: #{flexible_image_encoder.28} parent=0 // pred_check
    _
  $region7: #{flexible_image_encoder.28} parent=0 // pred_check_branch
    %11 = sbr.rel (0) target = $region9
  $region8: #{flexible_image_encoder.28} parent=0 // pred_region
    _
  $region9: #{flexible_image_encoder.28} parent=0 // pred_fallthru
    _
  // Predicated region
  $region10: #{flexible_image_encoder.28} parent=0 // pred_check
    _
  $region11: #{flexible_image_encoder.28} parent=0 // pred_check_branch
    %13 = sbr.rel (0) target = $region13
  $region12: #{flexible_image_encoder.28} parent=0 // pred_region
    _
  $region13: #{flexible_image_encoder.28} parent=0 // pred_fallthru
    _
  %v15 = vld [vmem:[%s0] sm:$0xff]
  %v16 = vld [vmem:[%s0 + $0x8] sm:$0xff]
  %v17 = vld [vmem:[%s0 + $0x10] sm:$0xff]
  %v18 = vld [vmem:[%s0 + $0x18] sm:$0xff]
  %v19 = vld [vmem:[%s1] sm:$0xf]
  %v20 = vld [vmem:[%s1 + $0x4] sm:$0xf]
  %v21 = vld [vmem:[%s1 + $0x8] sm:$0xf]
  %v22 = vld [vmem:[%s1 + $0xc] sm:$0xf]
  %v23 = vld [vmem:[%s1 + $0x10] sm:$0xf]
  %v24 = vld [vmem:[%s1 + $0x14] sm:$0xf]
  %v25 = vld [vmem:[%s1 + $0x18] sm:$0xf]
  %v26 = vld [vmem:[%s1 + $0x1c] sm:$0xf]
  %v27 = vld [vmem:[%s1 + $0x20] sm:$0xf]
  %v28 = vld [vmem:[%s1 + $0x24] sm:$0xf]
  %v29 = vld [vmem:[%s1 + $0x28] sm:$0xf]
  %v30 = vld [vmem:[%s1 + $0x2c] sm:$0xf]
  %v31 = vld [vmem:[%s1 + $0x30] sm:$0xf]
  %v32 = vld [vmem:[%s1 + $0x34] sm:$0xf]
  %v33 = vld [vmem:[%s1 + $0x38] sm:$0xf]
  %v34 = vld [vmem:[%s1 + $0x3c] sm:$0xf]
  %v35 = vld [vmem:[%s1 + $0x40] sm:$0xf]
  %v36 = vld [vmem:[%s1 + $0x44] sm:$0xf]
  %v37 = vld [vmem:[%s1 + $0x48] sm:$0xf]
  %v38 = vld [vmem:[%s1 + $0x4c] sm:$0xf]
  %v39 = vld [vmem:[%s1 + $0x50] sm:$0xf]
  %v40 = vld [vmem:[%s1 + $0x54] sm:$0xf]
  %v41 = vld [vmem:[%s1 + $0x58] sm:$0xf]
  %v42 = vld [vmem:[%s1 + $0x5c] sm:$0xf]
  %v43 = vld [vmem:[%s1 + $0x60] sm:$0xf]
  %v44 = vld [vmem:[%s1 + $0x64] sm:$0xf]
  %v45 = vld [vmem:[%s1 + $0x68] sm:$0xf]
  %v46 = vld [vmem:[%s1 + $0x6c] sm:$0xf]
  %v47 = vld [vmem:[%s1 + $0x70] sm:$0xf]
  %v48 = vld [vmem:[%s1 + $0x74] sm:$0xf]
  %v49 = vld [vmem:[%s1 + $0x78] sm:$0xf]
  %v50 = vld [vmem:[%s1 + $0x7c] sm:$0xf]
  %v51 = vld [vmem:[%s2] sm:$0x1]
  %v53 = vlaneseq
  %v54 = vshrl.u32 %v53, 7
  %v55 = vsub.s32 0, %v54
  %v56 = vrot.slane %v51, %v55
  %v62 = vunpack.c.l.b16 %v15
  %v63 = vunpack.c.h.b16 %v15
  %v64 = vunpack.c.l.b16 %v16
  %v65 = vunpack.c.h.b16 %v16
  %v66 = vunpack.c.l.b16 %v17
  %v67 = vunpack.c.h.b16 %v17
  %v68 = vunpack.c.l.b16 %v18
  %v69 = vunpack.c.h.b16 %v18
  %v70 = vpack.c.b16 %v64, %v62
  %v71 = vpack.c.b16 %v65, %v63
  %v72 = vpack.c.b16 %v68, %v66
  %v73 = vpack.c.b16 %v69, %v67
  %v110 = vunpack.c.l.b16 %v19
  %v111 = vunpack.c.l.b16 %v20
  %v112 = vunpack.c.l.b16 %v21
  %v113 = vunpack.c.l.b16 %v22
  %v114 = vunpack.c.l.b16 %v23
  %v115 = vunpack.c.l.b16 %v24
  %v116 = vunpack.c.l.b16 %v25
  %v117 = vunpack.c.l.b16 %v26
  %v118 = vunpack.c.l.b16 %v27
  %v119 = vunpack.c.l.b16 %v28
  %v120 = vunpack.c.l.b16 %v29
  %v121 = vunpack.c.l.b16 %v30
  %v122 = vunpack.c.l.b16 %v31
  %v123 = vunpack.c.l.b16 %v32
  %v124 = vunpack.c.l.b16 %v33
  %v125 = vunpack.c.l.b16 %v34
  %v126 = vunpack.c.l.b16 %v35
  %v127 = vunpack.c.l.b16 %v36
  %v128 = vunpack.c.l.b16 %v37
  %v129 = vunpack.c.l.b16 %v38
  %v130 = vunpack.c.l.b16 %v39
  %v131 = vunpack.c.l.b16 %v40
  %v132 = vunpack.c.l.b16 %v41
  %v133 = vunpack.c.l.b16 %v42
  %v134 = vunpack.c.l.b16 %v43
  %v135 = vunpack.c.l.b16 %v44
  %v136 = vunpack.c.l.b16 %v45
  %v137 = vunpack.c.l.b16 %v46
  %v138 = vunpack.c.l.b16 %v47
  %v139 = vunpack.c.l.b16 %v48
  %v140 = vunpack.c.l.b16 %v49
  %v141 = vunpack.c.l.b16 %v50
  %v142 = vpack.c.b16 %v111, %v110
  %v143 = vpack.c.b16 %v113, %v112
  %v144 = vpack.c.b16 %v115, %v114
  %v145 = vpack.c.b16 %v117, %v116
  %v146 = vpack.c.b16 %v119, %v118
  %v147 = vpack.c.b16 %v121, %v120
  %v148 = vpack.c.b16 %v123, %v122
  %v149 = vpack.c.b16 %v125, %v124
  %v150 = vpack.c.b16 %v127, %v126
  %v151 = vpack.c.b16 %v129, %v128
  %v152 = vpack.c.b16 %v131, %v130
  %v153 = vpack.c.b16 %v133, %v132
  %v154 = vpack.c.b16 %v135, %v134
  %v155 = vpack.c.b16 %v137, %v136
  %v156 = vpack.c.b16 %v139, %v138
  %v157 = vpack.c.b16 %v141, %v140
  %174 = vmatprep.subr.bf16.mxu0 0
  %175 = vmatpush1.bf16.msra.mxu0 %v149
  %176 = vmatprep.subr.bf16.mxu0 0
  %177 = vmatpush1.bf16.msra.mxu0 %v148
  %178 = vmatprep.subr.bf16.mxu0 0
  %179 = vmatpush1.bf16.msra.mxu0 %v147
  %180 = vmatprep.subr.bf16.mxu0 0
  %181 = vmatpush1.bf16.msra.mxu0 %v146
  %182 = vmatprep.subr.bf16.mxu0 0
  %183 = vmatpush1.bf16.msra.mxu0 %v145
  %184 = vmatprep.subr.bf16.mxu0 0
  %185 = vmatpush1.bf16.msra.mxu0 %v144
  %186 = vmatprep.subr.bf16.mxu0 0
  %187 = vmatpush1.bf16.msra.mxu0 %v143
  %188 = vmatprep.subr.bf16.mxu0 0
  %189 = vmatpush1.bf16.msra.mxu0 %v142
  %190 = vmatprep.subr.bf16.mxu0 0
  %191 = vmatpush2.bf16.msra.mxu0 %v157
  %192 = vmatprep.subr.bf16.mxu0 0
  %193 = vmatpush2.bf16.msra.mxu0 %v156
  %194 = vmatprep.subr.bf16.mxu0 0
  %195 = vmatpush2.bf16.msra.mxu0 %v155
  %196 = vmatprep.subr.bf16.mxu0 0
  %197 = vmatpush2.bf16.msra.mxu0 %v154
  %198 = vmatprep.subr.bf16.mxu0 0
  %199 = vmatpush2.bf16.msra.mxu0 %v153
  %200 = vmatprep.subr.bf16.mxu0 0
  %201 = vmatpush2.bf16.msra.mxu0 %v152
  %202 = vmatprep.subr.bf16.mxu0 0
  %203 = vmatpush2.bf16.msra.mxu0 %v151
  %204 = vmatprep.subr.bf16.mxu0 0
  %205 = vmatpush2.bf16.msra.mxu0 %v150
  %206 = vmatprep.mubr.bf16.mxu0 %v71
  %207 = vmatmul.mubr.bf16.gmra.mxu0 %v70
  %v208 = vpop.f32.mrf.mxu0
  %v209 = vadd.f32 %v56, %v208
  %v210 = vpop.f32.mrf.mxu0
  %v211 = vpop.f32.mrf.mxu0
  %v212 = vadd.f32 %v56, %v211
  %v213 = vpop.f32.mrf.mxu0
  %214 = vmatprep.mubr.bf16.mxu0 %v73
  %215 = vmatmul.mubr.bf16.gmra.mxu0 %v72
  %v216 = vpop.f32.mrf.mxu0
  %v217 = vadd.f32 %v56, %v216
  %v218 = vpop.f32.mrf.mxu0
  %v219 = vpop.f32.mrf.mxu0
  %v220 = vadd.f32 %v56, %v219
  %v221 = vpop.f32.mrf.mxu0
  %222 = vdwg.mxu0
  %v223 = vmax.f32 %v209, 0.0
  %v224 = vmax.f32 %v212, 0.0
  %v225 = vmax.f32 %v217, 0.0
  %v226 = vmax.f32 %v220, 0.0
  %v227 = vpack.c.bf16 %v224, %v223
  %v228 = vpack.c.bf16 %v226, %v225
  %v231 = vunpack.c.l.b16 %v227
  %v232 = vunpack.c.h.b16 %v227
  %v233 = vunpack.c.l.b16 %v228
  %v234 = vunpack.c.h.b16 %v228
  %v235 = vpack.c.b16 %v231, %v231
  %v236 = vpack.c.b16 %v232, %v232
  %v237 = vpack.c.b16 %v233, %v233
  %v238 = vpack.c.b16 %v234, %v234
  %243 = vst [vmem:[%s3] sm:$0xf] %v235
  %244 = vst [vmem:[%s3 + $0x4] sm:$0xf] %v236
  %245 = vst [vmem:[%s3 + $0x8] sm:$0xf] %v237
  %246 = vst [vmem:[%s3 + $0xc] sm:$0xf] %v238
  // Predicated region
  $region14: #{flexible_image_encoder.28} parent=0 // pred_check
    _
  $region15: #{flexible_image_encoder.28} parent=0 // pred_check_branch
    %248 = sbr.rel (0) target = $region17
  $region16: #{flexible_image_encoder.28} parent=0 // pred_region
    _
  $region17: #{flexible_image_encoder.28} parent=0 // pred_fallthru
    _
  // Predicated region
  $region18: #{flexible_image_encoder.28} parent=0 // pred_check
    _
  $region19: #{flexible_image_encoder.28} parent=0 // pred_check_branch
    %250 = sbr.rel (0) target = $region21
  $region20: #{flexible_image_encoder.28} parent=0 // pred_region
    _
  $region21: #{flexible_image_encoder.28} parent=0 // pred_fallthru
    _

// kernel: flexible_image_encoder.32
$region0: #{flexible_image_encoder.32}
  #allocation0 [shape = 'u32[]', space=smem, size = 0x4, offset = 0x4, fixed_abs, tag = 'smem constant byte address 0x4 - core index']
  #allocation1 [shape = 'u32[144,128]{1,0:T(1,128)}', space=vmem, size = 0x12000, scoped, tag = 'internal scratch']
  %s0 = inlined_call_operand.vmem [shape: bf16[32,384], index: 0, kind: input, shape index: {}]
  %s1 = inlined_call_operand.vmem [shape: bf16[384,256], index: 1, kind: input, shape index: {}]
  %s2 = inlined_call_operand.vmem [shape: f32[1,256], index: 2, kind: input, shape index: {}]
  %s3 = inlined_call_operand.vmem [shape: bf16[32,256], index: 3, kind: output, shape index: {}]
  %s4 = sld [smem:[#allocation0]]
  $region22: #{flexible_image_encoder.32} parent=0
    _
  %s6 = ssub.s32 1, %s4
  %s7 = scalar_select 0, %s6, %s4
  // Predicated region
  $region2: #{flexible_image_encoder.32} parent=0 // pred_check
    _
  $region3: #{flexible_image_encoder.32} parent=0 // pred_check_branch
    %9 = sbr.rel (0) target = $region5
  $region4: #{flexible_image_encoder.32} parent=0 // pred_region
    _
  $region5: #{flexible_image_encoder.32} parent=0 // pred_fallthru
    _
  // Predicated region
  $region6: #{flexible_image_encoder.32} parent=0 // pred_check
    _
  $region7: #{flexible_image_encoder.32} parent=0 // pred_check_branch
    %11 = sbr.rel (0) target = $region9
  $region8: #{flexible_image_encoder.32} parent=0 // pred_region
    _
  $region9: #{flexible_image_encoder.32} parent=0 // pred_fallthru
    _
  // Predicated region
  $region10: #{flexible_image_encoder.32} parent=0 // pred_check
    _
  $region11: #{flexible_image_encoder.32} parent=0 // pred_check_branch
    %13 = sbr.rel (0) target = $region13
  $region12: #{flexible_image_encoder.32} parent=0 // pred_region
    _
  $region13: #{flexible_image_encoder.32} parent=0 // pred_fallthru
    _
  %v15 = vld [vmem:[%s0] sm:$0xff]
  %v16 = vld [vmem:[%s0 + $0x8] sm:$0xf]
  %v17 = vld [vmem:[%s0 + $0xc] sm:$0xff]
  %v18 = vld [vmem:[%s0 + $0x14] sm:$0xf]
  %v19 = vld [vmem:[%s0 + $0x18] sm:$0xff]
  %v20 = vld [vmem:[%s0 + $0x20] sm:$0xf]
  %v21 = vld [vmem:[%s0 + $0x24] sm:$0xff]
  %v22 = vld [vmem:[%s0 + $0x2c] sm:$0xf]
  %v23 = vld [vmem:[%s1] sm:$0xff]
  %v24 = vld [vmem:[%s1 + $0x8] sm:$0xff]
  %v25 = vld [vmem:[%s1 + $0x10] sm:$0xff]
  %v26 = vld [vmem:[%s1 + $0x18] sm:$0xff]
  %v27 = vld [vmem:[%s1 + $0x20] sm:$0xff]
  %v28 = vld [vmem:[%s1 + $0x28] sm:$0xff]
  %v29 = vld [vmem:[%s1 + $0x30] sm:$0xff]
  %v30 = vld [vmem:[%s1 + $0x38] sm:$0xff]
  %v31 = vld [vmem:[%s1 + $0x40] sm:$0xff]
  %v32 = vld [vmem:[%s1 + $0x48] sm:$0xff]
  %v33 = vld [vmem:[%s1 + $0x50] sm:$0xff]
  %v34 = vld [vmem:[%s1 + $0x58] sm:$0xff]
  %v35 = vld [vmem:[%s1 + $0x60] sm:$0xff]
  %v36 = vld [vmem:[%s1 + $0x68] sm:$0xff]
  %v37 = vld [vmem:[%s1 + $0x70] sm:$0xff]
  %v38 = vld [vmem:[%s1 + $0x78] sm:$0xff]
  %v39 = vld [vmem:[%s1 + $0x80] sm:$0xff]
  %v40 = vld [vmem:[%s1 + $0x88] sm:$0xff]
  %v41 = vld [vmem:[%s1 + $0x90] sm:$0xff]
  %v42 = vld [vmem:[%s1 + $0x98] sm:$0xff]
  %v43 = vld [vmem:[%s1 + $0xa0] sm:$0xff]
  %v44 = vld [vmem:[%s1 + $0xa8] sm:$0xff]
  %v45 = vld [vmem:[%s1 + $0xb0] sm:$0xff]
  %v46 = vld [vmem:[%s1 + $0xb8] sm:$0xff]
  %v47 = vld [vmem:[%s1 + $0xc0] sm:$0xff]
  %v48 = vld [vmem:[%s1 + $0xc8] sm:$0xff]
  %v49 = vld [vmem:[%s1 + $0xd0] sm:$0xff]
  %v50 = vld [vmem:[%s1 + $0xd8] sm:$0xff]
  %v51 = vld [vmem:[%s1 + $0xe0] sm:$0xff]
  %v52 = vld [vmem:[%s1 + $0xe8] sm:$0xff]
  %v53 = vld [vmem:[%s1 + $0xf0] sm:$0xff]
  %v54 = vld [vmem:[%s1 + $0xf8] sm:$0xff]
  %v55 = vld [vmem:[%s1 + $0x100] sm:$0xff]
  %v56 = vld [vmem:[%s1 + $0x108] sm:$0xff]
  %v57 = vld [vmem:[%s1 + $0x110] sm:$0xff]
  %v58 = vld [vmem:[%s1 + $0x118] sm:$0xff]
  %v59 = vld [vmem:[%s1 + $0x120] sm:$0xff]
  %v60 = vld [vmem:[%s1 + $0x128] sm:$0xff]
  %v61 = vld [vmem:[%s1 + $0x130] sm:$0xff]
  %v62 = vld [vmem:[%s1 + $0x138] sm:$0xff]
  %v63 = vld [vmem:[%s1 + $0x140] sm:$0xff]
  %v64 = vld [vmem:[%s1 + $0x148] sm:$0xff]
  %v65 = vld [vmem:[%s1 + $0x150] sm:$0xff]
  %v66 = vld [vmem:[%s1 + $0x158] sm:$0xff]
  %v67 = vld [vmem:[%s1 + $0x160] sm:$0xff]
  %v68 = vld [vmem:[%s1 + $0x168] sm:$0xff]
  %v69 = vld [vmem:[%s1 + $0x170] sm:$0xff]
  %v70 = vld [vmem:[%s1 + $0x178] sm:$0xff]
  %v71 = vld [vmem:[%s2] sm:$0x3]
  %v73 = vlaneseq
  %v74 = vshrl.u32 %v73, 7
  %v75 = vsub.s32 0, %v74
  %v76 = vrot.slane %v71, %v75
  %v77 = vlaneseq
  %v78 = vshrl.u32 %v77, 7
  %v79 = vsub.s32 1, %v78
  %v80 = vrot.slane %v71, %v79
  %v91 = vunpack.c.l.b16 %v15
  %v92 = vunpack.c.h.b16 %v15
  %v93 = vunpack.c.l.b16 %v16
  %v94 = vunpack.c.l.b16 %v17
  %v95 = vunpack.c.h.b16 %v17
  %v96 = vunpack.c.l.b16 %v18
  %v97 = vunpack.c.l.b16 %v19
  %v98 = vunpack.c.h.b16 %v19
  %v99 = vunpack.c.l.b16 %v20
  %v100 = vunpack.c.l.b16 %v21
  %v101 = vunpack.c.h.b16 %v21
  %v102 = vunpack.c.l.b16 %v22
  %v103 = vpack.c.b16 %v94, %v91
  %v104 = vpack.c.b16 %v95, %v92
  %v105 = vpack.c.b16 %v96, %v93
  %v106 = vpack.c.b16 %v100, %v97
  %v107 = vpack.c.b16 %v101, %v98
  %v108 = vpack.c.b16 %v102, %v99
  %v163 = vunpack.c.l.b16 %v23
  %v164 = vunpack.c.h.b16 %v23
  %v165 = vunpack.c.l.b16 %v24
  %v166 = vunpack.c.h.b16 %v24
  %v167 = vunpack.c.l.b16 %v25
  %v168 = vunpack.c.h.b16 %v25
  %v169 = vunpack.c.l.b16 %v26
  %v170 = vunpack.c.h.b16 %v26
  %v171 = vunpack.c.l.b16 %v27
  %v172 = vunpack.c.h.b16 %v27
  %v173 = vunpack.c.l.b16 %v28
  %v174 = vunpack.c.h.b16 %v28
  %v175 = vunpack.c.l.b16 %v29
  %v176 = vunpack.c.h.b16 %v29
  %v177 = vunpack.c.l.b16 %v30
  %v178 = vunpack.c.h.b16 %v30
  %v179 = vunpack.c.l.b16 %v31
  %v180 = vunpack.c.h.b16 %v31
  %v181 = vunpack.c.l.b16 %v32
  %v182 = vunpack.c.h.b16 %v32
  %v183 = vunpack.c.l.b16 %v33
  %v184 = vunpack.c.h.b16 %v33
  %v185 = vunpack.c.l.b16 %v34
  %v186 = vunpack.c.h.b16 %v34
  %v187 = vunpack.c.l.b16 %v35
  %v188 = vunpack.c.h.b16 %v35
  %v189 = vunpack.c.l.b16 %v36
  %v190 = vunpack.c.h.b16 %v36
  %v191 = vunpack.c.l.b16 %v37
  %v192 = vunpack.c.h.b16 %v37
  %v193 = vunpack.c.l.b16 %v38
  %v194 = vunpack.c.h.b16 %v38
  %v195 = vunpack.c.l.b16 %v39
  %v196 = vunpack.c.h.b16 %v39
  %v197 = vunpack.c.l.b16 %v40
  %v198 = vunpack.c.h.b16 %v40
  %v199 = vunpack.c.l.b16 %v41
  %v200 = vunpack.c.h.b16 %v41
  %v201 = vunpack.c.l.b16 %v42
  %v202 = vunpack.c.h.b16 %v42
  %v203 = vunpack.c.l.b16 %v43
  %v204 = vunpack.c.h.b16 %v43
  %v205 = vunpack.c.l.b16 %v44
  %v206 = vunpack.c.h.b16 %v44
  %v207 = vunpack.c.l.b16 %v45
  %v208 = vunpack.c.h.b16 %v45
  %v209 = vunpack.c.l.b16 %v46
  %v210 = vunpack.c.h.b16 %v46
  %v211 = vunpack.c.l.b16 %v47
  %v212 = vunpack.c.h.b16 %v47
  %v213 = vunpack.c.l.b16 %v48
  %v214 = vunpack.c.h.b16 %v48
  %v215 = vunpack.c.l.b16 %v49
  %v216 = vunpack.c.h.b16 %v49
  %v217 = vunpack.c.l.b16 %v50
  %v218 = vunpack.c.h.b16 %v50
  %v219 = vunpack.c.l.b16 %v51
  %v220 = vunpack.c.h.b16 %v51
  %v221 = vunpack.c.l.b16 %v52
  %v222 = vunpack.c.h.b16 %v52
  %v223 = vunpack.c.l.b16 %v53
  %v224 = vunpack.c.h.b16 %v53
  %v225 = vunpack.c.l.b16 %v54
  %v226 = vunpack.c.h.b16 %v54
  %v227 = vunpack.c.l.b16 %v55
  %v228 = vunpack.c.h.b16 %v55
  %v229 = vunpack.c.l.b16 %v56
  %v230 = vunpack.c.h.b16 %v56
  %v231 = vunpack.c.l.b16 %v57
  %v232 = vunpack.c.h.b16 %v57
  %v233 = vunpack.c.l.b16 %v58
  %v234 = vunpack.c.h.b16 %v58
  %v235 = vunpack.c.l.b16 %v59
  %v236 = vunpack.c.h.b16 %v59
  %v237 = vunpack.c.l.b16 %v60
  %v238 = vunpack.c.h.b16 %v60
  %v239 = vunpack.c.l.b16 %v61
  %v240 = vunpack.c.h.b16 %v61
  %v241 = vunpack.c.l.b16 %v62
  %v242 = vunpack.c.h.b16 %v62
  %v243 = vunpack.c.l.b16 %v63
  %v244 = vunpack.c.h.b16 %v63
  %v245 = vunpack.c.l.b16 %v64
  %v246 = vunpack.c.h.b16 %v64
  %v247 = vunpack.c.l.b16 %v65
  %v248 = vunpack.c.h.b16 %v65
  %v249 = vunpack.c.l.b16 %v66
  %v250 = vunpack.c.h.b16 %v66
  %v251 = vunpack.c.l.b16 %v67
  %v252 = vunpack.c.h.b16 %v67
  %v253 = vunpack.c.l.b16 %v68
  %v254 = vunpack.c.h.b16 %v68
  %v255 = vunpack.c.l.b16 %v69
  %v256 = vunpack.c.h.b16 %v69
  %v257 = vunpack.c.l.b16 %v70
  %v258 = vunpack.c.h.b16 %v70
  %v259 = vpack.c.b16 %v165, %v163
  %v260 = vpack.c.b16 %v166, %v164
  %v261 = vpack.c.b16 %v169, %v167
  %v262 = vpack.c.b16 %v170, %v168
  %v263 = vpack.c.b16 %v173, %v171
  %v264 = vpack.c.b16 %v174, %v172
  %v265 = vpack.c.b16 %v177, %v175
  %v266 = vpack.c.b16 %v178, %v176
  %v267 = vpack.c.b16 %v181, %v179
  %v268 = vpack.c.b16 %v182, %v180
  %v269 = vpack.c.b16 %v185, %v183
  %v270 = vpack.c.b16 %v186, %v184
  %v271 = vpack.c.b16 %v189, %v187
  %v272 = vpack.c.b16 %v190, %v188
  %v273 = vpack.c.b16 %v193, %v191
  %v274 = vpack.c.b16 %v194, %v192
  %v275 = vpack.c.b16 %v197, %v195
  %v276 = vpack.c.b16 %v198, %v196
  %v277 = vpack.c.b16 %v201, %v199
  %v278 = vpack.c.b16 %v202, %v200
  %v279 = vpack.c.b16 %v205, %v203
  %v280 = vpack.c.b16 %v206, %v204
  %v281 = vpack.c.b16 %v209, %v207
  %v282 = vpack.c.b16 %v210, %v208
  %v283 = vpack.c.b16 %v213, %v211
  %v284 = vpack.c.b16 %v214, %v212
  %v285 = vpack.c.b16 %v217, %v215
  %v286 = vpack.c.b16 %v218, %v216
  %v287 = vpack.c.b16 %v221, %v219
  %v288 = vpack.c.b16 %v222, %v220
  %v289 = vpack.c.b16 %v225, %v223
  %v290 = vpack.c.b16 %v226, %v224
  %v291 = vpack.c.b16 %v229, %v227
  %v292 = vpack.c.b16 %v230, %v228
  %v293 = vpack.c.b16 %v233, %v231
  %v294 = vpack.c.b16 %v234, %v232
  %v295 = vpack.c.b16 %v237, %v235
  %v296 = vpack.c.b16 %v238, %v236
  %v297 = vpack.c.b16 %v241, %v239
  %v298 = vpack.c.b16 %v242, %v240
  %v299 = vpack.c.b16 %v245, %v243
  %v300 = vpack.c.b16 %v246, %v244
  %v301 = vpack.c.b16 %v249, %v247
  %v302 = vpack.c.b16 %v250, %v248
  %v303 = vpack.c.b16 %v253, %v251
  %v304 = vpack.c.b16 %v254, %v252
  %v305 = vpack.c.b16 %v257, %v255
  %v306 = vpack.c.b16 %v258, %v256
  %355 = vmatprep.subr.bf16.mxu0 %v274
  %356 = vmatpush1.bf16.msra.mxu0 %v273
  %357 = vmatprep.subr.bf16.mxu0 %v272
  %358 = vmatpush1.bf16.msra.mxu0 %v271
  %359 = vmatprep.subr.bf16.mxu0 %v270
  %360 = vmatpush1.bf16.msra.mxu0 %v269
  %361 = vmatprep.subr.bf16.mxu0 %v268
  %362 = vmatpush1.bf16.msra.mxu0 %v267
  %363 = vmatprep.subr.bf16.mxu0 %v266
  %364 = vmatpush1.bf16.msra.mxu0 %v265
  %365 = vmatprep.subr.bf16.mxu0 %v264
  %366 = vmatpush1.bf16.msra.mxu0 %v263
  %367 = vmatprep.subr.bf16.mxu0 %v262
  %368 = vmatpush1.bf16.msra.mxu0 %v261
  %369 = vmatprep.subr.bf16.mxu0 %v260
  %370 = vmatpush1.bf16.msra.mxu0 %v259
  %371 = vmatprep.subr.bf16.mxu0 %v290
  %372 = vmatpush2.bf16.msra.mxu0 %v289
  %373 = vmatprep.subr.bf16.mxu0 %v288
  %374 = vmatpush2.bf16.msra.mxu0 %v287
  %375 = vmatprep.subr.bf16.mxu0 %v286
  %376 = vmatpush2.bf16.msra.mxu0 %v285
  %377 = vmatprep.subr.bf16.mxu0 %v284
  %378 = vmatpush2.bf16.msra.mxu0 %v283
  %379 = vmatprep.subr.bf16.mxu0 %v282
  %380 = vmatpush2.bf16.msra.mxu0 %v281
  %381 = vmatprep.subr.bf16.mxu0 %v280
  %382 = vmatpush2.bf16.msra.mxu0 %v279
  %383 = vmatprep.subr.bf16.mxu0 %v278
  %384 = vmatpush2.bf16.msra.mxu0 %v277
  %385 = vmatprep.subr.bf16.mxu0 %v276
  %386 = vmatpush2.bf16.msra.mxu0 %v275
  %387 = vmatprep.mubr.bf16.mxu0 %v104
  %388 = vmatmul.mubr.bf16.gmra.mxu0 %v103
  %v389 = vpop.f32.mrf.mxu0
  %v390 = vadd.f32 %v76, %v389
  %v391 = vpop.f32.mrf.mxu0
  %v392 = vadd.f32 %v80, %v391
  %v393 = vpop.f32.mrf.mxu0
  %v394 = vadd.f32 %v76, %v393
  %v395 = vpop.f32.mrf.mxu0
  %v396 = vadd.f32 %v80, %v395
  %397 = vmatprep.mubr.bf16.mxu0 %v107
  %398 = vmatmul.mubr.bf16.gmra.mxu0 %v106
  %v399 = vpop.f32.mrf.mxu0
  %v400 = vadd.f32 %v76, %v399
  %v401 = vpop.f32.mrf.mxu0
  %v402 = vadd.f32 %v80, %v401
  %v403 = vpop.f32.mrf.mxu0
  %v404 = vadd.f32 %v76, %v403
  %v405 = vpop.f32.mrf.mxu0
  %v406 = vadd.f32 %v80, %v405
  %407 = vdwg.mxu0
  %408 = vmatprep.subr.bf16.mxu0 %v306
  %409 = vmatpush1.bf16.msra.mxu0 %v305
  %410 = vmatprep.subr.bf16.mxu0 %v304
  %411 = vmatpush1.bf16.msra.mxu0 %v303
  %412 = vmatprep.subr.bf16.mxu0 %v302
  %413 = vmatpush1.bf16.msra.mxu0 %v301
  %414 = vmatprep.subr.bf16.mxu0 %v300
  %415 = vmatpush1.bf16.msra.mxu0 %v299
  %416 = vmatprep.subr.bf16.mxu0 %v298
  %417 = vmatpush1.bf16.msra.mxu0 %v297
  %418 = vmatprep.subr.bf16.mxu0 %v296
  %419 = vmatpush1.bf16.msra.mxu0 %v295
  %420 = vmatprep.subr.bf16.mxu0 %v294
  %421 = vmatpush1.bf16.msra.mxu0 %v293
  %422 = vmatprep.subr.bf16.mxu0 %v292
  %423 = vmatpush1.bf16.msra.mxu0 %v291
  %424 = vmatprep.subr.bf16.mxu0 0
  %425 = vmatpush2.bf16.msra.mxu0 0
  %426 = vmatprep.subr.bf16.mxu0 0
  %427 = vmatpush2.bf16.msra.mxu0 0
  %428 = vmatprep.subr.bf16.mxu0 0
  %429 = vmatpush2.bf16.msra.mxu0 0
  %430 = vmatprep.subr.bf16.mxu0 0
  %431 = vmatpush2.bf16.msra.mxu0 0
  %432 = vmatprep.subr.bf16.mxu0 0
  %433 = vmatpush2.bf16.msra.mxu0 0
  %434 = vmatprep.subr.bf16.mxu0 0
  %435 = vmatpush2.bf16.msra.mxu0 0
  %436 = vmatprep.subr.bf16.mxu0 0
  %437 = vmatpush2.bf16.msra.mxu0 0
  %438 = vmatprep.subr.bf16.mxu0 0
  %439 = vmatpush2.bf16.msra.mxu0 0
  %440 = vmatprep.mubr.bf16.mxu0 0
  %441 = vmatmul.mubr.bf16.gmra.mxu0 %v105
  %v442 = vpop.f32.mrf.mxu0
  %v443 = vadd.f32 %v390, %v442
  %v444 = vpop.f32.mrf.mxu0
  %v445 = vadd.f32 %v392, %v444
  %v446 = vpop.f32.mrf.mxu0
  %v447 = vadd.f32 %v394, %v446
  %v448 = vpop.f32.mrf.mxu0
  %v449 = vadd.f32 %v396, %v448
  %450 = vmatprep.mubr.bf16.mxu0 0
  %451 = vmatmul.mubr.bf16.gmra.mxu0 %v108
  %v452 = vpop.f32.mrf.mxu0
  %v453 = vadd.f32 %v400, %v452
  %v454 = vpop.f32.mrf.mxu0
  %v455 = vadd.f32 %v402, %v454
  %v456 = vpop.f32.mrf.mxu0
  %v457 = vadd.f32 %v404, %v456
  %v458 = vpop.f32.mrf.mxu0
  %v459 = vadd.f32 %v406, %v458
  %460 = vdwg.mxu0
  %v461 = vmax.f32 %v443, 0.0
  %v462 = vmax.f32 %v445, 0.0
  %v463 = vmax.f32 %v447, 0.0
  %v464 = vmax.f32 %v449, 0.0
  %v465 = vmax.f32 %v453, 0.0
  %v466 = vmax.f32 %v455, 0.0
  %v467 = vmax.f32 %v457, 0.0
  %v468 = vmax.f32 %v459, 0.0
  %v469 = vpack.c.bf16 %v463, %v461
  %v470 = vpack.c.bf16 %v464, %v462
  %v471 = vpack.c.bf16 %v467, %v465
  %v472 = vpack.c.bf16 %v468, %v466
  %v477 = vunpack.c.l.b16 %v469
  %v478 = vunpack.c.l.b16 %v470
  %v479 = vunpack.c.h.b16 %v469
  %v480 = vunpack.c.h.b16 %v470
  %v481 = vunpack.c.l.b16 %v471
  %v482 = vunpack.c.l.b16 %v472
  %v483 = vunpack.c.h.b16 %v471
  %v484 = vunpack.c.h.b16 %v472
  %v485 = vpack.c.b16 %v478, %v477
  %v486 = vpack.c.b16 %v480, %v479
  %v487 = vpack.c.b16 %v482, %v481
  %v488 = vpack.c.b16 %v484, %v483
  %493 = vst [vmem:[%s3] sm:$0xff] %v485
  %494 = vst [vmem:[%s3 + $0x8] sm:$0xff] %v486
  %495 = vst [vmem:[%s3 + $0x10] sm:$0xff] %v487
  %496 = vst [vmem:[%s3 + $0x18] sm:$0xff] %v488
  // Predicated region
  $region14: #{flexible_image_encoder.32} parent=0 // pred_check
    _
  $region15: #{flexible_image_encoder.32} parent=0 // pred_check_branch
    %498 = sbr.rel (0) target = $region17
  $region16: #{flexible_image_encoder.32} parent=0 // pred_region
    _
  $region17: #{flexible_image_encoder.32} parent=0 // pred_fallthru
    _
  // Predicated region
  $region18: #{flexible_image_encoder.32} parent=0 // pred_check
    _
  $region19: #{flexible_image_encoder.32} parent=0 // pred_check_branch
    %500 = sbr.rel (0) target = $region21
  $region20: #{flexible_image_encoder.32} parent=0 // pred_region
    _
  $region21: #{flexible_image_encoder.32} parent=0 // pred_fallthru
    _

// kernel: flexible_image_encoder.33
$region0: #{flexible_image_encoder.33}
  #allocation0 [shape = 'u32[]', space=smem, size = 0x4, offset = 0x4, fixed_abs, tag = 'smem constant byte address 0x4 - core index']
  #allocation1 [shape = 'u32[144,128]{1,0:T(1,128)}', space=vmem, size = 0x12000, scoped, tag = 'internal scratch']
  %s0 = inlined_call_operand.vmem [shape: bf16[3,16,256], index: 0, kind: input, shape index: {}]
  %s1 = inlined_call_operand.vmem [shape: bf16[16,256], index: 1, kind: output, shape index: {}]
  %s2 = sld [smem:[#allocation0]]
  $region14: #{flexible_image_encoder.33} parent=0
    _
  %s4 = ssub.s32 1, %s2
  %s5 = scalar_select 0, %s4, %s2
  // Predicated region
  $region2: #{flexible_image_encoder.33} parent=0 // pred_check
    _
  $region3: #{flexible_image_encoder.33} parent=0 // pred_check_branch
    %7 = sbr.rel (0) target = $region5
  $region4: #{flexible_image_encoder.33} parent=0 // pred_region
    _
  $region5: #{flexible_image_encoder.33} parent=0 // pred_fallthru
    _
  %v8 = vld [vmem:[%s0] sm:$0xff]
  %v9 = vld [vmem:[%s0 + $0x8] sm:$0xff]
  %s10 = scalar_lea.vmem %s0, 16
  %v11 = vld [vmem:[%s10] sm:$0xff]
  %v12 = vld [vmem:[%s10 + $0x8] sm:$0xff]
  %v13 = vmax.bf16 %v8, %v11
  %v14 = vmax.bf16 %v9, %v12
  %s15 = scalar_lea.vmem %s0, 32
  %v16 = vld [vmem:[%s15] sm:$0xff]
  %v17 = vld [vmem:[%s15 + $0x8] sm:$0xff]
  %v18 = vmax.bf16 %v13, %v16
  %v19 = vmax.bf16 %v14, %v17
  %20 = vst [vmem:[%s1] sm:$0xff] %v18
  %21 = vst [vmem:[%s1 + $0x8] sm:$0xff] %v19
  // Predicated region
  $region6: #{flexible_image_encoder.33} parent=0 // pred_check
    _
  $region7: #{flexible_image_encoder.33} parent=0 // pred_check_branch
    %23 = sbr.rel (0) target = $region9
  $region8: #{flexible_image_encoder.33} parent=0 // pred_region
    _
  $region9: #{flexible_image_encoder.33} parent=0 // pred_fallthru
    _
  // Predicated region
  $region10: #{flexible_image_encoder.33} parent=0 // pred_check
    _
  $region11: #{flexible_image_encoder.33} parent=0 // pred_check_branch
    %25 = sbr.rel (0) target = $region13
  $region12: #{flexible_image_encoder.33} parent=0 // pred_region
    _
  $region13: #{flexible_image_encoder.33} parent=0 // pred_fallthru
    _

// kernel: flexible_image_encoder.35
$region0: #{flexible_image_encoder.35}
  #allocation0 [shape = 'u32[]', space=smem, size = 0x4, offset = 0x4, fixed_abs, tag = 'smem constant byte address 0x4 - core index']
  #allocation1 [shape = 'u32[144,128]{1,0:T(1,128)}', space=vmem, size = 0x12000, scoped, tag = 'internal scratch']
  %s0 = inlined_call_operand.vmem [shape: bf16[16,256], index: 0, kind: input, shape index: {}]
  %s1 = inlined_call_operand.vmem [shape: bf16[256,128], index: 1, kind: input, shape index: {}]
  %s2 = inlined_call_operand.vmem [shape: f32[1,128], index: 2, kind: input, shape index: {}]
  %s3 = inlined_call_operand.vmem [shape: bf16[16,128], index: 3, kind: output, shape index: {}]
  %s4 = sld [smem:[#allocation0]]
  $region22: #{flexible_image_encoder.35} parent=0
    _
  %s6 = ssub.s32 1, %s4
  %s7 = scalar_select 0, %s6, %s4
  // Predicated region
  $region2: #{flexible_image_encoder.35} parent=0 // pred_check
    _
  $region3: #{flexible_image_encoder.35} parent=0 // pred_check_branch
    %9 = sbr.rel (0) target = $region5
  $region4: #{flexible_image_encoder.35} parent=0 // pred_region
    _
  $region5: #{flexible_image_encoder.35} parent=0 // pred_fallthru
    _
  // Predicated region
  $region6: #{flexible_image_encoder.35} parent=0 // pred_check
    _
  $region7: #{flexible_image_encoder.35} parent=0 // pred_check_branch
    %11 = sbr.rel (0) target = $region9
  $region8: #{flexible_image_encoder.35} parent=0 // pred_region
    _
  $region9: #{flexible_image_encoder.35} parent=0 // pred_fallthru
    _
  // Predicated region
  $region10: #{flexible_image_encoder.35} parent=0 // pred_check
    _
  $region11: #{flexible_image_encoder.35} parent=0 // pred_check_branch
    %13 = sbr.rel (0) target = $region13
  $region12: #{flexible_image_encoder.35} parent=0 // pred_region
    _
  $region13: #{flexible_image_encoder.35} parent=0 // pred_fallthru
    _
  %v15 = vld [vmem:[%s0] sm:$0xff]
  %v16 = vld [vmem:[%s0 + $0x8] sm:$0xff]
  %v17 = vld [vmem:[%s1] sm:$0xf]
  %v18 = vld [vmem:[%s1 + $0x4] sm:$0xf]
  %v19 = vld [vmem:[%s1 + $0x8] sm:$0xf]
  %v20 = vld [vmem:[%s1 + $0xc] sm:$0xf]
  %v21 = vld [vmem:[%s1 + $0x10] sm:$0xf]
  %v22 = vld [vmem:[%s1 + $0x14] sm:$0xf]
  %v23 = vld [vmem:[%s1 + $0x18] sm:$0xf]
  %v24 = vld [vmem:[%s1 + $0x1c] sm:$0xf]
  %v25 = vld [vmem:[%s1 + $0x20] sm:$0xf]
  %v26 = vld [vmem:[%s1 + $0x24] sm:$0xf]
  %v27 = vld [vmem:[%s1 + $0x28] sm:$0xf]
  %v28 = vld [vmem:[%s1 + $0x2c] sm:$0xf]
  %v29 = vld [vmem:[%s1 + $0x30] sm:$0xf]
  %v30 = vld [vmem:[%s1 + $0x34] sm:$0xf]
  %v31 = vld [vmem:[%s1 + $0x38] sm:$0xf]
  %v32 = vld [vmem:[%s1 + $0x3c] sm:$0xf]
  %v33 = vld [vmem:[%s1 + $0x40] sm:$0xf]
  %v34 = vld [vmem:[%s1 + $0x44] sm:$0xf]
  %v35 = vld [vmem:[%s1 + $0x48] sm:$0xf]
  %v36 = vld [vmem:[%s1 + $0x4c] sm:$0xf]
  %v37 = vld [vmem:[%s1 + $0x50] sm:$0xf]
  %v38 = vld [vmem:[%s1 + $0x54] sm:$0xf]
  %v39 = vld [vmem:[%s1 + $0x58] sm:$0xf]
  %v40 = vld [vmem:[%s1 + $0x5c] sm:$0xf]
  %v41 = vld [vmem:[%s1 + $0x60] sm:$0xf]
  %v42 = vld [vmem:[%s1 + $0x64] sm:$0xf]
  %v43 = vld [vmem:[%s1 + $0x68] sm:$0xf]
  %v44 = vld [vmem:[%s1 + $0x6c] sm:$0xf]
  %v45 = vld [vmem:[%s1 + $0x70] sm:$0xf]
  %v46 = vld [vmem:[%s1 + $0x74] sm:$0xf]
  %v47 = vld [vmem:[%s1 + $0x78] sm:$0xf]
  %v48 = vld [vmem:[%s1 + $0x7c] sm:$0xf]
  %v49 = vld [vmem:[%s2] sm:$0x1]
  %v51 = vlaneseq
  %v52 = vshrl.u32 %v51, 7
  %v53 = vsub.s32 0, %v52
  %v54 = vrot.slane %v49, %v53
  %v58 = vunpack.c.l.b16 %v15
  %v59 = vunpack.c.h.b16 %v15
  %v60 = vunpack.c.l.b16 %v16
  %v61 = vunpack.c.h.b16 %v16
  %v62 = vpack.c.b16 %v60, %v58
  %v63 = vpack.c.b16 %v61, %v59
  %v98 = vunpack.c.l.b16 %v17
  %v99 = vunpack.c.l.b16 %v18
  %v100 = vunpack.c.l.b16 %v19
  %v101 = vunpack.c.l.b16 %v20
  %v102 = vunpack.c.l.b16 %v21
  %v103 = vunpack.c.l.b16 %v22
  %v104 = vunpack.c.l.b16 %v23
  %v105 = vunpack.c.l.b16 %v24
  %v106 = vunpack.c.l.b16 %v25
  %v107 = vunpack.c.l.b16 %v26
  %v108 = vunpack.c.l.b16 %v27
  %v109 = vunpack.c.l.b16 %v28
  %v110 = vunpack.c.l.b16 %v29
  %v111 = vunpack.c.l.b16 %v30
  %v112 = vunpack.c.l.b16 %v31
  %v113 = vunpack.c.l.b16 %v32
  %v114 = vunpack.c.l.b16 %v33
  %v115 = vunpack.c.l.b16 %v34
  %v116 = vunpack.c.l.b16 %v35
  %v117 = vunpack.c.l.b16 %v36
  %v118 = vunpack.c.l.b16 %v37
  %v119 = vunpack.c.l.b16 %v38
  %v120 = vunpack.c.l.b16 %v39
  %v121 = vunpack.c.l.b16 %v40
  %v122 = vunpack.c.l.b16 %v41
  %v123 = vunpack.c.l.b16 %v42
  %v124 = vunpack.c.l.b16 %v43
  %v125 = vunpack.c.l.b16 %v44
  %v126 = vunpack.c.l.b16 %v45
  %v127 = vunpack.c.l.b16 %v46
  %v128 = vunpack.c.l.b16 %v47
  %v129 = vunpack.c.l.b16 %v48
  %v130 = vpack.c.b16 %v99, %v98
  %v131 = vpack.c.b16 %v101, %v100
  %v132 = vpack.c.b16 %v103, %v102
  %v133 = vpack.c.b16 %v105, %v104
  %v134 = vpack.c.b16 %v107, %v106
  %v135 = vpack.c.b16 %v109, %v108
  %v136 = vpack.c.b16 %v111, %v110
  %v137 = vpack.c.b16 %v113, %v112
  %v138 = vpack.c.b16 %v115, %v114
  %v139 = vpack.c.b16 %v117, %v116
  %v140 = vpack.c.b16 %v119, %v118
  %v141 = vpack.c.b16 %v121, %v120
  %v142 = vpack.c.b16 %v123, %v122
  %v143 = vpack.c.b16 %v125, %v124
  %v144 = vpack.c.b16 %v127, %v126
  %v145 = vpack.c.b16 %v129, %v128
  %162 = vmatprep.subr.bf16.mxu0 0
  %163 = vmatpush1.bf16.msra.mxu0 %v137
  %164 = vmatprep.subr.bf16.mxu0 0
  %165 = vmatpush1.bf16.msra.mxu0 %v136
  %166 = vmatprep.subr.bf16.mxu0 0
  %167 = vmatpush1.bf16.msra.mxu0 %v135
  %168 = vmatprep.subr.bf16.mxu0 0
  %169 = vmatpush1.bf16.msra.mxu0 %v134
  %170 = vmatprep.subr.bf16.mxu0 0
  %171 = vmatpush1.bf16.msra.mxu0 %v133
  %172 = vmatprep.subr.bf16.mxu0 0
  %173 = vmatpush1.bf16.msra.mxu0 %v132
  %174 = vmatprep.subr.bf16.mxu0 0
  %175 = vmatpush1.bf16.msra.mxu0 %v131
  %176 = vmatprep.subr.bf16.mxu0 0
  %177 = vmatpush1.bf16.msra.mxu0 %v130
  %178 = vmatprep.subr.bf16.mxu0 0
  %179 = vmatpush2.bf16.msra.mxu0 %v145
  %180 = vmatprep.subr.bf16.mxu0 0
  %181 = vmatpush2.bf16.msra.mxu0 %v144
  %182 = vmatprep.subr.bf16.mxu0 0
  %183 = vmatpush2.bf16.msra.mxu0 %v143
  %184 = vmatprep.subr.bf16.mxu0 0
  %185 = vmatpush2.bf16.msra.mxu0 %v142
  %186 = vmatprep.subr.bf16.mxu0 0
  %187 = vmatpush2.bf16.msra.mxu0 %v141
  %188 = vmatprep.subr.bf16.mxu0 0
  %189 = vmatpush2.bf16.msra.mxu0 %v140
  %190 = vmatprep.subr.bf16.mxu0 0
  %191 = vmatpush2.bf16.msra.mxu0 %v139
  %192 = vmatprep.subr.bf16.mxu0 0
  %193 = vmatpush2.bf16.msra.mxu0 %v138
  %194 = vmatprep.mubr.bf16.mxu0 %v63
  %195 = vmatmul.mubr.bf16.gmra.mxu0 %v62
  %v196 = vpop.f32.mrf.mxu0
  %v197 = vadd.f32 %v54, %v196
  %v198 = vpop.f32.mrf.mxu0
  %v199 = vpop.f32.mrf.mxu0
  %v200 = vadd.f32 %v54, %v199
  %v201 = vpop.f32.mrf.mxu0
  %202 = vdwg.mxu0
  %v203 = vmax.f32 %v197, 0.0
  %v204 = vmax.f32 %v200, 0.0
  %v205 = vpack.c.bf16 %v204, %v203
  %v207 = vunpack.c.l.b16 %v205
  %v208 = vunpack.c.h.b16 %v205
  %v209 = vpack.c.b16 %v207, %v207
  %v210 = vpack.c.b16 %v208, %v208
  %213 = vst [vmem:[%s3] sm:$0xf] %v209
  %214 = vst [vmem:[%s3 + $0x4] sm:$0xf] %v210
  // Predicated region
  $region14: #{flexible_image_encoder.35} parent=0 // pred_check
    _
  $region15: #{flexible_image_encoder.35} parent=0 // pred_check_branch
    %216 = sbr.rel (0) target = $region17
  $region16: #{flexible_image_encoder.35} parent=0 // pred_region
    _
  $region17: #{flexible_image_encoder.35} parent=0 // pred_fallthru
    _
  // Predicated region
  $region18: #{flexible_image_encoder.35} parent=0 // pred_check
    _
  $region19: #{flexible_image_encoder.35} parent=0 // pred_check_branch
    %218 = sbr.rel (0) target = $region21
  $region20: #{flexible_image_encoder.35} parent=0 // pred_region
    _
  $region21: #{flexible_image_encoder.35} parent=0 // pred_fallthru
    _

// kernel: flexible_image_encoder.36
$region0: #{flexible_image_encoder.36}
  #allocation0 [shape = 'u32[]', space=smem, size = 0x4, offset = 0x4, fixed_abs, tag = 'smem constant byte address 0x4 - core index']
  #allocation1 [shape = 'u32[144,128]{1,0:T(1,128)}', space=vmem, size = 0x12000, scoped, tag = 'internal scratch']
  %s0 = inlined_call_operand.vmem [shape: bf16[16,384], index: 0, kind: input, shape index: {}]
  %s1 = inlined_call_operand.vmem [shape: bf16[384,256], index: 1, kind: input, shape index: {}]
  %s2 = inlined_call_operand.vmem [shape: f32[1,256], index: 2, kind: input, shape index: {}]
  %s3 = inlined_call_operand.vmem [shape: bf16[16,256], index: 3, kind: output, shape index: {}]
  %s4 = sld [smem:[#allocation0]]
  $region22: #{flexible_image_encoder.36} parent=0
    _
  %s6 = ssub.s32 1, %s4
  %s7 = scalar_select 0, %s6, %s4
  // Predicated region
  $region2: #{flexible_image_encoder.36} parent=0 // pred_check
    _
  $region3: #{flexible_image_encoder.36} parent=0 // pred_check_branch
    %9 = sbr.rel (0) target = $region5
  $region4: #{flexible_image_encoder.36} parent=0 // pred_region
    _
  $region5: #{flexible_image_encoder.36} parent=0 // pred_fallthru
    _
  // Predicated region
  $region6: #{flexible_image_encoder.36} parent=0 // pred_check
    _
  $region7: #{flexible_image_encoder.36} parent=0 // pred_check_branch
    %11 = sbr.rel (0) target = $region9
  $region8: #{flexible_image_encoder.36} parent=0 // pred_region
    _
  $region9: #{flexible_image_encoder.36} parent=0 // pred_fallthru
    _
  // Predicated region
  $region10: #{flexible_image_encoder.36} parent=0 // pred_check
    _
  $region11: #{flexible_image_encoder.36} parent=0 // pred_check_branch
    %13 = sbr.rel (0) target = $region13
  $region12: #{flexible_image_encoder.36} parent=0 // pred_region
    _
  $region13: #{flexible_image_encoder.36} parent=0 // pred_fallthru
    _
  %v15 = vld [vmem:[%s0] sm:$0xff]
  %v16 = vld [vmem:[%s0 + $0x8] sm:$0xf]
  %v17 = vld [vmem:[%s0 + $0xc] sm:$0xff]
  %v18 = vld [vmem:[%s0 + $0x14] sm:$0xf]
  %v19 = vld [vmem:[%s1] sm:$0xff]
  %v20 = vld [vmem:[%s1 + $0x8] sm:$0xff]
  %v21 = vld [vmem:[%s1 + $0x10] sm:$0xff]
  %v22 = vld [vmem:[%s1 + $0x18] sm:$0xff]
  %v23 = vld [vmem:[%s1 + $0x20] sm:$0xff]
  %v24 = vld [vmem:[%s1 + $0x28] sm:$0xff]
  %v25 = vld [vmem:[%s1 + $0x30] sm:$0xff]
  %v26 = vld [vmem:[%s1 + $0x38] sm:$0xff]
  %v27 = vld [vmem:[%s1 + $0x40] sm:$0xff]
  %v28 = vld [vmem:[%s1 + $0x48] sm:$0xff]
  %v29 = vld [vmem:[%s1 + $0x50] sm:$0xff]
  %v30 = vld [vmem:[%s1 + $0x58] sm:$0xff]
  %v31 = vld [vmem:[%s1 + $0x60] sm:$0xff]
  %v32 = vld [vmem:[%s1 + $0x68] sm:$0xff]
  %v33 = vld [vmem:[%s1 + $0x70] sm:$0xff]
  %v34 = vld [vmem:[%s1 + $0x78] sm:$0xff]
  %v35 = vld [vmem:[%s1 + $0x80] sm:$0xff]
  %v36 = vld [vmem:[%s1 + $0x88] sm:$0xff]
  %v37 = vld [vmem:[%s1 + $0x90] sm:$0xff]
  %v38 = vld [vmem:[%s1 + $0x98] sm:$0xff]
  %v39 = vld [vmem:[%s1 + $0xa0] sm:$0xff]
  %v40 = vld [vmem:[%s1 + $0xa8] sm:$0xff]
  %v41 = vld [vmem:[%s1 + $0xb0] sm:$0xff]
  %v42 = vld [vmem:[%s1 + $0xb8] sm:$0xff]
  %v43 = vld [vmem:[%s1 + $0xc0] sm:$0xff]
  %v44 = vld [vmem:[%s1 + $0xc8] sm:$0xff]
  %v45 = vld [vmem:[%s1 + $0xd0] sm:$0xff]
  %v46 = vld [vmem:[%s1 + $0xd8] sm:$0xff]
  %v47 = vld [vmem:[%s1 + $0xe0] sm:$0xff]
  %v48 = vld [vmem:[%s1 + $0xe8] sm:$0xff]
  %v49 = vld [vmem:[%s1 + $0xf0] sm:$0xff]
  %v50 = vld [vmem:[%s1 + $0xf8] sm:$0xff]
  %v51 = vld [vmem:[%s1 + $0x100] sm:$0xff]
  %v52 = vld [vmem:[%s1 + $0x108] sm:$0xff]
  %v53 = vld [vmem:[%s1 + $0x110] sm:$0xff]
  %v54 = vld [vmem:[%s1 + $0x118] sm:$0xff]
  %v55 = vld [vmem:[%s1 + $0x120] sm:$0xff]
  %v56 = vld [vmem:[%s1 + $0x128] sm:$0xff]
  %v57 = vld [vmem:[%s1 + $0x130] sm:$0xff]
  %v58 = vld [vmem:[%s1 + $0x138] sm:$0xff]
  %v59 = vld [vmem:[%s1 + $0x140] sm:$0xff]
  %v60 = vld [vmem:[%s1 + $0x148] sm:$0xff]
  %v61 = vld [vmem:[%s1 + $0x150] sm:$0xff]
  %v62 = vld [vmem:[%s1 + $0x158] sm:$0xff]
  %v63 = vld [vmem:[%s1 + $0x160] sm:$0xff]
  %v64 = vld [vmem:[%s1 + $0x168] sm:$0xff]
  %v65 = vld [vmem:[%s1 + $0x170] sm:$0xff]
  %v66 = vld [vmem:[%s1 + $0x178] sm:$0xff]
  %v67 = vld [vmem:[%s2] sm:$0x3]
  %v69 = vlaneseq
  %v70 = vshrl.u32 %v69, 7
  %v71 = vsub.s32 0, %v70
  %v72 = vrot.slane %v67, %v71
  %v73 = vlaneseq
  %v74 = vshrl.u32 %v73, 7
  %v75 = vsub.s32 1, %v74
  %v76 = vrot.slane %v67, %v75
  %v83 = vunpack.c.l.b16 %v15
  %v84 = vunpack.c.h.b16 %v15
  %v85 = vunpack.c.l.b16 %v16
  %v86 = vunpack.c.l.b16 %v17
  %v87 = vunpack.c.h.b16 %v17
  %v88 = vunpack.c.l.b16 %v18
  %v89 = vpack.c.b16 %v86, %v83
  %v90 = vpack.c.b16 %v87, %v84
  %v91 = vpack.c.b16 %v88, %v85
  %v143 = vunpack.c.l.b16 %v19
  %v144 = vunpack.c.h.b16 %v19
  %v145 = vunpack.c.l.b16 %v20
  %v146 = vunpack.c.h.b16 %v20
  %v147 = vunpack.c.l.b16 %v21
  %v148 = vunpack.c.h.b16 %v21
  %v149 = vunpack.c.l.b16 %v22
  %v150 = vunpack.c.h.b16 %v22
  %v151 = vunpack.c.l.b16 %v23
  %v152 = vunpack.c.h.b16 %v23
  %v153 = vunpack.c.l.b16 %v24
  %v154 = vunpack.c.h.b16 %v24
  %v155 = vunpack.c.l.b16 %v25
  %v156 = vunpack.c.h.b16 %v25
  %v157 = vunpack.c.l.b16 %v26
  %v158 = vunpack.c.h.b16 %v26
  %v159 = vunpack.c.l.b16 %v27
  %v160 = vunpack.c.h.b16 %v27
  %v161 = vunpack.c.l.b16 %v28
  %v162 = vunpack.c.h.b16 %v28
  %v163 = vunpack.c.l.b16 %v29
  %v164 = vunpack.c.h.b16 %v29
  %v165 = vunpack.c.l.b16 %v30
  %v166 = vunpack.c.h.b16 %v30
  %v167 = vunpack.c.l.b16 %v31
  %v168 = vunpack.c.h.b16 %v31
  %v169 = vunpack.c.l.b16 %v32
  %v170 = vunpack.c.h.b16 %v32
  %v171 = vunpack.c.l.b16 %v33
  %v172 = vunpack.c.h.b16 %v33
  %v173 = vunpack.c.l.b16 %v34
  %v174 = vunpack.c.h.b16 %v34
  %v175 = vunpack.c.l.b16 %v35
  %v176 = vunpack.c.h.b16 %v35
  %v177 = vunpack.c.l.b16 %v36
  %v178 = vunpack.c.h.b16 %v36
  %v179 = vunpack.c.l.b16 %v37
  %v180 = vunpack.c.h.b16 %v37
  %v181 = vunpack.c.l.b16 %v38
  %v182 = vunpack.c.h.b16 %v38
  %v183 = vunpack.c.l.b16 %v39
  %v184 = vunpack.c.h.b16 %v39
  %v185 = vunpack.c.l.b16 %v40
  %v186 = vunpack.c.h.b16 %v40
  %v187 = vunpack.c.l.b16 %v41
  %v188 = vunpack.c.h.b16 %v41
  %v189 = vunpack.c.l.b16 %v42
  %v190 = vunpack.c.h.b16 %v42
  %v191 = vunpack.c.l.b16 %v43
  %v192 = vunpack.c.h.b16 %v43
  %v193 = vunpack.c.l.b16 %v44
  %v194 = vunpack.c.h.b16 %v44
  %v195 = vunpack.c.l.b16 %v45
  %v196 = vunpack.c.h.b16 %v45
  %v197 = vunpack.c.l.b16 %v46
  %v198 = vunpack.c.h.b16 %v46
  %v199 = vunpack.c.l.b16 %v47
  %v200 = vunpack.c.h.b16 %v47
  %v201 = vunpack.c.l.b16 %v48
  %v202 = vunpack.c.h.b16 %v48
  %v203 = vunpack.c.l.b16 %v49
  %v204 = vunpack.c.h.b16 %v49
  %v205 = vunpack.c.l.b16 %v50
  %v206 = vunpack.c.h.b16 %v50
  %v207 = vunpack.c.l.b16 %v51
  %v208 = vunpack.c.h.b16 %v51
  %v209 = vunpack.c.l.b16 %v52
  %v210 = vunpack.c.h.b16 %v52
  %v211 = vunpack.c.l.b16 %v53
  %v212 = vunpack.c.h.b16 %v53
  %v213 = vunpack.c.l.b16 %v54
  %v214 = vunpack.c.h.b16 %v54
  %v215 = vunpack.c.l.b16 %v55
  %v216 = vunpack.c.h.b16 %v55
  %v217 = vunpack.c.l.b16 %v56
  %v218 = vunpack.c.h.b16 %v56
  %v219 = vunpack.c.l.b16 %v57
  %v220 = vunpack.c.h.b16 %v57
  %v221 = vunpack.c.l.b16 %v58
  %v222 = vunpack.c.h.b16 %v58
  %v223 = vunpack.c.l.b16 %v59
  %v224 = vunpack.c.h.b16 %v59
  %v225 = vunpack.c.l.b16 %v60
  %v226 = vunpack.c.h.b16 %v60
  %v227 = vunpack.c.l.b16 %v61
  %v228 = vunpack.c.h.b16 %v61
  %v229 = vunpack.c.l.b16 %v62
  %v230 = vunpack.c.h.b16 %v62
  %v231 = vunpack.c.l.b16 %v63
  %v232 = vunpack.c.h.b16 %v63
  %v233 = vunpack.c.l.b16 %v64
  %v234 = vunpack.c.h.b16 %v64
  %v235 = vunpack.c.l.b16 %v65
  %v236 = vunpack.c.h.b16 %v65
  %v237 = vunpack.c.l.b16 %v66
  %v238 = vunpack.c.h.b16 %v66
  %v239 = vpack.c.b16 %v145, %v143
  %v240 = vpack.c.b16 %v146, %v144
  %v241 = vpack.c.b16 %v149, %v147
  %v242 = vpack.c.b16 %v150, %v148
  %v243 = vpack.c.b16 %v153, %v151
  %v244 = vpack.c.b16 %v154, %v152
  %v245 = vpack.c.b16 %v157, %v155
  %v246 = vpack.c.b16 %v158, %v156
  %v247 = vpack.c.b16 %v161, %v159
  %v248 = vpack.c.b16 %v162, %v160
  %v249 = vpack.c.b16 %v165, %v163
  %v250 = vpack.c.b16 %v166, %v164
  %v251 = vpack.c.b16 %v169, %v167
  %v252 = vpack.c.b16 %v170, %v168
  %v253 = vpack.c.b16 %v173, %v171
  %v254 = vpack.c.b16 %v174, %v172
  %v255 = vpack.c.b16 %v177, %v175
  %v256 = vpack.c.b16 %v178, %v176
  %v257 = vpack.c.b16 %v181, %v179
  %v258 = vpack.c.b16 %v182, %v180
  %v259 = vpack.c.b16 %v185, %v183
  %v260 = vpack.c.b16 %v186, %v184
  %v261 = vpack.c.b16 %v189, %v187
  %v262 = vpack.c.b16 %v190, %v188
  %v263 = vpack.c.b16 %v193, %v191
  %v264 = vpack.c.b16 %v194, %v192
  %v265 = vpack.c.b16 %v197, %v195
  %v266 = vpack.c.b16 %v198, %v196
  %v267 = vpack.c.b16 %v201, %v199
  %v268 = vpack.c.b16 %v202, %v200
  %v269 = vpack.c.b16 %v205, %v203
  %v270 = vpack.c.b16 %v206, %v204
  %v271 = vpack.c.b16 %v209, %v207
  %v272 = vpack.c.b16 %v210, %v208
  %v273 = vpack.c.b16 %v213, %v211
  %v274 = vpack.c.b16 %v214, %v212
  %v275 = vpack.c.b16 %v217, %v215
  %v276 = vpack.c.b16 %v218, %v216
  %v277 = vpack.c.b16 %v221, %v219
  %v278 = vpack.c.b16 %v222, %v220
  %v279 = vpack.c.b16 %v225, %v223
  %v280 = vpack.c.b16 %v226, %v224
  %v281 = vpack.c.b16 %v229, %v227
  %v282 = vpack.c.b16 %v230, %v228
  %v283 = vpack.c.b16 %v233, %v231
  %v284 = vpack.c.b16 %v234, %v232
  %v285 = vpack.c.b16 %v237, %v235
  %v286 = vpack.c.b16 %v238, %v236
  %335 = vmatprep.subr.bf16.mxu0 %v254
  %336 = vmatpush1.bf16.msra.mxu0 %v253
  %337 = vmatprep.subr.bf16.mxu0 %v252
  %338 = vmatpush1.bf16.msra.mxu0 %v251
  %339 = vmatprep.subr.bf16.mxu0 %v250
  %340 = vmatpush1.bf16.msra.mxu0 %v249
  %341 = vmatprep.subr.bf16.mxu0 %v248
  %342 = vmatpush1.bf16.msra.mxu0 %v247
  %343 = vmatprep.subr.bf16.mxu0 %v246
  %344 = vmatpush1.bf16.msra.mxu0 %v245
  %345 = vmatprep.subr.bf16.mxu0 %v244
  %346 = vmatpush1.bf16.msra.mxu0 %v243
  %347 = vmatprep.subr.bf16.mxu0 %v242
  %348 = vmatpush1.bf16.msra.mxu0 %v241
  %349 = vmatprep.subr.bf16.mxu0 %v240
  %350 = vmatpush1.bf16.msra.mxu0 %v239
  %351 = vmatprep.subr.bf16.mxu0 %v270
  %352 = vmatpush2.bf16.msra.mxu0 %v269
  %353 = vmatprep.subr.bf16.mxu0 %v268
  %354 = vmatpush2.bf16.msra.mxu0 %v267
  %355 = vmatprep.subr.bf16.mxu0 %v266
  %356 = vmatpush2.bf16.msra.mxu0 %v265
  %357 = vmatprep.subr.bf16.mxu0 %v264
  %358 = vmatpush2.bf16.msra.mxu0 %v263
  %359 = vmatprep.subr.bf16.mxu0 %v262
  %360 = vmatpush2.bf16.msra.mxu0 %v261
  %361 = vmatprep.subr.bf16.mxu0 %v260
  %362 = vmatpush2.bf16.msra.mxu0 %v259
  %363 = vmatprep.subr.bf16.mxu0 %v258
  %364 = vmatpush2.bf16.msra.mxu0 %v257
  %365 = vmatprep.subr.bf16.mxu0 %v256
  %366 = vmatpush2.bf16.msra.mxu0 %v255
  %367 = vmatprep.mubr.bf16.mxu0 %v90
  %368 = vmatmul.mubr.bf16.gmra.mxu0 %v89
  %v369 = vpop.f32.mrf.mxu0
  %v370 = vadd.f32 %v72, %v369
  %v371 = vpop.f32.mrf.mxu0
  %v372 = vadd.f32 %v76, %v371
  %v373 = vpop.f32.mrf.mxu0
  %v374 = vadd.f32 %v72, %v373
  %v375 = vpop.f32.mrf.mxu0
  %v376 = vadd.f32 %v76, %v375
  %377 = vdwg.mxu0
  %378 = vmatprep.subr.bf16.mxu0 %v286
  %379 = vmatpush1.bf16.msra.mxu0 %v285
  %380 = vmatprep.subr.bf16.mxu0 %v284
  %381 = vmatpush1.bf16.msra.mxu0 %v283
  %382 = vmatprep.subr.bf16.mxu0 %v282
  %383 = vmatpush1.bf16.msra.mxu0 %v281
  %384 = vmatprep.subr.bf16.mxu0 %v280
  %385 = vmatpush1.bf16.msra.mxu0 %v279
  %386 = vmatprep.subr.bf16.mxu0 %v278
  %387 = vmatpush1.bf16.msra.mxu0 %v277
  %388 = vmatprep.subr.bf16.mxu0 %v276
  %389 = vmatpush1.bf16.msra.mxu0 %v275
  %390 = vmatprep.subr.bf16.mxu0 %v274
  %391 = vmatpush1.bf16.msra.mxu0 %v273
  %392 = vmatprep.subr.bf16.mxu0 %v272
  %393 = vmatpush1.bf16.msra.mxu0 %v271
  %394 = vmatprep.subr.bf16.mxu0 0
  %395 = vmatpush2.bf16.msra.mxu0 0
  %396 = vmatprep.subr.bf16.mxu0 0
  %397 = vmatpush2.bf16.msra.mxu0 0
  %398 = vmatprep.subr.bf16.mxu0 0
  %399 = vmatpush2.bf16.msra.mxu0 0
  %400 = vmatprep.subr.bf16.mxu0 0
  %401 = vmatpush2.bf16.msra.mxu0 0
  %402 = vmatprep.subr.bf16.mxu0 0
  %403 = vmatpush2.bf16.msra.mxu0 0
  %404 = vmatprep.subr.bf16.mxu0 0
  %405 = vmatpush2.bf16.msra.mxu0 0
  %406 = vmatprep.subr.bf16.mxu0 0
  %407 = vmatpush2.bf16.msra.mxu0 0
  %408 = vmatprep.subr.bf16.mxu0 0
  %409 = vmatpush2.bf16.msra.mxu0 0
  %410 = vmatprep.mubr.bf16.mxu0 0
  %411 = vmatmul.mubr.bf16.gmra.mxu0 %v91
  %v412 = vpop.f32.mrf.mxu0
  %v413 = vadd.f32 %v370, %v412
  %v414 = vpop.f32.mrf.mxu0
  %v415 = vadd.f32 %v372, %v414
  %v416 = vpop.f32.mrf.mxu0
  %v417 = vadd.f32 %v374, %v416
  %v418 = vpop.f32.mrf.mxu0
  %v419 = vadd.f32 %v376, %v418
  %420 = vdwg.mxu0
  %v421 = vmax.f32 %v413, 0.0
  %v422 = vmax.f32 %v415, 0.0
  %v423 = vmax.f32 %v417, 0.0
  %v424 = vmax.f32 %v419, 0.0
  %v425 = vpack.c.bf16 %v423, %v421
  %v426 = vpack.c.bf16 %v424, %v422
  %v429 = vunpack.c.l.b16 %v425
  %v430 = vunpack.c.l.b16 %v426
  %v431 = vunpack.c.h.b16 %v425
  %v432 = vunpack.c.h.b16 %v426
  %v433 = vpack.c.b16 %v430, %v429
  %v434 = vpack.c.b16 %v432, %v431
  %437 = vst [vmem:[%s3] sm:$0xff] %v433
  %438 = vst [vmem:[%s3 + $0x8] sm:$0xff] %v434
  // Predicated region
  $region14: #{flexible_image_encoder.36} parent=0 // pred_check
    _
  $region15: #{flexible_image_encoder.36} parent=0 // pred_check_branch
    %440 = sbr.rel (0) target = $region17
  $region16: #{flexible_image_encoder.36} parent=0 // pred_region
    _
  $region17: #{flexible_image_encoder.36} parent=0 // pred_fallthru
    _
  // Predicated region
  $region18: #{flexible_image_encoder.36} parent=0 // pred_check
    _
  $region19: #{flexible_image_encoder.36} parent=0 // pred_check_branch
    %442 = sbr.rel (0) target = $region21
  $region20: #{flexible_image_encoder.36} parent=0 // pred_region
    _
  $region21: #{flexible_image_encoder.36} parent=0 // pred_fallthru
    _

// kernel: flexible_image_encoder.39
$region0: #{flexible_image_encoder.39}
  #allocation0 [shape = 'u32[]', space=smem, size = 0x4, offset = 0x4, fixed_abs, tag = 'smem constant byte address 0x4 - core index']
  #allocation1 [shape = 'u32[144,128]{1,0:T(1,128)}', space=vmem, size = 0x12000, scoped, tag = 'internal scratch']
  %s0 = inlined_call_operand.vmem [shape: bf16[16,384], index: 0, kind: input, shape index: {}]
  %s1 = inlined_call_operand.vmem [shape: bf16[384,128], index: 1, kind: input, shape index: {}]
  %s2 = inlined_call_operand.vmem [shape: f32[1,128], index: 2, kind: input, shape index: {}]
  %s3 = inlined_call_operand.vmem [shape: bf16[16,128], index: 3, kind: output, shape index: {}]
  %s4 = sld [smem:[#allocation0]]
  $region22: #{flexible_image_encoder.39} parent=0
    _
  %s6 = ssub.s32 1, %s4
  %s7 = scalar_select 0, %s6, %s4
  // Predicated region
  $region2: #{flexible_image_encoder.39} parent=0 // pred_check
    _
  $region3: #{flexible_image_encoder.39} parent=0 // pred_check_branch
    %9 = sbr.rel (0) target = $region5
  $region4: #{flexible_image_encoder.39} parent=0 // pred_region
    _
  $region5: #{flexible_image_encoder.39} parent=0 // pred_fallthru
    _
  // Predicated region
  $region6: #{flexible_image_encoder.39} parent=0 // pred_check
    _
  $region7: #{flexible_image_encoder.39} parent=0 // pred_check_branch
    %11 = sbr.rel (0) target = $region9
  $region8: #{flexible_image_encoder.39} parent=0 // pred_region
    _
  $region9: #{flexible_image_encoder.39} parent=0 // pred_fallthru
    _
  // Predicated region
  $region10: #{flexible_image_encoder.39} parent=0 // pred_check
    _
  $region11: #{flexible_image_encoder.39} parent=0 // pred_check_branch
    %13 = sbr.rel (0) target = $region13
  $region12: #{flexible_image_encoder.39} parent=0 // pred_region
    _
  $region13: #{flexible_image_encoder.39} parent=0 // pred_fallthru
    _
  %v15 = vld [vmem:[%s0] sm:$0xff]
  %v16 = vld [vmem:[%s0 + $0x8] sm:$0xf]
  %v17 = vld [vmem:[%s0 + $0xc] sm:$0xff]
  %v18 = vld [vmem:[%s0 + $0x14] sm:$0xf]
  %v19 = vld [vmem:[%s1] sm:$0xf]
  %v20 = vld [vmem:[%s1 + $0x4] sm:$0xf]
  %v21 = vld [vmem:[%s1 + $0x8] sm:$0xf]
  %v22 = vld [vmem:[%s1 + $0xc] sm:$0xf]
  %v23 = vld [vmem:[%s1 + $0x10] sm:$0xf]
  %v24 = vld [vmem:[%s1 + $0x14] sm:$0xf]
  %v25 = vld [vmem:[%s1 + $0x18] sm:$0xf]
  %v26 = vld [vmem:[%s1 + $0x1c] sm:$0xf]
  %v27 = vld [vmem:[%s1 + $0x20] sm:$0xf]
  %v28 = vld [vmem:[%s1 + $0x24] sm:$0xf]
  %v29 = vld [vmem:[%s1 + $0x28] sm:$0xf]
  %v30 = vld [vmem:[%s1 + $0x2c] sm:$0xf]
  %v31 = vld [vmem:[%s1 + $0x30] sm:$0xf]
  %v32 = vld [vmem:[%s1 + $0x34] sm:$0xf]
  %v33 = vld [vmem:[%s1 + $0x38] sm:$0xf]
  %v34 = vld [vmem:[%s1 + $0x3c] sm:$0xf]
  %v35 = vld [vmem:[%s1 + $0x40] sm:$0xf]
  %v36 = vld [vmem:[%s1 + $0x44] sm:$0xf]
  %v37 = vld [vmem:[%s1 + $0x48] sm:$0xf]
  %v38 = vld [vmem:[%s1 + $0x4c] sm:$0xf]
  %v39 = vld [vmem:[%s1 + $0x50] sm:$0xf]
  %v40 = vld [vmem:[%s1 + $0x54] sm:$0xf]
  %v41 = vld [vmem:[%s1 + $0x58] sm:$0xf]
  %v42 = vld [vmem:[%s1 + $0x5c] sm:$0xf]
  %v43 = vld [vmem:[%s1 + $0x60] sm:$0xf]
  %v44 = vld [vmem:[%s1 + $0x64] sm:$0xf]
  %v45 = vld [vmem:[%s1 + $0x68] sm:$0xf]
  %v46 = vld [vmem:[%s1 + $0x6c] sm:$0xf]
  %v47 = vld [vmem:[%s1 + $0x70] sm:$0xf]
  %v48 = vld [vmem:[%s1 + $0x74] sm:$0xf]
  %v49 = vld [vmem:[%s1 + $0x78] sm:$0xf]
  %v50 = vld [vmem:[%s1 + $0x7c] sm:$0xf]
  %v51 = vld [vmem:[%s1 + $0x80] sm:$0xf]
  %v52 = vld [vmem:[%s1 + $0x84] sm:$0xf]
  %v53 = vld [vmem:[%s1 + $0x88] sm:$0xf]
  %v54 = vld [vmem:[%s1 + $0x8c] sm:$0xf]
  %v55 = vld [vmem:[%s1 + $0x90] sm:$0xf]
  %v56 = vld [vmem:[%s1 + $0x94] sm:$0xf]
  %v57 = vld [vmem:[%s1 + $0x98] sm:$0xf]
  %v58 = vld [vmem:[%s1 + $0x9c] sm:$0xf]
  %v59 = vld [vmem:[%s1 + $0xa0] sm:$0xf]
  %v60 = vld [vmem:[%s1 + $0xa4] sm:$0xf]
  %v61 = vld [vmem:[%s1 + $0xa8] sm:$0xf]
  %v62 = vld [vmem:[%s1 + $0xac] sm:$0xf]
  %v63 = vld [vmem:[%s1 + $0xb0] sm:$0xf]
  %v64 = vld [vmem:[%s1 + $0xb4] sm:$0xf]
  %v65 = vld [vmem:[%s1 + $0xb8] sm:$0xf]
  %v66 = vld [vmem:[%s1 + $0xbc] sm:$0xf]
  %v67 = vld [vmem:[%s2] sm:$0x1]
  %v69 = vlaneseq
  %v70 = vshrl.u32 %v69, 7
  %v71 = vsub.s32 0, %v70
  %v72 = vrot.slane %v67, %v71
  %v78 = vunpack.c.l.b16 %v15
  %v79 = vunpack.c.h.b16 %v15
  %v80 = vunpack.c.l.b16 %v16
  %v81 = vunpack.c.l.b16 %v17
  %v82 = vunpack.c.h.b16 %v17
  %v83 = vunpack.c.l.b16 %v18
  %v84 = vpack.c.b16 %v81, %v78
  %v85 = vpack.c.b16 %v82, %v79
  %v86 = vpack.c.b16 %v83, %v80
  %v138 = vunpack.c.l.b16 %v19
  %v139 = vunpack.c.l.b16 %v20
  %v140 = vunpack.c.l.b16 %v21
  %v141 = vunpack.c.l.b16 %v22
  %v142 = vunpack.c.l.b16 %v23
  %v143 = vunpack.c.l.b16 %v24
  %v144 = vunpack.c.l.b16 %v25
  %v145 = vunpack.c.l.b16 %v26
  %v146 = vunpack.c.l.b16 %v27
  %v147 = vunpack.c.l.b16 %v28
  %v148 = vunpack.c.l.b16 %v29
  %v149 = vunpack.c.l.b16 %v30
  %v150 = vunpack.c.l.b16 %v31
  %v151 = vunpack.c.l.b16 %v32
  %v152 = vunpack.c.l.b16 %v33
  %v153 = vunpack.c.l.b16 %v34
  %v154 = vunpack.c.l.b16 %v35
  %v155 = vunpack.c.l.b16 %v36
  %v156 = vunpack.c.l.b16 %v37
  %v157 = vunpack.c.l.b16 %v38
  %v158 = vunpack.c.l.b16 %v39
  %v159 = vunpack.c.l.b16 %v40
  %v160 = vunpack.c.l.b16 %v41
  %v161 = vunpack.c.l.b16 %v42
  %v162 = vunpack.c.l.b16 %v43
  %v163 = vunpack.c.l.b16 %v44
  %v164 = vunpack.c.l.b16 %v45
  %v165 = vunpack.c.l.b16 %v46
  %v166 = vunpack.c.l.b16 %v47
  %v167 = vunpack.c.l.b16 %v48
  %v168 = vunpack.c.l.b16 %v49
  %v169 = vunpack.c.l.b16 %v50
  %v170 = vunpack.c.l.b16 %v51
  %v171 = vunpack.c.l.b16 %v52
  %v172 = vunpack.c.l.b16 %v53
  %v173 = vunpack.c.l.b16 %v54
  %v174 = vunpack.c.l.b16 %v55
  %v175 = vunpack.c.l.b16 %v56
  %v176 = vunpack.c.l.b16 %v57
  %v177 = vunpack.c.l.b16 %v58
  %v178 = vunpack.c.l.b16 %v59
  %v179 = vunpack.c.l.b16 %v60
  %v180 = vunpack.c.l.b16 %v61
  %v181 = vunpack.c.l.b16 %v62
  %v182 = vunpack.c.l.b16 %v63
  %v183 = vunpack.c.l.b16 %v64
  %v184 = vunpack.c.l.b16 %v65
  %v185 = vunpack.c.l.b16 %v66
  %v186 = vpack.c.b16 %v139, %v138
  %v187 = vpack.c.b16 %v141, %v140
  %v188 = vpack.c.b16 %v143, %v142
  %v189 = vpack.c.b16 %v145, %v144
  %v190 = vpack.c.b16 %v147, %v146
  %v191 = vpack.c.b16 %v149, %v148
  %v192 = vpack.c.b16 %v151, %v150
  %v193 = vpack.c.b16 %v153, %v152
  %v194 = vpack.c.b16 %v155, %v154
  %v195 = vpack.c.b16 %v157, %v156
  %v196 = vpack.c.b16 %v159, %v158
  %v197 = vpack.c.b16 %v161, %v160
  %v198 = vpack.c.b16 %v163, %v162
  %v199 = vpack.c.b16 %v165, %v164
  %v200 = vpack.c.b16 %v167, %v166
  %v201 = vpack.c.b16 %v169, %v168
  %v202 = vpack.c.b16 %v171, %v170
  %v203 = vpack.c.b16 %v173, %v172
  %v204 = vpack.c.b16 %v175, %v174
  %v205 = vpack.c.b16 %v177, %v176
  %v206 = vpack.c.b16 %v179, %v178
  %v207 = vpack.c.b16 %v181, %v180
  %v208 = vpack.c.b16 %v183, %v182
  %v209 = vpack.c.b16 %v185, %v184
  %234 = vmatprep.subr.bf16.mxu0 0
  %235 = vmatpush1.bf16.msra.mxu0 %v193
  %236 = vmatprep.subr.bf16.mxu0 0
  %237 = vmatpush1.bf16.msra.mxu0 %v192
  %238 = vmatprep.subr.bf16.mxu0 0
  %239 = vmatpush1.bf16.msra.mxu0 %v191
  %240 = vmatprep.subr.bf16.mxu0 0
  %241 = vmatpush1.bf16.msra.mxu0 %v190
  %242 = vmatprep.subr.bf16.mxu0 0
  %243 = vmatpush1.bf16.msra.mxu0 %v189
  %244 = vmatprep.subr.bf16.mxu0 0
  %245 = vmatpush1.bf16.msra.mxu0 %v188
  %246 = vmatprep.subr.bf16.mxu0 0
  %247 = vmatpush1.bf16.msra.mxu0 %v187
  %248 = vmatprep.subr.bf16.mxu0 0
  %249 = vmatpush1.bf16.msra.mxu0 %v186
  %250 = vmatprep.subr.bf16.mxu0 0
  %251 = vmatpush2.bf16.msra.mxu0 %v201
  %252 = vmatprep.subr.bf16.mxu0 0
  %253 = vmatpush2.bf16.msra.mxu0 %v200
  %254 = vmatprep.subr.bf16.mxu0 0
  %255 = vmatpush2.bf16.msra.mxu0 %v199
  %256 = vmatprep.subr.bf16.mxu0 0
  %257 = vmatpush2.bf16.msra.mxu0 %v198
  %258 = vmatprep.subr.bf16.mxu0 0
  %259 = vmatpush2.bf16.msra.mxu0 %v197
  %260 = vmatprep.subr.bf16.mxu0 0
  %261 = vmatpush2.bf16.msra.mxu0 %v196
  %262 = vmatprep.subr.bf16.mxu0 0
  %263 = vmatpush2.bf16.msra.mxu0 %v195
  %264 = vmatprep.subr.bf16.mxu0 0
  %265 = vmatpush2.bf16.msra.mxu0 %v194
  %266 = vmatprep.mubr.bf16.mxu0 %v85
  %267 = vmatmul.mubr.bf16.gmra.mxu0 %v84
  %v268 = vpop.f32.mrf.mxu0
  %v269 = vadd.f32 %v72, %v268
  %v270 = vpop.f32.mrf.mxu0
  %v271 = vpop.f32.mrf.mxu0
  %v272 = vadd.f32 %v72, %v271
  %v273 = vpop.f32.mrf.mxu0
  %274 = vdwg.mxu0
  %275 = vmatprep.subr.bf16.mxu0 0
  %276 = vmatpush1.bf16.msra.mxu0 %v209
  %277 = vmatprep.subr.bf16.mxu0 0
  %278 = vmatpush1.bf16.msra.mxu0 %v208
  %279 = vmatprep.subr.bf16.mxu0 0
  %280 = vmatpush1.bf16.msra.mxu0 %v207
  %281 = vmatprep.subr.bf16.mxu0 0
  %282 = vmatpush1.bf16.msra.mxu0 %v206
  %283 = vmatprep.subr.bf16.mxu0 0
  %284 = vmatpush1.bf16.msra.mxu0 %v205
  %285 = vmatprep.subr.bf16.mxu0 0
  %286 = vmatpush1.bf16.msra.mxu0 %v204
  %287 = vmatprep.subr.bf16.mxu0 0
  %288 = vmatpush1.bf16.msra.mxu0 %v203
  %289 = vmatprep.subr.bf16.mxu0 0
  %290 = vmatpush1.bf16.msra.mxu0 %v202
  %291 = vmatprep.subr.bf16.mxu0 0
  %292 = vmatpush2.bf16.msra.mxu0 0
  %293 = vmatprep.subr.bf16.mxu0 0
  %294 = vmatpush2.bf16.msra.mxu0 0
  %295 = vmatprep.subr.bf16.mxu0 0
  %296 = vmatpush2.bf16.msra.mxu0 0
  %297 = vmatprep.subr.bf16.mxu0 0
  %298 = vmatpush2.bf16.msra.mxu0 0
  %299 = vmatprep.subr.bf16.mxu0 0
  %300 = vmatpush2.bf16.msra.mxu0 0
  %301 = vmatprep.subr.bf16.mxu0 0
  %302 = vmatpush2.bf16.msra.mxu0 0
  %303 = vmatprep.subr.bf16.mxu0 0
  %304 = vmatpush2.bf16.msra.mxu0 0
  %305 = vmatprep.subr.bf16.mxu0 0
  %306 = vmatpush2.bf16.msra.mxu0 0
  %307 = vmatprep.mubr.bf16.mxu0 0
  %308 = vmatmul.mubr.bf16.gmra.mxu0 %v86
  %v309 = vpop.f32.mrf.mxu0
  %v310 = vadd.f32 %v269, %v309
  %v311 = vpop.f32.mrf.mxu0
  %v312 = vpop.f32.mrf.mxu0
  %v313 = vadd.f32 %v272, %v312
  %v314 = vpop.f32.mrf.mxu0
  %315 = vdwg.mxu0
  %v316 = vmax.f32 %v310, 0.0
  %v317 = vmax.f32 %v313, 0.0
  %v318 = vpack.c.bf16 %v317, %v316
  %v320 = vunpack.c.l.b16 %v318
  %v321 = vunpack.c.h.b16 %v318
  %v322 = vpack.c.b16 %v320, %v320
  %v323 = vpack.c.b16 %v321, %v321
  %326 = vst [vmem:[%s3] sm:$0xf] %v322
  %327 = vst [vmem:[%s3 + $0x4] sm:$0xf] %v323
  // Predicated region
  $region14: #{flexible_image_encoder.39} parent=0 // pred_check
    _
  $region15: #{flexible_image_encoder.39} parent=0 // pred_check_branch
    %329 = sbr.rel (0) target = $region17
  $region16: #{flexible_image_encoder.39} parent=0 // pred_region
    _
  $region17: #{flexible_image_encoder.39} parent=0 // pred_fallthru
    _
  // Predicated region
  $region18: #{flexible_image_encoder.39} parent=0 // pred_check
    _
  $region19: #{flexible_image_encoder.39} parent=0 // pred_check_branch
    %331 = sbr.rel (0) target = $region21
  $region20: #{flexible_image_encoder.39} parent=0 // pred_region
    _
  $region21: #{flexible_image_encoder.39} parent=0 // pred_fallthru
    _

// kernel: flexible_image_encoder.38
$region0: #{flexible_image_encoder.38}
  #allocation0 [shape = 'u32[]', space=smem, size = 0x4, offset = 0x4, fixed_abs, tag = 'smem constant byte address 0x4 - core index']
  #allocation1 [shape = 'u32[144,128]{1,0:T(1,128)}', space=vmem, size = 0x12000, scoped, tag = 'internal scratch']
  %s0 = inlined_call_operand.vmem [shape: bf16[16,512], index: 0, kind: input, shape index: {}]
  %s1 = inlined_call_operand.vmem [shape: bf16[512,384], index: 1, kind: input, shape index: {}]
  %s2 = inlined_call_operand.vmem [shape: f32[1,384], index: 2, kind: input, shape index: {}]
  %s3 = inlined_call_operand.vmem [shape: bf16[16,384], index: 3, kind: output, shape index: {}]
  %s4 = sld [smem:[#allocation0]]
  $region22: #{flexible_image_encoder.38} parent=0
    _
  %s6 = ssub.s32 1, %s4
  %s7 = scalar_select 0, %s6, %s4
  // Predicated region
  $region2: #{flexible_image_encoder.38} parent=0 // pred_check
    _
  $region3: #{flexible_image_encoder.38} parent=0 // pred_check_branch
    %9 = sbr.rel (0) target = $region5
  $region4: #{flexible_image_encoder.38} parent=0 // pred_region
    _
  $region5: #{flexible_image_encoder.38} parent=0 // pred_fallthru
    _
  // Predicated region
  $region6: #{flexible_image_encoder.38} parent=0 // pred_check
    _
  $region7: #{flexible_image_encoder.38} parent=0 // pred_check_branch
    %11 = sbr.rel (0) target = $region9
  $region8: #{flexible_image_encoder.38} parent=0 // pred_region
    _
  $region9: #{flexible_image_encoder.38} parent=0 // pred_fallthru
    _
  // Predicated region
  $region10: #{flexible_image_encoder.38} parent=0 // pred_check
    _
  $region11: #{flexible_image_encoder.38} parent=0 // pred_check_branch
    %13 = sbr.rel (0) target = $region13
  $region12: #{flexible_image_encoder.38} parent=0 // pred_region
    _
  $region13: #{flexible_image_encoder.38} parent=0 // pred_fallthru
    _
  %v15 = vld [vmem:[%s0] sm:$0xff]
  %v16 = vld [vmem:[%s0 + $0x8] sm:$0xff]
  %v17 = vld [vmem:[%s0 + $0x10] sm:$0xff]
  %v18 = vld [vmem:[%s0 + $0x18] sm:$0xff]
  %v19 = vld [vmem:[%s1] sm:$0xff]
  %v20 = vld [vmem:[%s1 + $0x8] sm:$0xf]
  %v21 = vld [vmem:[%s1 + $0xc] sm:$0xff]
  %v22 = vld [vmem:[%s1 + $0x14] sm:$0xf]
  %v23 = vld [vmem:[%s1 + $0x18] sm:$0xff]
  %v24 = vld [vmem:[%s1 + $0x20] sm:$0xf]
  %v25 = vld [vmem:[%s1 + $0x24] sm:$0xff]
  %v26 = vld [vmem:[%s1 + $0x2c] sm:$0xf]
  %v27 = vld [vmem:[%s1 + $0x30] sm:$0xff]
  %v28 = vld [vmem:[%s1 + $0x38] sm:$0xf]
  %v29 = vld [vmem:[%s1 + $0x3c] sm:$0xff]
  %v30 = vld [vmem:[%s1 + $0x44] sm:$0xf]
  %v31 = vld [vmem:[%s1 + $0x48] sm:$0xff]
  %v32 = vld [vmem:[%s1 + $0x50] sm:$0xf]
  %v33 = vld [vmem:[%s1 + $0x54] sm:$0xff]
  %v34 = vld [vmem:[%s1 + $0x5c] sm:$0xf]
  %v35 = vld [vmem:[%s1 + $0x60] sm:$0xff]
  %v36 = vld [vmem:[%s1 + $0x68] sm:$0xf]
  %v37 = vld [vmem:[%s1 + $0x6c] sm:$0xff]
  %v38 = vld [vmem:[%s1 + $0x74] sm:$0xf]
  %v39 = vld [vmem:[%s1 + $0x78] sm:$0xff]
  %v40 = vld [vmem:[%s1 + $0x80] sm:$0xf]
  %v41 = vld [vmem:[%s1 + $0x84] sm:$0xff]
  %v42 = vld [vmem:[%s1 + $0x8c] sm:$0xf]
  %v43 = vld [vmem:[%s1 + $0x90] sm:$0xff]
  %v44 = vld [vmem:[%s1 + $0x98] sm:$0xf]
  %v45 = vld [vmem:[%s1 + $0x9c] sm:$0xff]
  %v46 = vld [vmem:[%s1 + $0xa4] sm:$0xf]
  %v47 = vld [vmem:[%s1 + $0xa8] sm:$0xff]
  %v48 = vld [vmem:[%s1 + $0xb0] sm:$0xf]
  %v49 = vld [vmem:[%s1 + $0xb4] sm:$0xff]
  %v50 = vld [vmem:[%s1 + $0xbc] sm:$0xf]
  %v51 = vld [vmem:[%s1 + $0xc0] sm:$0xff]
  %v52 = vld [vmem:[%s1 + $0xc8] sm:$0xf]
  %v53 = vld [vmem:[%s1 + $0xcc] sm:$0xff]
  %v54 = vld [vmem:[%s1 + $0xd4] sm:$0xf]
  %v55 = vld [vmem:[%s1 + $0xd8] sm:$0xff]
  %v56 = vld [vmem:[%s1 + $0xe0] sm:$0xf]
  %v57 = vld [vmem:[%s1 + $0xe4] sm:$0xff]
  %v58 = vld [vmem:[%s1 + $0xec] sm:$0xf]
  %v59 = vld [vmem:[%s1 + $0xf0] sm:$0xff]
  %v60 = vld [vmem:[%s1 + $0xf8] sm:$0xf]
  %v61 = vld [vmem:[%s1 + $0xfc] sm:$0xff]
  %v62 = vld [vmem:[%s1 + $0x104] sm:$0xf]
  %v63 = vld [vmem:[%s1 + $0x108] sm:$0xff]
  %v64 = vld [vmem:[%s1 + $0x110] sm:$0xf]
  %v65 = vld [vmem:[%s1 + $0x114] sm:$0xff]
  %v66 = vld [vmem:[%s1 + $0x11c] sm:$0xf]
  %v67 = vld [vmem:[%s1 + $0x120] sm:$0xff]
  %v68 = vld [vmem:[%s1 + $0x128] sm:$0xf]
  %v69 = vld [vmem:[%s1 + $0x12c] sm:$0xff]
  %v70 = vld [vmem:[%s1 + $0x134] sm:$0xf]
  %v71 = vld [vmem:[%s1 + $0x138] sm:$0xff]
  %v72 = vld [vmem:[%s1 + $0x140] sm:$0xf]
  %v73 = vld [vmem:[%s1 + $0x144] sm:$0xff]
  %v74 = vld [vmem:[%s1 + $0x14c] sm:$0xf]
  %v75 = vld [vmem:[%s1 + $0x150] sm:$0xff]
  %v76 = vld [vmem:[%s1 + $0x158] sm:$0xf]
  %v77 = vld [vmem:[%s1 + $0x15c] sm:$0xff]
  %v78 = vld [vmem:[%s1 + $0x164] sm:$0xf]
  %v79 = vld [vmem:[%s1 + $0x168] sm:$0xff]
  %v80 = vld [vmem:[%s1 + $0x170] sm:$0xf]
  %v81 = vld [vmem:[%s1 + $0x174] sm:$0xff]
  %v82 = vld [vmem:[%s1 + $0x17c] sm:$0xf]
  %v83 = vld [vmem:[%s1 + $0x180] sm:$0xff]
  %v84 = vld [vmem:[%s1 + $0x188] sm:$0xf]
  %v85 = vld [vmem:[%s1 + $0x18c] sm:$0xff]
  %v86 = vld [vmem:[%s1 + $0x194] sm:$0xf]
  %v87 = vld [vmem:[%s1 + $0x198] sm:$0xff]
  %v88 = vld [vmem:[%s1 + $0x1a0] sm:$0xf]
  %v89 = vld [vmem:[%s1 + $0x1a4] sm:$0xff]
  %v90 = vld [vmem:[%s1 + $0x1ac] sm:$0xf]
  %v91 = vld [vmem:[%s1 + $0x1b0] sm:$0xff]
  %v92 = vld [vmem:[%s1 + $0x1b8] sm:$0xf]
  %v93 = vld [vmem:[%s1 + $0x1bc] sm:$0xff]
  %v94 = vld [vmem:[%s1 + $0x1c4] sm:$0xf]
  %v95 = vld [vmem:[%s1 + $0x1c8] sm:$0xff]
  %v96 = vld [vmem:[%s1 + $0x1d0] sm:$0xf]
  %v97 = vld [vmem:[%s1 + $0x1d4] sm:$0xff]
  %v98 = vld [vmem:[%s1 + $0x1dc] sm:$0xf]
  %v99 = vld [vmem:[%s1 + $0x1e0] sm:$0xff]
  %v100 = vld [vmem:[%s1 + $0x1e8] sm:$0xf]
  %v101 = vld [vmem:[%s1 + $0x1ec] sm:$0xff]
  %v102 = vld [vmem:[%s1 + $0x1f4] sm:$0xf]
  %v103 = vld [vmem:[%s1 + $0x1f8] sm:$0xff]
  %v104 = vld [vmem:[%s1 + $0x200] sm:$0xf]
  %v105 = vld [vmem:[%s1 + $0x204] sm:$0xff]
  %v106 = vld [vmem:[%s1 + $0x20c] sm:$0xf]
  %v107 = vld [vmem:[%s1 + $0x210] sm:$0xff]
  %v108 = vld [vmem:[%s1 + $0x218] sm:$0xf]
  %v109 = vld [vmem:[%s1 + $0x21c] sm:$0xff]
  %v110 = vld [vmem:[%s1 + $0x224] sm:$0xf]
  %v111 = vld [vmem:[%s1 + $0x228] sm:$0xff]
  %v112 = vld [vmem:[%s1 + $0x230] sm:$0xf]
  %v113 = vld [vmem:[%s1 + $0x234] sm:$0xff]
  %v114 = vld [vmem:[%s1 + $0x23c] sm:$0xf]
  %v115 = vld [vmem:[%s1 + $0x240] sm:$0xff]
  %v116 = vld [vmem:[%s1 + $0x248] sm:$0xf]
  %v117 = vld [vmem:[%s1 + $0x24c] sm:$0xff]
  %v118 = vld [vmem:[%s1 + $0x254] sm:$0xf]
  %v119 = vld [vmem:[%s1 + $0x258] sm:$0xff]
  %v120 = vld [vmem:[%s1 + $0x260] sm:$0xf]
  %v121 = vld [vmem:[%s1 + $0x264] sm:$0xff]
  %v122 = vld [vmem:[%s1 + $0x26c] sm:$0xf]
  %v123 = vld [vmem:[%s1 + $0x270] sm:$0xff]
  %v124 = vld [vmem:[%s1 + $0x278] sm:$0xf]
  %v125 = vld [vmem:[%s1 + $0x27c] sm:$0xff]
  %v126 = vld [vmem:[%s1 + $0x284] sm:$0xf]
  %v127 = vld [vmem:[%s1 + $0x288] sm:$0xff]
  %v128 = vld [vmem:[%s1 + $0x290] sm:$0xf]
  %v129 = vld [vmem:[%s1 + $0x294] sm:$0xff]
  %v130 = vld [vmem:[%s1 + $0x29c] sm:$0xf]
  %v131 = vld [vmem:[%s1 + $0x2a0] sm:$0xff]
  %v132 = vld [vmem:[%s1 + $0x2a8] sm:$0xf]
  %v133 = vld [vmem:[%s1 + $0x2ac] sm:$0xff]
  %v134 = vld [vmem:[%s1 + $0x2b4] sm:$0xf]
  %v135 = vld [vmem:[%s1 + $0x2b8] sm:$0xff]
  %v136 = vld [vmem:[%s1 + $0x2c0] sm:$0xf]
  %v137 = vld [vmem:[%s1 + $0x2c4] sm:$0xff]
  %v138 = vld [vmem:[%s1 + $0x2cc] sm:$0xf]
  %v139 = vld [vmem:[%s1 + $0x2d0] sm:$0xff]
  %v140 = vld [vmem:[%s1 + $0x2d8] sm:$0xf]
  %v141 = vld [vmem:[%s1 + $0x2dc] sm:$0xff]
  %v142 = vld [vmem:[%s1 + $0x2e4] sm:$0xf]
  %v143 = vld [vmem:[%s1 + $0x2e8] sm:$0xff]
  %v144 = vld [vmem:[%s1 + $0x2f0] sm:$0xf]
  %v145 = vld [vmem:[%s1 + $0x2f4] sm:$0xff]
  %v146 = vld [vmem:[%s1 + $0x2fc] sm:$0xf]
  %v147 = vld [vmem:[%s2] sm:$0x7]
  %v149 = vlaneseq
  %v150 = vshrl.u32 %v149, 7
  %v151 = vsub.s32 0, %v150
  %v152 = vrot.slane %v147, %v151
  %v153 = vlaneseq
  %v154 = vshrl.u32 %v153, 7
  %v155 = vsub.s32 1, %v154
  %v156 = vrot.slane %v147, %v155
  %v157 = vlaneseq
  %v158 = vshrl.u32 %v157, 7
  %v159 = vsub.s32 2, %v158
  %v160 = vrot.slane %v147, %v159
  %v168 = vunpack.c.l.b16 %v15
  %v169 = vunpack.c.h.b16 %v15
  %v170 = vunpack.c.l.b16 %v16
  %v171 = vunpack.c.h.b16 %v16
  %v172 = vunpack.c.l.b16 %v17
  %v173 = vunpack.c.h.b16 %v17
  %v174 = vunpack.c.l.b16 %v18
  %v175 = vunpack.c.h.b16 %v18
  %v176 = vpack.c.b16 %v172, %v168
  %v177 = vpack.c.b16 %v173, %v169
  %v178 = vpack.c.b16 %v174, %v170
  %v179 = vpack.c.b16 %v175, %v171
  %v312 = vunpack.c.l.b16 %v19
  %v313 = vunpack.c.h.b16 %v19
  %v314 = vunpack.c.l.b16 %v20
  %v315 = vunpack.c.l.b16 %v21
  %v316 = vunpack.c.h.b16 %v21
  %v317 = vunpack.c.l.b16 %v22
  %v318 = vunpack.c.l.b16 %v23
  %v319 = vunpack.c.h.b16 %v23
  %v320 = vunpack.c.l.b16 %v24
  %v321 = vunpack.c.l.b16 %v25
  %v322 = vunpack.c.h.b16 %v25
  %v323 = vunpack.c.l.b16 %v26
  %v324 = vunpack.c.l.b16 %v27
  %v325 = vunpack.c.h.b16 %v27
  %v326 = vunpack.c.l.b16 %v28
  %v327 = vunpack.c.l.b16 %v29
  %v328 = vunpack.c.h.b16 %v29
  %v329 = vunpack.c.l.b16 %v30
  %v330 = vunpack.c.l.b16 %v31
  %v331 = vunpack.c.h.b16 %v31
  %v332 = vunpack.c.l.b16 %v32
  %v333 = vunpack.c.l.b16 %v33
  %v334 = vunpack.c.h.b16 %v33
  %v335 = vunpack.c.l.b16 %v34
  %v336 = vunpack.c.l.b16 %v35
  %v337 = vunpack.c.h.b16 %v35
  %v338 = vunpack.c.l.b16 %v36
  %v339 = vunpack.c.l.b16 %v37
  %v340 = vunpack.c.h.b16 %v37
  %v341 = vunpack.c.l.b16 %v38
  %v342 = vunpack.c.l.b16 %v39
  %v343 = vunpack.c.h.b16 %v39
  %v344 = vunpack.c.l.b16 %v40
  %v345 = vunpack.c.l.b16 %v41
  %v346 = vunpack.c.h.b16 %v41
  %v347 = vunpack.c.l.b16 %v42
  %v348 = vunpack.c.l.b16 %v43
  %v349 = vunpack.c.h.b16 %v43
  %v350 = vunpack.c.l.b16 %v44
  %v351 = vunpack.c.l.b16 %v45
  %v352 = vunpack.c.h.b16 %v45
  %v353 = vunpack.c.l.b16 %v46
  %v354 = vunpack.c.l.b16 %v47
  %v355 = vunpack.c.h.b16 %v47
  %v356 = vunpack.c.l.b16 %v48
  %v357 = vunpack.c.l.b16 %v49
  %v358 = vunpack.c.h.b16 %v49
  %v359 = vunpack.c.l.b16 %v50
  %v360 = vunpack.c.l.b16 %v51
  %v361 = vunpack.c.h.b16 %v51
  %v362 = vunpack.c.l.b16 %v52
  %v363 = vunpack.c.l.b16 %v53
  %v364 = vunpack.c.h.b16 %v53
  %v365 = vunpack.c.l.b16 %v54
  %v366 = vunpack.c.l.b16 %v55
  %v367 = vunpack.c.h.b16 %v55
  %v368 = vunpack.c.l.b16 %v56
  %v369 = vunpack.c.l.b16 %v57
  %v370 = vunpack.c.h.b16 %v57
  %v371 = vunpack.c.l.b16 %v58
  %v372 = vunpack.c.l.b16 %v59
  %v373 = vunpack.c.h.b16 %v59
  %v374 = vunpack.c.l.b16 %v60
  %v375 = vunpack.c.l.b16 %v61
  %v376 = vunpack.c.h.b16 %v61
  %v377 = vunpack.c.l.b16 %v62
  %v378 = vunpack.c.l.b16 %v63
  %v379 = vunpack.c.h.b16 %v63
  %v380 = vunpack.c.l.b16 %v64
  %v381 = vunpack.c.l.b16 %v65
  %v382 = vunpack.c.h.b16 %v65
  %v383 = vunpack.c.l.b16 %v66
  %v384 = vunpack.c.l.b16 %v67
  %v385 = vunpack.c.h.b16 %v67
  %v386 = vunpack.c.l.b16 %v68
  %v387 = vunpack.c.l.b16 %v69
  %v388 = vunpack.c.h.b16 %v69
  %v389 = vunpack.c.l.b16 %v70
  %v390 = vunpack.c.l.b16 %v71
  %v391 = vunpack.c.h.b16 %v71
  %v392 = vunpack.c.l.b16 %v72
  %v393 = vunpack.c.l.b16 %v73
  %v394 = vunpack.c.h.b16 %v73
  %v395 = vunpack.c.l.b16 %v74
  %v396 = vunpack.c.l.b16 %v75
  %v397 = vunpack.c.h.b16 %v75
  %v398 = vunpack.c.l.b16 %v76
  %v399 = vunpack.c.l.b16 %v77
  %v400 = vunpack.c.h.b16 %v77
  %v401 = vunpack.c.l.b16 %v78
  %v402 = vunpack.c.l.b16 %v79
  %v403 = vunpack.c.h.b16 %v79
  %v404 = vunpack.c.l.b16 %v80
  %v405 = vunpack.c.l.b16 %v81
  %v406 = vunpack.c.h.b16 %v81
  %v407 = vunpack.c.l.b16 %v82
  %v408 = vunpack.c.l.b16 %v83
  %v409 = vunpack.c.h.b16 %v83
  %v410 = vunpack.c.l.b16 %v84
  %v411 = vunpack.c.l.b16 %v85
  %v412 = vunpack.c.h.b16 %v85
  %v413 = vunpack.c.l.b16 %v86
  %v414 = vunpack.c.l.b16 %v87
  %v415 = vunpack.c.h.b16 %v87
  %v416 = vunpack.c.l.b16 %v88
  %v417 = vunpack.c.l.b16 %v89
  %v418 = vunpack.c.h.b16 %v89
  %v419 = vunpack.c.l.b16 %v90
  %v420 = vunpack.c.l.b16 %v91
  %v421 = vunpack.c.h.b16 %v91
  %v422 = vunpack.c.l.b16 %v92
  %v423 = vunpack.c.l.b16 %v93
  %v424 = vunpack.c.h.b16 %v93
  %v425 = vunpack.c.l.b16 %v94
  %v426 = vunpack.c.l.b16 %v95
  %v427 = vunpack.c.h.b16 %v95
  %v428 = vunpack.c.l.b16 %v96
  %v429 = vunpack.c.l.b16 %v97
  %v430 = vunpack.c.h.b16 %v97
  %v431 = vunpack.c.l.b16 %v98
  %v432 = vunpack.c.l.b16 %v99
  %v433 = vunpack.c.h.b16 %v99
  %v434 = vunpack.c.l.b16 %v100
  %v435 = vunpack.c.l.b16 %v101
  %v436 = vunpack.c.h.b16 %v101
  %v437 = vunpack.c.l.b16 %v102
  %v438 = vunpack.c.l.b16 %v103
  %v439 = vunpack.c.h.b16 %v103
  %v440 = vunpack.c.l.b16 %v104
  %v441 = vunpack.c.l.b16 %v105
  %v442 = vunpack.c.h.b16 %v105
  %v443 = vunpack.c.l.b16 %v106
  %v444 = vunpack.c.l.b16 %v107
  %v445 = vunpack.c.h.b16 %v107
  %v446 = vunpack.c.l.b16 %v108
  %v447 = vunpack.c.l.b16 %v109
  %v448 = vunpack.c.h.b16 %v109
  %v449 = vunpack.c.l.b16 %v110
  %v450 = vunpack.c.l.b16 %v111
  %v451 = vunpack.c.h.b16 %v111
  %v452 = vunpack.c.l.b16 %v112
  %v453 = vunpack.c.l.b16 %v113
  %v454 = vunpack.c.h.b16 %v113
  %v455 = vunpack.c.l.b16 %v114
  %v456 = vunpack.c.l.b16 %v115
  %v457 = vunpack.c.h.b16 %v115
  %v458 = vunpack.c.l.b16 %v116
  %v459 = vunpack.c.l.b16 %v117
  %v460 = vunpack.c.h.b16 %v117
  %v461 = vunpack.c.l.b16 %v118
  %v462 = vunpack.c.l.b16 %v119
  %v463 = vunpack.c.h.b16 %v119
  %v464 = vunpack.c.l.b16 %v120
  %v465 = vunpack.c.l.b16 %v121
  %v466 = vunpack.c.h.b16 %v121
  %v467 = vunpack.c.l.b16 %v122
  %v468 = vunpack.c.l.b16 %v123
  %v469 = vunpack.c.h.b16 %v123
  %v470 = vunpack.c.l.b16 %v124
  %v471 = vunpack.c.l.b16 %v125
  %v472 = vunpack.c.h.b16 %v125
  %v473 = vunpack.c.l.b16 %v126
  %v474 = vunpack.c.l.b16 %v127
  %v475 = vunpack.c.h.b16 %v127
  %v476 = vunpack.c.l.b16 %v128
  %v477 = vunpack.c.l.b16 %v129
  %v478 = vunpack.c.h.b16 %v129
  %v479 = vunpack.c.l.b16 %v130
  %v480 = vunpack.c.l.b16 %v131
  %v481 = vunpack.c.h.b16 %v131
  %v482 = vunpack.c.l.b16 %v132
  %v483 = vunpack.c.l.b16 %v133
  %v484 = vunpack.c.h.b16 %v133
  %v485 = vunpack.c.l.b16 %v134
  %v486 = vunpack.c.l.b16 %v135
  %v487 = vunpack.c.h.b16 %v135
  %v488 = vunpack.c.l.b16 %v136
  %v489 = vunpack.c.l.b16 %v137
  %v490 = vunpack.c.h.b16 %v137
  %v491 = vunpack.c.l.b16 %v138
  %v492 = vunpack.c.l.b16 %v139
  %v493 = vunpack.c.h.b16 %v139
  %v494 = vunpack.c.l.b16 %v140
  %v495 = vunpack.c.l.b16 %v141
  %v496 = vunpack.c.h.b16 %v141
  %v497 = vunpack.c.l.b16 %v142
  %v498 = vunpack.c.l.b16 %v143
  %v499 = vunpack.c.h.b16 %v143
  %v500 = vunpack.c.l.b16 %v144
  %v501 = vunpack.c.l.b16 %v145
  %v502 = vunpack.c.h.b16 %v145
  %v503 = vunpack.c.l.b16 %v146
  %v504 = vpack.c.b16 %v315, %v312
  %v505 = vpack.c.b16 %v316, %v313
  %v506 = vpack.c.b16 %v317, %v314
  %v507 = vpack.c.b16 %v321, %v318
  %v508 = vpack.c.b16 %v322, %v319
  %v509 = vpack.c.b16 %v323, %v320
  %v510 = vpack.c.b16 %v327, %v324
  %v511 = vpack.c.b16 %v328, %v325
  %v512 = vpack.c.b16 %v329, %v326
  %v513 = vpack.c.b16 %v333, %v330
  %v514 = vpack.c.b16 %v334, %v331
  %v515 = vpack.c.b16 %v335, %v332
  %v516 = vpack.c.b16 %v339, %v336
  %v517 = vpack.c.b16 %v340, %v337
  %v518 = vpack.c.b16 %v341, %v338
  %v519 = vpack.c.b16 %v345, %v342
  %v520 = vpack.c.b16 %v346, %v343
  %v521 = vpack.c.b16 %v347, %v344
  %v522 = vpack.c.b16 %v351, %v348
  %v523 = vpack.c.b16 %v352, %v349
  %v524 = vpack.c.b16 %v353, %v350
  %v525 = vpack.c.b16 %v357, %v354
  %v526 = vpack.c.b16 %v358, %v355
  %v527 = vpack.c.b16 %v359, %v356
  %v528 = vpack.c.b16 %v363, %v360
  %v529 = vpack.c.b16 %v364, %v361
  %v530 = vpack.c.b16 %v365, %v362
  %v531 = vpack.c.b16 %v369, %v366
  %v532 = vpack.c.b16 %v370, %v367
  %v533 = vpack.c.b16 %v371, %v368
  %v534 = vpack.c.b16 %v375, %v372
  %v535 = vpack.c.b16 %v376, %v373
  %v536 = vpack.c.b16 %v377, %v374
  %v537 = vpack.c.b16 %v381, %v378
  %v538 = vpack.c.b16 %v382, %v379
  %v539 = vpack.c.b16 %v383, %v380
  %v540 = vpack.c.b16 %v387, %v384
  %v541 = vpack.c.b16 %v388, %v385
  %v542 = vpack.c.b16 %v389, %v386
  %v543 = vpack.c.b16 %v393, %v390
  %v544 = vpack.c.b16 %v394, %v391
  %v545 = vpack.c.b16 %v395, %v392
  %v546 = vpack.c.b16 %v399, %v396
  %v547 = vpack.c.b16 %v400, %v397
  %v548 = vpack.c.b16 %v401, %v398
  %v549 = vpack.c.b16 %v405, %v402
  %v550 = vpack.c.b16 %v406, %v403
  %v551 = vpack.c.b16 %v407, %v404
  %v552 = vpack.c.b16 %v411, %v408
  %v553 = vpack.c.b16 %v412, %v409
  %v554 = vpack.c.b16 %v413, %v410
  %v555 = vpack.c.b16 %v417, %v414
  %v556 = vpack.c.b16 %v418, %v415
  %v557 = vpack.c.b16 %v419, %v416
  %v558 = vpack.c.b16 %v423, %v420
  %v559 = vpack.c.b16 %v424, %v421
  %v560 = vpack.c.b16 %v425, %v422
  %v561 = vpack.c.b16 %v429, %v426
  %v562 = vpack.c.b16 %v430, %v427
  %v563 = vpack.c.b16 %v431, %v428
  %v564 = vpack.c.b16 %v435, %v432
  %v565 = vpack.c.b16 %v436, %v433
  %v566 = vpack.c.b16 %v437, %v434
  %v567 = vpack.c.b16 %v441, %v438
  %v568 = vpack.c.b16 %v442, %v439
  %v569 = vpack.c.b16 %v443, %v440
  %v570 = vpack.c.b16 %v447, %v444
  %v571 = vpack.c.b16 %v448, %v445
  %v572 = vpack.c.b16 %v449, %v446
  %v573 = vpack.c.b16 %v453, %v450
  %v574 = vpack.c.b16 %v454, %v451
  %v575 = vpack.c.b16 %v455, %v452
  %v576 = vpack.c.b16 %v459, %v456
  %v577 = vpack.c.b16 %v460, %v457
  %v578 = vpack.c.b16 %v461, %v458
  %v579 = vpack.c.b16 %v465, %v462
  %v580 = vpack.c.b16 %v466, %v463
  %v581 = vpack.c.b16 %v467, %v464
  %v582 = vpack.c.b16 %v471, %v468
  %v583 = vpack.c.b16 %v472, %v469
  %v584 = vpack.c.b16 %v473, %v470
  %v585 = vpack.c.b16 %v477, %v474
  %v586 = vpack.c.b16 %v478, %v475
  %v587 = vpack.c.b16 %v479, %v476
  %v588 = vpack.c.b16 %v483, %v480
  %v589 = vpack.c.b16 %v484, %v481
  %v590 = vpack.c.b16 %v485, %v482
  %v591 = vpack.c.b16 %v489, %v486
  %v592 = vpack.c.b16 %v490, %v487
  %v593 = vpack.c.b16 %v491, %v488
  %v594 = vpack.c.b16 %v495, %v492
  %v595 = vpack.c.b16 %v496, %v493
  %v596 = vpack.c.b16 %v497, %v494
  %v597 = vpack.c.b16 %v501, %v498
  %v598 = vpack.c.b16 %v502, %v499
  %v599 = vpack.c.b16 %v503, %v500
  %696 = vmatprep.subr.bf16.mxu0 %v526
  %697 = vmatpush1.bf16.msra.mxu0 %v525
  %698 = vmatprep.subr.bf16.mxu0 %v523
  %699 = vmatpush1.bf16.msra.mxu0 %v522
  %700 = vmatprep.subr.bf16.mxu0 %v520
  %701 = vmatpush1.bf16.msra.mxu0 %v519
  %702 = vmatprep.subr.bf16.mxu0 %v517
  %703 = vmatpush1.bf16.msra.mxu0 %v516
  %704 = vmatprep.subr.bf16.mxu0 %v514
  %705 = vmatpush1.bf16.msra.mxu0 %v513
  %706 = vmatprep.subr.bf16.mxu0 %v511
  %707 = vmatpush1.bf16.msra.mxu0 %v510
  %708 = vmatprep.subr.bf16.mxu0 %v508
  %709 = vmatpush1.bf16.msra.mxu0 %v507
  %710 = vmatprep.subr.bf16.mxu0 %v505
  %711 = vmatpush1.bf16.msra.mxu0 %v504
  %712 = vmatprep.subr.bf16.mxu0 %v550
  %713 = vmatpush2.bf16.msra.mxu0 %v549
  %714 = vmatprep.subr.bf16.mxu0 %v547
  %715 = vmatpush2.bf16.msra.mxu0 %v546
  %716 = vmatprep.subr.bf16.mxu0 %v544
  %717 = vmatpush2.bf16.msra.mxu0 %v543
  %718 = vmatprep.subr.bf16.mxu0 %v541
  %719 = vmatpush2.bf16.msra.mxu0 %v540
  %720 = vmatprep.subr.bf16.mxu0 %v538
  %721 = vmatpush2.bf16.msra.mxu0 %v537
  %722 = vmatprep.subr.bf16.mxu0 %v535
  %723 = vmatpush2.bf16.msra.mxu0 %v534
  %724 = vmatprep.subr.bf16.mxu0 %v532
  %725 = vmatpush2.bf16.msra.mxu0 %v531
  %726 = vmatprep.subr.bf16.mxu0 %v529
  %727 = vmatpush2.bf16.msra.mxu0 %v528
  %728 = vmatprep.mubr.bf16.mxu0 %v177
  %729 = vmatmul.mubr.bf16.gmra.mxu0 %v176
  %v730 = vpop.f32.mrf.mxu0
  %v731 = vadd.f32 %v152, %v730
  %v732 = vpop.f32.mrf.mxu0
  %v733 = vadd.f32 %v156, %v732
  %v734 = vpop.f32.mrf.mxu0
  %v735 = vadd.f32 %v152, %v734
  %v736 = vpop.f32.mrf.mxu0
  %v737 = vadd.f32 %v156, %v736
  %738 = vdwg.mxu0
  %739 = vmatprep.subr.bf16.mxu0 %v574
  %740 = vmatpush1.bf16.msra.mxu0 %v573
  %741 = vmatprep.subr.bf16.mxu0 %v571
  %742 = vmatpush1.bf16.msra.mxu0 %v570
  %743 = vmatprep.subr.bf16.mxu0 %v568
  %744 = vmatpush1.bf16.msra.mxu0 %v567
  %745 = vmatprep.subr.bf16.mxu0 %v565
  %746 = vmatpush1.bf16.msra.mxu0 %v564
  %747 = vmatprep.subr.bf16.mxu0 %v562
  %748 = vmatpush1.bf16.msra.mxu0 %v561
  %749 = vmatprep.subr.bf16.mxu0 %v559
  %750 = vmatpush1.bf16.msra.mxu0 %v558
  %751 = vmatprep.subr.bf16.mxu0 %v556
  %752 = vmatpush1.bf16.msra.mxu0 %v555
  %753 = vmatprep.subr.bf16.mxu0 %v553
  %754 = vmatpush1.bf16.msra.mxu0 %v552
  %755 = vmatprep.subr.bf16.mxu0 %v598
  %756 = vmatpush2.bf16.msra.mxu0 %v597
  %757 = vmatprep.subr.bf16.mxu0 %v595
  %758 = vmatpush2.bf16.msra.mxu0 %v594
  %759 = vmatprep.subr.bf16.mxu0 %v592
  %760 = vmatpush2.bf16.msra.mxu0 %v591
  %761 = vmatprep.subr.bf16.mxu0 %v589
  %762 = vmatpush2.bf16.msra.mxu0 %v588
  %763 = vmatprep.subr.bf16.mxu0 %v586
  %764 = vmatpush2.bf16.msra.mxu0 %v585
  %765 = vmatprep.subr.bf16.mxu0 %v583
  %766 = vmatpush2.bf16.msra.mxu0 %v582
  %767 = vmatprep.subr.bf16.mxu0 %v580
  %768 = vmatpush2.bf16.msra.mxu0 %v579
  %769 = vmatprep.subr.bf16.mxu0 %v577
  %770 = vmatpush2.bf16.msra.mxu0 %v576
  %771 = vmatprep.mubr.bf16.mxu0 %v179
  %772 = vmatmul.mubr.bf16.gmra.mxu0 %v178
  %v773 = vpop.f32.mrf.mxu0
  %v774 = vadd.f32 %v731, %v773
  %v775 = vpop.f32.mrf.mxu0
  %v776 = vadd.f32 %v733, %v775
  %v777 = vpop.f32.mrf.mxu0
  %v778 = vadd.f32 %v735, %v777
  %v779 = vpop.f32.mrf.mxu0
  %v780 = vadd.f32 %v737, %v779
  %781 = vdwg.mxu0
  %782 = vmatprep.subr.bf16.mxu0 0
  %783 = vmatpush1.bf16.msra.mxu0 %v527
  %784 = vmatprep.subr.bf16.mxu0 0
  %785 = vmatpush1.bf16.msra.mxu0 %v524
  %786 = vmatprep.subr.bf16.mxu0 0
  %787 = vmatpush1.bf16.msra.mxu0 %v521
  %788 = vmatprep.subr.bf16.mxu0 0
  %789 = vmatpush1.bf16.msra.mxu0 %v518
  %790 = vmatprep.subr.bf16.mxu0 0
  %791 = vmatpush1.bf16.msra.mxu0 %v515
  %792 = vmatprep.subr.bf16.mxu0 0
  %793 = vmatpush1.bf16.msra.mxu0 %v512
  %794 = vmatprep.subr.bf16.mxu0 0
  %795 = vmatpush1.bf16.msra.mxu0 %v509
  %796 = vmatprep.subr.bf16.mxu0 0
  %797 = vmatpush1.bf16.msra.mxu0 %v506
  %798 = vmatprep.subr.bf16.mxu0 0
  %799 = vmatpush2.bf16.msra.mxu0 %v551
  %800 = vmatprep.subr.bf16.mxu0 0
  %801 = vmatpush2.bf16.msra.mxu0 %v548
  %802 = vmatprep.subr.bf16.mxu0 0
  %803 = vmatpush2.bf16.msra.mxu0 %v545
  %804 = vmatprep.subr.bf16.mxu0 0
  %805 = vmatpush2.bf16.msra.mxu0 %v542
  %806 = vmatprep.subr.bf16.mxu0 0
  %807 = vmatpush2.bf16.msra.mxu0 %v539
  %808 = vmatprep.subr.bf16.mxu0 0
  %809 = vmatpush2.bf16.msra.mxu0 %v536
  %810 = vmatprep.subr.bf16.mxu0 0
  %811 = vmatpush2.bf16.msra.mxu0 %v533
  %812 = vmatprep.subr.bf16.mxu0 0
  %813 = vmatpush2.bf16.msra.mxu0 %v530
  %814 = vmatprep.mubr.bf16.mxu0 %v177
  %815 = vmatmul.mubr.bf16.gmra.mxu0 %v176
  %v816 = vpop.f32.mrf.mxu0
  %v817 = vadd.f32 %v160, %v816
  %v818 = vpop.f32.mrf.mxu0
  %v819 = vpop.f32.mrf.mxu0
  %v820 = vadd.f32 %v160, %v819
  %v821 = vpop.f32.mrf.mxu0
  %822 = vdwg.mxu0
  %823 = vmatprep.subr.bf16.mxu0 0
  %824 = vmatpush1.bf16.msra.mxu0 %v575
  %825 = vmatprep.subr.bf16.mxu0 0
  %826 = vmatpush1.bf16.msra.mxu0 %v572
  %827 = vmatprep.subr.bf16.mxu0 0
  %828 = vmatpush1.bf16.msra.mxu0 %v569
  %829 = vmatprep.subr.bf16.mxu0 0
  %830 = vmatpush1.bf16.msra.mxu0 %v566
  %831 = vmatprep.subr.bf16.mxu0 0
  %832 = vmatpush1.bf16.msra.mxu0 %v563
  %833 = vmatprep.subr.bf16.mxu0 0
  %834 = vmatpush1.bf16.msra.mxu0 %v560
  %835 = vmatprep.subr.bf16.mxu0 0
  %836 = vmatpush1.bf16.msra.mxu0 %v557
  %837 = vmatprep.subr.bf16.mxu0 0
  %838 = vmatpush1.bf16.msra.mxu0 %v554
  %839 = vmatprep.subr.bf16.mxu0 0
  %840 = vmatpush2.bf16.msra.mxu0 %v599
  %841 = vmatprep.subr.bf16.mxu0 0
  %842 = vmatpush2.bf16.msra.mxu0 %v596
  %843 = vmatprep.subr.bf16.mxu0 0
  %844 = vmatpush2.bf16.msra.mxu0 %v593
  %845 = vmatprep.subr.bf16.mxu0 0
  %846 = vmatpush2.bf16.msra.mxu0 %v590
  %847 = vmatprep.subr.bf16.mxu0 0
  %848 = vmatpush2.bf16.msra.mxu0 %v587
  %849 = vmatprep.subr.bf16.mxu0 0
  %850 = vmatpush2.bf16.msra.mxu0 %v584
  %851 = vmatprep.subr.bf16.mxu0 0
  %852 = vmatpush2.bf16.msra.mxu0 %v581
  %853 = vmatprep.subr.bf16.mxu0 0
  %854 = vmatpush2.bf16.msra.mxu0 %v578
  %855 = vmatprep.mubr.bf16.mxu0 %v179
  %856 = vmatmul.mubr.bf16.gmra.mxu0 %v178
  %v857 = vpop.f32.mrf.mxu0
  %v858 = vadd.f32 %v817, %v857
  %v859 = vpop.f32.mrf.mxu0
  %v860 = vpop.f32.mrf.mxu0
  %v861 = vadd.f32 %v820, %v860
  %v862 = vpop.f32.mrf.mxu0
  %863 = vdwg.mxu0
  %v864 = vmax.f32 %v774, 0.0
  %v865 = vmax.f32 %v776, 0.0
  %v866 = vmax.f32 %v858, 0.0
  %v867 = vmax.f32 %v778, 0.0
  %v868 = vmax.f32 %v780, 0.0
  %v869 = vmax.f32 %v861, 0.0
  %v870 = vpack.c.bf16 %v867, %v864
  %v871 = vpack.c.bf16 %v868, %v865
  %v872 = vpack.c.bf16 %v869, %v866
  %v876 = vunpack.c.l.b16 %v870
  %v877 = vunpack.c.l.b16 %v871
  %v878 = vunpack.c.l.b16 %v872
  %v879 = vunpack.c.h.b16 %v870
  %v880 = vunpack.c.h.b16 %v871
  %v881 = vunpack.c.h.b16 %v872
  %v882 = vpack.c.b16 %v877, %v876
  %v883 = vpack.c.b16 %v878, %v878
  %v884 = vpack.c.b16 %v880, %v879
  %v885 = vpack.c.b16 %v881, %v881
  %890 = vst [vmem:[%s3] sm:$0xff] %v882
  %891 = vst [vmem:[%s3 + $0x8] sm:$0xf] %v883
  %892 = vst [vmem:[%s3 + $0xc] sm:$0xff] %v884
  %893 = vst [vmem:[%s3 + $0x14] sm:$0xf] %v885
  // Predicated region
  $region14: #{flexible_image_encoder.38} parent=0 // pred_check
    _
  $region15: #{flexible_image_encoder.38} parent=0 // pred_check_branch
    %895 = sbr.rel (0) target = $region17
  $region16: #{flexible_image_encoder.38} parent=0 // pred_region
    _
  $region17: #{flexible_image_encoder.38} parent=0 // pred_fallthru
    _
  // Predicated region
  $region18: #{flexible_image_encoder.38} parent=0 // pred_check
    _
  $region19: #{flexible_image_encoder.38} parent=0 // pred_check_branch
    %897 = sbr.rel (0) target = $region21
  $region20: #{flexible_image_encoder.38} parent=0 // pred_region
    _
  $region21: #{flexible_image_encoder.38} parent=0 // pred_fallthru
    _

// kernel: flexible_image_encoder.43
$region0: #{flexible_image_encoder.43}
  #allocation0 [shape = 'u32[]', space=smem, size = 0x4, offset = 0x4, fixed_abs, tag = 'smem constant byte address 0x4 - core index']
  #allocation1 [shape = 'u32[144,128]{1,0:T(1,128)}', space=vmem, size = 0x12000, scoped, tag = 'internal scratch']
  %s0 = inlined_call_operand.vmem [shape: bf16[3,16,512], index: 0, kind: input, shape index: {}]
  %s1 = inlined_call_operand.vmem [shape: bf16[16,512], index: 1, kind: output, shape index: {}]
  %s2 = sld [smem:[#allocation0]]
  $region14: #{flexible_image_encoder.43} parent=0
    _
  %s4 = ssub.s32 1, %s2
  %s5 = scalar_select 0, %s4, %s2
  // Predicated region
  $region2: #{flexible_image_encoder.43} parent=0 // pred_check
    _
  $region3: #{flexible_image_encoder.43} parent=0 // pred_check_branch
    %7 = sbr.rel (0) target = $region5
  $region4: #{flexible_image_encoder.43} parent=0 // pred_region
    _
  $region5: #{flexible_image_encoder.43} parent=0 // pred_fallthru
    _
  %v8 = vld [vmem:[%s0] sm:$0xff]
  %v9 = vld [vmem:[%s0 + $0x8] sm:$0xff]
  %v10 = vld [vmem:[%s0 + $0x10] sm:$0xff]
  %v11 = vld [vmem:[%s0 + $0x18] sm:$0xff]
  %s12 = scalar_lea.vmem %s0, 32
  %v13 = vld [vmem:[%s12] sm:$0xff]
  %v14 = vld [vmem:[%s12 + $0x8] sm:$0xff]
  %v15 = vld [vmem:[%s12 + $0x10] sm:$0xff]
  %v16 = vld [vmem:[%s12 + $0x18] sm:$0xff]
  %v17 = vmax.bf16 %v8, %v13
  %v18 = vmax.bf16 %v9, %v14
  %v19 = vmax.bf16 %v10, %v15
  %v20 = vmax.bf16 %v11, %v16
  %s21 = scalar_lea.vmem %s0, 64
  %v22 = vld [vmem:[%s21] sm:$0xff]
  %v23 = vld [vmem:[%s21 + $0x8] sm:$0xff]
  %v24 = vld [vmem:[%s21 + $0x10] sm:$0xff]
  %v25 = vld [vmem:[%s21 + $0x18] sm:$0xff]
  %v26 = vmax.bf16 %v17, %v22
  %v27 = vmax.bf16 %v18, %v23
  %v28 = vmax.bf16 %v19, %v24
  %v29 = vmax.bf16 %v20, %v25
  %30 = vst [vmem:[%s1] sm:$0xff] %v26
  %31 = vst [vmem:[%s1 + $0x8] sm:$0xff] %v27
  %32 = vst [vmem:[%s1 + $0x10] sm:$0xff] %v28
  %33 = vst [vmem:[%s1 + $0x18] sm:$0xff] %v29
  // Predicated region
  $region6: #{flexible_image_encoder.43} parent=0 // pred_check
    _
  $region7: #{flexible_image_encoder.43} parent=0 // pred_check_branch
    %35 = sbr.rel (0) target = $region9
  $region8: #{flexible_image_encoder.43} parent=0 // pred_region
    _
  $region9: #{flexible_image_encoder.43} parent=0 // pred_fallthru
    _
  // Predicated region
  $region10: #{flexible_image_encoder.43} parent=0 // pred_check
    _
  $region11: #{flexible_image_encoder.43} parent=0 // pred_check_branch
    %37 = sbr.rel (0) target = $region13
  $region12: #{flexible_image_encoder.43} parent=0 // pred_region
    _
  $region13: #{flexible_image_encoder.43} parent=0 // pred_fallthru
    _

// kernel: flexible_image_encoder.42
$region0: #{flexible_image_encoder.42}
  #allocation0 [shape = 'u32[]', space=smem, size = 0x4, offset = 0x4, fixed_abs, tag = 'smem constant byte address 0x4 - core index']
  #allocation1 [shape = 'u32[144,128]{1,0:T(1,128)}', space=vmem, size = 0x12000, scoped, tag = 'internal scratch']
  %s0 = inlined_call_operand.vmem [shape: bf16[16,640], index: 0, kind: input, shape index: {}]
  %s1 = inlined_call_operand.vmem [shape: bf16[640,512], index: 1, kind: input, shape index: {}]
  %s2 = inlined_call_operand.vmem [shape: f32[1,512], index: 2, kind: input, shape index: {}]
  %s3 = inlined_call_operand.vmem [shape: bf16[16,512], index: 3, kind: output, shape index: {}]
  %s4 = sld [smem:[#allocation0]]
  $region22: #{flexible_image_encoder.42} parent=0
    _
  %s6 = ssub.s32 1, %s4
  %s7 = scalar_select 0, %s6, %s4
  // Predicated region
  $region2: #{flexible_image_encoder.42} parent=0 // pred_check
    _
  $region3: #{flexible_image_encoder.42} parent=0 // pred_check_branch
    %9 = sbr.rel (0) target = $region5
  $region4: #{flexible_image_encoder.42} parent=0 // pred_region
    _
  $region5: #{flexible_image_encoder.42} parent=0 // pred_fallthru
    _
  // Predicated region
  $region6: #{flexible_image_encoder.42} parent=0 // pred_check
    _
  $region7: #{flexible_image_encoder.42} parent=0 // pred_check_branch
    %11 = sbr.rel (0) target = $region9
  $region8: #{flexible_image_encoder.42} parent=0 // pred_region
    _
  $region9: #{flexible_image_encoder.42} parent=0 // pred_fallthru
    _
  // Predicated region
  $region10: #{flexible_image_encoder.42} parent=0 // pred_check
    _
  $region11: #{flexible_image_encoder.42} parent=0 // pred_check_branch
    %13 = sbr.rel (0) target = $region13
  $region12: #{flexible_image_encoder.42} parent=0 // pred_region
    _
  $region13: #{flexible_image_encoder.42} parent=0 // pred_fallthru
    _
  %v15 = vld [vmem:[%s0] sm:$0xff]
  %v16 = vld [vmem:[%s0 + $0x8] sm:$0xff]
  %v17 = vld [vmem:[%s0 + $0x10] sm:$0xf]
  %v18 = vld [vmem:[%s0 + $0x14] sm:$0xff]
  %v19 = vld [vmem:[%s0 + $0x1c] sm:$0xff]
  %v20 = vld [vmem:[%s0 + $0x24] sm:$0xf]
  %v21 = vld [vmem:[%s1] sm:$0xff]
  %v22 = vld [vmem:[%s1 + $0x8] sm:$0xff]
  %v23 = vld [vmem:[%s1 + $0x10] sm:$0xff]
  %v24 = vld [vmem:[%s1 + $0x18] sm:$0xff]
  %v25 = vld [vmem:[%s1 + $0x20] sm:$0xff]
  %v26 = vld [vmem:[%s1 + $0x28] sm:$0xff]
  %v27 = vld [vmem:[%s1 + $0x30] sm:$0xff]
  %v28 = vld [vmem:[%s1 + $0x38] sm:$0xff]
  %v29 = vld [vmem:[%s1 + $0x40] sm:$0xff]
  %v30 = vld [vmem:[%s1 + $0x48] sm:$0xff]
  %v31 = vld [vmem:[%s1 + $0x50] sm:$0xff]
  %v32 = vld [vmem:[%s1 + $0x58] sm:$0xff]
  %v33 = vld [vmem:[%s1 + $0x60] sm:$0xff]
  %v34 = vld [vmem:[%s1 + $0x68] sm:$0xff]
  %v35 = vld [vmem:[%s1 + $0x70] sm:$0xff]
  %v36 = vld [vmem:[%s1 + $0x78] sm:$0xff]
  %v37 = vld [vmem:[%s1 + $0x80] sm:$0xff]
  %v38 = vld [vmem:[%s1 + $0x88] sm:$0xff]
  %v39 = vld [vmem:[%s1 + $0x90] sm:$0xff]
  %v40 = vld [vmem:[%s1 + $0x98] sm:$0xff]
  %v41 = vld [vmem:[%s1 + $0xa0] sm:$0xff]
  %v42 = vld [vmem:[%s1 + $0xa8] sm:$0xff]
  %v43 = vld [vmem:[%s1 + $0xb0] sm:$0xff]
  %v44 = vld [vmem:[%s1 + $0xb8] sm:$0xff]
  %v45 = vld [vmem:[%s1 + $0xc0] sm:$0xff]
  %v46 = vld [vmem:[%s1 + $0xc8] sm:$0xff]
  %v47 = vld [vmem:[%s1 + $0xd0] sm:$0xff]
  %v48 = vld [vmem:[%s1 + $0xd8] sm:$0xff]
  %v49 = vld [vmem:[%s1 + $0xe0] sm:$0xff]
  %v50 = vld [vmem:[%s1 + $0xe8] sm:$0xff]
  %v51 = vld [vmem:[%s1 + $0xf0] sm:$0xff]
  %v52 = vld [vmem:[%s1 + $0xf8] sm:$0xff]
  %v53 = vld [vmem:[%s1 + $0x100] sm:$0xff]
  %v54 = vld [vmem:[%s1 + $0x108] sm:$0xff]
  %v55 = vld [vmem:[%s1 + $0x110] sm:$0xff]
  %v56 = vld [vmem:[%s1 + $0x118] sm:$0xff]
  %v57 = vld [vmem:[%s1 + $0x120] sm:$0xff]
  %v58 = vld [vmem:[%s1 + $0x128] sm:$0xff]
  %v59 = vld [vmem:[%s1 + $0x130] sm:$0xff]
  %v60 = vld [vmem:[%s1 + $0x138] sm:$0xff]
  %v61 = vld [vmem:[%s1 + $0x140] sm:$0xff]
  %v62 = vld [vmem:[%s1 + $0x148] sm:$0xff]
  %v63 = vld [vmem:[%s1 + $0x150] sm:$0xff]
  %v64 = vld [vmem:[%s1 + $0x158] sm:$0xff]
  %v65 = vld [vmem:[%s1 + $0x160] sm:$0xff]
  %v66 = vld [vmem:[%s1 + $0x168] sm:$0xff]
  %v67 = vld [vmem:[%s1 + $0x170] sm:$0xff]
  %v68 = vld [vmem:[%s1 + $0x178] sm:$0xff]
  %v69 = vld [vmem:[%s1 + $0x180] sm:$0xff]
  %v70 = vld [vmem:[%s1 + $0x188] sm:$0xff]
  %v71 = vld [vmem:[%s1 + $0x190] sm:$0xff]
  %v72 = vld [vmem:[%s1 + $0x198] sm:$0xff]
  %v73 = vld [vmem:[%s1 + $0x1a0] sm:$0xff]
  %v74 = vld [vmem:[%s1 + $0x1a8] sm:$0xff]
  %v75 = vld [vmem:[%s1 + $0x1b0] sm:$0xff]
  %v76 = vld [vmem:[%s1 + $0x1b8] sm:$0xff]
  %v77 = vld [vmem:[%s1 + $0x1c0] sm:$0xff]
  %v78 = vld [vmem:[%s1 + $0x1c8] sm:$0xff]
  %v79 = vld [vmem:[%s1 + $0x1d0] sm:$0xff]
  %v80 = vld [vmem:[%s1 + $0x1d8] sm:$0xff]
  %v81 = vld [vmem:[%s1 + $0x1e0] sm:$0xff]
  %v82 = vld [vmem:[%s1 + $0x1e8] sm:$0xff]
  %v83 = vld [vmem:[%s1 + $0x1f0] sm:$0xff]
  %v84 = vld [vmem:[%s1 + $0x1f8] sm:$0xff]
  %v85 = vld [vmem:[%s1 + $0x200] sm:$0xff]
  %v86 = vld [vmem:[%s1 + $0x208] sm:$0xff]
  %v87 = vld [vmem:[%s1 + $0x210] sm:$0xff]
  %v88 = vld [vmem:[%s1 + $0x218] sm:$0xff]
  %v89 = vld [vmem:[%s1 + $0x220] sm:$0xff]
  %v90 = vld [vmem:[%s1 + $0x228] sm:$0xff]
  %v91 = vld [vmem:[%s1 + $0x230] sm:$0xff]
  %v92 = vld [vmem:[%s1 + $0x238] sm:$0xff]
  %v93 = vld [vmem:[%s1 + $0x240] sm:$0xff]
  %v94 = vld [vmem:[%s1 + $0x248] sm:$0xff]
  %v95 = vld [vmem:[%s1 + $0x250] sm:$0xff]
  %v96 = vld [vmem:[%s1 + $0x258] sm:$0xff]
  %v97 = vld [vmem:[%s1 + $0x260] sm:$0xff]
  %v98 = vld [vmem:[%s1 + $0x268] sm:$0xff]
  %v99 = vld [vmem:[%s1 + $0x270] sm:$0xff]
  %v100 = vld [vmem:[%s1 + $0x278] sm:$0xff]
  %v101 = vld [vmem:[%s1 + $0x280] sm:$0xff]
  %v102 = vld [vmem:[%s1 + $0x288] sm:$0xff]
  %v103 = vld [vmem:[%s1 + $0x290] sm:$0xff]
  %v104 = vld [vmem:[%s1 + $0x298] sm:$0xff]
  %v105 = vld [vmem:[%s1 + $0x2a0] sm:$0xff]
  %v106 = vld [vmem:[%s1 + $0x2a8] sm:$0xff]
  %v107 = vld [vmem:[%s1 + $0x2b0] sm:$0xff]
  %v108 = vld [vmem:[%s1 + $0x2b8] sm:$0xff]
  %v109 = vld [vmem:[%s1 + $0x2c0] sm:$0xff]
  %v110 = vld [vmem:[%s1 + $0x2c8] sm:$0xff]
  %v111 = vld [vmem:[%s1 + $0x2d0] sm:$0xff]
  %v112 = vld [vmem:[%s1 + $0x2d8] sm:$0xff]
  %v113 = vld [vmem:[%s1 + $0x2e0] sm:$0xff]
  %v114 = vld [vmem:[%s1 + $0x2e8] sm:$0xff]
  %v115 = vld [vmem:[%s1 + $0x2f0] sm:$0xff]
  %v116 = vld [vmem:[%s1 + $0x2f8] sm:$0xff]
  %v117 = vld [vmem:[%s1 + $0x300] sm:$0xff]
  %v118 = vld [vmem:[%s1 + $0x308] sm:$0xff]
  %v119 = vld [vmem:[%s1 + $0x310] sm:$0xff]
  %v120 = vld [vmem:[%s1 + $0x318] sm:$0xff]
  %v121 = vld [vmem:[%s1 + $0x320] sm:$0xff]
  %v122 = vld [vmem:[%s1 + $0x328] sm:$0xff]
  %v123 = vld [vmem:[%s1 + $0x330] sm:$0xff]
  %v124 = vld [vmem:[%s1 + $0x338] sm:$0xff]
  %v125 = vld [vmem:[%s1 + $0x340] sm:$0xff]
  %v126 = vld [vmem:[%s1 + $0x348] sm:$0xff]
  %v127 = vld [vmem:[%s1 + $0x350] sm:$0xff]
  %v128 = vld [vmem:[%s1 + $0x358] sm:$0xff]
  %v129 = vld [vmem:[%s1 + $0x360] sm:$0xff]
  %v130 = vld [vmem:[%s1 + $0x368] sm:$0xff]
  %v131 = vld [vmem:[%s1 + $0x370] sm:$0xff]
  %v132 = vld [vmem:[%s1 + $0x378] sm:$0xff]
  %v133 = vld [vmem:[%s1 + $0x380] sm:$0xff]
  %v134 = vld [vmem:[%s1 + $0x388] sm:$0xff]
  %v135 = vld [vmem:[%s1 + $0x390] sm:$0xff]
  %v136 = vld [vmem:[%s1 + $0x398] sm:$0xff]
  %v137 = vld [vmem:[%s1 + $0x3a0] sm:$0xff]
  %v138 = vld [vmem:[%s1 + $0x3a8] sm:$0xff]
  %v139 = vld [vmem:[%s1 + $0x3b0] sm:$0xff]
  %v140 = vld [vmem:[%s1 + $0x3b8] sm:$0xff]
  %v141 = vld [vmem:[%s1 + $0x3c0] sm:$0xff]
  %v142 = vld [vmem:[%s1 + $0x3c8] sm:$0xff]
  %v143 = vld [vmem:[%s1 + $0x3d0] sm:$0xff]
  %v144 = vld [vmem:[%s1 + $0x3d8] sm:$0xff]
  %v145 = vld [vmem:[%s1 + $0x3e0] sm:$0xff]
  %v146 = vld [vmem:[%s1 + $0x3e8] sm:$0xff]
  %v147 = vld [vmem:[%s1 + $0x3f0] sm:$0xff]
  %v148 = vld [vmem:[%s1 + $0x3f8] sm:$0xff]
  %v149 = vld [vmem:[%s1 + $0x400] sm:$0xff]
  %v150 = vld [vmem:[%s1 + $0x408] sm:$0xff]
  %v151 = vld [vmem:[%s1 + $0x410] sm:$0xff]
  %v152 = vld [vmem:[%s1 + $0x418] sm:$0xff]
  %v153 = vld [vmem:[%s1 + $0x420] sm:$0xff]
  %v154 = vld [vmem:[%s1 + $0x428] sm:$0xff]
  %v155 = vld [vmem:[%s1 + $0x430] sm:$0xff]
  %v156 = vld [vmem:[%s1 + $0x438] sm:$0xff]
  %v157 = vld [vmem:[%s1 + $0x440] sm:$0xff]
  %v158 = vld [vmem:[%s1 + $0x448] sm:$0xff]
  %v159 = vld [vmem:[%s1 + $0x450] sm:$0xff]
  %v160 = vld [vmem:[%s1 + $0x458] sm:$0xff]
  %v161 = vld [vmem:[%s1 + $0x460] sm:$0xff]
  %v162 = vld [vmem:[%s1 + $0x468] sm:$0xff]
  %v163 = vld [vmem:[%s1 + $0x470] sm:$0xff]
  %v164 = vld [vmem:[%s1 + $0x478] sm:$0xff]
  %v165 = vld [vmem:[%s1 + $0x480] sm:$0xff]
  %v166 = vld [vmem:[%s1 + $0x488] sm:$0xff]
  %v167 = vld [vmem:[%s1 + $0x490] sm:$0xff]
  %v168 = vld [vmem:[%s1 + $0x498] sm:$0xff]
  %v169 = vld [vmem:[%s1 + $0x4a0] sm:$0xff]
  %v170 = vld [vmem:[%s1 + $0x4a8] sm:$0xff]
  %v171 = vld [vmem:[%s1 + $0x4b0] sm:$0xff]
  %v172 = vld [vmem:[%s1 + $0x4b8] sm:$0xff]
  %v173 = vld [vmem:[%s1 + $0x4c0] sm:$0xff]
  %v174 = vld [vmem:[%s1 + $0x4c8] sm:$0xff]
  %v175 = vld [vmem:[%s1 + $0x4d0] sm:$0xff]
  %v176 = vld [vmem:[%s1 + $0x4d8] sm:$0xff]
  %v177 = vld [vmem:[%s1 + $0x4e0] sm:$0xff]
  %v178 = vld [vmem:[%s1 + $0x4e8] sm:$0xff]
  %v179 = vld [vmem:[%s1 + $0x4f0] sm:$0xff]
  %v180 = vld [vmem:[%s1 + $0x4f8] sm:$0xff]
  %v181 = vld [vmem:[%s2] sm:$0xf]
  %v183 = vlaneseq
  %v184 = vshrl.u32 %v183, 7
  %v185 = vsub.s32 0, %v184
  %v186 = vrot.slane %v181, %v185
  %v187 = vlaneseq
  %v188 = vshrl.u32 %v187, 7
  %v189 = vsub.s32 1, %v188
  %v190 = vrot.slane %v181, %v189
  %v191 = vlaneseq
  %v192 = vshrl.u32 %v191, 7
  %v193 = vsub.s32 2, %v192
  %v194 = vrot.slane %v181, %v193
  %v195 = vlaneseq
  %v196 = vshrl.u32 %v195, 7
  %v197 = vsub.s32 3, %v196
  %v198 = vrot.slane %v181, %v197
  %v209 = vunpack.c.l.b16 %v15
  %v210 = vunpack.c.h.b16 %v15
  %v211 = vunpack.c.l.b16 %v16
  %v212 = vunpack.c.h.b16 %v16
  %v213 = vunpack.c.l.b16 %v17
  %v214 = vunpack.c.l.b16 %v18
  %v215 = vunpack.c.h.b16 %v18
  %v216 = vunpack.c.l.b16 %v19
  %v217 = vunpack.c.h.b16 %v19
  %v218 = vunpack.c.l.b16 %v20
  %v219 = vpack.c.b16 %v214, %v209
  %v220 = vpack.c.b16 %v215, %v210
  %v221 = vpack.c.b16 %v216, %v211
  %v222 = vpack.c.b16 %v217, %v212
  %v223 = vpack.c.b16 %v218, %v213
  %v389 = vunpack.c.l.b16 %v21
  %v390 = vunpack.c.h.b16 %v21
  %v391 = vunpack.c.l.b16 %v22
  %v392 = vunpack.c.h.b16 %v22
  %v393 = vunpack.c.l.b16 %v23
  %v394 = vunpack.c.h.b16 %v23
  %v395 = vunpack.c.l.b16 %v24
  %v396 = vunpack.c.h.b16 %v24
  %v397 = vunpack.c.l.b16 %v25
  %v398 = vunpack.c.h.b16 %v25
  %v399 = vunpack.c.l.b16 %v26
  %v400 = vunpack.c.h.b16 %v26
  %v401 = vunpack.c.l.b16 %v27
  %v402 = vunpack.c.h.b16 %v27
  %v403 = vunpack.c.l.b16 %v28
  %v404 = vunpack.c.h.b16 %v28
  %v405 = vunpack.c.l.b16 %v29
  %v406 = vunpack.c.h.b16 %v29
  %v407 = vunpack.c.l.b16 %v30
  %v408 = vunpack.c.h.b16 %v30
  %v409 = vunpack.c.l.b16 %v31
  %v410 = vunpack.c.h.b16 %v31
  %v411 = vunpack.c.l.b16 %v32
  %v412 = vunpack.c.h.b16 %v32
  %v413 = vunpack.c.l.b16 %v33
  %v414 = vunpack.c.h.b16 %v33
  %v415 = vunpack.c.l.b16 %v34
  %v416 = vunpack.c.h.b16 %v34
  %v417 = vunpack.c.l.b16 %v35
  %v418 = vunpack.c.h.b16 %v35
  %v419 = vunpack.c.l.b16 %v36
  %v420 = vunpack.c.h.b16 %v36
  %v421 = vunpack.c.l.b16 %v37
  %v422 = vunpack.c.h.b16 %v37
  %v423 = vunpack.c.l.b16 %v38
  %v424 = vunpack.c.h.b16 %v38
  %v425 = vunpack.c.l.b16 %v39
  %v426 = vunpack.c.h.b16 %v39
  %v427 = vunpack.c.l.b16 %v40
  %v428 = vunpack.c.h.b16 %v40
  %v429 = vunpack.c.l.b16 %v41
  %v430 = vunpack.c.h.b16 %v41
  %v431 = vunpack.c.l.b16 %v42
  %v432 = vunpack.c.h.b16 %v42
  %v433 = vunpack.c.l.b16 %v43
  %v434 = vunpack.c.h.b16 %v43
  %v435 = vunpack.c.l.b16 %v44
  %v436 = vunpack.c.h.b16 %v44
  %v437 = vunpack.c.l.b16 %v45
  %v438 = vunpack.c.h.b16 %v45
  %v439 = vunpack.c.l.b16 %v46
  %v440 = vunpack.c.h.b16 %v46
  %v441 = vunpack.c.l.b16 %v47
  %v442 = vunpack.c.h.b16 %v47
  %v443 = vunpack.c.l.b16 %v48
  %v444 = vunpack.c.h.b16 %v48
  %v445 = vunpack.c.l.b16 %v49
  %v446 = vunpack.c.h.b16 %v49
  %v447 = vunpack.c.l.b16 %v50
  %v448 = vunpack.c.h.b16 %v50
  %v449 = vunpack.c.l.b16 %v51
  %v450 = vunpack.c.h.b16 %v51
  %v451 = vunpack.c.l.b16 %v52
  %v452 = vunpack.c.h.b16 %v52
  %v453 = vunpack.c.l.b16 %v53
  %v454 = vunpack.c.h.b16 %v53
  %v455 = vunpack.c.l.b16 %v54
  %v456 = vunpack.c.h.b16 %v54
  %v457 = vunpack.c.l.b16 %v55
  %v458 = vunpack.c.h.b16 %v55
  %v459 = vunpack.c.l.b16 %v56
  %v460 = vunpack.c.h.b16 %v56
  %v461 = vunpack.c.l.b16 %v57
  %v462 = vunpack.c.h.b16 %v57
  %v463 = vunpack.c.l.b16 %v58
  %v464 = vunpack.c.h.b16 %v58
  %v465 = vunpack.c.l.b16 %v59
  %v466 = vunpack.c.h.b16 %v59
  %v467 = vunpack.c.l.b16 %v60
  %v468 = vunpack.c.h.b16 %v60
  %v469 = vunpack.c.l.b16 %v61
  %v470 = vunpack.c.h.b16 %v61
  %v471 = vunpack.c.l.b16 %v62
  %v472 = vunpack.c.h.b16 %v62
  %v473 = vunpack.c.l.b16 %v63
  %v474 = vunpack.c.h.b16 %v63
  %v475 = vunpack.c.l.b16 %v64
  %v476 = vunpack.c.h.b16 %v64
  %v477 = vunpack.c.l.b16 %v65
  %v478 = vunpack.c.h.b16 %v65
  %v479 = vunpack.c.l.b16 %v66
  %v480 = vunpack.c.h.b16 %v66
  %v481 = vunpack.c.l.b16 %v67
  %v482 = vunpack.c.h.b16 %v67
  %v483 = vunpack.c.l.b16 %v68
  %v484 = vunpack.c.h.b16 %v68
  %v485 = vunpack.c.l.b16 %v69
  %v486 = vunpack.c.h.b16 %v69
  %v487 = vunpack.c.l.b16 %v70
  %v488 = vunpack.c.h.b16 %v70
  %v489 = vunpack.c.l.b16 %v71
  %v490 = vunpack.c.h.b16 %v71
  %v491 = vunpack.c.l.b16 %v72
  %v492 = vunpack.c.h.b16 %v72
  %v493 = vunpack.c.l.b16 %v73
  %v494 = vunpack.c.h.b16 %v73
  %v495 = vunpack.c.l.b16 %v74
  %v496 = vunpack.c.h.b16 %v74
  %v497 = vunpack.c.l.b16 %v75
  %v498 = vunpack.c.h.b16 %v75
  %v499 = vunpack.c.l.b16 %v76
  %v500 = vunpack.c.h.b16 %v76
  %v501 = vunpack.c.l.b16 %v77
  %v502 = vunpack.c.h.b16 %v77
  %v503 = vunpack.c.l.b16 %v78
  %v504 = vunpack.c.h.b16 %v78
  %v505 = vunpack.c.l.b16 %v79
  %v506 = vunpack.c.h.b16 %v79
  %v507 = vunpack.c.l.b16 %v80
  %v508 = vunpack.c.h.b16 %v80
  %v509 = vunpack.c.l.b16 %v81
  %v510 = vunpack.c.h.b16 %v81
  %v511 = vunpack.c.l.b16 %v82
  %v512 = vunpack.c.h.b16 %v82
  %v513 = vunpack.c.l.b16 %v83
  %v514 = vunpack.c.h.b16 %v83
  %v515 = vunpack.c.l.b16 %v84
  %v516 = vunpack.c.h.b16 %v84
  %v517 = vunpack.c.l.b16 %v85
  %v518 = vunpack.c.h.b16 %v85
  %v519 = vunpack.c.l.b16 %v86
  %v520 = vunpack.c.h.b16 %v86
  %v521 = vunpack.c.l.b16 %v87
  %v522 = vunpack.c.h.b16 %v87
  %v523 = vunpack.c.l.b16 %v88
  %v524 = vunpack.c.h.b16 %v88
  %v525 = vunpack.c.l.b16 %v89
  %v526 = vunpack.c.h.b16 %v89
  %v527 = vunpack.c.l.b16 %v90
  %v528 = vunpack.c.h.b16 %v90
  %v529 = vunpack.c.l.b16 %v91
  %v530 = vunpack.c.h.b16 %v91
  %v531 = vunpack.c.l.b16 %v92
  %v532 = vunpack.c.h.b16 %v92
  %v533 = vunpack.c.l.b16 %v93
  %v534 = vunpack.c.h.b16 %v93
  %v535 = vunpack.c.l.b16 %v94
  %v536 = vunpack.c.h.b16 %v94
  %v537 = vunpack.c.l.b16 %v95
  %v538 = vunpack.c.h.b16 %v95
  %v539 = vunpack.c.l.b16 %v96
  %v540 = vunpack.c.h.b16 %v96
  %v541 = vunpack.c.l.b16 %v97
  %v542 = vunpack.c.h.b16 %v97
  %v543 = vunpack.c.l.b16 %v98
  %v544 = vunpack.c.h.b16 %v98
  %v545 = vunpack.c.l.b16 %v99
  %v546 = vunpack.c.h.b16 %v99
  %v547 = vunpack.c.l.b16 %v100
  %v548 = vunpack.c.h.b16 %v100
  %v549 = vunpack.c.l.b16 %v101
  %v550 = vunpack.c.h.b16 %v101
  %v551 = vunpack.c.l.b16 %v102
  %v552 = vunpack.c.h.b16 %v102
  %v553 = vunpack.c.l.b16 %v103
  %v554 = vunpack.c.h.b16 %v103
  %v555 = vunpack.c.l.b16 %v104
  %v556 = vunpack.c.h.b16 %v104
  %v557 = vunpack.c.l.b16 %v105
  %v558 = vunpack.c.h.b16 %v105
  %v559 = vunpack.c.l.b16 %v106
  %v560 = vunpack.c.h.b16 %v106
  %v561 = vunpack.c.l.b16 %v107
  %v562 = vunpack.c.h.b16 %v107
  %v563 = vunpack.c.l.b16 %v108
  %v564 = vunpack.c.h.b16 %v108
  %v565 = vunpack.c.l.b16 %v109
  %v566 = vunpack.c.h.b16 %v109
  %v567 = vunpack.c.l.b16 %v110
  %v568 = vunpack.c.h.b16 %v110
  %v569 = vunpack.c.l.b16 %v111
  %v570 = vunpack.c.h.b16 %v111
  %v571 = vunpack.c.l.b16 %v112
  %v572 = vunpack.c.h.b16 %v112
  %v573 = vunpack.c.l.b16 %v113
  %v574 = vunpack.c.h.b16 %v113
  %v575 = vunpack.c.l.b16 %v114
  %v576 = vunpack.c.h.b16 %v114
  %v577 = vunpack.c.l.b16 %v115
  %v578 = vunpack.c.h.b16 %v115
  %v579 = vunpack.c.l.b16 %v116
  %v580 = vunpack.c.h.b16 %v116
  %v581 = vunpack.c.l.b16 %v117
  %v582 = vunpack.c.h.b16 %v117
  %v583 = vunpack.c.l.b16 %v118
  %v584 = vunpack.c.h.b16 %v118
  %v585 = vunpack.c.l.b16 %v119
  %v586 = vunpack.c.h.b16 %v119
  %v587 = vunpack.c.l.b16 %v120
  %v588 = vunpack.c.h.b16 %v120
  %v589 = vunpack.c.l.b16 %v121
  %v590 = vunpack.c.h.b16 %v121
  %v591 = vunpack.c.l.b16 %v122
  %v592 = vunpack.c.h.b16 %v122
  %v593 = vunpack.c.l.b16 %v123
  %v594 = vunpack.c.h.b16 %v123
  %v595 = vunpack.c.l.b16 %v124
  %v596 = vunpack.c.h.b16 %v124
  %v597 = vunpack.c.l.b16 %v125
  %v598 = vunpack.c.h.b16 %v125
  %v599 = vunpack.c.l.b16 %v126
  %v600 = vunpack.c.h.b16 %v126
  %v601 = vunpack.c.l.b16 %v127
  %v602 = vunpack.c.h.b16 %v127
  %v603 = vunpack.c.l.b16 %v128
  %v604 = vunpack.c.h.b16 %v128
  %v605 = vunpack.c.l.b16 %v129
  %v606 = vunpack.c.h.b16 %v129
  %v607 = vunpack.c.l.b16 %v130
  %v608 = vunpack.c.h.b16 %v130
  %v609 = vunpack.c.l.b16 %v131
  %v610 = vunpack.c.h.b16 %v131
  %v611 = vunpack.c.l.b16 %v132
  %v612 = vunpack.c.h.b16 %v132
  %v613 = vunpack.c.l.b16 %v133
  %v614 = vunpack.c.h.b16 %v133
  %v615 = vunpack.c.l.b16 %v134
  %v616 = vunpack.c.h.b16 %v134
  %v617 = vunpack.c.l.b16 %v135
  %v618 = vunpack.c.h.b16 %v135
  %v619 = vunpack.c.l.b16 %v136
  %v620 = vunpack.c.h.b16 %v136
  %v621 = vunpack.c.l.b16 %v137
  %v622 = vunpack.c.h.b16 %v137
  %v623 = vunpack.c.l.b16 %v138
  %v624 = vunpack.c.h.b16 %v138
  %v625 = vunpack.c.l.b16 %v139
  %v626 = vunpack.c.h.b16 %v139
  %v627 = vunpack.c.l.b16 %v140
  %v628 = vunpack.c.h.b16 %v140
  %v629 = vunpack.c.l.b16 %v141
  %v630 = vunpack.c.h.b16 %v141
  %v631 = vunpack.c.l.b16 %v142
  %v632 = vunpack.c.h.b16 %v142
  %v633 = vunpack.c.l.b16 %v143
  %v634 = vunpack.c.h.b16 %v143
  %v635 = vunpack.c.l.b16 %v144
  %v636 = vunpack.c.h.b16 %v144
  %v637 = vunpack.c.l.b16 %v145
  %v638 = vunpack.c.h.b16 %v145
  %v639 = vunpack.c.l.b16 %v146
  %v640 = vunpack.c.h.b16 %v146
  %v641 = vunpack.c.l.b16 %v147
  %v642 = vunpack.c.h.b16 %v147
  %v643 = vunpack.c.l.b16 %v148
  %v644 = vunpack.c.h.b16 %v148
  %v645 = vunpack.c.l.b16 %v149
  %v646 = vunpack.c.h.b16 %v149
  %v647 = vunpack.c.l.b16 %v150
  %v648 = vunpack.c.h.b16 %v150
  %v649 = vunpack.c.l.b16 %v151
  %v650 = vunpack.c.h.b16 %v151
  %v651 = vunpack.c.l.b16 %v152
  %v652 = vunpack.c.h.b16 %v152
  %v653 = vunpack.c.l.b16 %v153
  %v654 = vunpack.c.h.b16 %v153
  %v655 = vunpack.c.l.b16 %v154
  %v656 = vunpack.c.h.b16 %v154
  %v657 = vunpack.c.l.b16 %v155
  %v658 = vunpack.c.h.b16 %v155
  %v659 = vunpack.c.l.b16 %v156
  %v660 = vunpack.c.h.b16 %v156
  %v661 = vunpack.c.l.b16 %v157
  %v662 = vunpack.c.h.b16 %v157
  %v663 = vunpack.c.l.b16 %v158
  %v664 = vunpack.c.h.b16 %v158
  %v665 = vunpack.c.l.b16 %v159
  %v666 = vunpack.c.h.b16 %v159
  %v667 = vunpack.c.l.b16 %v160
  %v668 = vunpack.c.h.b16 %v160
  %v669 = vunpack.c.l.b16 %v161
  %v670 = vunpack.c.h.b16 %v161
  %v671 = vunpack.c.l.b16 %v162
  %v672 = vunpack.c.h.b16 %v162
  %v673 = vunpack.c.l.b16 %v163
  %v674 = vunpack.c.h.b16 %v163
  %v675 = vunpack.c.l.b16 %v164
  %v676 = vunpack.c.h.b16 %v164
  %v677 = vunpack.c.l.b16 %v165
  %v678 = vunpack.c.h.b16 %v165
  %v679 = vunpack.c.l.b16 %v166
  %v680 = vunpack.c.h.b16 %v166
  %v681 = vunpack.c.l.b16 %v167
  %v682 = vunpack.c.h.b16 %v167
  %v683 = vunpack.c.l.b16 %v168
  %v684 = vunpack.c.h.b16 %v168
  %v685 = vunpack.c.l.b16 %v169
  %v686 = vunpack.c.h.b16 %v169
  %v687 = vunpack.c.l.b16 %v170
  %v688 = vunpack.c.h.b16 %v170
  %v689 = vunpack.c.l.b16 %v171
  %v690 = vunpack.c.h.b16 %v171
  %v691 = vunpack.c.l.b16 %v172
  %v692 = vunpack.c.h.b16 %v172
  %v693 = vunpack.c.l.b16 %v173
  %v694 = vunpack.c.h.b16 %v173
  %v695 = vunpack.c.l.b16 %v174
  %v696 = vunpack.c.h.b16 %v174
  %v697 = vunpack.c.l.b16 %v175
  %v698 = vunpack.c.h.b16 %v175
  %v699 = vunpack.c.l.b16 %v176
  %v700 = vunpack.c.h.b16 %v176
  %v701 = vunpack.c.l.b16 %v177
  %v702 = vunpack.c.h.b16 %v177
  %v703 = vunpack.c.l.b16 %v178
  %v704 = vunpack.c.h.b16 %v178
  %v705 = vunpack.c.l.b16 %v179
  %v706 = vunpack.c.h.b16 %v179
  %v707 = vunpack.c.l.b16 %v180
  %v708 = vunpack.c.h.b16 %v180
  %v709 = vpack.c.b16 %v393, %v389
  %v710 = vpack.c.b16 %v394, %v390
  %v711 = vpack.c.b16 %v395, %v391
  %v712 = vpack.c.b16 %v396, %v392
  %v713 = vpack.c.b16 %v401, %v397
  %v714 = vpack.c.b16 %v402, %v398
  %v715 = vpack.c.b16 %v403, %v399
  %v716 = vpack.c.b16 %v404, %v400
  %v717 = vpack.c.b16 %v409, %v405
  %v718 = vpack.c.b16 %v410, %v406
  %v719 = vpack.c.b16 %v411, %v407
  %v720 = vpack.c.b16 %v412, %v408
  %v721 = vpack.c.b16 %v417, %v413
  %v722 = vpack.c.b16 %v418, %v414
  %v723 = vpack.c.b16 %v419, %v415
  %v724 = vpack.c.b16 %v420, %v416
  %v725 = vpack.c.b16 %v425, %v421
  %v726 = vpack.c.b16 %v426, %v422
  %v727 = vpack.c.b16 %v427, %v423
  %v728 = vpack.c.b16 %v428, %v424
  %v729 = vpack.c.b16 %v433, %v429
  %v730 = vpack.c.b16 %v434, %v430
  %v731 = vpack.c.b16 %v435, %v431
  %v732 = vpack.c.b16 %v436, %v432
  %v733 = vpack.c.b16 %v441, %v437
  %v734 = vpack.c.b16 %v442, %v438
  %v735 = vpack.c.b16 %v443, %v439
  %v736 = vpack.c.b16 %v444, %v440
  %v737 = vpack.c.b16 %v449, %v445
  %v738 = vpack.c.b16 %v450, %v446
  %v739 = vpack.c.b16 %v451, %v447
  %v740 = vpack.c.b16 %v452, %v448
  %v741 = vpack.c.b16 %v457, %v453
  %v742 = vpack.c.b16 %v458, %v454
  %v743 = vpack.c.b16 %v459, %v455
  %v744 = vpack.c.b16 %v460, %v456
  %v745 = vpack.c.b16 %v465, %v461
  %v746 = vpack.c.b16 %v466, %v462
  %v747 = vpack.c.b16 %v467, %v463
  %v748 = vpack.c.b16 %v468, %v464
  %v749 = vpack.c.b16 %v473, %v469
  %v750 = vpack.c.b16 %v474, %v470
  %v751 = vpack.c.b16 %v475, %v471
  %v752 = vpack.c.b16 %v476, %v472
  %v753 = vpack.c.b16 %v481, %v477
  %v754 = vpack.c.b16 %v482, %v478
  %v755 = vpack.c.b16 %v483, %v479
  %v756 = vpack.c.b16 %v484, %v480
  %v757 = vpack.c.b16 %v489, %v485
  %v758 = vpack.c.b16 %v490, %v486
  %v759 = vpack.c.b16 %v491, %v487
  %v760 = vpack.c.b16 %v492, %v488
  %v761 = vpack.c.b16 %v497, %v493
  %v762 = vpack.c.b16 %v498, %v494
  %v763 = vpack.c.b16 %v499, %v495
  %v764 = vpack.c.b16 %v500, %v496
  %v765 = vpack.c.b16 %v505, %v501
  %v766 = vpack.c.b16 %v506, %v502
  %v767 = vpack.c.b16 %v507, %v503
  %v768 = vpack.c.b16 %v508, %v504
  %v769 = vpack.c.b16 %v513, %v509
  %v770 = vpack.c.b16 %v514, %v510
  %v771 = vpack.c.b16 %v515, %v511
  %v772 = vpack.c.b16 %v516, %v512
  %v773 = vpack.c.b16 %v521, %v517
  %v774 = vpack.c.b16 %v522, %v518
  %v775 = vpack.c.b16 %v523, %v519
  %v776 = vpack.c.b16 %v524, %v520
  %v777 = vpack.c.b16 %v529, %v525
  %v778 = vpack.c.b16 %v530, %v526
  %v779 = vpack.c.b16 %v531, %v527
  %v780 = vpack.c.b16 %v532, %v528
  %v781 = vpack.c.b16 %v537, %v533
  %v782 = vpack.c.b16 %v538, %v534
  %v783 = vpack.c.b16 %v539, %v535
  %v784 = vpack.c.b16 %v540, %v536
  %v785 = vpack.c.b16 %v545, %v541
  %v786 = vpack.c.b16 %v546, %v542
  %v787 = vpack.c.b16 %v547, %v543
  %v788 = vpack.c.b16 %v548, %v544
  %v789 = vpack.c.b16 %v553, %v549
  %v790 = vpack.c.b16 %v554, %v550
  %v791 = vpack.c.b16 %v555, %v551
  %v792 = vpack.c.b16 %v556, %v552
  %v793 = vpack.c.b16 %v561, %v557
  %v794 = vpack.c.b16 %v562, %v558
  %v795 = vpack.c.b16 %v563, %v559
  %v796 = vpack.c.b16 %v564, %v560
  %v797 = vpack.c.b16 %v569, %v565
  %v798 = vpack.c.b16 %v570, %v566
  %v799 = vpack.c.b16 %v571, %v567
  %v800 = vpack.c.b16 %v572, %v568
  %v801 = vpack.c.b16 %v577, %v573
  %v802 = vpack.c.b16 %v578, %v574
  %v803 = vpack.c.b16 %v579, %v575
  %v804 = vpack.c.b16 %v580, %v576
  %v805 = vpack.c.b16 %v585, %v581
  %v806 = vpack.c.b16 %v586, %v582
  %v807 = vpack.c.b16 %v587, %v583
  %v808 = vpack.c.b16 %v588, %v584
  %v809 = vpack.c.b16 %v593, %v589
  %v810 = vpack.c.b16 %v594, %v590
  %v811 = vpack.c.b16 %v595, %v591
  %v812 = vpack.c.b16 %v596, %v592
  %v813 = vpack.c.b16 %v601, %v597
  %v814 = vpack.c.b16 %v602, %v598
  %v815 = vpack.c.b16 %v603, %v599
  %v816 = vpack.c.b16 %v604, %v600
  %v817 = vpack.c.b16 %v609, %v605
  %v818 = vpack.c.b16 %v610, %v606
  %v819 = vpack.c.b16 %v611, %v607
  %v820 = vpack.c.b16 %v612, %v608
  %v821 = vpack.c.b16 %v617, %v613
  %v822 = vpack.c.b16 %v618, %v614
  %v823 = vpack.c.b16 %v619, %v615
  %v824 = vpack.c.b16 %v620, %v616
  %v825 = vpack.c.b16 %v625, %v621
  %v826 = vpack.c.b16 %v626, %v622
  %v827 = vpack.c.b16 %v627, %v623
  %v828 = vpack.c.b16 %v628, %v624
  %v829 = vpack.c.b16 %v633, %v629
  %v830 = vpack.c.b16 %v634, %v630
  %v831 = vpack.c.b16 %v635, %v631
  %v832 = vpack.c.b16 %v636, %v632
  %v833 = vpack.c.b16 %v641, %v637
  %v834 = vpack.c.b16 %v642, %v638
  %v835 = vpack.c.b16 %v643, %v639
  %v836 = vpack.c.b16 %v644, %v640
  %v837 = vpack.c.b16 %v649, %v645
  %v838 = vpack.c.b16 %v650, %v646
  %v839 = vpack.c.b16 %v651, %v647
  %v840 = vpack.c.b16 %v652, %v648
  %v841 = vpack.c.b16 %v657, %v653
  %v842 = vpack.c.b16 %v658, %v654
  %v843 = vpack.c.b16 %v659, %v655
  %v844 = vpack.c.b16 %v660, %v656
  %v845 = vpack.c.b16 %v665, %v661
  %v846 = vpack.c.b16 %v666, %v662
  %v847 = vpack.c.b16 %v667, %v663
  %v848 = vpack.c.b16 %v668, %v664
  %v849 = vpack.c.b16 %v673, %v669
  %v850 = vpack.c.b16 %v674, %v670
  %v851 = vpack.c.b16 %v675, %v671
  %v852 = vpack.c.b16 %v676, %v672
  %v853 = vpack.c.b16 %v681, %v677
  %v854 = vpack.c.b16 %v682, %v678
  %v855 = vpack.c.b16 %v683, %v679
  %v856 = vpack.c.b16 %v684, %v680
  %v857 = vpack.c.b16 %v689, %v685
  %v858 = vpack.c.b16 %v690, %v686
  %v859 = vpack.c.b16 %v691, %v687
  %v860 = vpack.c.b16 %v692, %v688
  %v861 = vpack.c.b16 %v697, %v693
  %v862 = vpack.c.b16 %v698, %v694
  %v863 = vpack.c.b16 %v699, %v695
  %v864 = vpack.c.b16 %v700, %v696
  %v865 = vpack.c.b16 %v705, %v701
  %v866 = vpack.c.b16 %v706, %v702
  %v867 = vpack.c.b16 %v707, %v703
  %v868 = vpack.c.b16 %v708, %v704
  %1029 = vmatprep.subr.bf16.mxu0 %v738
  %1030 = vmatpush1.bf16.msra.mxu0 %v737
  %1031 = vmatprep.subr.bf16.mxu0 %v734
  %1032 = vmatpush1.bf16.msra.mxu0 %v733
  %1033 = vmatprep.subr.bf16.mxu0 %v730
  %1034 = vmatpush1.bf16.msra.mxu0 %v729
  %1035 = vmatprep.subr.bf16.mxu0 %v726
  %1036 = vmatpush1.bf16.msra.mxu0 %v725
  %1037 = vmatprep.subr.bf16.mxu0 %v722
  %1038 = vmatpush1.bf16.msra.mxu0 %v721
  %1039 = vmatprep.subr.bf16.mxu0 %v718
  %1040 = vmatpush1.bf16.msra.mxu0 %v717
  %1041 = vmatprep.subr.bf16.mxu0 %v714
  %1042 = vmatpush1.bf16.msra.mxu0 %v713
  %1043 = vmatprep.subr.bf16.mxu0 %v710
  %1044 = vmatpush1.bf16.msra.mxu0 %v709
  %1045 = vmatprep.subr.bf16.mxu0 %v770
  %1046 = vmatpush2.bf16.msra.mxu0 %v769
  %1047 = vmatprep.subr.bf16.mxu0 %v766
  %1048 = vmatpush2.bf16.msra.mxu0 %v765
  %1049 = vmatprep.subr.bf16.mxu0 %v762
  %1050 = vmatpush2.bf16.msra.mxu0 %v761
  %1051 = vmatprep.subr.bf16.mxu0 %v758
  %1052 = vmatpush2.bf16.msra.mxu0 %v757
  %1053 = vmatprep.subr.bf16.mxu0 %v754
  %1054 = vmatpush2.bf16.msra.mxu0 %v753
  %1055 = vmatprep.subr.bf16.mxu0 %v750
  %1056 = vmatpush2.bf16.msra.mxu0 %v749
  %1057 = vmatprep.subr.bf16.mxu0 %v746
  %1058 = vmatpush2.bf16.msra.mxu0 %v745
  %1059 = vmatprep.subr.bf16.mxu0 %v742
  %1060 = vmatpush2.bf16.msra.mxu0 %v741
  %1061 = vmatprep.mubr.bf16.mxu0 %v220
  %1062 = vmatmul.mubr.bf16.gmra.mxu0 %v219
  %v1063 = vpop.f32.mrf.mxu0
  %v1064 = vadd.f32 %v186, %v1063
  %v1065 = vpop.f32.mrf.mxu0
  %v1066 = vadd.f32 %v190, %v1065
  %v1067 = vpop.f32.mrf.mxu0
  %v1068 = vadd.f32 %v186, %v1067
  %v1069 = vpop.f32.mrf.mxu0
  %v1070 = vadd.f32 %v190, %v1069
  %1071 = vdwg.mxu0
  %1072 = vmatprep.subr.bf16.mxu0 %v802
  %1073 = vmatpush1.bf16.msra.mxu0 %v801
  %1074 = vmatprep.subr.bf16.mxu0 %v798
  %1075 = vmatpush1.bf16.msra.mxu0 %v797
  %1076 = vmatprep.subr.bf16.mxu0 %v794
  %1077 = vmatpush1.bf16.msra.mxu0 %v793
  %1078 = vmatprep.subr.bf16.mxu0 %v790
  %1079 = vmatpush1.bf16.msra.mxu0 %v789
  %1080 = vmatprep.subr.bf16.mxu0 %v786
  %1081 = vmatpush1.bf16.msra.mxu0 %v785
  %1082 = vmatprep.subr.bf16.mxu0 %v782
  %1083 = vmatpush1.bf16.msra.mxu0 %v781
  %1084 = vmatprep.subr.bf16.mxu0 %v778
  %1085 = vmatpush1.bf16.msra.mxu0 %v777
  %1086 = vmatprep.subr.bf16.mxu0 %v774
  %1087 = vmatpush1.bf16.msra.mxu0 %v773
  %1088 = vmatprep.subr.bf16.mxu0 %v834
  %1089 = vmatpush2.bf16.msra.mxu0 %v833
  %1090 = vmatprep.subr.bf16.mxu0 %v830
  %1091 = vmatpush2.bf16.msra.mxu0 %v829
  %1092 = vmatprep.subr.bf16.mxu0 %v826
  %1093 = vmatpush2.bf16.msra.mxu0 %v825
  %1094 = vmatprep.subr.bf16.mxu0 %v822
  %1095 = vmatpush2.bf16.msra.mxu0 %v821
  %1096 = vmatprep.subr.bf16.mxu0 %v818
  %1097 = vmatpush2.bf16.msra.mxu0 %v817
  %1098 = vmatprep.subr.bf16.mxu0 %v814
  %1099 = vmatpush2.bf16.msra.mxu0 %v813
  %1100 = vmatprep.subr.bf16.mxu0 %v810
  %1101 = vmatpush2.bf16.msra.mxu0 %v809
  %1102 = vmatprep.subr.bf16.mxu0 %v806
  %1103 = vmatpush2.bf16.msra.mxu0 %v805
  %1104 = vmatprep.mubr.bf16.mxu0 %v222
  %1105 = vmatmul.mubr.bf16.gmra.mxu0 %v221
  %v1106 = vpop.f32.mrf.mxu0
  %v1107 = vadd.f32 %v1064, %v1106
  %v1108 = vpop.f32.mrf.mxu0
  %v1109 = vadd.f32 %v1066, %v1108
  %v1110 = vpop.f32.mrf.mxu0
  %v1111 = vadd.f32 %v1068, %v1110
  %v1112 = vpop.f32.mrf.mxu0
  %v1113 = vadd.f32 %v1070, %v1112
  %1114 = vdwg.mxu0
  %1115 = vmatprep.subr.bf16.mxu0 %v866
  %1116 = vmatpush1.bf16.msra.mxu0 %v865
  %1117 = vmatprep.subr.bf16.mxu0 %v862
  %1118 = vmatpush1.bf16.msra.mxu0 %v861
  %1119 = vmatprep.subr.bf16.mxu0 %v858
  %1120 = vmatpush1.bf16.msra.mxu0 %v857
  %1121 = vmatprep.subr.bf16.mxu0 %v854
  %1122 = vmatpush1.bf16.msra.mxu0 %v853
  %1123 = vmatprep.subr.bf16.mxu0 %v850
  %1124 = vmatpush1.bf16.msra.mxu0 %v849
  %1125 = vmatprep.subr.bf16.mxu0 %v846
  %1126 = vmatpush1.bf16.msra.mxu0 %v845
  %1127 = vmatprep.subr.bf16.mxu0 %v842
  %1128 = vmatpush1.bf16.msra.mxu0 %v841
  %1129 = vmatprep.subr.bf16.mxu0 %v838
  %1130 = vmatpush1.bf16.msra.mxu0 %v837
  %1131 = vmatprep.subr.bf16.mxu0 0
  %1132 = vmatpush2.bf16.msra.mxu0 0
  %1133 = vmatprep.subr.bf16.mxu0 0
  %1134 = vmatpush2.bf16.msra.mxu0 0
  %1135 = vmatprep.subr.bf16.mxu0 0
  %1136 = vmatpush2.bf16.msra.mxu0 0
  %1137 = vmatprep.subr.bf16.mxu0 0
  %1138 = vmatpush2.bf16.msra.mxu0 0
  %1139 = vmatprep.subr.bf16.mxu0 0
  %1140 = vmatpush2.bf16.msra.mxu0 0
  %1141 = vmatprep.subr.bf16.mxu0 0
  %1142 = vmatpush2.bf16.msra.mxu0 0
  %1143 = vmatprep.subr.bf16.mxu0 0
  %1144 = vmatpush2.bf16.msra.mxu0 0
  %1145 = vmatprep.subr.bf16.mxu0 0
  %1146 = vmatpush2.bf16.msra.mxu0 0
  %1147 = vmatprep.mubr.bf16.mxu0 0
  %1148 = vmatmul.mubr.bf16.gmra.mxu0 %v223
  %v1149 = vpop.f32.mrf.mxu0
  %v1150 = vadd.f32 %v1107, %v1149
  %v1151 = vpop.f32.mrf.mxu0
  %v1152 = vadd.f32 %v1109, %v1151
  %v1153 = vpop.f32.mrf.mxu0
  %v1154 = vadd.f32 %v1111, %v1153
  %v1155 = vpop.f32.mrf.mxu0
  %v1156 = vadd.f32 %v1113, %v1155
  %1157 = vdwg.mxu0
  %1158 = vmatprep.subr.bf16.mxu0 %v740
  %1159 = vmatpush1.bf16.msra.mxu0 %v739
  %1160 = vmatprep.subr.bf16.mxu0 %v736
  %1161 = vmatpush1.bf16.msra.mxu0 %v735
  %1162 = vmatprep.subr.bf16.mxu0 %v732
  %1163 = vmatpush1.bf16.msra.mxu0 %v731
  %1164 = vmatprep.subr.bf16.mxu0 %v728
  %1165 = vmatpush1.bf16.msra.mxu0 %v727
  %1166 = vmatprep.subr.bf16.mxu0 %v724
  %1167 = vmatpush1.bf16.msra.mxu0 %v723
  %1168 = vmatprep.subr.bf16.mxu0 %v720
  %1169 = vmatpush1.bf16.msra.mxu0 %v719
  %1170 = vmatprep.subr.bf16.mxu0 %v716
  %1171 = vmatpush1.bf16.msra.mxu0 %v715
  %1172 = vmatprep.subr.bf16.mxu0 %v712
  %1173 = vmatpush1.bf16.msra.mxu0 %v711
  %1174 = vmatprep.subr.bf16.mxu0 %v772
  %1175 = vmatpush2.bf16.msra.mxu0 %v771
  %1176 = vmatprep.subr.bf16.mxu0 %v768
  %1177 = vmatpush2.bf16.msra.mxu0 %v767
  %1178 = vmatprep.subr.bf16.mxu0 %v764
  %1179 = vmatpush2.bf16.msra.mxu0 %v763
  %1180 = vmatprep.subr.bf16.mxu0 %v760
  %1181 = vmatpush2.bf16.msra.mxu0 %v759
  %1182 = vmatprep.subr.bf16.mxu0 %v756
  %1183 = vmatpush2.bf16.msra.mxu0 %v755
  %1184 = vmatprep.subr.bf16.mxu0 %v752
  %1185 = vmatpush2.bf16.msra.mxu0 %v751
  %1186 = vmatprep.subr.bf16.mxu0 %v748
  %1187 = vmatpush2.bf16.msra.mxu0 %v747
  %1188 = vmatprep.subr.bf16.mxu0 %v744
  %1189 = vmatpush2.bf16.msra.mxu0 %v743
  %1190 = vmatprep.mubr.bf16.mxu0 %v220
  %1191 = vmatmul.mubr.bf16.gmra.mxu0 %v219
  %v1192 = vpop.f32.mrf.mxu0
  %v1193 = vadd.f32 %v194, %v1192
  %v1194 = vpop.f32.mrf.mxu0
  %v1195 = vadd.f32 %v198, %v1194
  %v1196 = vpop.f32.mrf.mxu0
  %v1197 = vadd.f32 %v194, %v1196
  %v1198 = vpop.f32.mrf.mxu0
  %v1199 = vadd.f32 %v198, %v1198
  %1200 = vdwg.mxu0
  %1201 = vmatprep.subr.bf16.mxu0 %v804
  %1202 = vmatpush1.bf16.msra.mxu0 %v803
  %1203 = vmatprep.subr.bf16.mxu0 %v800
  %1204 = vmatpush1.bf16.msra.mxu0 %v799
  %1205 = vmatprep.subr.bf16.mxu0 %v796
  %1206 = vmatpush1.bf16.msra.mxu0 %v795
  %1207 = vmatprep.subr.bf16.mxu0 %v792
  %1208 = vmatpush1.bf16.msra.mxu0 %v791
  %1209 = vmatprep.subr.bf16.mxu0 %v788
  %1210 = vmatpush1.bf16.msra.mxu0 %v787
  %1211 = vmatprep.subr.bf16.mxu0 %v784
  %1212 = vmatpush1.bf16.msra.mxu0 %v783
  %1213 = vmatprep.subr.bf16.mxu0 %v780
  %1214 = vmatpush1.bf16.msra.mxu0 %v779
  %1215 = vmatprep.subr.bf16.mxu0 %v776
  %1216 = vmatpush1.bf16.msra.mxu0 %v775
  %1217 = vmatprep.subr.bf16.mxu0 %v836
  %1218 = vmatpush2.bf16.msra.mxu0 %v835
  %1219 = vmatprep.subr.bf16.mxu0 %v832
  %1220 = vmatpush2.bf16.msra.mxu0 %v831
  %1221 = vmatprep.subr.bf16.mxu0 %v828
  %1222 = vmatpush2.bf16.msra.mxu0 %v827
  %1223 = vmatprep.subr.bf16.mxu0 %v824
  %1224 = vmatpush2.bf16.msra.mxu0 %v823
  %1225 = vmatprep.subr.bf16.mxu0 %v820
  %1226 = vmatpush2.bf16.msra.mxu0 %v819
  %1227 = vmatprep.subr.bf16.mxu0 %v816
  %1228 = vmatpush2.bf16.msra.mxu0 %v815
  %1229 = vmatprep.subr.bf16.mxu0 %v812
  %1230 = vmatpush2.bf16.msra.mxu0 %v811
  %1231 = vmatprep.subr.bf16.mxu0 %v808
  %1232 = vmatpush2.bf16.msra.mxu0 %v807
  %1233 = vmatprep.mubr.bf16.mxu0 %v222
  %1234 = vmatmul.mubr.bf16.gmra.mxu0 %v221
  %v1235 = vpop.f32.mrf.mxu0
  %v1236 = vadd.f32 %v1193, %v1235
  %v1237 = vpop.f32.mrf.mxu0
  %v1238 = vadd.f32 %v1195, %v1237
  %v1239 = vpop.f32.mrf.mxu0
  %v1240 = vadd.f32 %v1197, %v1239
  %v1241 = vpop.f32.mrf.mxu0
  %v1242 = vadd.f32 %v1199, %v1241
  %1243 = vdwg.mxu0
  %1244 = vmatprep.subr.bf16.mxu0 %v868
  %1245 = vmatpush1.bf16.msra.mxu0 %v867
  %1246 = vmatprep.subr.bf16.mxu0 %v864
  %1247 = vmatpush1.bf16.msra.mxu0 %v863
  %1248 = vmatprep.subr.bf16.mxu0 %v860
  %1249 = vmatpush1.bf16.msra.mxu0 %v859
  %1250 = vmatprep.subr.bf16.mxu0 %v856
  %1251 = vmatpush1.bf16.msra.mxu0 %v855
  %1252 = vmatprep.subr.bf16.mxu0 %v852
  %1253 = vmatpush1.bf16.msra.mxu0 %v851
  %1254 = vmatprep.subr.bf16.mxu0 %v848
  %1255 = vmatpush1.bf16.msra.mxu0 %v847
  %1256 = vmatprep.subr.bf16.mxu0 %v844
  %1257 = vmatpush1.bf16.msra.mxu0 %v843
  %1258 = vmatprep.subr.bf16.mxu0 %v840
  %1259 = vmatpush1.bf16.msra.mxu0 %v839
  %1260 = vmatprep.subr.bf16.mxu0 0
  %1261 = vmatpush2.bf16.msra.mxu0 0
  %1262 = vmatprep.subr.bf16.mxu0 0
  %1263 = vmatpush2.bf16.msra.mxu0 0
  %1264 = vmatprep.subr.bf16.mxu0 0
  %1265 = vmatpush2.bf16.msra.mxu0 0
  %1266 = vmatprep.subr.bf16.mxu0 0
  %1267 = vmatpush2.bf16.msra.mxu0 0
  %1268 = vmatprep.subr.bf16.mxu0 0
  %1269 = vmatpush2.bf16.msra.mxu0 0
  %1270 = vmatprep.subr.bf16.mxu0 0
  %1271 = vmatpush2.bf16.msra.mxu0 0
  %1272 = vmatprep.subr.bf16.mxu0 0
  %1273 = vmatpush2.bf16.msra.mxu0 0
  %1274 = vmatprep.subr.bf16.mxu0 0
  %1275 = vmatpush2.bf16.msra.mxu0 0
  %1276 = vmatprep.mubr.bf16.mxu0 0
  %1277 = vmatmul.mubr.bf16.gmra.mxu0 %v223
  %v1278 = vpop.f32.mrf.mxu0
  %v1279 = vadd.f32 %v1236, %v1278
  %v1280 = vpop.f32.mrf.mxu0
  %v1281 = vadd.f32 %v1238, %v1280
  %v1282 = vpop.f32.mrf.mxu0
  %v1283 = vadd.f32 %v1240, %v1282
  %v1284 = vpop.f32.mrf.mxu0
  %v1285 = vadd.f32 %v1242, %v1284
  %1286 = vdwg.mxu0
  %v1287 = vmax.f32 %v1150, 0.0
  %v1288 = vmax.f32 %v1152, 0.0
  %v1289 = vmax.f32 %v1279, 0.0
  %v1290 = vmax.f32 %v1281, 0.0
  %v1291 = vmax.f32 %v1154, 0.0
  %v1292 = vmax.f32 %v1156, 0.0
  %v1293 = vmax.f32 %v1283, 0.0
  %v1294 = vmax.f32 %v1285, 0.0
  %v1295 = vpack.c.bf16 %v1291, %v1287
  %v1296 = vpack.c.bf16 %v1292, %v1288
  %v1297 = vpack.c.bf16 %v1293, %v1289
  %v1298 = vpack.c.bf16 %v1294, %v1290
  %v1303 = vunpack.c.l.b16 %v1295
  %v1304 = vunpack.c.l.b16 %v1296
  %v1305 = vunpack.c.l.b16 %v1297
  %v1306 = vunpack.c.l.b16 %v1298
  %v1307 = vunpack.c.h.b16 %v1295
  %v1308 = vunpack.c.h.b16 %v1296
  %v1309 = vunpack.c.h.b16 %v1297
  %v1310 = vunpack.c.h.b16 %v1298
  %v1311 = vpack.c.b16 %v1304, %v1303
  %v1312 = vpack.c.b16 %v1306, %v1305
  %v1313 = vpack.c.b16 %v1308, %v1307
  %v1314 = vpack.c.b16 %v1310, %v1309
  %1319 = vst [vmem:[%s3] sm:$0xff] %v1311
  %1320 = vst [vmem:[%s3 + $0x8] sm:$0xff] %v1312
  %1321 = vst [vmem:[%s3 + $0x10] sm:$0xff] %v1313
  %1322 = vst [vmem:[%s3 + $0x18] sm:$0xff] %v1314
  // Predicated region
  $region14: #{flexible_image_encoder.42} parent=0 // pred_check
    _
  $region15: #{flexible_image_encoder.42} parent=0 // pred_check_branch
    %1324 = sbr.rel (0) target = $region17
  $region16: #{flexible_image_encoder.42} parent=0 // pred_region
    _
  $region17: #{flexible_image_encoder.42} parent=0 // pred_fallthru
    _
  // Predicated region
  $region18: #{flexible_image_encoder.42} parent=0 // pred_check
    _
  $region19: #{flexible_image_encoder.42} parent=0 // pred_check_branch
    %1326 = sbr.rel (0) target = $region21
  $region20: #{flexible_image_encoder.42} parent=0 // pred_region
    _
  $region21: #{flexible_image_encoder.42} parent=0 // pred_fallthru
    _

// kernel: flexible_image_encoder.45
$region0: #{flexible_image_encoder.45}
  #allocation0 [shape = 'u32[]', space=smem, size = 0x4, offset = 0x4, fixed_abs, tag = 'smem constant byte address 0x4 - core index']
  #allocation1 [shape = 'u32[144,128]{1,0:T(1,128)}', space=vmem, size = 0x12000, scoped, tag = 'internal scratch']
  %s0 = inlined_call_operand.vmem [shape: bf16[16,512], index: 0, kind: input, shape index: {}]
  %s1 = inlined_call_operand.vmem [shape: bf16[512,128], index: 1, kind: input, shape index: {}]
  %s2 = inlined_call_operand.vmem [shape: f32[1,128], index: 2, kind: input, shape index: {}]
  %s3 = inlined_call_operand.vmem [shape: bf16[16,128], index: 3, kind: output, shape index: {}]
  %s4 = sld [smem:[#allocation0]]
  $region22: #{flexible_image_encoder.45} parent=0
    _
  %s6 = ssub.s32 1, %s4
  %s7 = scalar_select 0, %s6, %s4
  // Predicated region
  $region2: #{flexible_image_encoder.45} parent=0 // pred_check
    _
  $region3: #{flexible_image_encoder.45} parent=0 // pred_check_branch
    %9 = sbr.rel (0) target = $region5
  $region4: #{flexible_image_encoder.45} parent=0 // pred_region
    _
  $region5: #{flexible_image_encoder.45} parent=0 // pred_fallthru
    _
  // Predicated region
  $region6: #{flexible_image_encoder.45} parent=0 // pred_check
    _
  $region7: #{flexible_image_encoder.45} parent=0 // pred_check_branch
    %11 = sbr.rel (0) target = $region9
  $region8: #{flexible_image_encoder.45} parent=0 // pred_region
    _
  $region9: #{flexible_image_encoder.45} parent=0 // pred_fallthru
    _
  // Predicated region
  $region10: #{flexible_image_encoder.45} parent=0 // pred_check
    _
  $region11: #{flexible_image_encoder.45} parent=0 // pred_check_branch
    %13 = sbr.rel (0) target = $region13
  $region12: #{flexible_image_encoder.45} parent=0 // pred_region
    _
  $region13: #{flexible_image_encoder.45} parent=0 // pred_fallthru
    _
  %v15 = vld [vmem:[%s0] sm:$0xff]
  %v16 = vld [vmem:[%s0 + $0x8] sm:$0xff]
  %v17 = vld [vmem:[%s0 + $0x10] sm:$0xff]
  %v18 = vld [vmem:[%s0 + $0x18] sm:$0xff]
  %v19 = vld [vmem:[%s1] sm:$0xf]
  %v20 = vld [vmem:[%s1 + $0x4] sm:$0xf]
  %v21 = vld [vmem:[%s1 + $0x8] sm:$0xf]
  %v22 = vld [vmem:[%s1 + $0xc] sm:$0xf]
  %v23 = vld [vmem:[%s1 + $0x10] sm:$0xf]
  %v24 = vld [vmem:[%s1 + $0x14] sm:$0xf]
  %v25 = vld [vmem:[%s1 + $0x18] sm:$0xf]
  %v26 = vld [vmem:[%s1 + $0x1c] sm:$0xf]
  %v27 = vld [vmem:[%s1 + $0x20] sm:$0xf]
  %v28 = vld [vmem:[%s1 + $0x24] sm:$0xf]
  %v29 = vld [vmem:[%s1 + $0x28] sm:$0xf]
  %v30 = vld [vmem:[%s1 + $0x2c] sm:$0xf]
  %v31 = vld [vmem:[%s1 + $0x30] sm:$0xf]
  %v32 = vld [vmem:[%s1 + $0x34] sm:$0xf]
  %v33 = vld [vmem:[%s1 + $0x38] sm:$0xf]
  %v34 = vld [vmem:[%s1 + $0x3c] sm:$0xf]
  %v35 = vld [vmem:[%s1 + $0x40] sm:$0xf]
  %v36 = vld [vmem:[%s1 + $0x44] sm:$0xf]
  %v37 = vld [vmem:[%s1 + $0x48] sm:$0xf]
  %v38 = vld [vmem:[%s1 + $0x4c] sm:$0xf]
  %v39 = vld [vmem:[%s1 + $0x50] sm:$0xf]
  %v40 = vld [vmem:[%s1 + $0x54] sm:$0xf]
  %v41 = vld [vmem:[%s1 + $0x58] sm:$0xf]
  %v42 = vld [vmem:[%s1 + $0x5c] sm:$0xf]
  %v43 = vld [vmem:[%s1 + $0x60] sm:$0xf]
  %v44 = vld [vmem:[%s1 + $0x64] sm:$0xf]
  %v45 = vld [vmem:[%s1 + $0x68] sm:$0xf]
  %v46 = vld [vmem:[%s1 + $0x6c] sm:$0xf]
  %v47 = vld [vmem:[%s1 + $0x70] sm:$0xf]
  %v48 = vld [vmem:[%s1 + $0x74] sm:$0xf]
  %v49 = vld [vmem:[%s1 + $0x78] sm:$0xf]
  %v50 = vld [vmem:[%s1 + $0x7c] sm:$0xf]
  %v51 = vld [vmem:[%s1 + $0x80] sm:$0xf]
  %v52 = vld [vmem:[%s1 + $0x84] sm:$0xf]
  %v53 = vld [vmem:[%s1 + $0x88] sm:$0xf]
  %v54 = vld [vmem:[%s1 + $0x8c] sm:$0xf]
  %v55 = vld [vmem:[%s1 + $0x90] sm:$0xf]
  %v56 = vld [vmem:[%s1 + $0x94] sm:$0xf]
  %v57 = vld [vmem:[%s1 + $0x98] sm:$0xf]
  %v58 = vld [vmem:[%s1 + $0x9c] sm:$0xf]
  %v59 = vld [vmem:[%s1 + $0xa0] sm:$0xf]
  %v60 = vld [vmem:[%s1 + $0xa4] sm:$0xf]
  %v61 = vld [vmem:[%s1 + $0xa8] sm:$0xf]
  %v62 = vld [vmem:[%s1 + $0xac] sm:$0xf]
  %v63 = vld [vmem:[%s1 + $0xb0] sm:$0xf]
  %v64 = vld [vmem:[%s1 + $0xb4] sm:$0xf]
  %v65 = vld [vmem:[%s1 + $0xb8] sm:$0xf]
  %v66 = vld [vmem:[%s1 + $0xbc] sm:$0xf]
  %v67 = vld [vmem:[%s1 + $0xc0] sm:$0xf]
  %v68 = vld [vmem:[%s1 + $0xc4] sm:$0xf]
  %v69 = vld [vmem:[%s1 + $0xc8] sm:$0xf]
  %v70 = vld [vmem:[%s1 + $0xcc] sm:$0xf]
  %v71 = vld [vmem:[%s1 + $0xd0] sm:$0xf]
  %v72 = vld [vmem:[%s1 + $0xd4] sm:$0xf]
  %v73 = vld [vmem:[%s1 + $0xd8] sm:$0xf]
  %v74 = vld [vmem:[%s1 + $0xdc] sm:$0xf]
  %v75 = vld [vmem:[%s1 + $0xe0] sm:$0xf]
  %v76 = vld [vmem:[%s1 + $0xe4] sm:$0xf]
  %v77 = vld [vmem:[%s1 + $0xe8] sm:$0xf]
  %v78 = vld [vmem:[%s1 + $0xec] sm:$0xf]
  %v79 = vld [vmem:[%s1 + $0xf0] sm:$0xf]
  %v80 = vld [vmem:[%s1 + $0xf4] sm:$0xf]
  %v81 = vld [vmem:[%s1 + $0xf8] sm:$0xf]
  %v82 = vld [vmem:[%s1 + $0xfc] sm:$0xf]
  %v83 = vld [vmem:[%s2] sm:$0x1]
  %v85 = vlaneseq
  %v86 = vshrl.u32 %v85, 7
  %v87 = vsub.s32 0, %v86
  %v88 = vrot.slane %v83, %v87
  %v94 = vunpack.c.l.b16 %v15
  %v95 = vunpack.c.h.b16 %v15
  %v96 = vunpack.c.l.b16 %v16
  %v97 = vunpack.c.h.b16 %v16
  %v98 = vunpack.c.l.b16 %v17
  %v99 = vunpack.c.h.b16 %v17
  %v100 = vunpack.c.l.b16 %v18
  %v101 = vunpack.c.h.b16 %v18
  %v102 = vpack.c.b16 %v98, %v94
  %v103 = vpack.c.b16 %v99, %v95
  %v104 = vpack.c.b16 %v100, %v96
  %v105 = vpack.c.b16 %v101, %v97
  %v174 = vunpack.c.l.b16 %v19
  %v175 = vunpack.c.l.b16 %v20
  %v176 = vunpack.c.l.b16 %v21
  %v177 = vunpack.c.l.b16 %v22
  %v178 = vunpack.c.l.b16 %v23
  %v179 = vunpack.c.l.b16 %v24
  %v180 = vunpack.c.l.b16 %v25
  %v181 = vunpack.c.l.b16 %v26
  %v182 = vunpack.c.l.b16 %v27
  %v183 = vunpack.c.l.b16 %v28
  %v184 = vunpack.c.l.b16 %v29
  %v185 = vunpack.c.l.b16 %v30
  %v186 = vunpack.c.l.b16 %v31
  %v187 = vunpack.c.l.b16 %v32
  %v188 = vunpack.c.l.b16 %v33
  %v189 = vunpack.c.l.b16 %v34
  %v190 = vunpack.c.l.b16 %v35
  %v191 = vunpack.c.l.b16 %v36
  %v192 = vunpack.c.l.b16 %v37
  %v193 = vunpack.c.l.b16 %v38
  %v194 = vunpack.c.l.b16 %v39
  %v195 = vunpack.c.l.b16 %v40
  %v196 = vunpack.c.l.b16 %v41
  %v197 = vunpack.c.l.b16 %v42
  %v198 = vunpack.c.l.b16 %v43
  %v199 = vunpack.c.l.b16 %v44
  %v200 = vunpack.c.l.b16 %v45
  %v201 = vunpack.c.l.b16 %v46
  %v202 = vunpack.c.l.b16 %v47
  %v203 = vunpack.c.l.b16 %v48
  %v204 = vunpack.c.l.b16 %v49
  %v205 = vunpack.c.l.b16 %v50
  %v206 = vunpack.c.l.b16 %v51
  %v207 = vunpack.c.l.b16 %v52
  %v208 = vunpack.c.l.b16 %v53
  %v209 = vunpack.c.l.b16 %v54
  %v210 = vunpack.c.l.b16 %v55
  %v211 = vunpack.c.l.b16 %v56
  %v212 = vunpack.c.l.b16 %v57
  %v213 = vunpack.c.l.b16 %v58
  %v214 = vunpack.c.l.b16 %v59
  %v215 = vunpack.c.l.b16 %v60
  %v216 = vunpack.c.l.b16 %v61
  %v217 = vunpack.c.l.b16 %v62
  %v218 = vunpack.c.l.b16 %v63
  %v219 = vunpack.c.l.b16 %v64
  %v220 = vunpack.c.l.b16 %v65
  %v221 = vunpack.c.l.b16 %v66
  %v222 = vunpack.c.l.b16 %v67
  %v223 = vunpack.c.l.b16 %v68
  %v224 = vunpack.c.l.b16 %v69
  %v225 = vunpack.c.l.b16 %v70
  %v226 = vunpack.c.l.b16 %v71
  %v227 = vunpack.c.l.b16 %v72
  %v228 = vunpack.c.l.b16 %v73
  %v229 = vunpack.c.l.b16 %v74
  %v230 = vunpack.c.l.b16 %v75
  %v231 = vunpack.c.l.b16 %v76
  %v232 = vunpack.c.l.b16 %v77
  %v233 = vunpack.c.l.b16 %v78
  %v234 = vunpack.c.l.b16 %v79
  %v235 = vunpack.c.l.b16 %v80
  %v236 = vunpack.c.l.b16 %v81
  %v237 = vunpack.c.l.b16 %v82
  %v238 = vpack.c.b16 %v175, %v174
  %v239 = vpack.c.b16 %v177, %v176
  %v240 = vpack.c.b16 %v179, %v178
  %v241 = vpack.c.b16 %v181, %v180
  %v242 = vpack.c.b16 %v183, %v182
  %v243 = vpack.c.b16 %v185, %v184
  %v244 = vpack.c.b16 %v187, %v186
  %v245 = vpack.c.b16 %v189, %v188
  %v246 = vpack.c.b16 %v191, %v190
  %v247 = vpack.c.b16 %v193, %v192
  %v248 = vpack.c.b16 %v195, %v194
  %v249 = vpack.c.b16 %v197, %v196
  %v250 = vpack.c.b16 %v199, %v198
  %v251 = vpack.c.b16 %v201, %v200
  %v252 = vpack.c.b16 %v203, %v202
  %v253 = vpack.c.b16 %v205, %v204
  %v254 = vpack.c.b16 %v207, %v206
  %v255 = vpack.c.b16 %v209, %v208
  %v256 = vpack.c.b16 %v211, %v210
  %v257 = vpack.c.b16 %v213, %v212
  %v258 = vpack.c.b16 %v215, %v214
  %v259 = vpack.c.b16 %v217, %v216
  %v260 = vpack.c.b16 %v219, %v218
  %v261 = vpack.c.b16 %v221, %v220
  %v262 = vpack.c.b16 %v223, %v222
  %v263 = vpack.c.b16 %v225, %v224
  %v264 = vpack.c.b16 %v227, %v226
  %v265 = vpack.c.b16 %v229, %v228
  %v266 = vpack.c.b16 %v231, %v230
  %v267 = vpack.c.b16 %v233, %v232
  %v268 = vpack.c.b16 %v235, %v234
  %v269 = vpack.c.b16 %v237, %v236
  %302 = vmatprep.subr.bf16.mxu0 0
  %303 = vmatpush1.bf16.msra.mxu0 %v245
  %304 = vmatprep.subr.bf16.mxu0 0
  %305 = vmatpush1.bf16.msra.mxu0 %v244
  %306 = vmatprep.subr.bf16.mxu0 0
  %307 = vmatpush1.bf16.msra.mxu0 %v243
  %308 = vmatprep.subr.bf16.mxu0 0
  %309 = vmatpush1.bf16.msra.mxu0 %v242
  %310 = vmatprep.subr.bf16.mxu0 0
  %311 = vmatpush1.bf16.msra.mxu0 %v241
  %312 = vmatprep.subr.bf16.mxu0 0
  %313 = vmatpush1.bf16.msra.mxu0 %v240
  %314 = vmatprep.subr.bf16.mxu0 0
  %315 = vmatpush1.bf16.msra.mxu0 %v239
  %316 = vmatprep.subr.bf16.mxu0 0
  %317 = vmatpush1.bf16.msra.mxu0 %v238
  %318 = vmatprep.subr.bf16.mxu0 0
  %319 = vmatpush2.bf16.msra.mxu0 %v253
  %320 = vmatprep.subr.bf16.mxu0 0
  %321 = vmatpush2.bf16.msra.mxu0 %v252
  %322 = vmatprep.subr.bf16.mxu0 0
  %323 = vmatpush2.bf16.msra.mxu0 %v251
  %324 = vmatprep.subr.bf16.mxu0 0
  %325 = vmatpush2.bf16.msra.mxu0 %v250
  %326 = vmatprep.subr.bf16.mxu0 0
  %327 = vmatpush2.bf16.msra.mxu0 %v249
  %328 = vmatprep.subr.bf16.mxu0 0
  %329 = vmatpush2.bf16.msra.mxu0 %v248
  %330 = vmatprep.subr.bf16.mxu0 0
  %331 = vmatpush2.bf16.msra.mxu0 %v247
  %332 = vmatprep.subr.bf16.mxu0 0
  %333 = vmatpush2.bf16.msra.mxu0 %v246
  %334 = vmatprep.mubr.bf16.mxu0 %v103
  %335 = vmatmul.mubr.bf16.gmra.mxu0 %v102
  %v336 = vpop.f32.mrf.mxu0
  %v337 = vadd.f32 %v88, %v336
  %v338 = vpop.f32.mrf.mxu0
  %v339 = vpop.f32.mrf.mxu0
  %v340 = vadd.f32 %v88, %v339
  %v341 = vpop.f32.mrf.mxu0
  %342 = vdwg.mxu0
  %343 = vmatprep.subr.bf16.mxu0 0
  %344 = vmatpush1.bf16.msra.mxu0 %v261
  %345 = vmatprep.subr.bf16.mxu0 0
  %346 = vmatpush1.bf16.msra.mxu0 %v260
  %347 = vmatprep.subr.bf16.mxu0 0
  %348 = vmatpush1.bf16.msra.mxu0 %v259
  %349 = vmatprep.subr.bf16.mxu0 0
  %350 = vmatpush1.bf16.msra.mxu0 %v258
  %351 = vmatprep.subr.bf16.mxu0 0
  %352 = vmatpush1.bf16.msra.mxu0 %v257
  %353 = vmatprep.subr.bf16.mxu0 0
  %354 = vmatpush1.bf16.msra.mxu0 %v256
  %355 = vmatprep.subr.bf16.mxu0 0
  %356 = vmatpush1.bf16.msra.mxu0 %v255
  %357 = vmatprep.subr.bf16.mxu0 0
  %358 = vmatpush1.bf16.msra.mxu0 %v254
  %359 = vmatprep.subr.bf16.mxu0 0
  %360 = vmatpush2.bf16.msra.mxu0 %v269
  %361 = vmatprep.subr.bf16.mxu0 0
  %362 = vmatpush2.bf16.msra.mxu0 %v268
  %363 = vmatprep.subr.bf16.mxu0 0
  %364 = vmatpush2.bf16.msra.mxu0 %v267
  %365 = vmatprep.subr.bf16.mxu0 0
  %366 = vmatpush2.bf16.msra.mxu0 %v266
  %367 = vmatprep.subr.bf16.mxu0 0
  %368 = vmatpush2.bf16.msra.mxu0 %v265
  %369 = vmatprep.subr.bf16.mxu0 0
  %370 = vmatpush2.bf16.msra.mxu0 %v264
  %371 = vmatprep.subr.bf16.mxu0 0
  %372 = vmatpush2.bf16.msra.mxu0 %v263
  %373 = vmatprep.subr.bf16.mxu0 0
  %374 = vmatpush2.bf16.msra.mxu0 %v262
  %375 = vmatprep.mubr.bf16.mxu0 %v105
  %376 = vmatmul.mubr.bf16.gmra.mxu0 %v104
  %v377 = vpop.f32.mrf.mxu0
  %v378 = vadd.f32 %v337, %v377
  %v379 = vpop.f32.mrf.mxu0
  %v380 = vpop.f32.mrf.mxu0
  %v381 = vadd.f32 %v340, %v380
  %v382 = vpop.f32.mrf.mxu0
  %383 = vdwg.mxu0
  %v384 = vmax.f32 %v378, 0.0
  %v385 = vmax.f32 %v381, 0.0
  %v386 = vpack.c.bf16 %v385, %v384
  %v388 = vunpack.c.l.b16 %v386
  %v389 = vunpack.c.h.b16 %v386
  %v390 = vpack.c.b16 %v388, %v388
  %v391 = vpack.c.b16 %v389, %v389
  %394 = vst [vmem:[%s3] sm:$0xf] %v390
  %395 = vst [vmem:[%s3 + $0x4] sm:$0xf] %v391
  // Predicated region
  $region14: #{flexible_image_encoder.45} parent=0 // pred_check
    _
  $region15: #{flexible_image_encoder.45} parent=0 // pred_check_branch
    %397 = sbr.rel (0) target = $region17
  $region16: #{flexible_image_encoder.45} parent=0 // pred_region
    _
  $region17: #{flexible_image_encoder.45} parent=0 // pred_fallthru
    _
  // Predicated region
  $region18: #{flexible_image_encoder.45} parent=0 // pred_check
    _
  $region19: #{flexible_image_encoder.45} parent=0 // pred_check_branch
    %399 = sbr.rel (0) target = $region21
  $region20: #{flexible_image_encoder.45} parent=0 // pred_region
    _
  $region21: #{flexible_image_encoder.45} parent=0 // pred_fallthru
    _

// kernel: flexible_image_encoder.46
$region0: #{flexible_image_encoder.46}
  #allocation0 [shape = 'u32[]', space=smem, size = 0x4, offset = 0x4, fixed_abs, tag = 'smem constant byte address 0x4 - core index']
  #allocation1 [shape = 'u32[144,128]{1,0:T(1,128)}', space=vmem, size = 0x12000, scoped, tag = 'internal scratch']
  %s0 = inlined_call_operand.vmem [shape: bf16[16,640], index: 0, kind: input, shape index: {}]
  %s1 = inlined_call_operand.vmem [shape: bf16[640,512], index: 1, kind: input, shape index: {}]
  %s2 = inlined_call_operand.vmem [shape: f32[1,512], index: 2, kind: input, shape index: {}]
  %s3 = inlined_call_operand.vmem [shape: f32[16,512], index: 3, kind: output, shape index: {}]
  %s4 = sld [smem:[#allocation0]]
  $region22: #{flexible_image_encoder.46} parent=0
    _
  %s6 = ssub.s32 1, %s4
  %s7 = scalar_select 0, %s6, %s4
  // Predicated region
  $region2: #{flexible_image_encoder.46} parent=0 // pred_check
    _
  $region3: #{flexible_image_encoder.46} parent=0 // pred_check_branch
    %9 = sbr.rel (0) target = $region5
  $region4: #{flexible_image_encoder.46} parent=0 // pred_region
    _
  $region5: #{flexible_image_encoder.46} parent=0 // pred_fallthru
    _
  // Predicated region
  $region6: #{flexible_image_encoder.46} parent=0 // pred_check
    _
  $region7: #{flexible_image_encoder.46} parent=0 // pred_check_branch
    %11 = sbr.rel (0) target = $region9
  $region8: #{flexible_image_encoder.46} parent=0 // pred_region
    _
  $region9: #{flexible_image_encoder.46} parent=0 // pred_fallthru
    _
  // Predicated region
  $region10: #{flexible_image_encoder.46} parent=0 // pred_check
    _
  $region11: #{flexible_image_encoder.46} parent=0 // pred_check_branch
    %13 = sbr.rel (0) target = $region13
  $region12: #{flexible_image_encoder.46} parent=0 // pred_region
    _
  $region13: #{flexible_image_encoder.46} parent=0 // pred_fallthru
    _
  %v15 = vld [vmem:[%s0] sm:$0xff]
  %v16 = vld [vmem:[%s0 + $0x8] sm:$0xff]
  %v17 = vld [vmem:[%s0 + $0x10] sm:$0xf]
  %v18 = vld [vmem:[%s0 + $0x14] sm:$0xff]
  %v19 = vld [vmem:[%s0 + $0x1c] sm:$0xff]
  %v20 = vld [vmem:[%s0 + $0x24] sm:$0xf]
  %v21 = vld [vmem:[%s1] sm:$0xff]
  %v22 = vld [vmem:[%s1 + $0x8] sm:$0xff]
  %v23 = vld [vmem:[%s1 + $0x10] sm:$0xff]
  %v24 = vld [vmem:[%s1 + $0x18] sm:$0xff]
  %v25 = vld [vmem:[%s1 + $0x20] sm:$0xff]
  %v26 = vld [vmem:[%s1 + $0x28] sm:$0xff]
  %v27 = vld [vmem:[%s1 + $0x30] sm:$0xff]
  %v28 = vld [vmem:[%s1 + $0x38] sm:$0xff]
  %v29 = vld [vmem:[%s1 + $0x40] sm:$0xff]
  %v30 = vld [vmem:[%s1 + $0x48] sm:$0xff]
  %v31 = vld [vmem:[%s1 + $0x50] sm:$0xff]
  %v32 = vld [vmem:[%s1 + $0x58] sm:$0xff]
  %v33 = vld [vmem:[%s1 + $0x60] sm:$0xff]
  %v34 = vld [vmem:[%s1 + $0x68] sm:$0xff]
  %v35 = vld [vmem:[%s1 + $0x70] sm:$0xff]
  %v36 = vld [vmem:[%s1 + $0x78] sm:$0xff]
  %v37 = vld [vmem:[%s1 + $0x80] sm:$0xff]
  %v38 = vld [vmem:[%s1 + $0x88] sm:$0xff]
  %v39 = vld [vmem:[%s1 + $0x90] sm:$0xff]
  %v40 = vld [vmem:[%s1 + $0x98] sm:$0xff]
  %v41 = vld [vmem:[%s1 + $0xa0] sm:$0xff]
  %v42 = vld [vmem:[%s1 + $0xa8] sm:$0xff]
  %v43 = vld [vmem:[%s1 + $0xb0] sm:$0xff]
  %v44 = vld [vmem:[%s1 + $0xb8] sm:$0xff]
  %v45 = vld [vmem:[%s1 + $0xc0] sm:$0xff]
  %v46 = vld [vmem:[%s1 + $0xc8] sm:$0xff]
  %v47 = vld [vmem:[%s1 + $0xd0] sm:$0xff]
  %v48 = vld [vmem:[%s1 + $0xd8] sm:$0xff]
  %v49 = vld [vmem:[%s1 + $0xe0] sm:$0xff]
  %v50 = vld [vmem:[%s1 + $0xe8] sm:$0xff]
  %v51 = vld [vmem:[%s1 + $0xf0] sm:$0xff]
  %v52 = vld [vmem:[%s1 + $0xf8] sm:$0xff]
  %v53 = vld [vmem:[%s1 + $0x100] sm:$0xff]
  %v54 = vld [vmem:[%s1 + $0x108] sm:$0xff]
  %v55 = vld [vmem:[%s1 + $0x110] sm:$0xff]
  %v56 = vld [vmem:[%s1 + $0x118] sm:$0xff]
  %v57 = vld [vmem:[%s1 + $0x120] sm:$0xff]
  %v58 = vld [vmem:[%s1 + $0x128] sm:$0xff]
  %v59 = vld [vmem:[%s1 + $0x130] sm:$0xff]
  %v60 = vld [vmem:[%s1 + $0x138] sm:$0xff]
  %v61 = vld [vmem:[%s1 + $0x140] sm:$0xff]
  %v62 = vld [vmem:[%s1 + $0x148] sm:$0xff]
  %v63 = vld [vmem:[%s1 + $0x150] sm:$0xff]
  %v64 = vld [vmem:[%s1 + $0x158] sm:$0xff]
  %v65 = vld [vmem:[%s1 + $0x160] sm:$0xff]
  %v66 = vld [vmem:[%s1 + $0x168] sm:$0xff]
  %v67 = vld [vmem:[%s1 + $0x170] sm:$0xff]
  %v68 = vld [vmem:[%s1 + $0x178] sm:$0xff]
  %v69 = vld [vmem:[%s1 + $0x180] sm:$0xff]
  %v70 = vld [vmem:[%s1 + $0x188] sm:$0xff]
  %v71 = vld [vmem:[%s1 + $0x190] sm:$0xff]
  %v72 = vld [vmem:[%s1 + $0x198] sm:$0xff]
  %v73 = vld [vmem:[%s1 + $0x1a0] sm:$0xff]
  %v74 = vld [vmem:[%s1 + $0x1a8] sm:$0xff]
  %v75 = vld [vmem:[%s1 + $0x1b0] sm:$0xff]
  %v76 = vld [vmem:[%s1 + $0x1b8] sm:$0xff]
  %v77 = vld [vmem:[%s1 + $0x1c0] sm:$0xff]
  %v78 = vld [vmem:[%s1 + $0x1c8] sm:$0xff]
  %v79 = vld [vmem:[%s1 + $0x1d0] sm:$0xff]
  %v80 = vld [vmem:[%s1 + $0x1d8] sm:$0xff]
  %v81 = vld [vmem:[%s1 + $0x1e0] sm:$0xff]
  %v82 = vld [vmem:[%s1 + $0x1e8] sm:$0xff]
  %v83 = vld [vmem:[%s1 + $0x1f0] sm:$0xff]
  %v84 = vld [vmem:[%s1 + $0x1f8] sm:$0xff]
  %v85 = vld [vmem:[%s1 + $0x200] sm:$0xff]
  %v86 = vld [vmem:[%s1 + $0x208] sm:$0xff]
  %v87 = vld [vmem:[%s1 + $0x210] sm:$0xff]
  %v88 = vld [vmem:[%s1 + $0x218] sm:$0xff]
  %v89 = vld [vmem:[%s1 + $0x220] sm:$0xff]
  %v90 = vld [vmem:[%s1 + $0x228] sm:$0xff]
  %v91 = vld [vmem:[%s1 + $0x230] sm:$0xff]
  %v92 = vld [vmem:[%s1 + $0x238] sm:$0xff]
  %v93 = vld [vmem:[%s1 + $0x240] sm:$0xff]
  %v94 = vld [vmem:[%s1 + $0x248] sm:$0xff]
  %v95 = vld [vmem:[%s1 + $0x250] sm:$0xff]
  %v96 = vld [vmem:[%s1 + $0x258] sm:$0xff]
  %v97 = vld [vmem:[%s1 + $0x260] sm:$0xff]
  %v98 = vld [vmem:[%s1 + $0x268] sm:$0xff]
  %v99 = vld [vmem:[%s1 + $0x270] sm:$0xff]
  %v100 = vld [vmem:[%s1 + $0x278] sm:$0xff]
  %v101 = vld [vmem:[%s1 + $0x280] sm:$0xff]
  %v102 = vld [vmem:[%s1 + $0x288] sm:$0xff]
  %v103 = vld [vmem:[%s1 + $0x290] sm:$0xff]
  %v104 = vld [vmem:[%s1 + $0x298] sm:$0xff]
  %v105 = vld [vmem:[%s1 + $0x2a0] sm:$0xff]
  %v106 = vld [vmem:[%s1 + $0x2a8] sm:$0xff]
  %v107 = vld [vmem:[%s1 + $0x2b0] sm:$0xff]
  %v108 = vld [vmem:[%s1 + $0x2b8] sm:$0xff]
  %v109 = vld [vmem:[%s1 + $0x2c0] sm:$0xff]
  %v110 = vld [vmem:[%s1 + $0x2c8] sm:$0xff]
  %v111 = vld [vmem:[%s1 + $0x2d0] sm:$0xff]
  %v112 = vld [vmem:[%s1 + $0x2d8] sm:$0xff]
  %v113 = vld [vmem:[%s1 + $0x2e0] sm:$0xff]
  %v114 = vld [vmem:[%s1 + $0x2e8] sm:$0xff]
  %v115 = vld [vmem:[%s1 + $0x2f0] sm:$0xff]
  %v116 = vld [vmem:[%s1 + $0x2f8] sm:$0xff]
  %v117 = vld [vmem:[%s1 + $0x300] sm:$0xff]
  %v118 = vld [vmem:[%s1 + $0x308] sm:$0xff]
  %v119 = vld [vmem:[%s1 + $0x310] sm:$0xff]
  %v120 = vld [vmem:[%s1 + $0x318] sm:$0xff]
  %v121 = vld [vmem:[%s1 + $0x320] sm:$0xff]
  %v122 = vld [vmem:[%s1 + $0x328] sm:$0xff]
  %v123 = vld [vmem:[%s1 + $0x330] sm:$0xff]
  %v124 = vld [vmem:[%s1 + $0x338] sm:$0xff]
  %v125 = vld [vmem:[%s1 + $0x340] sm:$0xff]
  %v126 = vld [vmem:[%s1 + $0x348] sm:$0xff]
  %v127 = vld [vmem:[%s1 + $0x350] sm:$0xff]
  %v128 = vld [vmem:[%s1 + $0x358] sm:$0xff]
  %v129 = vld [vmem:[%s1 + $0x360] sm:$0xff]
  %v130 = vld [vmem:[%s1 + $0x368] sm:$0xff]
  %v131 = vld [vmem:[%s1 + $0x370] sm:$0xff]
  %v132 = vld [vmem:[%s1 + $0x378] sm:$0xff]
  %v133 = vld [vmem:[%s1 + $0x380] sm:$0xff]
  %v134 = vld [vmem:[%s1 + $0x388] sm:$0xff]
  %v135 = vld [vmem:[%s1 + $0x390] sm:$0xff]
  %v136 = vld [vmem:[%s1 + $0x398] sm:$0xff]
  %v137 = vld [vmem:[%s1 + $0x3a0] sm:$0xff]
  %v138 = vld [vmem:[%s1 + $0x3a8] sm:$0xff]
  %v139 = vld [vmem:[%s1 + $0x3b0] sm:$0xff]
  %v140 = vld [vmem:[%s1 + $0x3b8] sm:$0xff]
  %v141 = vld [vmem:[%s1 + $0x3c0] sm:$0xff]
  %v142 = vld [vmem:[%s1 + $0x3c8] sm:$0xff]
  %v143 = vld [vmem:[%s1 + $0x3d0] sm:$0xff]
  %v144 = vld [vmem:[%s1 + $0x3d8] sm:$0xff]
  %v145 = vld [vmem:[%s1 + $0x3e0] sm:$0xff]
  %v146 = vld [vmem:[%s1 + $0x3e8] sm:$0xff]
  %v147 = vld [vmem:[%s1 + $0x3f0] sm:$0xff]
  %v148 = vld [vmem:[%s1 + $0x3f8] sm:$0xff]
  %v149 = vld [vmem:[%s1 + $0x400] sm:$0xff]
  %v150 = vld [vmem:[%s1 + $0x408] sm:$0xff]
  %v151 = vld [vmem:[%s1 + $0x410] sm:$0xff]
  %v152 = vld [vmem:[%s1 + $0x418] sm:$0xff]
  %v153 = vld [vmem:[%s1 + $0x420] sm:$0xff]
  %v154 = vld [vmem:[%s1 + $0x428] sm:$0xff]
  %v155 = vld [vmem:[%s1 + $0x430] sm:$0xff]
  %v156 = vld [vmem:[%s1 + $0x438] sm:$0xff]
  %v157 = vld [vmem:[%s1 + $0x440] sm:$0xff]
  %v158 = vld [vmem:[%s1 + $0x448] sm:$0xff]
  %v159 = vld [vmem:[%s1 + $0x450] sm:$0xff]
  %v160 = vld [vmem:[%s1 + $0x458] sm:$0xff]
  %v161 = vld [vmem:[%s1 + $0x460] sm:$0xff]
  %v162 = vld [vmem:[%s1 + $0x468] sm:$0xff]
  %v163 = vld [vmem:[%s1 + $0x470] sm:$0xff]
  %v164 = vld [vmem:[%s1 + $0x478] sm:$0xff]
  %v165 = vld [vmem:[%s1 + $0x480] sm:$0xff]
  %v166 = vld [vmem:[%s1 + $0x488] sm:$0xff]
  %v167 = vld [vmem:[%s1 + $0x490] sm:$0xff]
  %v168 = vld [vmem:[%s1 + $0x498] sm:$0xff]
  %v169 = vld [vmem:[%s1 + $0x4a0] sm:$0xff]
  %v170 = vld [vmem:[%s1 + $0x4a8] sm:$0xff]
  %v171 = vld [vmem:[%s1 + $0x4b0] sm:$0xff]
  %v172 = vld [vmem:[%s1 + $0x4b8] sm:$0xff]
  %v173 = vld [vmem:[%s1 + $0x4c0] sm:$0xff]
  %v174 = vld [vmem:[%s1 + $0x4c8] sm:$0xff]
  %v175 = vld [vmem:[%s1 + $0x4d0] sm:$0xff]
  %v176 = vld [vmem:[%s1 + $0x4d8] sm:$0xff]
  %v177 = vld [vmem:[%s1 + $0x4e0] sm:$0xff]
  %v178 = vld [vmem:[%s1 + $0x4e8] sm:$0xff]
  %v179 = vld [vmem:[%s1 + $0x4f0] sm:$0xff]
  %v180 = vld [vmem:[%s1 + $0x4f8] sm:$0xff]
  %v181 = vld [vmem:[%s2] sm:$0xf]
  %v183 = vlaneseq
  %v184 = vshrl.u32 %v183, 7
  %v185 = vsub.s32 0, %v184
  %v186 = vrot.slane %v181, %v185
  %v187 = vlaneseq
  %v188 = vshrl.u32 %v187, 7
  %v189 = vsub.s32 1, %v188
  %v190 = vrot.slane %v181, %v189
  %v191 = vlaneseq
  %v192 = vshrl.u32 %v191, 7
  %v193 = vsub.s32 2, %v192
  %v194 = vrot.slane %v181, %v193
  %v195 = vlaneseq
  %v196 = vshrl.u32 %v195, 7
  %v197 = vsub.s32 3, %v196
  %v198 = vrot.slane %v181, %v197
  %v209 = vunpack.c.l.b16 %v15
  %v210 = vunpack.c.h.b16 %v15
  %v211 = vunpack.c.l.b16 %v16
  %v212 = vunpack.c.h.b16 %v16
  %v213 = vunpack.c.l.b16 %v17
  %v214 = vunpack.c.l.b16 %v18
  %v215 = vunpack.c.h.b16 %v18
  %v216 = vunpack.c.l.b16 %v19
  %v217 = vunpack.c.h.b16 %v19
  %v218 = vunpack.c.l.b16 %v20
  %v219 = vpack.c.b16 %v214, %v209
  %v220 = vpack.c.b16 %v215, %v210
  %v221 = vpack.c.b16 %v216, %v211
  %v222 = vpack.c.b16 %v217, %v212
  %v223 = vpack.c.b16 %v218, %v213
  %v389 = vunpack.c.l.b16 %v21
  %v390 = vunpack.c.h.b16 %v21
  %v391 = vunpack.c.l.b16 %v22
  %v392 = vunpack.c.h.b16 %v22
  %v393 = vunpack.c.l.b16 %v23
  %v394 = vunpack.c.h.b16 %v23
  %v395 = vunpack.c.l.b16 %v24
  %v396 = vunpack.c.h.b16 %v24
  %v397 = vunpack.c.l.b16 %v25
  %v398 = vunpack.c.h.b16 %v25
  %v399 = vunpack.c.l.b16 %v26
  %v400 = vunpack.c.h.b16 %v26
  %v401 = vunpack.c.l.b16 %v27
  %v402 = vunpack.c.h.b16 %v27
  %v403 = vunpack.c.l.b16 %v28
  %v404 = vunpack.c.h.b16 %v28
  %v405 = vunpack.c.l.b16 %v29
  %v406 = vunpack.c.h.b16 %v29
  %v407 = vunpack.c.l.b16 %v30
  %v408 = vunpack.c.h.b16 %v30
  %v409 = vunpack.c.l.b16 %v31
  %v410 = vunpack.c.h.b16 %v31
  %v411 = vunpack.c.l.b16 %v32
  %v412 = vunpack.c.h.b16 %v32
  %v413 = vunpack.c.l.b16 %v33
  %v414 = vunpack.c.h.b16 %v33
  %v415 = vunpack.c.l.b16 %v34
  %v416 = vunpack.c.h.b16 %v34
  %v417 = vunpack.c.l.b16 %v35
  %v418 = vunpack.c.h.b16 %v35
  %v419 = vunpack.c.l.b16 %v36
  %v420 = vunpack.c.h.b16 %v36
  %v421 = vunpack.c.l.b16 %v37
  %v422 = vunpack.c.h.b16 %v37
  %v423 = vunpack.c.l.b16 %v38
  %v424 = vunpack.c.h.b16 %v38
  %v425 = vunpack.c.l.b16 %v39
  %v426 = vunpack.c.h.b16 %v39
  %v427 = vunpack.c.l.b16 %v40
  %v428 = vunpack.c.h.b16 %v40
  %v429 = vunpack.c.l.b16 %v41
  %v430 = vunpack.c.h.b16 %v41
  %v431 = vunpack.c.l.b16 %v42
  %v432 = vunpack.c.h.b16 %v42
  %v433 = vunpack.c.l.b16 %v43
  %v434 = vunpack.c.h.b16 %v43
  %v435 = vunpack.c.l.b16 %v44
  %v436 = vunpack.c.h.b16 %v44
  %v437 = vunpack.c.l.b16 %v45
  %v438 = vunpack.c.h.b16 %v45
  %v439 = vunpack.c.l.b16 %v46
  %v440 = vunpack.c.h.b16 %v46
  %v441 = vunpack.c.l.b16 %v47
  %v442 = vunpack.c.h.b16 %v47
  %v443 = vunpack.c.l.b16 %v48
  %v444 = vunpack.c.h.b16 %v48
  %v445 = vunpack.c.l.b16 %v49
  %v446 = vunpack.c.h.b16 %v49
  %v447 = vunpack.c.l.b16 %v50
  %v448 = vunpack.c.h.b16 %v50
  %v449 = vunpack.c.l.b16 %v51
  %v450 = vunpack.c.h.b16 %v51
  %v451 = vunpack.c.l.b16 %v52
  %v452 = vunpack.c.h.b16 %v52
  %v453 = vunpack.c.l.b16 %v53
  %v454 = vunpack.c.h.b16 %v53
  %v455 = vunpack.c.l.b16 %v54
  %v456 = vunpack.c.h.b16 %v54
  %v457 = vunpack.c.l.b16 %v55
  %v458 = vunpack.c.h.b16 %v55
  %v459 = vunpack.c.l.b16 %v56
  %v460 = vunpack.c.h.b16 %v56
  %v461 = vunpack.c.l.b16 %v57
  %v462 = vunpack.c.h.b16 %v57
  %v463 = vunpack.c.l.b16 %v58
  %v464 = vunpack.c.h.b16 %v58
  %v465 = vunpack.c.l.b16 %v59
  %v466 = vunpack.c.h.b16 %v59
  %v467 = vunpack.c.l.b16 %v60
  %v468 = vunpack.c.h.b16 %v60
  %v469 = vunpack.c.l.b16 %v61
  %v470 = vunpack.c.h.b16 %v61
  %v471 = vunpack.c.l.b16 %v62
  %v472 = vunpack.c.h.b16 %v62
  %v473 = vunpack.c.l.b16 %v63
  %v474 = vunpack.c.h.b16 %v63
  %v475 = vunpack.c.l.b16 %v64
  %v476 = vunpack.c.h.b16 %v64
  %v477 = vunpack.c.l.b16 %v65
  %v478 = vunpack.c.h.b16 %v65
  %v479 = vunpack.c.l.b16 %v66
  %v480 = vunpack.c.h.b16 %v66
  %v481 = vunpack.c.l.b16 %v67
  %v482 = vunpack.c.h.b16 %v67
  %v483 = vunpack.c.l.b16 %v68
  %v484 = vunpack.c.h.b16 %v68
  %v485 = vunpack.c.l.b16 %v69
  %v486 = vunpack.c.h.b16 %v69
  %v487 = vunpack.c.l.b16 %v70
  %v488 = vunpack.c.h.b16 %v70
  %v489 = vunpack.c.l.b16 %v71
  %v490 = vunpack.c.h.b16 %v71
  %v491 = vunpack.c.l.b16 %v72
  %v492 = vunpack.c.h.b16 %v72
  %v493 = vunpack.c.l.b16 %v73
  %v494 = vunpack.c.h.b16 %v73
  %v495 = vunpack.c.l.b16 %v74
  %v496 = vunpack.c.h.b16 %v74
  %v497 = vunpack.c.l.b16 %v75
  %v498 = vunpack.c.h.b16 %v75
  %v499 = vunpack.c.l.b16 %v76
  %v500 = vunpack.c.h.b16 %v76
  %v501 = vunpack.c.l.b16 %v77
  %v502 = vunpack.c.h.b16 %v77
  %v503 = vunpack.c.l.b16 %v78
  %v504 = vunpack.c.h.b16 %v78
  %v505 = vunpack.c.l.b16 %v79
  %v506 = vunpack.c.h.b16 %v79
  %v507 = vunpack.c.l.b16 %v80
  %v508 = vunpack.c.h.b16 %v80
  %v509 = vunpack.c.l.b16 %v81
  %v510 = vunpack.c.h.b16 %v81
  %v511 = vunpack.c.l.b16 %v82
  %v512 = vunpack.c.h.b16 %v82
  %v513 = vunpack.c.l.b16 %v83
  %v514 = vunpack.c.h.b16 %v83
  %v515 = vunpack.c.l.b16 %v84
  %v516 = vunpack.c.h.b16 %v84
  %v517 = vunpack.c.l.b16 %v85
  %v518 = vunpack.c.h.b16 %v85
  %v519 = vunpack.c.l.b16 %v86
  %v520 = vunpack.c.h.b16 %v86
  %v521 = vunpack.c.l.b16 %v87
  %v522 = vunpack.c.h.b16 %v87
  %v523 = vunpack.c.l.b16 %v88
  %v524 = vunpack.c.h.b16 %v88
  %v525 = vunpack.c.l.b16 %v89
  %v526 = vunpack.c.h.b16 %v89
  %v527 = vunpack.c.l.b16 %v90
  %v528 = vunpack.c.h.b16 %v90
  %v529 = vunpack.c.l.b16 %v91
  %v530 = vunpack.c.h.b16 %v91
  %v531 = vunpack.c.l.b16 %v92
  %v532 = vunpack.c.h.b16 %v92
  %v533 = vunpack.c.l.b16 %v93
  %v534 = vunpack.c.h.b16 %v93
  %v535 = vunpack.c.l.b16 %v94
  %v536 = vunpack.c.h.b16 %v94
  %v537 = vunpack.c.l.b16 %v95
  %v538 = vunpack.c.h.b16 %v95
  %v539 = vunpack.c.l.b16 %v96
  %v540 = vunpack.c.h.b16 %v96
  %v541 = vunpack.c.l.b16 %v97
  %v542 = vunpack.c.h.b16 %v97
  %v543 = vunpack.c.l.b16 %v98
  %v544 = vunpack.c.h.b16 %v98
  %v545 = vunpack.c.l.b16 %v99
  %v546 = vunpack.c.h.b16 %v99
  %v547 = vunpack.c.l.b16 %v100
  %v548 = vunpack.c.h.b16 %v100
  %v549 = vunpack.c.l.b16 %v101
  %v550 = vunpack.c.h.b16 %v101
  %v551 = vunpack.c.l.b16 %v102
  %v552 = vunpack.c.h.b16 %v102
  %v553 = vunpack.c.l.b16 %v103
  %v554 = vunpack.c.h.b16 %v103
  %v555 = vunpack.c.l.b16 %v104
  %v556 = vunpack.c.h.b16 %v104
  %v557 = vunpack.c.l.b16 %v105
  %v558 = vunpack.c.h.b16 %v105
  %v559 = vunpack.c.l.b16 %v106
  %v560 = vunpack.c.h.b16 %v106
  %v561 = vunpack.c.l.b16 %v107
  %v562 = vunpack.c.h.b16 %v107
  %v563 = vunpack.c.l.b16 %v108
  %v564 = vunpack.c.h.b16 %v108
  %v565 = vunpack.c.l.b16 %v109
  %v566 = vunpack.c.h.b16 %v109
  %v567 = vunpack.c.l.b16 %v110
  %v568 = vunpack.c.h.b16 %v110
  %v569 = vunpack.c.l.b16 %v111
  %v570 = vunpack.c.h.b16 %v111
  %v571 = vunpack.c.l.b16 %v112
  %v572 = vunpack.c.h.b16 %v112
  %v573 = vunpack.c.l.b16 %v113
  %v574 = vunpack.c.h.b16 %v113
  %v575 = vunpack.c.l.b16 %v114
  %v576 = vunpack.c.h.b16 %v114
  %v577 = vunpack.c.l.b16 %v115
  %v578 = vunpack.c.h.b16 %v115
  %v579 = vunpack.c.l.b16 %v116
  %v580 = vunpack.c.h.b16 %v116
  %v581 = vunpack.c.l.b16 %v117
  %v582 = vunpack.c.h.b16 %v117
  %v583 = vunpack.c.l.b16 %v118
  %v584 = vunpack.c.h.b16 %v118
  %v585 = vunpack.c.l.b16 %v119
  %v586 = vunpack.c.h.b16 %v119
  %v587 = vunpack.c.l.b16 %v120
  %v588 = vunpack.c.h.b16 %v120
  %v589 = vunpack.c.l.b16 %v121
  %v590 = vunpack.c.h.b16 %v121
  %v591 = vunpack.c.l.b16 %v122
  %v592 = vunpack.c.h.b16 %v122
  %v593 = vunpack.c.l.b16 %v123
  %v594 = vunpack.c.h.b16 %v123
  %v595 = vunpack.c.l.b16 %v124
  %v596 = vunpack.c.h.b16 %v124
  %v597 = vunpack.c.l.b16 %v125
  %v598 = vunpack.c.h.b16 %v125
  %v599 = vunpack.c.l.b16 %v126
  %v600 = vunpack.c.h.b16 %v126
  %v601 = vunpack.c.l.b16 %v127
  %v602 = vunpack.c.h.b16 %v127
  %v603 = vunpack.c.l.b16 %v128
  %v604 = vunpack.c.h.b16 %v128
  %v605 = vunpack.c.l.b16 %v129
  %v606 = vunpack.c.h.b16 %v129
  %v607 = vunpack.c.l.b16 %v130
  %v608 = vunpack.c.h.b16 %v130
  %v609 = vunpack.c.l.b16 %v131
  %v610 = vunpack.c.h.b16 %v131
  %v611 = vunpack.c.l.b16 %v132
  %v612 = vunpack.c.h.b16 %v132
  %v613 = vunpack.c.l.b16 %v133
  %v614 = vunpack.c.h.b16 %v133
  %v615 = vunpack.c.l.b16 %v134
  %v616 = vunpack.c.h.b16 %v134
  %v617 = vunpack.c.l.b16 %v135
  %v618 = vunpack.c.h.b16 %v135
  %v619 = vunpack.c.l.b16 %v136
  %v620 = vunpack.c.h.b16 %v136
  %v621 = vunpack.c.l.b16 %v137
  %v622 = vunpack.c.h.b16 %v137
  %v623 = vunpack.c.l.b16 %v138
  %v624 = vunpack.c.h.b16 %v138
  %v625 = vunpack.c.l.b16 %v139
  %v626 = vunpack.c.h.b16 %v139
  %v627 = vunpack.c.l.b16 %v140
  %v628 = vunpack.c.h.b16 %v140
  %v629 = vunpack.c.l.b16 %v141
  %v630 = vunpack.c.h.b16 %v141
  %v631 = vunpack.c.l.b16 %v142
  %v632 = vunpack.c.h.b16 %v142
  %v633 = vunpack.c.l.b16 %v143
  %v634 = vunpack.c.h.b16 %v143
  %v635 = vunpack.c.l.b16 %v144
  %v636 = vunpack.c.h.b16 %v144
  %v637 = vunpack.c.l.b16 %v145
  %v638 = vunpack.c.h.b16 %v145
  %v639 = vunpack.c.l.b16 %v146
  %v640 = vunpack.c.h.b16 %v146
  %v641 = vunpack.c.l.b16 %v147
  %v642 = vunpack.c.h.b16 %v147
  %v643 = vunpack.c.l.b16 %v148
  %v644 = vunpack.c.h.b16 %v148
  %v645 = vunpack.c.l.b16 %v149
  %v646 = vunpack.c.h.b16 %v149
  %v647 = vunpack.c.l.b16 %v150
  %v648 = vunpack.c.h.b16 %v150
  %v649 = vunpack.c.l.b16 %v151
  %v650 = vunpack.c.h.b16 %v151
  %v651 = vunpack.c.l.b16 %v152
  %v652 = vunpack.c.h.b16 %v152
  %v653 = vunpack.c.l.b16 %v153
  %v654 = vunpack.c.h.b16 %v153
  %v655 = vunpack.c.l.b16 %v154
  %v656 = vunpack.c.h.b16 %v154
  %v657 = vunpack.c.l.b16 %v155
  %v658 = vunpack.c.h.b16 %v155
  %v659 = vunpack.c.l.b16 %v156
  %v660 = vunpack.c.h.b16 %v156
  %v661 = vunpack.c.l.b16 %v157
  %v662 = vunpack.c.h.b16 %v157
  %v663 = vunpack.c.l.b16 %v158
  %v664 = vunpack.c.h.b16 %v158
  %v665 = vunpack.c.l.b16 %v159
  %v666 = vunpack.c.h.b16 %v159
  %v667 = vunpack.c.l.b16 %v160
  %v668 = vunpack.c.h.b16 %v160
  %v669 = vunpack.c.l.b16 %v161
  %v670 = vunpack.c.h.b16 %v161
  %v671 = vunpack.c.l.b16 %v162
  %v672 = vunpack.c.h.b16 %v162
  %v673 = vunpack.c.l.b16 %v163
  %v674 = vunpack.c.h.b16 %v163
  %v675 = vunpack.c.l.b16 %v164
  %v676 = vunpack.c.h.b16 %v164
  %v677 = vunpack.c.l.b16 %v165
  %v678 = vunpack.c.h.b16 %v165
  %v679 = vunpack.c.l.b16 %v166
  %v680 = vunpack.c.h.b16 %v166
  %v681 = vunpack.c.l.b16 %v167
  %v682 = vunpack.c.h.b16 %v167
  %v683 = vunpack.c.l.b16 %v168
  %v684 = vunpack.c.h.b16 %v168
  %v685 = vunpack.c.l.b16 %v169
  %v686 = vunpack.c.h.b16 %v169
  %v687 = vunpack.c.l.b16 %v170
  %v688 = vunpack.c.h.b16 %v170
  %v689 = vunpack.c.l.b16 %v171
  %v690 = vunpack.c.h.b16 %v171
  %v691 = vunpack.c.l.b16 %v172
  %v692 = vunpack.c.h.b16 %v172
  %v693 = vunpack.c.l.b16 %v173
  %v694 = vunpack.c.h.b16 %v173
  %v695 = vunpack.c.l.b16 %v174
  %v696 = vunpack.c.h.b16 %v174
  %v697 = vunpack.c.l.b16 %v175
  %v698 = vunpack.c.h.b16 %v175
  %v699 = vunpack.c.l.b16 %v176
  %v700 = vunpack.c.h.b16 %v176
  %v701 = vunpack.c.l.b16 %v177
  %v702 = vunpack.c.h.b16 %v177
  %v703 = vunpack.c.l.b16 %v178
  %v704 = vunpack.c.h.b16 %v178
  %v705 = vunpack.c.l.b16 %v179
  %v706 = vunpack.c.h.b16 %v179
  %v707 = vunpack.c.l.b16 %v180
  %v708 = vunpack.c.h.b16 %v180
  %v709 = vpack.c.b16 %v393, %v389
  %v710 = vpack.c.b16 %v394, %v390
  %v711 = vpack.c.b16 %v395, %v391
  %v712 = vpack.c.b16 %v396, %v392
  %v713 = vpack.c.b16 %v401, %v397
  %v714 = vpack.c.b16 %v402, %v398
  %v715 = vpack.c.b16 %v403, %v399
  %v716 = vpack.c.b16 %v404, %v400
  %v717 = vpack.c.b16 %v409, %v405
  %v718 = vpack.c.b16 %v410, %v406
  %v719 = vpack.c.b16 %v411, %v407
  %v720 = vpack.c.b16 %v412, %v408
  %v721 = vpack.c.b16 %v417, %v413
  %v722 = vpack.c.b16 %v418, %v414
  %v723 = vpack.c.b16 %v419, %v415
  %v724 = vpack.c.b16 %v420, %v416
  %v725 = vpack.c.b16 %v425, %v421
  %v726 = vpack.c.b16 %v426, %v422
  %v727 = vpack.c.b16 %v427, %v423
  %v728 = vpack.c.b16 %v428, %v424
  %v729 = vpack.c.b16 %v433, %v429
  %v730 = vpack.c.b16 %v434, %v430
  %v731 = vpack.c.b16 %v435, %v431
  %v732 = vpack.c.b16 %v436, %v432
  %v733 = vpack.c.b16 %v441, %v437
  %v734 = vpack.c.b16 %v442, %v438
  %v735 = vpack.c.b16 %v443, %v439
  %v736 = vpack.c.b16 %v444, %v440
  %v737 = vpack.c.b16 %v449, %v445
  %v738 = vpack.c.b16 %v450, %v446
  %v739 = vpack.c.b16 %v451, %v447
  %v740 = vpack.c.b16 %v452, %v448
  %v741 = vpack.c.b16 %v457, %v453
  %v742 = vpack.c.b16 %v458, %v454
  %v743 = vpack.c.b16 %v459, %v455
  %v744 = vpack.c.b16 %v460, %v456
  %v745 = vpack.c.b16 %v465, %v461
  %v746 = vpack.c.b16 %v466, %v462
  %v747 = vpack.c.b16 %v467, %v463
  %v748 = vpack.c.b16 %v468, %v464
  %v749 = vpack.c.b16 %v473, %v469
  %v750 = vpack.c.b16 %v474, %v470
  %v751 = vpack.c.b16 %v475, %v471
  %v752 = vpack.c.b16 %v476, %v472
  %v753 = vpack.c.b16 %v481, %v477
  %v754 = vpack.c.b16 %v482, %v478
  %v755 = vpack.c.b16 %v483, %v479
  %v756 = vpack.c.b16 %v484, %v480
  %v757 = vpack.c.b16 %v489, %v485
  %v758 = vpack.c.b16 %v490, %v486
  %v759 = vpack.c.b16 %v491, %v487
  %v760 = vpack.c.b16 %v492, %v488
  %v761 = vpack.c.b16 %v497, %v493
  %v762 = vpack.c.b16 %v498, %v494
  %v763 = vpack.c.b16 %v499, %v495
  %v764 = vpack.c.b16 %v500, %v496
  %v765 = vpack.c.b16 %v505, %v501
  %v766 = vpack.c.b16 %v506, %v502
  %v767 = vpack.c.b16 %v507, %v503
  %v768 = vpack.c.b16 %v508, %v504
  %v769 = vpack.c.b16 %v513, %v509
  %v770 = vpack.c.b16 %v514, %v510
  %v771 = vpack.c.b16 %v515, %v511
  %v772 = vpack.c.b16 %v516, %v512
  %v773 = vpack.c.b16 %v521, %v517
  %v774 = vpack.c.b16 %v522, %v518
  %v775 = vpack.c.b16 %v523, %v519
  %v776 = vpack.c.b16 %v524, %v520
  %v777 = vpack.c.b16 %v529, %v525
  %v778 = vpack.c.b16 %v530, %v526
  %v779 = vpack.c.b16 %v531, %v527
  %v780 = vpack.c.b16 %v532, %v528
  %v781 = vpack.c.b16 %v537, %v533
  %v782 = vpack.c.b16 %v538, %v534
  %v783 = vpack.c.b16 %v539, %v535
  %v784 = vpack.c.b16 %v540, %v536
  %v785 = vpack.c.b16 %v545, %v541
  %v786 = vpack.c.b16 %v546, %v542
  %v787 = vpack.c.b16 %v547, %v543
  %v788 = vpack.c.b16 %v548, %v544
  %v789 = vpack.c.b16 %v553, %v549
  %v790 = vpack.c.b16 %v554, %v550
  %v791 = vpack.c.b16 %v555, %v551
  %v792 = vpack.c.b16 %v556, %v552
  %v793 = vpack.c.b16 %v561, %v557
  %v794 = vpack.c.b16 %v562, %v558
  %v795 = vpack.c.b16 %v563, %v559
  %v796 = vpack.c.b16 %v564, %v560
  %v797 = vpack.c.b16 %v569, %v565
  %v798 = vpack.c.b16 %v570, %v566
  %v799 = vpack.c.b16 %v571, %v567
  %v800 = vpack.c.b16 %v572, %v568
  %v801 = vpack.c.b16 %v577, %v573
  %v802 = vpack.c.b16 %v578, %v574
  %v803 = vpack.c.b16 %v579, %v575
  %v804 = vpack.c.b16 %v580, %v576
  %v805 = vpack.c.b16 %v585, %v581
  %v806 = vpack.c.b16 %v586, %v582
  %v807 = vpack.c.b16 %v587, %v583
  %v808 = vpack.c.b16 %v588, %v584
  %v809 = vpack.c.b16 %v593, %v589
  %v810 = vpack.c.b16 %v594, %v590
  %v811 = vpack.c.b16 %v595, %v591
  %v812 = vpack.c.b16 %v596, %v592
  %v813 = vpack.c.b16 %v601, %v597
  %v814 = vpack.c.b16 %v602, %v598
  %v815 = vpack.c.b16 %v603, %v599
  %v816 = vpack.c.b16 %v604, %v600
  %v817 = vpack.c.b16 %v609, %v605
  %v818 = vpack.c.b16 %v610, %v606
  %v819 = vpack.c.b16 %v611, %v607
  %v820 = vpack.c.b16 %v612, %v608
  %v821 = vpack.c.b16 %v617, %v613
  %v822 = vpack.c.b16 %v618, %v614
  %v823 = vpack.c.b16 %v619, %v615
  %v824 = vpack.c.b16 %v620, %v616
  %v825 = vpack.c.b16 %v625, %v621
  %v826 = vpack.c.b16 %v626, %v622
  %v827 = vpack.c.b16 %v627, %v623
  %v828 = vpack.c.b16 %v628, %v624
  %v829 = vpack.c.b16 %v633, %v629
  %v830 = vpack.c.b16 %v634, %v630
  %v831 = vpack.c.b16 %v635, %v631
  %v832 = vpack.c.b16 %v636, %v632
  %v833 = vpack.c.b16 %v641, %v637
  %v834 = vpack.c.b16 %v642, %v638
  %v835 = vpack.c.b16 %v643, %v639
  %v836 = vpack.c.b16 %v644, %v640
  %v837 = vpack.c.b16 %v649, %v645
  %v838 = vpack.c.b16 %v650, %v646
  %v839 = vpack.c.b16 %v651, %v647
  %v840 = vpack.c.b16 %v652, %v648
  %v841 = vpack.c.b16 %v657, %v653
  %v842 = vpack.c.b16 %v658, %v654
  %v843 = vpack.c.b16 %v659, %v655
  %v844 = vpack.c.b16 %v660, %v656
  %v845 = vpack.c.b16 %v665, %v661
  %v846 = vpack.c.b16 %v666, %v662
  %v847 = vpack.c.b16 %v667, %v663
  %v848 = vpack.c.b16 %v668, %v664
  %v849 = vpack.c.b16 %v673, %v669
  %v850 = vpack.c.b16 %v674, %v670
  %v851 = vpack.c.b16 %v675, %v671
  %v852 = vpack.c.b16 %v676, %v672
  %v853 = vpack.c.b16 %v681, %v677
  %v854 = vpack.c.b16 %v682, %v678
  %v855 = vpack.c.b16 %v683, %v679
  %v856 = vpack.c.b16 %v684, %v680
  %v857 = vpack.c.b16 %v689, %v685
  %v858 = vpack.c.b16 %v690, %v686
  %v859 = vpack.c.b16 %v691, %v687
  %v860 = vpack.c.b16 %v692, %v688
  %v861 = vpack.c.b16 %v697, %v693
  %v862 = vpack.c.b16 %v698, %v694
  %v863 = vpack.c.b16 %v699, %v695
  %v864 = vpack.c.b16 %v700, %v696
  %v865 = vpack.c.b16 %v705, %v701
  %v866 = vpack.c.b16 %v706, %v702
  %v867 = vpack.c.b16 %v707, %v703
  %v868 = vpack.c.b16 %v708, %v704
  %1029 = vmatprep.subr.bf16.mxu0 %v738
  %1030 = vmatpush1.bf16.msra.mxu0 %v737
  %1031 = vmatprep.subr.bf16.mxu0 %v734
  %1032 = vmatpush1.bf16.msra.mxu0 %v733
  %1033 = vmatprep.subr.bf16.mxu0 %v730
  %1034 = vmatpush1.bf16.msra.mxu0 %v729
  %1035 = vmatprep.subr.bf16.mxu0 %v726
  %1036 = vmatpush1.bf16.msra.mxu0 %v725
  %1037 = vmatprep.subr.bf16.mxu0 %v722
  %1038 = vmatpush1.bf16.msra.mxu0 %v721
  %1039 = vmatprep.subr.bf16.mxu0 %v718
  %1040 = vmatpush1.bf16.msra.mxu0 %v717
  %1041 = vmatprep.subr.bf16.mxu0 %v714
  %1042 = vmatpush1.bf16.msra.mxu0 %v713
  %1043 = vmatprep.subr.bf16.mxu0 %v710
  %1044 = vmatpush1.bf16.msra.mxu0 %v709
  %1045 = vmatprep.subr.bf16.mxu0 %v770
  %1046 = vmatpush2.bf16.msra.mxu0 %v769
  %1047 = vmatprep.subr.bf16.mxu0 %v766
  %1048 = vmatpush2.bf16.msra.mxu0 %v765
  %1049 = vmatprep.subr.bf16.mxu0 %v762
  %1050 = vmatpush2.bf16.msra.mxu0 %v761
  %1051 = vmatprep.subr.bf16.mxu0 %v758
  %1052 = vmatpush2.bf16.msra.mxu0 %v757
  %1053 = vmatprep.subr.bf16.mxu0 %v754
  %1054 = vmatpush2.bf16.msra.mxu0 %v753
  %1055 = vmatprep.subr.bf16.mxu0 %v750
  %1056 = vmatpush2.bf16.msra.mxu0 %v749
  %1057 = vmatprep.subr.bf16.mxu0 %v746
  %1058 = vmatpush2.bf16.msra.mxu0 %v745
  %1059 = vmatprep.subr.bf16.mxu0 %v742
  %1060 = vmatpush2.bf16.msra.mxu0 %v741
  %1061 = vmatprep.mubr.bf16.mxu0 %v220
  %1062 = vmatmul.mubr.bf16.gmra.mxu0 %v219
  %v1063 = vpop.f32.mrf.mxu0
  %v1064 = vadd.f32 %v186, %v1063
  %v1065 = vpop.f32.mrf.mxu0
  %v1066 = vadd.f32 %v190, %v1065
  %v1067 = vpop.f32.mrf.mxu0
  %v1068 = vadd.f32 %v186, %v1067
  %v1069 = vpop.f32.mrf.mxu0
  %v1070 = vadd.f32 %v190, %v1069
  %1071 = vdwg.mxu0
  %1072 = vmatprep.subr.bf16.mxu0 %v802
  %1073 = vmatpush1.bf16.msra.mxu0 %v801
  %1074 = vmatprep.subr.bf16.mxu0 %v798
  %1075 = vmatpush1.bf16.msra.mxu0 %v797
  %1076 = vmatprep.subr.bf16.mxu0 %v794
  %1077 = vmatpush1.bf16.msra.mxu0 %v793
  %1078 = vmatprep.subr.bf16.mxu0 %v790
  %1079 = vmatpush1.bf16.msra.mxu0 %v789
  %1080 = vmatprep.subr.bf16.mxu0 %v786
  %1081 = vmatpush1.bf16.msra.mxu0 %v785
  %1082 = vmatprep.subr.bf16.mxu0 %v782
  %1083 = vmatpush1.bf16.msra.mxu0 %v781
  %1084 = vmatprep.subr.bf16.mxu0 %v778
  %1085 = vmatpush1.bf16.msra.mxu0 %v777
  %1086 = vmatprep.subr.bf16.mxu0 %v774
  %1087 = vmatpush1.bf16.msra.mxu0 %v773
  %1088 = vmatprep.subr.bf16.mxu0 %v834
  %1089 = vmatpush2.bf16.msra.mxu0 %v833
  %1090 = vmatprep.subr.bf16.mxu0 %v830
  %1091 = vmatpush2.bf16.msra.mxu0 %v829
  %1092 = vmatprep.subr.bf16.mxu0 %v826
  %1093 = vmatpush2.bf16.msra.mxu0 %v825
  %1094 = vmatprep.subr.bf16.mxu0 %v822
  %1095 = vmatpush2.bf16.msra.mxu0 %v821
  %1096 = vmatprep.subr.bf16.mxu0 %v818
  %1097 = vmatpush2.bf16.msra.mxu0 %v817
  %1098 = vmatprep.subr.bf16.mxu0 %v814
  %1099 = vmatpush2.bf16.msra.mxu0 %v813
  %1100 = vmatprep.subr.bf16.mxu0 %v810
  %1101 = vmatpush2.bf16.msra.mxu0 %v809
  %1102 = vmatprep.subr.bf16.mxu0 %v806
  %1103 = vmatpush2.bf16.msra.mxu0 %v805
  %1104 = vmatprep.mubr.bf16.mxu0 %v222
  %1105 = vmatmul.mubr.bf16.gmra.mxu0 %v221
  %v1106 = vpop.f32.mrf.mxu0
  %v1107 = vadd.f32 %v1064, %v1106
  %v1108 = vpop.f32.mrf.mxu0
  %v1109 = vadd.f32 %v1066, %v1108
  %v1110 = vpop.f32.mrf.mxu0
  %v1111 = vadd.f32 %v1068, %v1110
  %v1112 = vpop.f32.mrf.mxu0
  %v1113 = vadd.f32 %v1070, %v1112
  %1114 = vdwg.mxu0
  %1115 = vmatprep.subr.bf16.mxu0 %v866
  %1116 = vmatpush1.bf16.msra.mxu0 %v865
  %1117 = vmatprep.subr.bf16.mxu0 %v862
  %1118 = vmatpush1.bf16.msra.mxu0 %v861
  %1119 = vmatprep.subr.bf16.mxu0 %v858
  %1120 = vmatpush1.bf16.msra.mxu0 %v857
  %1121 = vmatprep.subr.bf16.mxu0 %v854
  %1122 = vmatpush1.bf16.msra.mxu0 %v853
  %1123 = vmatprep.subr.bf16.mxu0 %v850
  %1124 = vmatpush1.bf16.msra.mxu0 %v849
  %1125 = vmatprep.subr.bf16.mxu0 %v846
  %1126 = vmatpush1.bf16.msra.mxu0 %v845
  %1127 = vmatprep.subr.bf16.mxu0 %v842
  %1128 = vmatpush1.bf16.msra.mxu0 %v841
  %1129 = vmatprep.subr.bf16.mxu0 %v838
  %1130 = vmatpush1.bf16.msra.mxu0 %v837
  %1131 = vmatprep.subr.bf16.mxu0 0
  %1132 = vmatpush2.bf16.msra.mxu0 0
  %1133 = vmatprep.subr.bf16.mxu0 0
  %1134 = vmatpush2.bf16.msra.mxu0 0
  %1135 = vmatprep.subr.bf16.mxu0 0
  %1136 = vmatpush2.bf16.msra.mxu0 0
  %1137 = vmatprep.subr.bf16.mxu0 0
  %1138 = vmatpush2.bf16.msra.mxu0 0
  %1139 = vmatprep.subr.bf16.mxu0 0
  %1140 = vmatpush2.bf16.msra.mxu0 0
  %1141 = vmatprep.subr.bf16.mxu0 0
  %1142 = vmatpush2.bf16.msra.mxu0 0
  %1143 = vmatprep.subr.bf16.mxu0 0
  %1144 = vmatpush2.bf16.msra.mxu0 0
  %1145 = vmatprep.subr.bf16.mxu0 0
  %1146 = vmatpush2.bf16.msra.mxu0 0
  %1147 = vmatprep.mubr.bf16.mxu0 0
  %1148 = vmatmul.mubr.bf16.gmra.mxu0 %v223
  %v1149 = vpop.f32.mrf.mxu0
  %v1150 = vadd.f32 %v1107, %v1149
  %v1151 = vpop.f32.mrf.mxu0
  %v1152 = vadd.f32 %v1109, %v1151
  %v1153 = vpop.f32.mrf.mxu0
  %v1154 = vadd.f32 %v1111, %v1153
  %v1155 = vpop.f32.mrf.mxu0
  %v1156 = vadd.f32 %v1113, %v1155
  %1157 = vdwg.mxu0
  %1158 = vmatprep.subr.bf16.mxu0 %v740
  %1159 = vmatpush1.bf16.msra.mxu0 %v739
  %1160 = vmatprep.subr.bf16.mxu0 %v736
  %1161 = vmatpush1.bf16.msra.mxu0 %v735
  %1162 = vmatprep.subr.bf16.mxu0 %v732
  %1163 = vmatpush1.bf16.msra.mxu0 %v731
  %1164 = vmatprep.subr.bf16.mxu0 %v728
  %1165 = vmatpush1.bf16.msra.mxu0 %v727
  %1166 = vmatprep.subr.bf16.mxu0 %v724
  %1167 = vmatpush1.bf16.msra.mxu0 %v723
  %1168 = vmatprep.subr.bf16.mxu0 %v720
  %1169 = vmatpush1.bf16.msra.mxu0 %v719
  %1170 = vmatprep.subr.bf16.mxu0 %v716
  %1171 = vmatpush1.bf16.msra.mxu0 %v715
  %1172 = vmatprep.subr.bf16.mxu0 %v712
  %1173 = vmatpush1.bf16.msra.mxu0 %v711
  %1174 = vmatprep.subr.bf16.mxu0 %v772
  %1175 = vmatpush2.bf16.msra.mxu0 %v771
  %1176 = vmatprep.subr.bf16.mxu0 %v768
  %1177 = vmatpush2.bf16.msra.mxu0 %v767
  %1178 = vmatprep.subr.bf16.mxu0 %v764
  %1179 = vmatpush2.bf16.msra.mxu0 %v763
  %1180 = vmatprep.subr.bf16.mxu0 %v760
  %1181 = vmatpush2.bf16.msra.mxu0 %v759
  %1182 = vmatprep.subr.bf16.mxu0 %v756
  %1183 = vmatpush2.bf16.msra.mxu0 %v755
  %1184 = vmatprep.subr.bf16.mxu0 %v752
  %1185 = vmatpush2.bf16.msra.mxu0 %v751
  %1186 = vmatprep.subr.bf16.mxu0 %v748
  %1187 = vmatpush2.bf16.msra.mxu0 %v747
  %1188 = vmatprep.subr.bf16.mxu0 %v744
  %1189 = vmatpush2.bf16.msra.mxu0 %v743
  %1190 = vmatprep.mubr.bf16.mxu0 %v220
  %1191 = vmatmul.mubr.bf16.gmra.mxu0 %v219
  %v1192 = vpop.f32.mrf.mxu0
  %v1193 = vadd.f32 %v194, %v1192
  %v1194 = vpop.f32.mrf.mxu0
  %v1195 = vadd.f32 %v198, %v1194
  %v1196 = vpop.f32.mrf.mxu0
  %v1197 = vadd.f32 %v194, %v1196
  %v1198 = vpop.f32.mrf.mxu0
  %v1199 = vadd.f32 %v198, %v1198
  %1200 = vdwg.mxu0
  %1201 = vmatprep.subr.bf16.mxu0 %v804
  %1202 = vmatpush1.bf16.msra.mxu0 %v803
  %1203 = vmatprep.subr.bf16.mxu0 %v800
  %1204 = vmatpush1.bf16.msra.mxu0 %v799
  %1205 = vmatprep.subr.bf16.mxu0 %v796
  %1206 = vmatpush1.bf16.msra.mxu0 %v795
  %1207 = vmatprep.subr.bf16.mxu0 %v792
  %1208 = vmatpush1.bf16.msra.mxu0 %v791
  %1209 = vmatprep.subr.bf16.mxu0 %v788
  %1210 = vmatpush1.bf16.msra.mxu0 %v787
  %1211 = vmatprep.subr.bf16.mxu0 %v784
  %1212 = vmatpush1.bf16.msra.mxu0 %v783
  %1213 = vmatprep.subr.bf16.mxu0 %v780
  %1214 = vmatpush1.bf16.msra.mxu0 %v779
  %1215 = vmatprep.subr.bf16.mxu0 %v776
  %1216 = vmatpush1.bf16.msra.mxu0 %v775
  %1217 = vmatprep.subr.bf16.mxu0 %v836
  %1218 = vmatpush2.bf16.msra.mxu0 %v835
  %1219 = vmatprep.subr.bf16.mxu0 %v832
  %1220 = vmatpush2.bf16.msra.mxu0 %v831
  %1221 = vmatprep.subr.bf16.mxu0 %v828
  %1222 = vmatpush2.bf16.msra.mxu0 %v827
  %1223 = vmatprep.subr.bf16.mxu0 %v824
  %1224 = vmatpush2.bf16.msra.mxu0 %v823
  %1225 = vmatprep.subr.bf16.mxu0 %v820
  %1226 = vmatpush2.bf16.msra.mxu0 %v819
  %1227 = vmatprep.subr.bf16.mxu0 %v816
  %1228 = vmatpush2.bf16.msra.mxu0 %v815
  %1229 = vmatprep.subr.bf16.mxu0 %v812
  %1230 = vmatpush2.bf16.msra.mxu0 %v811
  %1231 = vmatprep.subr.bf16.mxu0 %v808
  %1232 = vmatpush2.bf16.msra.mxu0 %v807
  %1233 = vmatprep.mubr.bf16.mxu0 %v222
  %1234 = vmatmul.mubr.bf16.gmra.mxu0 %v221
  %v1235 = vpop.f32.mrf.mxu0
  %v1236 = vadd.f32 %v1193, %v1235
  %v1237 = vpop.f32.mrf.mxu0
  %v1238 = vadd.f32 %v1195, %v1237
  %v1239 = vpop.f32.mrf.mxu0
  %v1240 = vadd.f32 %v1197, %v1239
  %v1241 = vpop.f32.mrf.mxu0
  %v1242 = vadd.f32 %v1199, %v1241
  %1243 = vdwg.mxu0
  %1244 = vmatprep.subr.bf16.mxu0 %v868
  %1245 = vmatpush1.bf16.msra.mxu0 %v867
  %1246 = vmatprep.subr.bf16.mxu0 %v864
  %1247 = vmatpush1.bf16.msra.mxu0 %v863
  %1248 = vmatprep.subr.bf16.mxu0 %v860
  %1249 = vmatpush1.bf16.msra.mxu0 %v859
  %1250 = vmatprep.subr.bf16.mxu0 %v856
  %1251 = vmatpush1.bf16.msra.mxu0 %v855
  %1252 = vmatprep.subr.bf16.mxu0 %v852
  %1253 = vmatpush1.bf16.msra.mxu0 %v851
  %1254 = vmatprep.subr.bf16.mxu0 %v848
  %1255 = vmatpush1.bf16.msra.mxu0 %v847
  %1256 = vmatprep.subr.bf16.mxu0 %v844
  %1257 = vmatpush1.bf16.msra.mxu0 %v843
  %1258 = vmatprep.subr.bf16.mxu0 %v840
  %1259 = vmatpush1.bf16.msra.mxu0 %v839
  %1260 = vmatprep.subr.bf16.mxu0 0
  %1261 = vmatpush2.bf16.msra.mxu0 0
  %1262 = vmatprep.subr.bf16.mxu0 0
  %1263 = vmatpush2.bf16.msra.mxu0 0
  %1264 = vmatprep.subr.bf16.mxu0 0
  %1265 = vmatpush2.bf16.msra.mxu0 0
  %1266 = vmatprep.subr.bf16.mxu0 0
  %1267 = vmatpush2.bf16.msra.mxu0 0
  %1268 = vmatprep.subr.bf16.mxu0 0
  %1269 = vmatpush2.bf16.msra.mxu0 0
  %1270 = vmatprep.subr.bf16.mxu0 0
  %1271 = vmatpush2.bf16.msra.mxu0 0
  %1272 = vmatprep.subr.bf16.mxu0 0
  %1273 = vmatpush2.bf16.msra.mxu0 0
  %1274 = vmatprep.subr.bf16.mxu0 0
  %1275 = vmatpush2.bf16.msra.mxu0 0
  %1276 = vmatprep.mubr.bf16.mxu0 0
  %1277 = vmatmul.mubr.bf16.gmra.mxu0 %v223
  %v1278 = vpop.f32.mrf.mxu0
  %v1279 = vadd.f32 %v1236, %v1278
  %v1280 = vpop.f32.mrf.mxu0
  %v1281 = vadd.f32 %v1238, %v1280
  %v1282 = vpop.f32.mrf.mxu0
  %v1283 = vadd.f32 %v1240, %v1282
  %v1284 = vpop.f32.mrf.mxu0
  %v1285 = vadd.f32 %v1242, %v1284
  %1286 = vdwg.mxu0
  %v1287 = vmax.f32 %v1150, 0.0
  %v1288 = vmax.f32 %v1152, 0.0
  %v1289 = vmax.f32 %v1279, 0.0
  %v1290 = vmax.f32 %v1281, 0.0
  %v1291 = vmax.f32 %v1154, 0.0
  %v1292 = vmax.f32 %v1156, 0.0
  %v1293 = vmax.f32 %v1283, 0.0
  %v1294 = vmax.f32 %v1285, 0.0
  %1295 = vst [vmem:[%s3] sm:$0xff] %v1287
  %1296 = vst [vmem:[%s3 + $0x8] sm:$0xff] %v1288
  %1297 = vst [vmem:[%s3 + $0x10] sm:$0xff] %v1289
  %1298 = vst [vmem:[%s3 + $0x18] sm:$0xff] %v1290
  %1299 = vst [vmem:[%s3 + $0x20] sm:$0xff] %v1291
  %1300 = vst [vmem:[%s3 + $0x28] sm:$0xff] %v1292
  %1301 = vst [vmem:[%s3 + $0x30] sm:$0xff] %v1293
  %1302 = vst [vmem:[%s3 + $0x38] sm:$0xff] %v1294
  // Predicated region
  $region14: #{flexible_image_encoder.46} parent=0 // pred_check
    _
  $region15: #{flexible_image_encoder.46} parent=0 // pred_check_branch
    %1304 = sbr.rel (0) target = $region17
  $region16: #{flexible_image_encoder.46} parent=0 // pred_region
    _
  $region17: #{flexible_image_encoder.46} parent=0 // pred_fallthru
    _
  // Predicated region
  $region18: #{flexible_image_encoder.46} parent=0 // pred_check
    _
  $region19: #{flexible_image_encoder.46} parent=0 // pred_check_branch
    %1306 = sbr.rel (0) target = $region21
  $region20: #{flexible_image_encoder.46} parent=0 // pred_region
    _
  $region21: #{flexible_image_encoder.46} parent=0 // pred_fallthru
    _

// kernel: flexible_image_encoder.47
$region0: #{flexible_image_encoder.47}
  #allocation0 [shape = 'u32[]', space=smem, size = 0x4, offset = 0x4, fixed_abs, tag = 'smem constant byte address 0x4 - core index']
  #allocation1 [shape = 'u32[144,128]{1,0:T(1,128)}', space=vmem, size = 0x12000, scoped, tag = 'internal scratch']
  %s0 = inlined_call_operand.vmem [shape: f32[8,1,512], index: 0, kind: input, shape index: {}]
  %s1 = inlined_call_operand.vmem [shape: bf16[512,128], index: 1, kind: input, shape index: {}]
  %s2 = inlined_call_operand.vmem [shape: f32[1,128], index: 2, kind: input, shape index: {}]
  %s3 = inlined_call_operand.vmem [shape: f32[8,128], index: 3, kind: output, shape index: {}]
  %s4 = sld [smem:[#allocation0]]
  $region22: #{flexible_image_encoder.47} parent=0
    _
  %s6 = ssub.s32 1, %s4
  %s7 = scalar_select 0, %s6, %s4
  // Predicated region
  $region2: #{flexible_image_encoder.47} parent=0 // pred_check
    _
  $region3: #{flexible_image_encoder.47} parent=0 // pred_check_branch
    %9 = sbr.rel (0) target = $region5
  $region4: #{flexible_image_encoder.47} parent=0 // pred_region
    _
  $region5: #{flexible_image_encoder.47} parent=0 // pred_fallthru
    _
  // Predicated region
  $region6: #{flexible_image_encoder.47} parent=0 // pred_check
    _
  $region7: #{flexible_image_encoder.47} parent=0 // pred_check_branch
    %11 = sbr.rel (0) target = $region9
  $region8: #{flexible_image_encoder.47} parent=0 // pred_region
    _
  $region9: #{flexible_image_encoder.47} parent=0 // pred_fallthru
    _
  // Predicated region
  $region10: #{flexible_image_encoder.47} parent=0 // pred_check
    _
  $region11: #{flexible_image_encoder.47} parent=0 // pred_check_branch
    %13 = sbr.rel (0) target = $region13
  $region12: #{flexible_image_encoder.47} parent=0 // pred_region
    _
  $region13: #{flexible_image_encoder.47} parent=0 // pred_fallthru
    _
  %v15 = vld [vmem:[%s0] sm:$0xf]
  %v16 = vld [vmem:[%s0 + $0x4] sm:$0xf]
  %v17 = vld [vmem:[%s0 + $0x8] sm:$0xf]
  %v18 = vld [vmem:[%s0 + $0xc] sm:$0xf]
  %v19 = vld [vmem:[%s0 + $0x10] sm:$0xf]
  %v20 = vld [vmem:[%s0 + $0x14] sm:$0xf]
  %v21 = vld [vmem:[%s0 + $0x18] sm:$0xf]
  %v22 = vld [vmem:[%s0 + $0x1c] sm:$0xf]
  %v23 = vadd.f32 %v15, 0.0
  %v24 = vadd.f32 %v16, 0.0
  %v25 = vadd.f32 %v17, 0.0
  %v26 = vadd.f32 %v18, 0.0
  %v27 = vadd.f32 %v19, 0.0
  %v28 = vadd.f32 %v20, 0.0
  %v29 = vadd.f32 %v21, 0.0
  %v30 = vadd.f32 %v22, 0.0
  %v39 = vlaneseq
  %v40 = vshrl.u32 %v39, 7
  %v41 = vsub.s32 0, %v40
  %v42 = vrot.slane %v23, %v41
  %v43 = vlaneseq
  %v44 = vshrl.u32 %v43, 7
  %v45 = vsub.s32 1, %v44
  %v46 = vrot.slane %v23, %v45
  %v47 = vlaneseq
  %v48 = vshrl.u32 %v47, 7
  %v49 = vsub.s32 2, %v48
  %v50 = vrot.slane %v23, %v49
  %v51 = vlaneseq
  %v52 = vshrl.u32 %v51, 7
  %v53 = vsub.s32 3, %v52
  %v54 = vrot.slane %v23, %v53
  %v55 = vlaneseq
  %v56 = vshrl.u32 %v55, 7
  %v57 = vsub.s32 0, %v56
  %v58 = vrot.slane %v24, %v57
  %v59 = vlaneseq
  %v60 = vshrl.u32 %v59, 7
  %v61 = vsub.s32 1, %v60
  %v62 = vrot.slane %v24, %v61
  %v63 = vlaneseq
  %v64 = vshrl.u32 %v63, 7
  %v65 = vsub.s32 2, %v64
  %v66 = vrot.slane %v24, %v65
  %v67 = vlaneseq
  %v68 = vshrl.u32 %v67, 7
  %v69 = vsub.s32 3, %v68
  %v70 = vrot.slane %v24, %v69
  %v71 = vlaneseq
  %v72 = vshrl.u32 %v71, 7
  %v73 = vsub.s32 0, %v72
  %v74 = vrot.slane %v25, %v73
  %v75 = vlaneseq
  %v76 = vshrl.u32 %v75, 7
  %v77 = vsub.s32 1, %v76
  %v78 = vrot.slane %v25, %v77
  %v79 = vlaneseq
  %v80 = vshrl.u32 %v79, 7
  %v81 = vsub.s32 2, %v80
  %v82 = vrot.slane %v25, %v81
  %v83 = vlaneseq
  %v84 = vshrl.u32 %v83, 7
  %v85 = vsub.s32 3, %v84
  %v86 = vrot.slane %v25, %v85
  %v87 = vlaneseq
  %v88 = vshrl.u32 %v87, 7
  %v89 = vsub.s32 0, %v88
  %v90 = vrot.slane %v26, %v89
  %v91 = vlaneseq
  %v92 = vshrl.u32 %v91, 7
  %v93 = vsub.s32 1, %v92
  %v94 = vrot.slane %v26, %v93
  %v95 = vlaneseq
  %v96 = vshrl.u32 %v95, 7
  %v97 = vsub.s32 2, %v96
  %v98 = vrot.slane %v26, %v97
  %v99 = vlaneseq
  %v100 = vshrl.u32 %v99, 7
  %v101 = vsub.s32 3, %v100
  %v102 = vrot.slane %v26, %v101
  %v103 = vlaneseq
  %v104 = vshrl.u32 %v103, 7
  %v105 = vsub.s32 0, %v104
  %v106 = vrot.slane %v27, %v105
  %v107 = vlaneseq
  %v108 = vshrl.u32 %v107, 7
  %v109 = vsub.s32 1, %v108
  %v110 = vrot.slane %v27, %v109
  %v111 = vlaneseq
  %v112 = vshrl.u32 %v111, 7
  %v113 = vsub.s32 2, %v112
  %v114 = vrot.slane %v27, %v113
  %v115 = vlaneseq
  %v116 = vshrl.u32 %v115, 7
  %v117 = vsub.s32 3, %v116
  %v118 = vrot.slane %v27, %v117
  %v119 = vlaneseq
  %v120 = vshrl.u32 %v119, 7
  %v121 = vsub.s32 0, %v120
  %v122 = vrot.slane %v28, %v121
  %v123 = vlaneseq
  %v124 = vshrl.u32 %v123, 7
  %v125 = vsub.s32 1, %v124
  %v126 = vrot.slane %v28, %v125
  %v127 = vlaneseq
  %v128 = vshrl.u32 %v127, 7
  %v129 = vsub.s32 2, %v128
  %v130 = vrot.slane %v28, %v129
  %v131 = vlaneseq
  %v132 = vshrl.u32 %v131, 7
  %v133 = vsub.s32 3, %v132
  %v134 = vrot.slane %v28, %v133
  %v135 = vlaneseq
  %v136 = vshrl.u32 %v135, 7
  %v137 = vsub.s32 0, %v136
  %v138 = vrot.slane %v29, %v137
  %v139 = vlaneseq
  %v140 = vshrl.u32 %v139, 7
  %v141 = vsub.s32 1, %v140
  %v142 = vrot.slane %v29, %v141
  %v143 = vlaneseq
  %v144 = vshrl.u32 %v143, 7
  %v145 = vsub.s32 2, %v144
  %v146 = vrot.slane %v29, %v145
  %v147 = vlaneseq
  %v148 = vshrl.u32 %v147, 7
  %v149 = vsub.s32 3, %v148
  %v150 = vrot.slane %v29, %v149
  %v151 = vlaneseq
  %v152 = vshrl.u32 %v151, 7
  %v153 = vsub.s32 0, %v152
  %v154 = vrot.slane %v30, %v153
  %v155 = vlaneseq
  %v156 = vshrl.u32 %v155, 7
  %v157 = vsub.s32 1, %v156
  %v158 = vrot.slane %v30, %v157
  %v159 = vlaneseq
  %v160 = vshrl.u32 %v159, 7
  %v161 = vsub.s32 2, %v160
  %v162 = vrot.slane %v30, %v161
  %v163 = vlaneseq
  %v164 = vshrl.u32 %v163, 7
  %v165 = vsub.s32 3, %v164
  %v166 = vrot.slane %v30, %v165
  %v199 = vpack.c.bf16 %v42, %v42
  %v200 = vpack.c.bf16 %v46, %v46
  %v201 = vpack.c.bf16 %v50, %v50
  %v202 = vpack.c.bf16 %v54, %v54
  %v203 = vpack.c.bf16 %v58, %v58
  %v204 = vpack.c.bf16 %v62, %v62
  %v205 = vpack.c.bf16 %v66, %v66
  %v206 = vpack.c.bf16 %v70, %v70
  %v207 = vpack.c.bf16 %v74, %v74
  %v208 = vpack.c.bf16 %v78, %v78
  %v209 = vpack.c.bf16 %v82, %v82
  %v210 = vpack.c.bf16 %v86, %v86
  %v211 = vpack.c.bf16 %v90, %v90
  %v212 = vpack.c.bf16 %v94, %v94
  %v213 = vpack.c.bf16 %v98, %v98
  %v214 = vpack.c.bf16 %v102, %v102
  %v215 = vpack.c.bf16 %v106, %v106
  %v216 = vpack.c.bf16 %v110, %v110
  %v217 = vpack.c.bf16 %v114, %v114
  %v218 = vpack.c.bf16 %v118, %v118
  %v219 = vpack.c.bf16 %v122, %v122
  %v220 = vpack.c.bf16 %v126, %v126
  %v221 = vpack.c.bf16 %v130, %v130
  %v222 = vpack.c.bf16 %v134, %v134
  %v223 = vpack.c.bf16 %v138, %v138
  %v224 = vpack.c.bf16 %v142, %v142
  %v225 = vpack.c.bf16 %v146, %v146
  %v226 = vpack.c.bf16 %v150, %v150
  %v227 = vpack.c.bf16 %v154, %v154
  %v228 = vpack.c.bf16 %v158, %v158
  %v229 = vpack.c.bf16 %v162, %v162
  %v230 = vpack.c.bf16 %v166, %v166
  %v231 = vld [vmem:[%s1] sm:$0xf]
  %v232 = vld [vmem:[%s1 + $0x4] sm:$0xf]
  %v233 = vld [vmem:[%s1 + $0x8] sm:$0xf]
  %v234 = vld [vmem:[%s1 + $0xc] sm:$0xf]
  %v235 = vld [vmem:[%s1 + $0x10] sm:$0xf]
  %v236 = vld [vmem:[%s1 + $0x14] sm:$0xf]
  %v237 = vld [vmem:[%s1 + $0x18] sm:$0xf]
  %v238 = vld [vmem:[%s1 + $0x1c] sm:$0xf]
  %v239 = vld [vmem:[%s1 + $0x20] sm:$0xf]
  %v240 = vld [vmem:[%s1 + $0x24] sm:$0xf]
  %v241 = vld [vmem:[%s1 + $0x28] sm:$0xf]
  %v242 = vld [vmem:[%s1 + $0x2c] sm:$0xf]
  %v243 = vld [vmem:[%s1 + $0x30] sm:$0xf]
  %v244 = vld [vmem:[%s1 + $0x34] sm:$0xf]
  %v245 = vld [vmem:[%s1 + $0x38] sm:$0xf]
  %v246 = vld [vmem:[%s1 + $0x3c] sm:$0xf]
  %v247 = vld [vmem:[%s1 + $0x40] sm:$0xf]
  %v248 = vld [vmem:[%s1 + $0x44] sm:$0xf]
  %v249 = vld [vmem:[%s1 + $0x48] sm:$0xf]
  %v250 = vld [vmem:[%s1 + $0x4c] sm:$0xf]
  %v251 = vld [vmem:[%s1 + $0x50] sm:$0xf]
  %v252 = vld [vmem:[%s1 + $0x54] sm:$0xf]
  %v253 = vld [vmem:[%s1 + $0x58] sm:$0xf]
  %v254 = vld [vmem:[%s1 + $0x5c] sm:$0xf]
  %v255 = vld [vmem:[%s1 + $0x60] sm:$0xf]
  %v256 = vld [vmem:[%s1 + $0x64] sm:$0xf]
  %v257 = vld [vmem:[%s1 + $0x68] sm:$0xf]
  %v258 = vld [vmem:[%s1 + $0x6c] sm:$0xf]
  %v259 = vld [vmem:[%s1 + $0x70] sm:$0xf]
  %v260 = vld [vmem:[%s1 + $0x74] sm:$0xf]
  %v261 = vld [vmem:[%s1 + $0x78] sm:$0xf]
  %v262 = vld [vmem:[%s1 + $0x7c] sm:$0xf]
  %v263 = vld [vmem:[%s1 + $0x80] sm:$0xf]
  %v264 = vld [vmem:[%s1 + $0x84] sm:$0xf]
  %v265 = vld [vmem:[%s1 + $0x88] sm:$0xf]
  %v266 = vld [vmem:[%s1 + $0x8c] sm:$0xf]
  %v267 = vld [vmem:[%s1 + $0x90] sm:$0xf]
  %v268 = vld [vmem:[%s1 + $0x94] sm:$0xf]
  %v269 = vld [vmem:[%s1 + $0x98] sm:$0xf]
  %v270 = vld [vmem:[%s1 + $0x9c] sm:$0xf]
  %v271 = vld [vmem:[%s1 + $0xa0] sm:$0xf]
  %v272 = vld [vmem:[%s1 + $0xa4] sm:$0xf]
  %v273 = vld [vmem:[%s1 + $0xa8] sm:$0xf]
  %v274 = vld [vmem:[%s1 + $0xac] sm:$0xf]
  %v275 = vld [vmem:[%s1 + $0xb0] sm:$0xf]
  %v276 = vld [vmem:[%s1 + $0xb4] sm:$0xf]
  %v277 = vld [vmem:[%s1 + $0xb8] sm:$0xf]
  %v278 = vld [vmem:[%s1 + $0xbc] sm:$0xf]
  %v279 = vld [vmem:[%s1 + $0xc0] sm:$0xf]
  %v280 = vld [vmem:[%s1 + $0xc4] sm:$0xf]
  %v281 = vld [vmem:[%s1 + $0xc8] sm:$0xf]
  %v282 = vld [vmem:[%s1 + $0xcc] sm:$0xf]
  %v283 = vld [vmem:[%s1 + $0xd0] sm:$0xf]
  %v284 = vld [vmem:[%s1 + $0xd4] sm:$0xf]
  %v285 = vld [vmem:[%s1 + $0xd8] sm:$0xf]
  %v286 = vld [vmem:[%s1 + $0xdc] sm:$0xf]
  %v287 = vld [vmem:[%s1 + $0xe0] sm:$0xf]
  %v288 = vld [vmem:[%s1 + $0xe4] sm:$0xf]
  %v289 = vld [vmem:[%s1 + $0xe8] sm:$0xf]
  %v290 = vld [vmem:[%s1 + $0xec] sm:$0xf]
  %v291 = vld [vmem:[%s1 + $0xf0] sm:$0xf]
  %v292 = vld [vmem:[%s1 + $0xf4] sm:$0xf]
  %v293 = vld [vmem:[%s1 + $0xf8] sm:$0xf]
  %v294 = vld [vmem:[%s1 + $0xfc] sm:$0xf]
  %v295 = vld [vmem:[%s2] sm:$0x1]
  %v297 = vlaneseq
  %v298 = vshrl.u32 %v297, 7
  %v299 = vsub.s32 0, %v298
  %v300 = vrot.slane %v295, %v299
  %v334 = vunpack.c.l.b16 %v199
  %v335 = vunpack.c.l.b16 %v200
  %v336 = vunpack.c.l.b16 %v201
  %v337 = vunpack.c.l.b16 %v202
  %v338 = vunpack.c.l.b16 %v203
  %v339 = vunpack.c.l.b16 %v204
  %v340 = vunpack.c.l.b16 %v205
  %v341 = vunpack.c.l.b16 %v206
  %v342 = vunpack.c.l.b16 %v207
  %v343 = vunpack.c.l.b16 %v208
  %v344 = vunpack.c.l.b16 %v209
  %v345 = vunpack.c.l.b16 %v210
  %v346 = vunpack.c.l.b16 %v211
  %v347 = vunpack.c.l.b16 %v212
  %v348 = vunpack.c.l.b16 %v213
  %v349 = vunpack.c.l.b16 %v214
  %v350 = vunpack.c.l.b16 %v215
  %v351 = vunpack.c.l.b16 %v216
  %v352 = vunpack.c.l.b16 %v217
  %v353 = vunpack.c.l.b16 %v218
  %v354 = vunpack.c.l.b16 %v219
  %v355 = vunpack.c.l.b16 %v220
  %v356 = vunpack.c.l.b16 %v221
  %v357 = vunpack.c.l.b16 %v222
  %v358 = vunpack.c.l.b16 %v223
  %v359 = vunpack.c.l.b16 %v224
  %v360 = vunpack.c.l.b16 %v225
  %v361 = vunpack.c.l.b16 %v226
  %v362 = vunpack.c.l.b16 %v227
  %v363 = vunpack.c.l.b16 %v228
  %v364 = vunpack.c.l.b16 %v229
  %v365 = vunpack.c.l.b16 %v230
  %v366 = vrot.slane %v338, 7
  %vm367 = vcmask 1041409
  %v368 = vsel %vm367, %v366, %v334
  %v369 = vrot.slane %v342, 6
  %vm370 = vcmask 1042434
  %v371 = vsel %vm370, %v369, %v368
  %v372 = vrot.slane %v346, 5
  %vm373 = vcmask 1043459
  %v374 = vsel %vm373, %v372, %v371
  %v375 = vrot.slane %v350, 4
  %vm376 = vcmask 1044484
  %v377 = vsel %vm376, %v375, %v374
  %v378 = vrot.slane %v354, 3
  %vm379 = vcmask 1045509
  %v380 = vsel %vm379, %v378, %v377
  %v381 = vrot.slane %v358, 2
  %vm382 = vcmask 1046534
  %v383 = vsel %vm382, %v381, %v380
  %v384 = vrot.slane %v362, 1
  %vm385 = vcmask 1047559
  %v386 = vsel %vm385, %v384, %v383
  %v387 = vrot.slane %v339, 7
  %v388 = vsel %vm367, %v387, %v335
  %v389 = vrot.slane %v343, 6
  %v390 = vsel %vm370, %v389, %v388
  %v391 = vrot.slane %v347, 5
  %v392 = vsel %vm373, %v391, %v390
  %v393 = vrot.slane %v351, 4
  %v394 = vsel %vm376, %v393, %v392
  %v395 = vrot.slane %v355, 3
  %v396 = vsel %vm379, %v395, %v394
  %v397 = vrot.slane %v359, 2
  %v398 = vsel %vm382, %v397, %v396
  %v399 = vrot.slane %v363, 1
  %v400 = vsel %vm385, %v399, %v398
  %v401 = vrot.slane %v340, 7
  %v402 = vsel %vm367, %v401, %v336
  %v403 = vrot.slane %v344, 6
  %v404 = vsel %vm370, %v403, %v402
  %v405 = vrot.slane %v348, 5
  %v406 = vsel %vm373, %v405, %v404
  %v407 = vrot.slane %v352, 4
  %v408 = vsel %vm376, %v407, %v406
  %v409 = vrot.slane %v356, 3
  %v410 = vsel %vm379, %v409, %v408
  %v411 = vrot.slane %v360, 2
  %v412 = vsel %vm382, %v411, %v410
  %v413 = vrot.slane %v364, 1
  %v414 = vsel %vm385, %v413, %v412
  %v415 = vrot.slane %v341, 7
  %v416 = vsel %vm367, %v415, %v337
  %v417 = vrot.slane %v345, 6
  %v418 = vsel %vm370, %v417, %v416
  %v419 = vrot.slane %v349, 5
  %v420 = vsel %vm373, %v419, %v418
  %v421 = vrot.slane %v353, 4
  %v422 = vsel %vm376, %v421, %v420
  %v423 = vrot.slane %v357, 3
  %v424 = vsel %vm379, %v423, %v422
  %v425 = vrot.slane %v361, 2
  %v426 = vsel %vm382, %v425, %v424
  %v427 = vrot.slane %v365, 1
  %v428 = vsel %vm385, %v427, %v426
  %v429 = vpack.c.b16 %v386, %v386
  %v430 = vpack.c.b16 %v400, %v400
  %v431 = vpack.c.b16 %v414, %v414
  %v432 = vpack.c.b16 %v428, %v428
  %v501 = vunpack.c.l.b16 %v231
  %v502 = vunpack.c.l.b16 %v232
  %v503 = vunpack.c.l.b16 %v233
  %v504 = vunpack.c.l.b16 %v234
  %v505 = vunpack.c.l.b16 %v235
  %v506 = vunpack.c.l.b16 %v236
  %v507 = vunpack.c.l.b16 %v237
  %v508 = vunpack.c.l.b16 %v238
  %v509 = vunpack.c.l.b16 %v239
  %v510 = vunpack.c.l.b16 %v240
  %v511 = vunpack.c.l.b16 %v241
  %v512 = vunpack.c.l.b16 %v242
  %v513 = vunpack.c.l.b16 %v243
  %v514 = vunpack.c.l.b16 %v244
  %v515 = vunpack.c.l.b16 %v245
  %v516 = vunpack.c.l.b16 %v246
  %v517 = vunpack.c.l.b16 %v247
  %v518 = vunpack.c.l.b16 %v248
  %v519 = vunpack.c.l.b16 %v249
  %v520 = vunpack.c.l.b16 %v250
  %v521 = vunpack.c.l.b16 %v251
  %v522 = vunpack.c.l.b16 %v252
  %v523 = vunpack.c.l.b16 %v253
  %v524 = vunpack.c.l.b16 %v254
  %v525 = vunpack.c.l.b16 %v255
  %v526 = vunpack.c.l.b16 %v256
  %v527 = vunpack.c.l.b16 %v257
  %v528 = vunpack.c.l.b16 %v258
  %v529 = vunpack.c.l.b16 %v259
  %v530 = vunpack.c.l.b16 %v260
  %v531 = vunpack.c.l.b16 %v261
  %v532 = vunpack.c.l.b16 %v262
  %v533 = vunpack.c.l.b16 %v263
  %v534 = vunpack.c.l.b16 %v264
  %v535 = vunpack.c.l.b16 %v265
  %v536 = vunpack.c.l.b16 %v266
  %v537 = vunpack.c.l.b16 %v267
  %v538 = vunpack.c.l.b16 %v268
  %v539 = vunpack.c.l.b16 %v269
  %v540 = vunpack.c.l.b16 %v270
  %v541 = vunpack.c.l.b16 %v271
  %v542 = vunpack.c.l.b16 %v272
  %v543 = vunpack.c.l.b16 %v273
  %v544 = vunpack.c.l.b16 %v274
  %v545 = vunpack.c.l.b16 %v275
  %v546 = vunpack.c.l.b16 %v276
  %v547 = vunpack.c.l.b16 %v277
  %v548 = vunpack.c.l.b16 %v278
  %v549 = vunpack.c.l.b16 %v279
  %v550 = vunpack.c.l.b16 %v280
  %v551 = vunpack.c.l.b16 %v281
  %v552 = vunpack.c.l.b16 %v282
  %v553 = vunpack.c.l.b16 %v283
  %v554 = vunpack.c.l.b16 %v284
  %v555 = vunpack.c.l.b16 %v285
  %v556 = vunpack.c.l.b16 %v286
  %v557 = vunpack.c.l.b16 %v287
  %v558 = vunpack.c.l.b16 %v288
  %v559 = vunpack.c.l.b16 %v289
  %v560 = vunpack.c.l.b16 %v290
  %v561 = vunpack.c.l.b16 %v291
  %v562 = vunpack.c.l.b16 %v292
  %v563 = vunpack.c.l.b16 %v293
  %v564 = vunpack.c.l.b16 %v294
  %v565 = vpack.c.b16 %v502, %v501
  %v566 = vpack.c.b16 %v504, %v503
  %v567 = vpack.c.b16 %v506, %v505
  %v568 = vpack.c.b16 %v508, %v507
  %v569 = vpack.c.b16 %v510, %v509
  %v570 = vpack.c.b16 %v512, %v511
  %v571 = vpack.c.b16 %v514, %v513
  %v572 = vpack.c.b16 %v516, %v515
  %v573 = vpack.c.b16 %v518, %v517
  %v574 = vpack.c.b16 %v520, %v519
  %v575 = vpack.c.b16 %v522, %v521
  %v576 = vpack.c.b16 %v524, %v523
  %v577 = vpack.c.b16 %v526, %v525
  %v578 = vpack.c.b16 %v528, %v527
  %v579 = vpack.c.b16 %v530, %v529
  %v580 = vpack.c.b16 %v532, %v531
  %v581 = vpack.c.b16 %v534, %v533
  %v582 = vpack.c.b16 %v536, %v535
  %v583 = vpack.c.b16 %v538, %v537
  %v584 = vpack.c.b16 %v540, %v539
  %v585 = vpack.c.b16 %v542, %v541
  %v586 = vpack.c.b16 %v544, %v543
  %v587 = vpack.c.b16 %v546, %v545
  %v588 = vpack.c.b16 %v548, %v547
  %v589 = vpack.c.b16 %v550, %v549
  %v590 = vpack.c.b16 %v552, %v551
  %v591 = vpack.c.b16 %v554, %v553
  %v592 = vpack.c.b16 %v556, %v555
  %v593 = vpack.c.b16 %v558, %v557
  %v594 = vpack.c.b16 %v560, %v559
  %v595 = vpack.c.b16 %v562, %v561
  %v596 = vpack.c.b16 %v564, %v563
  %629 = vmatprep.subr.bf16.mxu0 0
  %630 = vmatpush1.bf16.msra.mxu0 %v572
  %631 = vmatprep.subr.bf16.mxu0 0
  %632 = vmatpush1.bf16.msra.mxu0 %v571
  %633 = vmatprep.subr.bf16.mxu0 0
  %634 = vmatpush1.bf16.msra.mxu0 %v570
  %635 = vmatprep.subr.bf16.mxu0 0
  %636 = vmatpush1.bf16.msra.mxu0 %v569
  %637 = vmatprep.subr.bf16.mxu0 0
  %638 = vmatpush1.bf16.msra.mxu0 %v568
  %639 = vmatprep.subr.bf16.mxu0 0
  %640 = vmatpush1.bf16.msra.mxu0 %v567
  %641 = vmatprep.subr.bf16.mxu0 0
  %642 = vmatpush1.bf16.msra.mxu0 %v566
  %643 = vmatprep.subr.bf16.mxu0 0
  %644 = vmatpush1.bf16.msra.mxu0 %v565
  %645 = vmatprep.subr.bf16.mxu0 0
  %646 = vmatpush2.bf16.msra.mxu0 %v580
  %647 = vmatprep.subr.bf16.mxu0 0
  %648 = vmatpush2.bf16.msra.mxu0 %v579
  %649 = vmatprep.subr.bf16.mxu0 0
  %650 = vmatpush2.bf16.msra.mxu0 %v578
  %651 = vmatprep.subr.bf16.mxu0 0
  %652 = vmatpush2.bf16.msra.mxu0 %v577
  %653 = vmatprep.subr.bf16.mxu0 0
  %654 = vmatpush2.bf16.msra.mxu0 %v576
  %655 = vmatprep.subr.bf16.mxu0 0
  %656 = vmatpush2.bf16.msra.mxu0 %v575
  %657 = vmatprep.subr.bf16.mxu0 0
  %658 = vmatpush2.bf16.msra.mxu0 %v574
  %659 = vmatprep.subr.bf16.mxu0 0
  %660 = vmatpush2.bf16.msra.mxu0 %v573
  %661 = vmatprep.mubr.bf16.mxu0 %v430
  %662 = vmatmul.mubr.bf16.gmra.mxu0 %v429
  %v663 = vpop.f32.mrf.mxu0
  %v664 = vadd.f32 %v300, %v663
  %v665 = vpop.f32.mrf.mxu0
  %v666 = vpop.f32.mrf.mxu0
  %v667 = vpop.f32.mrf.mxu0
  %668 = vdwg.mxu0
  %669 = vmatprep.subr.bf16.mxu0 0
  %670 = vmatpush1.bf16.msra.mxu0 %v588
  %671 = vmatprep.subr.bf16.mxu0 0
  %672 = vmatpush1.bf16.msra.mxu0 %v587
  %673 = vmatprep.subr.bf16.mxu0 0
  %674 = vmatpush1.bf16.msra.mxu0 %v586
  %675 = vmatprep.subr.bf16.mxu0 0
  %676 = vmatpush1.bf16.msra.mxu0 %v585
  %677 = vmatprep.subr.bf16.mxu0 0
  %678 = vmatpush1.bf16.msra.mxu0 %v584
  %679 = vmatprep.subr.bf16.mxu0 0
  %680 = vmatpush1.bf16.msra.mxu0 %v583
  %681 = vmatprep.subr.bf16.mxu0 0
  %682 = vmatpush1.bf16.msra.mxu0 %v582
  %683 = vmatprep.subr.bf16.mxu0 0
  %684 = vmatpush1.bf16.msra.mxu0 %v581
  %685 = vmatprep.subr.bf16.mxu0 0
  %686 = vmatpush2.bf16.msra.mxu0 %v596
  %687 = vmatprep.subr.bf16.mxu0 0
  %688 = vmatpush2.bf16.msra.mxu0 %v595
  %689 = vmatprep.subr.bf16.mxu0 0
  %690 = vmatpush2.bf16.msra.mxu0 %v594
  %691 = vmatprep.subr.bf16.mxu0 0
  %692 = vmatpush2.bf16.msra.mxu0 %v593
  %693 = vmatprep.subr.bf16.mxu0 0
  %694 = vmatpush2.bf16.msra.mxu0 %v592
  %695 = vmatprep.subr.bf16.mxu0 0
  %696 = vmatpush2.bf16.msra.mxu0 %v591
  %697 = vmatprep.subr.bf16.mxu0 0
  %698 = vmatpush2.bf16.msra.mxu0 %v590
  %699 = vmatprep.subr.bf16.mxu0 0
  %700 = vmatpush2.bf16.msra.mxu0 %v589
  %701 = vmatprep.mubr.bf16.mxu0 %v432
  %702 = vmatmul.mubr.bf16.gmra.mxu0 %v431
  %v703 = vpop.f32.mrf.mxu0
  %v704 = vadd.f32 %v664, %v703
  %v705 = vpop.f32.mrf.mxu0
  %v706 = vpop.f32.mrf.mxu0
  %v707 = vpop.f32.mrf.mxu0
  %708 = vdwg.mxu0
  %v709 = vtanh.pop %v704
  %710 = vst [vmem:[%s3] sm:$0xff] %v709
  // Predicated region
  $region14: #{flexible_image_encoder.47} parent=0 // pred_check
    _
  $region15: #{flexible_image_encoder.47} parent=0 // pred_check_branch
    %712 = sbr.rel (0) target = $region17
  $region16: #{flexible_image_encoder.47} parent=0 // pred_region
    _
  $region17: #{flexible_image_encoder.47} parent=0 // pred_fallthru
    _
  // Predicated region
  $region18: #{flexible_image_encoder.47} parent=0 // pred_check
    _
  $region19: #{flexible_image_encoder.47} parent=0 // pred_check_branch
    %714 = sbr.rel (0) target = $region21
  $region20: #{flexible_image_encoder.47} parent=0 // pred_region
    _
  $region21: #{flexible_image_encoder.47} parent=0 // pred_fallthru
    _

</llo_original>
